<compile_context>
chip_gen: v6e
topology: v6e:2x2x1
jax: 0.10.0
libtpu: 0.0.40
codegen_flags: <defaults>
</compile_context>

<pallas_src>
import functools

import jax
import jax.numpy as jnp
from jax.experimental import pallas as pl
from jax.experimental.pallas import tpu as pltpu


# ----------------------------------------------------------------------------
# Fused kernel: CNN (conv-as-matmul + ReLU + GAP) -> 2-layer LSTM -> FC
#   Gate order matches PyTorch nn.LSTM: i, f, g, o.
#   Output = fc(hn[-1]) = fc(h of layer 2 at the final time step).
# ----------------------------------------------------------------------------
def _video_lstm_kernel(patch_ref, cw_ref, cb_ref,
                       w0ih_ref, b0_ref, whh_ref, w1ih_ref, b1_ref,
                       wfc_ref, bfc_ref, out_ref,
                       *, num_frames, batch, hw, hidden):
    T, B, HW, H = num_frames, batch, hw, hidden

    # ------------------------- CNN stage -------------------------
    # One big MXU matmul over every frame at once (bf16 operands, f32 accumulate).
    y = jnp.dot(patch_ref[...], cw_ref[...],
                preferred_element_type=jnp.float32)               # (T*B*HW, F) f32
    F = y.shape[-1]
    y = jnp.maximum(y + cb_ref[...], 0.0)                         # bias + ReLU (f32)
    # Global average pool per frame; rows are time-major (row = t*B + b).
    feats = jnp.mean(y.reshape(T * B, HW, F), axis=1)             # (T*B, F)

    # ----- hoisted layer-0 input projection (off the recurrence path) -----
    gx0 = jnp.dot(feats, w0ih_ref[...],
                  preferred_element_type=jnp.float32) + b0_ref[...]   # (T*B, 4H)
    gx0 = gx0.reshape(T, B, 4 * H)          # leading-dim index per step is free

    whh = whh_ref[...]        # (2H, 8H)  blockdiag(W0_hh, W1_hh)
    w1ih = w1ih_ref[...]      # (H, 4H)   layer-1 input weight
    b1 = b1_ref[...]          # (1, 4H)   layer-1 combined bias (b_ih + b_hh)

    def gates_to_hc(gates, c):
        # Full-width EUP activations on the (B, 4H) vreg, then static lane slices.
        sg = jax.nn.sigmoid(gates)
        tg = jnp.tanh(gates)
        i = sg[:, 0 * H:1 * H]
        f = sg[:, 1 * H:2 * H]
        g = tg[:, 2 * H:3 * H]
        o = sg[:, 3 * H:4 * H]
        c_new = f * c + i * g
        h_new = o * jnp.tanh(c_new)
        return h_new, c_new

    zeros = jnp.zeros((B, H), jnp.float32)
    c0, c1 = zeros, zeros
    hcat = jnp.zeros((B, 2 * H), jnp.float32)     # [h0 | h1]
    h1 = zeros
    for t in range(T):                            # fully unrolled recurrence
        # One block-diagonal recurrent matmul for BOTH layers; only depends on
        # the previous step's states, so it heads the per-step critical path.
        g_hh = jnp.dot(hcat, whh, preferred_element_type=jnp.float32)   # (B, 8H)
        # Layer 0: hoisted x-projection + recurrent half.
        h0, c0 = gates_to_hc(gx0[t] + g_hh[:, :4 * H], c0)
        # Layer 1: fresh h0 through W1_ih + its recurrent half.
        gates1 = (jnp.dot(h0, w1ih, preferred_element_type=jnp.float32)
                  + g_hh[:, 4 * H:] + b1)
        h1, c1 = gates_to_hc(gates1, c1)
        hcat = jnp.concatenate([h0, h1], axis=-1)   # rebuilt once per step

    # ------------------- final FC on hn[-1] -------------------
    out_ref[...] = (jnp.dot(h1, wfc_ref[...], preferred_element_type=jnp.float32)
                    + bfc_ref[...])


def video_lstm_fused(patches, params, *, num_frames, batch, hw, hidden, num_classes):
    args = (patches,) + tuple(params)
    T, B, H = num_frames, batch, hidden
    feat = params[0].shape[-1]
    k_pad = patches.shape[-1]

    def full_spec(a):
        return pl.BlockSpec(a.shape, lambda i, n=a.ndim: (0,) * n)

    # Advisory cost hint so XLA schedules the wrapper im2col chain around us.
    flops = int(2 * patches.shape[0] * k_pad * feat           # CNN matmul
                + 2 * T * B * feat * 4 * H                    # hoisted input proj
                + T * (2 * B * (2 * H) * (8 * H)              # block-diag recurrent
                       + 2 * B * H * 4 * H)                   # layer-1 input proj
                + 2 * B * H * num_classes)                    # final FC
    transcendentals = int(T * 2 * B * (2 * 4 * H + H))        # sigmoid+tanh+tanh(c)
    bytes_accessed = int(sum(a.size * a.dtype.itemsize for a in args)
                         + B * num_classes * 4)

    kernel = functools.partial(_video_lstm_kernel, num_frames=T,
                               batch=B, hw=hw, hidden=H)
    return pl.pallas_call(
        kernel,
        out_shape=jax.ShapeDtypeStruct((B, num_classes), jnp.float32),
        grid_spec=pltpu.PrefetchScalarGridSpec(
            num_scalar_prefetch=0,
            grid=(1,),                         # whole problem fits comfortably in VMEM
            in_specs=[full_spec(a) for a in args],
            out_specs=pl.BlockSpec((B, num_classes), lambda i: (0, 0)),
        ),
        compiler_params=pltpu.CompilerParams(
            dimension_semantics=("arbitrary",),
            # Plenty for these shapes; raise (v6e/v5e have 128 MiB) if the CNN
            # stage is ever tiled with large blocks, keep <=32 MiB for v7x.
            vmem_limit_bytes=32 * 1024 * 1024,
        ),
        cost_estimate=pl.CostEstimate(flops=flops,
                                      transcendentals=transcendentals,
                                      bytes_accessed=bytes_accessed),
    )(*args)


# ----------------------------------------------------------------------------
# Full forward pass (glue: im2col, layout to time-major patches, weight packing)
# ----------------------------------------------------------------------------
def video_lstm_forward(x, weights, *, hidden_size, num_classes):
    # x: (B, T, C, H, W)  -- PyTorch NCHW per frame
    B, T, C, Hs, Ws = x.shape
    kk = 3
    K = C * kk * kk
    K_pad = 64 if K <= 64 else ((K + 127) // 128) * 128   # lane-friendly CNN K

    # Time-major frame order so in-kernel feature rows come out as (t*B + b),
    # ready for the LSTM with no wrapper-side transpose of the features.
    frames = jnp.transpose(x, (1, 0, 2, 3, 4)).reshape(T * B, C, Hs, Ws)

    # im2col (glue, plain JAX): NCHW -> NHWC -> 3x3 'same' patches.
    f_nhwc = jnp.transpose(frames, (0, 2, 3, 1))
    fp = jnp.pad(f_nhwc, ((0, 0), (1, 1), (1, 1), (0, 0)))
    patches = jnp.concatenate(
        [fp[:, di:di + Hs, dj:dj + Ws, :] for di in range(kk) for dj in range(kk)],
        axis=-1)                                                   # (T*B, Hs, Ws, K)
    patches = jnp.pad(patches, ((0, 0), (0, 0), (0, 0), (0, K_pad - K)))
    # bf16 operands for the CNN matmul (f32 accumulation inside the kernel).
    patches = patches.reshape(T * B * Hs * Ws, K_pad).astype(jnp.bfloat16)

    H = hidden_size
    conv_w = jnp.pad(weights["conv_w"],
                     ((0, K_pad - K), (0, 0))).astype(jnp.bfloat16)
    # Block-diagonal fused recurrent weight: blockdiag(W0_hh, W1_hh) (2H, 8H).
    w_hh_blk = jnp.zeros((2 * H, 8 * H), jnp.float32)
    w_hh_blk = w_hh_blk.at[:H, :4 * H].set(weights["w0_hh"])
    w_hh_blk = w_hh_blk.at[H:, 4 * H:].set(weights["w1_hh"])

    params = (conv_w, weights["conv_b"],
              weights["w0_ih"], weights["b0"],
              w_hh_blk, weights["w1_ih"], weights["b1"],
              weights["wfc"], weights["bfc"])
    return video_lstm_fused(patches, params, num_frames=T, batch=B, hw=Hs * Ws,
                            hidden=H, num_classes=num_classes)       # (B, NC)


def init_weights(key, *, in_ch, feat_dim, hidden_size, num_classes, kk=3):
    # NOTE: patch flattening order is (ki, kj, C); a ported PyTorch conv weight
    # (F, C, 3, 3) must be permuted to that order before flattening into conv_w.
    # NOTE: combined biases b0/b1 are drawn as a single uniform(-s, s); a real
    # PyTorch nn.LSTM sums two independent uniforms (different variance). For a
    # ported checkpoint the caller would set b = b_ih + b_hh directly.
    ks = jax.random.split(key, 10)
    u = lambda k, shape, scale: jax.random.uniform(
        k, shape, jnp.float32, minval=-scale, maxval=scale)
    H = hidden_size
    s_cnn = 1.0 / jnp.sqrt(in_ch * kk * kk)
    s_l = 1.0 / jnp.sqrt(H)
    return {
        "conv_w": u(ks[0], (in_ch * kk * kk, feat_dim), s_cnn),
        "conv_b": u(ks[1], (1, feat_dim), s_cnn),
        "w0_ih": u(ks[2], (feat_dim, 4 * H), s_l),
        "w0_hh": u(ks[3], (H, 4 * H), s_l),
        "b0":    u(ks[4], (1, 4 * H), s_l),
        "w1_ih": u(ks[5], (H, 4 * H), s_l),
        "w1_hh": u(ks[6], (H, 4 * H), s_l),
        "b1":    u(ks[7], (1, 4 * H), s_l),
        "wfc":   u(ks[8], (H, num_classes), s_l),
        "bfc":   u(ks[9], (1, num_classes), s_l),
    }


if __name__ == "__main__":
    # Small shapes consistent with the module's forward:
    #   batch=2, num_frames=8, C=4, H=W=16, cnn_fc_size=64, hidden=32, classes=2
    B, T, C, Hs, Ws = 2, 8, 4, 16, 16
    FEAT, HIDDEN, NUM_CLASSES = 64, 32, 2

    key = jax.random.PRNGKey(0)
    kx, kw = jax.random.split(key)
    x = jax.random.normal(kx, (B, T, C, Hs, Ws), jnp.float32)
    weights = init_weights(kw, in_ch=C, feat_dim=FEAT,
                           hidden_size=HIDDEN, num_classes=NUM_CLASSES)

    fwd = jax.jit(functools.partial(video_lstm_forward,
                                    hidden_size=HIDDEN,
                                    num_classes=NUM_CLASSES))
    out = fwd(x, weights)
    jax.block_until_ready(out)
    assert out.shape == (B, NUM_CLASSES)
    print("KERNEL_OK")
</pallas_src>

<mosaic_0001>
module attributes {stable_mosaic.version = 11 : i64} {
  func.func @_video_lstm_kernel(%arg0: i32, %arg1: memref<4096x64xbf16, #tpu.memory_space<vmem>>, %arg2: memref<64x64xbf16, #tpu.memory_space<vmem>>, %arg3: memref<1x64xf32, #tpu.memory_space<vmem>>, %arg4: memref<64x128xf32, #tpu.memory_space<vmem>>, %arg5: memref<1x128xf32, #tpu.memory_space<vmem>>, %arg6: memref<64x256xf32, #tpu.memory_space<vmem>>, %arg7: memref<32x128xf32, #tpu.memory_space<vmem>>, %arg8: memref<1x128xf32, #tpu.memory_space<vmem>>, %arg9: memref<32x2xf32, #tpu.memory_space<vmem>>, %arg10: memref<1x2xf32, #tpu.memory_space<vmem>>, %arg11: memref<2x2xf32, #tpu.memory_space<vmem>>) attributes {dimension_semantics = [#tpu.dimension_semantics<arbitrary>], iteration_bounds = array<i64: 1>, scalar_prefetch = 0 : i64, scratch_operands = 0 : i64, tpu.core_type = #tpu.core_type<tc>, window_params = [{pipeline_mode = #tpu.pipeline_mode<synchronous>, transform_indices = @transform_0, window_bounds = array<i64: 4096, 64>}, {pipeline_mode = #tpu.pipeline_mode<synchronous>, transform_indices = @transform_1, window_bounds = array<i64: 64, 64>}, {pipeline_mode = #tpu.pipeline_mode<synchronous>, transform_indices = @transform_2, window_bounds = array<i64: 1, 64>}, {pipeline_mode = #tpu.pipeline_mode<synchronous>, transform_indices = @transform_3, window_bounds = array<i64: 64, 128>}, {pipeline_mode = #tpu.pipeline_mode<synchronous>, transform_indices = @transform_4, window_bounds = array<i64: 1, 128>}, {pipeline_mode = #tpu.pipeline_mode<synchronous>, transform_indices = @transform_5, window_bounds = array<i64: 64, 256>}, {pipeline_mode = #tpu.pipeline_mode<synchronous>, transform_indices = @transform_6, window_bounds = array<i64: 32, 128>}, {pipeline_mode = #tpu.pipeline_mode<synchronous>, transform_indices = @transform_7, window_bounds = array<i64: 1, 128>}, {pipeline_mode = #tpu.pipeline_mode<synchronous>, transform_indices = @transform_8, window_bounds = array<i64: 32, 2>}, {pipeline_mode = #tpu.pipeline_mode<synchronous>, transform_indices = @transform_9, window_bounds = array<i64: 1, 2>}, {pipeline_mode = #tpu.pipeline_mode<synchronous>, transform_indices = @transform_10, window_bounds = array<i64: 2, 2>}]} {
    %c0 = arith.constant 0 : index
    %c0_0 = arith.constant 0 : index
    %0 = vector.load %arg1[%c0, %c0_0] : memref<4096x64xbf16, #tpu.memory_space<vmem>>, vector<4096x64xbf16>
    %c0_1 = arith.constant 0 : index
    %c0_2 = arith.constant 0 : index
    %1 = vector.load %arg2[%c0_1, %c0_2] : memref<64x64xbf16, #tpu.memory_space<vmem>>, vector<64x64xbf16>
    %cst = arith.constant dense<0.000000e+00> : vector<4096x64xf32>
    %2 = tpu.matmul %0, %1, %cst {dimension_numbers = #tpu.dot_dimension_numbers<[1], [0], [0], [1], [0, 0, 1, 1], [], []>} : vector<4096x64xbf16>, vector<64x64xbf16>, vector<4096x64xf32> -> vector<4096x64xf32>
    %c0_3 = arith.constant 0 : index
    %c0_4 = arith.constant 0 : index
    %3 = vector.load %arg3[%c0_3, %c0_4] : memref<1x64xf32, #tpu.memory_space<vmem>>, vector<1x64xf32>
    %4 = vector.broadcast %3 : vector<1x64xf32> to vector<4096x64xf32>
    %5 = arith.addf %2, %4 : vector<4096x64xf32>
    %cst_5 = arith.constant 0.000000e+00 : f32
    %6 = vector.broadcast %cst_5 : f32 to vector<4096x64xf32>
    %7 = arith.maximumf %5, %6 : vector<4096x64xf32>
    %8 = vector.shape_cast %7 : vector<4096x64xf32> to vector<16x256x64xf32>
    %cst_6 = arith.constant dense<0.000000e+00> : vector<16x64xf32>
    %9 = vector.multi_reduction <add>, %8, %cst_6 [1] : vector<16x256x64xf32> to vector<16x64xf32>
    %cst_7 = arith.constant 2.560000e+02 : f32
    %10 = vector.broadcast %cst_7 : f32 to vector<16x64xf32>
    %11 = arith.divf %9, %10 : vector<16x64xf32>
    %c0_8 = arith.constant 0 : index
    %c0_9 = arith.constant 0 : index
    %12 = vector.load %arg4[%c0_8, %c0_9] : memref<64x128xf32, #tpu.memory_space<vmem>>, vector<64x128xf32>
    %cst_10 = arith.constant dense<0.000000e+00> : vector<16x128xf32>
    %13 = tpu.matmul %11, %12, %cst_10 {dimension_numbers = #tpu.dot_dimension_numbers<[1], [0], [0], [1], [0, 0, 1, 1], [], []>} : vector<16x64xf32>, vector<64x128xf32>, vector<16x128xf32> -> vector<16x128xf32>
    %c0_11 = arith.constant 0 : index
    %c0_12 = arith.constant 0 : index
    %14 = vector.load %arg5[%c0_11, %c0_12] : memref<1x128xf32, #tpu.memory_space<vmem>>, vector<1x128xf32>
    %15 = vector.broadcast %14 : vector<1x128xf32> to vector<16x128xf32>
    %16 = arith.addf %13, %15 : vector<16x128xf32>
    %17 = vector.shape_cast %16 : vector<16x128xf32> to vector<8x2x128xf32>
    %c0_13 = arith.constant 0 : index
    %c0_14 = arith.constant 0 : index
    %18 = vector.load %arg6[%c0_13, %c0_14] : memref<64x256xf32, #tpu.memory_space<vmem>>, vector<64x256xf32>
    %c0_15 = arith.constant 0 : index
    %c0_16 = arith.constant 0 : index
    %19 = vector.load %arg7[%c0_15, %c0_16] : memref<32x128xf32, #tpu.memory_space<vmem>>, vector<32x128xf32>
    %c0_17 = arith.constant 0 : index
    %c0_18 = arith.constant 0 : index
    %20 = vector.load %arg8[%c0_17, %c0_18] : memref<1x128xf32, #tpu.memory_space<vmem>>, vector<1x128xf32>
    %cst_19 = arith.constant 0.000000e+00 : f32
    %21 = vector.broadcast %cst_19 : f32 to vector<2x32xf32>
    %cst_20 = arith.constant 0.000000e+00 : f32
    %22 = vector.broadcast %cst_20 : f32 to vector<2x64xf32>
    %cst_21 = arith.constant dense<0.000000e+00> : vector<2x256xf32>
    %23 = tpu.matmul %22, %18, %cst_21 {dimension_numbers = #tpu.dot_dimension_numbers<[1], [0], [0], [1], [0, 0, 1, 1], [], []>} : vector<2x64xf32>, vector<64x256xf32>, vector<2x256xf32> -> vector<2x256xf32>
    %24 = vector.extract_strided_slice %17 {offsets = [0, 0, 0], sizes = [1, 2, 128], strides = [1, 1, 1]} : vector<8x2x128xf32> to vector<1x2x128xf32>
    %25 = vector.shape_cast %24 : vector<1x2x128xf32> to vector<2x128xf32>
    %26 = vector.extract_strided_slice %23 {offsets = [0, 0], sizes = [2, 128], strides = [1, 1]} : vector<2x256xf32> to vector<2x128xf32>
    %27 = arith.addf %25, %26 : vector<2x128xf32>
    %28 = arith.negf %27 : vector<2x128xf32>
    %29 = math.exp %28 : vector<2x128xf32>
    %cst_22 = arith.constant 1.000000e+00 : f32
    %30 = vector.broadcast %cst_22 : f32 to vector<2x128xf32>
    %31 = arith.addf %30, %29 : vector<2x128xf32>
    %32 = arith.divf %30, %31 : vector<2x128xf32>
    %33 = math.tanh %27 : vector<2x128xf32>
    %34 = vector.extract_strided_slice %32 {offsets = [0, 0], sizes = [2, 32], strides = [1, 1]} : vector<2x128xf32> to vector<2x32xf32>
    %35 = vector.extract_strided_slice %32 {offsets = [0, 32], sizes = [2, 32], strides = [1, 1]} : vector<2x128xf32> to vector<2x32xf32>
    %36 = vector.extract_strided_slice %33 {offsets = [0, 64], sizes = [2, 32], strides = [1, 1]} : vector<2x128xf32> to vector<2x32xf32>
    %37 = vector.extract_strided_slice %32 {offsets = [0, 96], sizes = [2, 32], strides = [1, 1]} : vector<2x128xf32> to vector<2x32xf32>
    %38 = arith.mulf %35, %21 : vector<2x32xf32>
    %39 = arith.mulf %34, %36 : vector<2x32xf32>
    %40 = arith.addf %38, %39 : vector<2x32xf32>
    %41 = math.tanh %40 : vector<2x32xf32>
    %42 = arith.mulf %37, %41 : vector<2x32xf32>
    %cst_23 = arith.constant dense<0.000000e+00> : vector<2x128xf32>
    %43 = tpu.matmul %42, %19, %cst_23 {dimension_numbers = #tpu.dot_dimension_numbers<[1], [0], [0], [1], [0, 0, 1, 1], [], []>} : vector<2x32xf32>, vector<32x128xf32>, vector<2x128xf32> -> vector<2x128xf32>
    %44 = vector.extract_strided_slice %23 {offsets = [0, 128], sizes = [2, 128], strides = [1, 1]} : vector<2x256xf32> to vector<2x128xf32>
    %45 = arith.addf %43, %44 : vector<2x128xf32>
    %46 = vector.broadcast %20 : vector<1x128xf32> to vector<2x128xf32>
    %47 = arith.addf %45, %46 : vector<2x128xf32>
    %48 = arith.negf %47 : vector<2x128xf32>
    %49 = math.exp %48 : vector<2x128xf32>
    %cst_24 = arith.constant 1.000000e+00 : f32
    %50 = vector.broadcast %cst_24 : f32 to vector<2x128xf32>
    %51 = arith.addf %50, %49 : vector<2x128xf32>
    %52 = arith.divf %50, %51 : vector<2x128xf32>
    %53 = math.tanh %47 : vector<2x128xf32>
    %54 = vector.extract_strided_slice %52 {offsets = [0, 0], sizes = [2, 32], strides = [1, 1]} : vector<2x128xf32> to vector<2x32xf32>
    %55 = vector.extract_strided_slice %52 {offsets = [0, 32], sizes = [2, 32], strides = [1, 1]} : vector<2x128xf32> to vector<2x32xf32>
    %56 = vector.extract_strided_slice %53 {offsets = [0, 64], sizes = [2, 32], strides = [1, 1]} : vector<2x128xf32> to vector<2x32xf32>
    %57 = vector.extract_strided_slice %52 {offsets = [0, 96], sizes = [2, 32], strides = [1, 1]} : vector<2x128xf32> to vector<2x32xf32>
    %58 = arith.mulf %55, %21 : vector<2x32xf32>
    %59 = arith.mulf %54, %56 : vector<2x32xf32>
    %60 = arith.addf %58, %59 : vector<2x32xf32>
    %61 = math.tanh %60 : vector<2x32xf32>
    %62 = arith.mulf %57, %61 : vector<2x32xf32>
    %63 = tpu.concatenate %42, %62 in 1 : vector<2x32xf32>, vector<2x32xf32> -> vector<2x64xf32>
    %cst_25 = arith.constant dense<0.000000e+00> : vector<2x256xf32>
    %64 = tpu.matmul %63, %18, %cst_25 {dimension_numbers = #tpu.dot_dimension_numbers<[1], [0], [0], [1], [0, 0, 1, 1], [], []>} : vector<2x64xf32>, vector<64x256xf32>, vector<2x256xf32> -> vector<2x256xf32>
    %65 = vector.extract_strided_slice %17 {offsets = [1, 0, 0], sizes = [1, 2, 128], strides = [1, 1, 1]} : vector<8x2x128xf32> to vector<1x2x128xf32>
    %66 = vector.shape_cast %65 : vector<1x2x128xf32> to vector<2x128xf32>
    %67 = vector.extract_strided_slice %64 {offsets = [0, 0], sizes = [2, 128], strides = [1, 1]} : vector<2x256xf32> to vector<2x128xf32>
    %68 = arith.addf %66, %67 : vector<2x128xf32>
    %69 = arith.negf %68 : vector<2x128xf32>
    %70 = math.exp %69 : vector<2x128xf32>
    %cst_26 = arith.constant 1.000000e+00 : f32
    %71 = vector.broadcast %cst_26 : f32 to vector<2x128xf32>
    %72 = arith.addf %71, %70 : vector<2x128xf32>
    %73 = arith.divf %71, %72 : vector<2x128xf32>
    %74 = math.tanh %68 : vector<2x128xf32>
    %75 = vector.extract_strided_slice %73 {offsets = [0, 0], sizes = [2, 32], strides = [1, 1]} : vector<2x128xf32> to vector<2x32xf32>
    %76 = vector.extract_strided_slice %73 {offsets = [0, 32], sizes = [2, 32], strides = [1, 1]} : vector<2x128xf32> to vector<2x32xf32>
    %77 = vector.extract_strided_slice %74 {offsets = [0, 64], sizes = [2, 32], strides = [1, 1]} : vector<2x128xf32> to vector<2x32xf32>
    %78 = vector.extract_strided_slice %73 {offsets = [0, 96], sizes = [2, 32], strides = [1, 1]} : vector<2x128xf32> to vector<2x32xf32>
    %79 = arith.mulf %76, %40 : vector<2x32xf32>
    %80 = arith.mulf %75, %77 : vector<2x32xf32>
    %81 = arith.addf %79, %80 : vector<2x32xf32>
    %82 = math.tanh %81 : vector<2x32xf32>
    %83 = arith.mulf %78, %82 : vector<2x32xf32>
    %cst_27 = arith.constant dense<0.000000e+00> : vector<2x128xf32>
    %84 = tpu.matmul %83, %19, %cst_27 {dimension_numbers = #tpu.dot_dimension_numbers<[1], [0], [0], [1], [0, 0, 1, 1], [], []>} : vector<2x32xf32>, vector<32x128xf32>, vector<2x128xf32> -> vector<2x128xf32>
    %85 = vector.extract_strided_slice %64 {offsets = [0, 128], sizes = [2, 128], strides = [1, 1]} : vector<2x256xf32> to vector<2x128xf32>
    %86 = arith.addf %84, %85 : vector<2x128xf32>
    %87 = vector.broadcast %20 : vector<1x128xf32> to vector<2x128xf32>
    %88 = arith.addf %86, %87 : vector<2x128xf32>
    %89 = arith.negf %88 : vector<2x128xf32>
    %90 = math.exp %89 : vector<2x128xf32>
    %cst_28 = arith.constant 1.000000e+00 : f32
    %91 = vector.broadcast %cst_28 : f32 to vector<2x128xf32>
    %92 = arith.addf %91, %90 : vector<2x128xf32>
    %93 = arith.divf %91, %92 : vector<2x128xf32>
    %94 = math.tanh %88 : vector<2x128xf32>
    %95 = vector.extract_strided_slice %93 {offsets = [0, 0], sizes = [2, 32], strides = [1, 1]} : vector<2x128xf32> to vector<2x32xf32>
    %96 = vector.extract_strided_slice %93 {offsets = [0, 32], sizes = [2, 32], strides = [1, 1]} : vector<2x128xf32> to vector<2x32xf32>
    %97 = vector.extract_strided_slice %94 {offsets = [0, 64], sizes = [2, 32], strides = [1, 1]} : vector<2x128xf32> to vector<2x32xf32>
    %98 = vector.extract_strided_slice %93 {offsets = [0, 96], sizes = [2, 32], strides = [1, 1]} : vector<2x128xf32> to vector<2x32xf32>
    %99 = arith.mulf %96, %60 : vector<2x32xf32>
    %100 = arith.mulf %95, %97 : vector<2x32xf32>
    %101 = arith.addf %99, %100 : vector<2x32xf32>
    %102 = math.tanh %101 : vector<2x32xf32>
    %103 = arith.mulf %98, %102 : vector<2x32xf32>
    %104 = tpu.concatenate %83, %103 in 1 : vector<2x32xf32>, vector<2x32xf32> -> vector<2x64xf32>
    %cst_29 = arith.constant dense<0.000000e+00> : vector<2x256xf32>
    %105 = tpu.matmul %104, %18, %cst_29 {dimension_numbers = #tpu.dot_dimension_numbers<[1], [0], [0], [1], [0, 0, 1, 1], [], []>} : vector<2x64xf32>, vector<64x256xf32>, vector<2x256xf32> -> vector<2x256xf32>
    %106 = vector.extract_strided_slice %17 {offsets = [2, 0, 0], sizes = [1, 2, 128], strides = [1, 1, 1]} : vector<8x2x128xf32> to vector<1x2x128xf32>
    %107 = vector.shape_cast %106 : vector<1x2x128xf32> to vector<2x128xf32>
    %108 = vector.extract_strided_slice %105 {offsets = [0, 0], sizes = [2, 128], strides = [1, 1]} : vector<2x256xf32> to vector<2x128xf32>
    %109 = arith.addf %107, %108 : vector<2x128xf32>
    %110 = arith.negf %109 : vector<2x128xf32>
    %111 = math.exp %110 : vector<2x128xf32>
    %cst_30 = arith.constant 1.000000e+00 : f32
    %112 = vector.broadcast %cst_30 : f32 to vector<2x128xf32>
    %113 = arith.addf %112, %111 : vector<2x128xf32>
    %114 = arith.divf %112, %113 : vector<2x128xf32>
    %115 = math.tanh %109 : vector<2x128xf32>
    %116 = vector.extract_strided_slice %114 {offsets = [0, 0], sizes = [2, 32], strides = [1, 1]} : vector<2x128xf32> to vector<2x32xf32>
    %117 = vector.extract_strided_slice %114 {offsets = [0, 32], sizes = [2, 32], strides = [1, 1]} : vector<2x128xf32> to vector<2x32xf32>
    %118 = vector.extract_strided_slice %115 {offsets = [0, 64], sizes = [2, 32], strides = [1, 1]} : vector<2x128xf32> to vector<2x32xf32>
    %119 = vector.extract_strided_slice %114 {offsets = [0, 96], sizes = [2, 32], strides = [1, 1]} : vector<2x128xf32> to vector<2x32xf32>
    %120 = arith.mulf %117, %81 : vector<2x32xf32>
    %121 = arith.mulf %116, %118 : vector<2x32xf32>
    %122 = arith.addf %120, %121 : vector<2x32xf32>
    %123 = math.tanh %122 : vector<2x32xf32>
    %124 = arith.mulf %119, %123 : vector<2x32xf32>
    %cst_31 = arith.constant dense<0.000000e+00> : vector<2x128xf32>
    %125 = tpu.matmul %124, %19, %cst_31 {dimension_numbers = #tpu.dot_dimension_numbers<[1], [0], [0], [1], [0, 0, 1, 1], [], []>} : vector<2x32xf32>, vector<32x128xf32>, vector<2x128xf32> -> vector<2x128xf32>
    %126 = vector.extract_strided_slice %105 {offsets = [0, 128], sizes = [2, 128], strides = [1, 1]} : vector<2x256xf32> to vector<2x128xf32>
    %127 = arith.addf %125, %126 : vector<2x128xf32>
    %128 = vector.broadcast %20 : vector<1x128xf32> to vector<2x128xf32>
    %129 = arith.addf %127, %128 : vector<2x128xf32>
    %130 = arith.negf %129 : vector<2x128xf32>
    %131 = math.exp %130 : vector<2x128xf32>
    %cst_32 = arith.constant 1.000000e+00 : f32
    %132 = vector.broadcast %cst_32 : f32 to vector<2x128xf32>
    %133 = arith.addf %132, %131 : vector<2x128xf32>
    %134 = arith.divf %132, %133 : vector<2x128xf32>
    %135 = math.tanh %129 : vector<2x128xf32>
    %136 = vector.extract_strided_slice %134 {offsets = [0, 0], sizes = [2, 32], strides = [1, 1]} : vector<2x128xf32> to vector<2x32xf32>
    %137 = vector.extract_strided_slice %134 {offsets = [0, 32], sizes = [2, 32], strides = [1, 1]} : vector<2x128xf32> to vector<2x32xf32>
    %138 = vector.extract_strided_slice %135 {offsets = [0, 64], sizes = [2, 32], strides = [1, 1]} : vector<2x128xf32> to vector<2x32xf32>
    %139 = vector.extract_strided_slice %134 {offsets = [0, 96], sizes = [2, 32], strides = [1, 1]} : vector<2x128xf32> to vector<2x32xf32>
    %140 = arith.mulf %137, %101 : vector<2x32xf32>
    %141 = arith.mulf %136, %138 : vector<2x32xf32>
    %142 = arith.addf %140, %141 : vector<2x32xf32>
    %143 = math.tanh %142 : vector<2x32xf32>
    %144 = arith.mulf %139, %143 : vector<2x32xf32>
    %145 = tpu.concatenate %124, %144 in 1 : vector<2x32xf32>, vector<2x32xf32> -> vector<2x64xf32>
    %cst_33 = arith.constant dense<0.000000e+00> : vector<2x256xf32>
    %146 = tpu.matmul %145, %18, %cst_33 {dimension_numbers = #tpu.dot_dimension_numbers<[1], [0], [0], [1], [0, 0, 1, 1], [], []>} : vector<2x64xf32>, vector<64x256xf32>, vector<2x256xf32> -> vector<2x256xf32>
    %147 = vector.extract_strided_slice %17 {offsets = [3, 0, 0], sizes = [1, 2, 128], strides = [1, 1, 1]} : vector<8x2x128xf32> to vector<1x2x128xf32>
    %148 = vector.shape_cast %147 : vector<1x2x128xf32> to vector<2x128xf32>
    %149 = vector.extract_strided_slice %146 {offsets = [0, 0], sizes = [2, 128], strides = [1, 1]} : vector<2x256xf32> to vector<2x128xf32>
    %150 = arith.addf %148, %149 : vector<2x128xf32>
    %151 = arith.negf %150 : vector<2x128xf32>
    %152 = math.exp %151 : vector<2x128xf32>
    %cst_34 = arith.constant 1.000000e+00 : f32
    %153 = vector.broadcast %cst_34 : f32 to vector<2x128xf32>
    %154 = arith.addf %153, %152 : vector<2x128xf32>
    %155 = arith.divf %153, %154 : vector<2x128xf32>
    %156 = math.tanh %150 : vector<2x128xf32>
    %157 = vector.extract_strided_slice %155 {offsets = [0, 0], sizes = [2, 32], strides = [1, 1]} : vector<2x128xf32> to vector<2x32xf32>
    %158 = vector.extract_strided_slice %155 {offsets = [0, 32], sizes = [2, 32], strides = [1, 1]} : vector<2x128xf32> to vector<2x32xf32>
    %159 = vector.extract_strided_slice %156 {offsets = [0, 64], sizes = [2, 32], strides = [1, 1]} : vector<2x128xf32> to vector<2x32xf32>
    %160 = vector.extract_strided_slice %155 {offsets = [0, 96], sizes = [2, 32], strides = [1, 1]} : vector<2x128xf32> to vector<2x32xf32>
    %161 = arith.mulf %158, %122 : vector<2x32xf32>
    %162 = arith.mulf %157, %159 : vector<2x32xf32>
    %163 = arith.addf %161, %162 : vector<2x32xf32>
    %164 = math.tanh %163 : vector<2x32xf32>
    %165 = arith.mulf %160, %164 : vector<2x32xf32>
    %cst_35 = arith.constant dense<0.000000e+00> : vector<2x128xf32>
    %166 = tpu.matmul %165, %19, %cst_35 {dimension_numbers = #tpu.dot_dimension_numbers<[1], [0], [0], [1], [0, 0, 1, 1], [], []>} : vector<2x32xf32>, vector<32x128xf32>, vector<2x128xf32> -> vector<2x128xf32>
    %167 = vector.extract_strided_slice %146 {offsets = [0, 128], sizes = [2, 128], strides = [1, 1]} : vector<2x256xf32> to vector<2x128xf32>
    %168 = arith.addf %166, %167 : vector<2x128xf32>
    %169 = vector.broadcast %20 : vector<1x128xf32> to vector<2x128xf32>
    %170 = arith.addf %168, %169 : vector<2x128xf32>
    %171 = arith.negf %170 : vector<2x128xf32>
    %172 = math.exp %171 : vector<2x128xf32>
    %cst_36 = arith.constant 1.000000e+00 : f32
    %173 = vector.broadcast %cst_36 : f32 to vector<2x128xf32>
    %174 = arith.addf %173, %172 : vector<2x128xf32>
    %175 = arith.divf %173, %174 : vector<2x128xf32>
    %176 = math.tanh %170 : vector<2x128xf32>
    %177 = vector.extract_strided_slice %175 {offsets = [0, 0], sizes = [2, 32], strides = [1, 1]} : vector<2x128xf32> to vector<2x32xf32>
    %178 = vector.extract_strided_slice %175 {offsets = [0, 32], sizes = [2, 32], strides = [1, 1]} : vector<2x128xf32> to vector<2x32xf32>
    %179 = vector.extract_strided_slice %176 {offsets = [0, 64], sizes = [2, 32], strides = [1, 1]} : vector<2x128xf32> to vector<2x32xf32>
    %180 = vector.extract_strided_slice %175 {offsets = [0, 96], sizes = [2, 32], strides = [1, 1]} : vector<2x128xf32> to vector<2x32xf32>
    %181 = arith.mulf %178, %142 : vector<2x32xf32>
    %182 = arith.mulf %177, %179 : vector<2x32xf32>
    %183 = arith.addf %181, %182 : vector<2x32xf32>
    %184 = math.tanh %183 : vector<2x32xf32>
    %185 = arith.mulf %180, %184 : vector<2x32xf32>
    %186 = tpu.concatenate %165, %185 in 1 : vector<2x32xf32>, vector<2x32xf32> -> vector<2x64xf32>
    %cst_37 = arith.constant dense<0.000000e+00> : vector<2x256xf32>
    %187 = tpu.matmul %186, %18, %cst_37 {dimension_numbers = #tpu.dot_dimension_numbers<[1], [0], [0], [1], [0, 0, 1, 1], [], []>} : vector<2x64xf32>, vector<64x256xf32>, vector<2x256xf32> -> vector<2x256xf32>
    %188 = vector.extract_strided_slice %17 {offsets = [4, 0, 0], sizes = [1, 2, 128], strides = [1, 1, 1]} : vector<8x2x128xf32> to vector<1x2x128xf32>
    %189 = vector.shape_cast %188 : vector<1x2x128xf32> to vector<2x128xf32>
    %190 = vector.extract_strided_slice %187 {offsets = [0, 0], sizes = [2, 128], strides = [1, 1]} : vector<2x256xf32> to vector<2x128xf32>
    %191 = arith.addf %189, %190 : vector<2x128xf32>
    %192 = arith.negf %191 : vector<2x128xf32>
    %193 = math.exp %192 : vector<2x128xf32>
    %cst_38 = arith.constant 1.000000e+00 : f32
    %194 = vector.broadcast %cst_38 : f32 to vector<2x128xf32>
    %195 = arith.addf %194, %193 : vector<2x128xf32>
    %196 = arith.divf %194, %195 : vector<2x128xf32>
    %197 = math.tanh %191 : vector<2x128xf32>
    %198 = vector.extract_strided_slice %196 {offsets = [0, 0], sizes = [2, 32], strides = [1, 1]} : vector<2x128xf32> to vector<2x32xf32>
    %199 = vector.extract_strided_slice %196 {offsets = [0, 32], sizes = [2, 32], strides = [1, 1]} : vector<2x128xf32> to vector<2x32xf32>
    %200 = vector.extract_strided_slice %197 {offsets = [0, 64], sizes = [2, 32], strides = [1, 1]} : vector<2x128xf32> to vector<2x32xf32>
    %201 = vector.extract_strided_slice %196 {offsets = [0, 96], sizes = [2, 32], strides = [1, 1]} : vector<2x128xf32> to vector<2x32xf32>
    %202 = arith.mulf %199, %163 : vector<2x32xf32>
    %203 = arith.mulf %198, %200 : vector<2x32xf32>
    %204 = arith.addf %202, %203 : vector<2x32xf32>
    %205 = math.tanh %204 : vector<2x32xf32>
    %206 = arith.mulf %201, %205 : vector<2x32xf32>
    %cst_39 = arith.constant dense<0.000000e+00> : vector<2x128xf32>
    %207 = tpu.matmul %206, %19, %cst_39 {dimension_numbers = #tpu.dot_dimension_numbers<[1], [0], [0], [1], [0, 0, 1, 1], [], []>} : vector<2x32xf32>, vector<32x128xf32>, vector<2x128xf32> -> vector<2x128xf32>
    %208 = vector.extract_strided_slice %187 {offsets = [0, 128], sizes = [2, 128], strides = [1, 1]} : vector<2x256xf32> to vector<2x128xf32>
    %209 = arith.addf %207, %208 : vector<2x128xf32>
    %210 = vector.broadcast %20 : vector<1x128xf32> to vector<2x128xf32>
    %211 = arith.addf %209, %210 : vector<2x128xf32>
    %212 = arith.negf %211 : vector<2x128xf32>
    %213 = math.exp %212 : vector<2x128xf32>
    %cst_40 = arith.constant 1.000000e+00 : f32
    %214 = vector.broadcast %cst_40 : f32 to vector<2x128xf32>
    %215 = arith.addf %214, %213 : vector<2x128xf32>
    %216 = arith.divf %214, %215 : vector<2x128xf32>
    %217 = math.tanh %211 : vector<2x128xf32>
    %218 = vector.extract_strided_slice %216 {offsets = [0, 0], sizes = [2, 32], strides = [1, 1]} : vector<2x128xf32> to vector<2x32xf32>
    %219 = vector.extract_strided_slice %216 {offsets = [0, 32], sizes = [2, 32], strides = [1, 1]} : vector<2x128xf32> to vector<2x32xf32>
    %220 = vector.extract_strided_slice %217 {offsets = [0, 64], sizes = [2, 32], strides = [1, 1]} : vector<2x128xf32> to vector<2x32xf32>
    %221 = vector.extract_strided_slice %216 {offsets = [0, 96], sizes = [2, 32], strides = [1, 1]} : vector<2x128xf32> to vector<2x32xf32>
    %222 = arith.mulf %219, %183 : vector<2x32xf32>
    %223 = arith.mulf %218, %220 : vector<2x32xf32>
    %224 = arith.addf %222, %223 : vector<2x32xf32>
    %225 = math.tanh %224 : vector<2x32xf32>
    %226 = arith.mulf %221, %225 : vector<2x32xf32>
    %227 = tpu.concatenate %206, %226 in 1 : vector<2x32xf32>, vector<2x32xf32> -> vector<2x64xf32>
    %cst_41 = arith.constant dense<0.000000e+00> : vector<2x256xf32>
    %228 = tpu.matmul %227, %18, %cst_41 {dimension_numbers = #tpu.dot_dimension_numbers<[1], [0], [0], [1], [0, 0, 1, 1], [], []>} : vector<2x64xf32>, vector<64x256xf32>, vector<2x256xf32> -> vector<2x256xf32>
    %229 = vector.extract_strided_slice %17 {offsets = [5, 0, 0], sizes = [1, 2, 128], strides = [1, 1, 1]} : vector<8x2x128xf32> to vector<1x2x128xf32>
    %230 = vector.shape_cast %229 : vector<1x2x128xf32> to vector<2x128xf32>
    %231 = vector.extract_strided_slice %228 {offsets = [0, 0], sizes = [2, 128], strides = [1, 1]} : vector<2x256xf32> to vector<2x128xf32>
    %232 = arith.addf %230, %231 : vector<2x128xf32>
    %233 = arith.negf %232 : vector<2x128xf32>
    %234 = math.exp %233 : vector<2x128xf32>
    %cst_42 = arith.constant 1.000000e+00 : f32
    %235 = vector.broadcast %cst_42 : f32 to vector<2x128xf32>
    %236 = arith.addf %235, %234 : vector<2x128xf32>
    %237 = arith.divf %235, %236 : vector<2x128xf32>
    %238 = math.tanh %232 : vector<2x128xf32>
    %239 = vector.extract_strided_slice %237 {offsets = [0, 0], sizes = [2, 32], strides = [1, 1]} : vector<2x128xf32> to vector<2x32xf32>
    %240 = vector.extract_strided_slice %237 {offsets = [0, 32], sizes = [2, 32], strides = [1, 1]} : vector<2x128xf32> to vector<2x32xf32>
    %241 = vector.extract_strided_slice %238 {offsets = [0, 64], sizes = [2, 32], strides = [1, 1]} : vector<2x128xf32> to vector<2x32xf32>
    %242 = vector.extract_strided_slice %237 {offsets = [0, 96], sizes = [2, 32], strides = [1, 1]} : vector<2x128xf32> to vector<2x32xf32>
    %243 = arith.mulf %240, %204 : vector<2x32xf32>
    %244 = arith.mulf %239, %241 : vector<2x32xf32>
    %245 = arith.addf %243, %244 : vector<2x32xf32>
    %246 = math.tanh %245 : vector<2x32xf32>
    %247 = arith.mulf %242, %246 : vector<2x32xf32>
    %cst_43 = arith.constant dense<0.000000e+00> : vector<2x128xf32>
    %248 = tpu.matmul %247, %19, %cst_43 {dimension_numbers = #tpu.dot_dimension_numbers<[1], [0], [0], [1], [0, 0, 1, 1], [], []>} : vector<2x32xf32>, vector<32x128xf32>, vector<2x128xf32> -> vector<2x128xf32>
    %249 = vector.extract_strided_slice %228 {offsets = [0, 128], sizes = [2, 128], strides = [1, 1]} : vector<2x256xf32> to vector<2x128xf32>
    %250 = arith.addf %248, %249 : vector<2x128xf32>
    %251 = vector.broadcast %20 : vector<1x128xf32> to vector<2x128xf32>
    %252 = arith.addf %250, %251 : vector<2x128xf32>
    %253 = arith.negf %252 : vector<2x128xf32>
    %254 = math.exp %253 : vector<2x128xf32>
    %cst_44 = arith.constant 1.000000e+00 : f32
    %255 = vector.broadcast %cst_44 : f32 to vector<2x128xf32>
    %256 = arith.addf %255, %254 : vector<2x128xf32>
    %257 = arith.divf %255, %256 : vector<2x128xf32>
    %258 = math.tanh %252 : vector<2x128xf32>
    %259 = vector.extract_strided_slice %257 {offsets = [0, 0], sizes = [2, 32], strides = [1, 1]} : vector<2x128xf32> to vector<2x32xf32>
    %260 = vector.extract_strided_slice %257 {offsets = [0, 32], sizes = [2, 32], strides = [1, 1]} : vector<2x128xf32> to vector<2x32xf32>
    %261 = vector.extract_strided_slice %258 {offsets = [0, 64], sizes = [2, 32], strides = [1, 1]} : vector<2x128xf32> to vector<2x32xf32>
    %262 = vector.extract_strided_slice %257 {offsets = [0, 96], sizes = [2, 32], strides = [1, 1]} : vector<2x128xf32> to vector<2x32xf32>
    %263 = arith.mulf %260, %224 : vector<2x32xf32>
    %264 = arith.mulf %259, %261 : vector<2x32xf32>
    %265 = arith.addf %263, %264 : vector<2x32xf32>
    %266 = math.tanh %265 : vector<2x32xf32>
    %267 = arith.mulf %262, %266 : vector<2x32xf32>
    %268 = tpu.concatenate %247, %267 in 1 : vector<2x32xf32>, vector<2x32xf32> -> vector<2x64xf32>
    %cst_45 = arith.constant dense<0.000000e+00> : vector<2x256xf32>
    %269 = tpu.matmul %268, %18, %cst_45 {dimension_numbers = #tpu.dot_dimension_numbers<[1], [0], [0], [1], [0, 0, 1, 1], [], []>} : vector<2x64xf32>, vector<64x256xf32>, vector<2x256xf32> -> vector<2x256xf32>
    %270 = vector.extract_strided_slice %17 {offsets = [6, 0, 0], sizes = [1, 2, 128], strides = [1, 1, 1]} : vector<8x2x128xf32> to vector<1x2x128xf32>
    %271 = vector.shape_cast %270 : vector<1x2x128xf32> to vector<2x128xf32>
    %272 = vector.extract_strided_slice %269 {offsets = [0, 0], sizes = [2, 128], strides = [1, 1]} : vector<2x256xf32> to vector<2x128xf32>
    %273 = arith.addf %271, %272 : vector<2x128xf32>
    %274 = arith.negf %273 : vector<2x128xf32>
    %275 = math.exp %274 : vector<2x128xf32>
    %cst_46 = arith.constant 1.000000e+00 : f32
    %276 = vector.broadcast %cst_46 : f32 to vector<2x128xf32>
    %277 = arith.addf %276, %275 : vector<2x128xf32>
    %278 = arith.divf %276, %277 : vector<2x128xf32>
    %279 = math.tanh %273 : vector<2x128xf32>
    %280 = vector.extract_strided_slice %278 {offsets = [0, 0], sizes = [2, 32], strides = [1, 1]} : vector<2x128xf32> to vector<2x32xf32>
    %281 = vector.extract_strided_slice %278 {offsets = [0, 32], sizes = [2, 32], strides = [1, 1]} : vector<2x128xf32> to vector<2x32xf32>
    %282 = vector.extract_strided_slice %279 {offsets = [0, 64], sizes = [2, 32], strides = [1, 1]} : vector<2x128xf32> to vector<2x32xf32>
    %283 = vector.extract_strided_slice %278 {offsets = [0, 96], sizes = [2, 32], strides = [1, 1]} : vector<2x128xf32> to vector<2x32xf32>
    %284 = arith.mulf %281, %245 : vector<2x32xf32>
    %285 = arith.mulf %280, %282 : vector<2x32xf32>
    %286 = arith.addf %284, %285 : vector<2x32xf32>
    %287 = math.tanh %286 : vector<2x32xf32>
    %288 = arith.mulf %283, %287 : vector<2x32xf32>
    %cst_47 = arith.constant dense<0.000000e+00> : vector<2x128xf32>
    %289 = tpu.matmul %288, %19, %cst_47 {dimension_numbers = #tpu.dot_dimension_numbers<[1], [0], [0], [1], [0, 0, 1, 1], [], []>} : vector<2x32xf32>, vector<32x128xf32>, vector<2x128xf32> -> vector<2x128xf32>
    %290 = vector.extract_strided_slice %269 {offsets = [0, 128], sizes = [2, 128], strides = [1, 1]} : vector<2x256xf32> to vector<2x128xf32>
    %291 = arith.addf %289, %290 : vector<2x128xf32>
    %292 = vector.broadcast %20 : vector<1x128xf32> to vector<2x128xf32>
    %293 = arith.addf %291, %292 : vector<2x128xf32>
    %294 = arith.negf %293 : vector<2x128xf32>
    %295 = math.exp %294 : vector<2x128xf32>
    %cst_48 = arith.constant 1.000000e+00 : f32
    %296 = vector.broadcast %cst_48 : f32 to vector<2x128xf32>
    %297 = arith.addf %296, %295 : vector<2x128xf32>
    %298 = arith.divf %296, %297 : vector<2x128xf32>
    %299 = math.tanh %293 : vector<2x128xf32>
    %300 = vector.extract_strided_slice %298 {offsets = [0, 0], sizes = [2, 32], strides = [1, 1]} : vector<2x128xf32> to vector<2x32xf32>
    %301 = vector.extract_strided_slice %298 {offsets = [0, 32], sizes = [2, 32], strides = [1, 1]} : vector<2x128xf32> to vector<2x32xf32>
    %302 = vector.extract_strided_slice %299 {offsets = [0, 64], sizes = [2, 32], strides = [1, 1]} : vector<2x128xf32> to vector<2x32xf32>
    %303 = vector.extract_strided_slice %298 {offsets = [0, 96], sizes = [2, 32], strides = [1, 1]} : vector<2x128xf32> to vector<2x32xf32>
    %304 = arith.mulf %301, %265 : vector<2x32xf32>
    %305 = arith.mulf %300, %302 : vector<2x32xf32>
    %306 = arith.addf %304, %305 : vector<2x32xf32>
    %307 = math.tanh %306 : vector<2x32xf32>
    %308 = arith.mulf %303, %307 : vector<2x32xf32>
    %309 = tpu.concatenate %288, %308 in 1 : vector<2x32xf32>, vector<2x32xf32> -> vector<2x64xf32>
    %cst_49 = arith.constant dense<0.000000e+00> : vector<2x256xf32>
    %310 = tpu.matmul %309, %18, %cst_49 {dimension_numbers = #tpu.dot_dimension_numbers<[1], [0], [0], [1], [0, 0, 1, 1], [], []>} : vector<2x64xf32>, vector<64x256xf32>, vector<2x256xf32> -> vector<2x256xf32>
    %311 = vector.extract_strided_slice %17 {offsets = [7, 0, 0], sizes = [1, 2, 128], strides = [1, 1, 1]} : vector<8x2x128xf32> to vector<1x2x128xf32>
    %312 = vector.shape_cast %311 : vector<1x2x128xf32> to vector<2x128xf32>
    %313 = vector.extract_strided_slice %310 {offsets = [0, 0], sizes = [2, 128], strides = [1, 1]} : vector<2x256xf32> to vector<2x128xf32>
    %314 = arith.addf %312, %313 : vector<2x128xf32>
    %315 = arith.negf %314 : vector<2x128xf32>
    %316 = math.exp %315 : vector<2x128xf32>
    %cst_50 = arith.constant 1.000000e+00 : f32
    %317 = vector.broadcast %cst_50 : f32 to vector<2x128xf32>
    %318 = arith.addf %317, %316 : vector<2x128xf32>
    %319 = arith.divf %317, %318 : vector<2x128xf32>
    %320 = math.tanh %314 : vector<2x128xf32>
    %321 = vector.extract_strided_slice %319 {offsets = [0, 0], sizes = [2, 32], strides = [1, 1]} : vector<2x128xf32> to vector<2x32xf32>
    %322 = vector.extract_strided_slice %319 {offsets = [0, 32], sizes = [2, 32], strides = [1, 1]} : vector<2x128xf32> to vector<2x32xf32>
    %323 = vector.extract_strided_slice %320 {offsets = [0, 64], sizes = [2, 32], strides = [1, 1]} : vector<2x128xf32> to vector<2x32xf32>
    %324 = vector.extract_strided_slice %319 {offsets = [0, 96], sizes = [2, 32], strides = [1, 1]} : vector<2x128xf32> to vector<2x32xf32>
    %325 = arith.mulf %322, %286 : vector<2x32xf32>
    %326 = arith.mulf %321, %323 : vector<2x32xf32>
    %327 = arith.addf %325, %326 : vector<2x32xf32>
    %328 = math.tanh %327 : vector<2x32xf32>
    %329 = arith.mulf %324, %328 : vector<2x32xf32>
    %cst_51 = arith.constant dense<0.000000e+00> : vector<2x128xf32>
    %330 = tpu.matmul %329, %19, %cst_51 {dimension_numbers = #tpu.dot_dimension_numbers<[1], [0], [0], [1], [0, 0, 1, 1], [], []>} : vector<2x32xf32>, vector<32x128xf32>, vector<2x128xf32> -> vector<2x128xf32>
    %331 = vector.extract_strided_slice %310 {offsets = [0, 128], sizes = [2, 128], strides = [1, 1]} : vector<2x256xf32> to vector<2x128xf32>
    %332 = arith.addf %330, %331 : vector<2x128xf32>
    %333 = vector.broadcast %20 : vector<1x128xf32> to vector<2x128xf32>
    %334 = arith.addf %332, %333 : vector<2x128xf32>
    %335 = arith.negf %334 : vector<2x128xf32>
    %336 = math.exp %335 : vector<2x128xf32>
    %cst_52 = arith.constant 1.000000e+00 : f32
    %337 = vector.broadcast %cst_52 : f32 to vector<2x128xf32>
    %338 = arith.addf %337, %336 : vector<2x128xf32>
    %339 = arith.divf %337, %338 : vector<2x128xf32>
    %340 = math.tanh %334 : vector<2x128xf32>
    %341 = vector.extract_strided_slice %339 {offsets = [0, 0], sizes = [2, 32], strides = [1, 1]} : vector<2x128xf32> to vector<2x32xf32>
    %342 = vector.extract_strided_slice %339 {offsets = [0, 32], sizes = [2, 32], strides = [1, 1]} : vector<2x128xf32> to vector<2x32xf32>
    %343 = vector.extract_strided_slice %340 {offsets = [0, 64], sizes = [2, 32], strides = [1, 1]} : vector<2x128xf32> to vector<2x32xf32>
    %344 = vector.extract_strided_slice %339 {offsets = [0, 96], sizes = [2, 32], strides = [1, 1]} : vector<2x128xf32> to vector<2x32xf32>
    %345 = arith.mulf %342, %306 : vector<2x32xf32>
    %346 = arith.mulf %341, %343 : vector<2x32xf32>
    %347 = arith.addf %345, %346 : vector<2x32xf32>
    %348 = math.tanh %347 : vector<2x32xf32>
    %349 = arith.mulf %344, %348 : vector<2x32xf32>
    %c0_53 = arith.constant 0 : index
    %c0_54 = arith.constant 0 : index
    %350 = vector.load %arg9[%c0_53, %c0_54] : memref<32x2xf32, #tpu.memory_space<vmem>>, vector<32x2xf32>
    %cst_55 = arith.constant dense<0.000000e+00> : vector<2x2xf32>
    %351 = tpu.matmul %349, %350, %cst_55 {dimension_numbers = #tpu.dot_dimension_numbers<[1], [0], [0], [1], [0, 0, 1, 1], [], []>} : vector<2x32xf32>, vector<32x2xf32>, vector<2x2xf32> -> vector<2x2xf32>
    %c0_56 = arith.constant 0 : index
    %c0_57 = arith.constant 0 : index
    %352 = vector.load %arg10[%c0_56, %c0_57] : memref<1x2xf32, #tpu.memory_space<vmem>>, vector<1x2xf32>
    %353 = vector.broadcast %352 : vector<1x2xf32> to vector<2x2xf32>
    %354 = arith.addf %351, %353 : vector<2x2xf32>
    %c0_58 = arith.constant 0 : index
    %c0_59 = arith.constant 0 : index
    %355 = vector.load %arg11[%c0_58, %c0_59] : memref<2x2xf32, #tpu.memory_space<vmem>>, vector<2x2xf32>
    tpu.vector_store %arg11[%c0_58, %c0_59], %354 {strides = array<i32>} : memref<2x2xf32, #tpu.memory_space<vmem>>, vector<2x2xf32>,
    return
  }
  func.func @transform_0(%arg0: i32) -> (i32, i32) {
    %c0_i32 = arith.constant 0 : i32
    %c0_i32_0 = arith.constant 0 : i32
    %c0_i32_1 = arith.constant 0 : i32
    return %c0_i32, %c0_i32_0 : i32, i32
  }
  func.func @transform_1(%arg0: i32) -> (i32, i32) {
    %c0_i32 = arith.constant 0 : i32
    %c0_i32_0 = arith.constant 0 : i32
    %c0_i32_1 = arith.constant 0 : i32
    return %c0_i32, %c0_i32_0 : i32, i32
  }
  func.func @transform_2(%arg0: i32) -> (i32, i32) {
    %c0_i32 = arith.constant 0 : i32
    %c0_i32_0 = arith.constant 0 : i32
    %c0_i32_1 = arith.constant 0 : i32
    return %c0_i32, %c0_i32_0 : i32, i32
  }
  func.func @transform_3(%arg0: i32) -> (i32, i32) {
    %c0_i32 = arith.constant 0 : i32
    %c0_i32_0 = arith.constant 0 : i32
    %c0_i32_1 = arith.constant 0 : i32
    return %c0_i32, %c0_i32_0 : i32, i32
  }
  func.func @transform_4(%arg0: i32) -> (i32, i32) {
    %c0_i32 = arith.constant 0 : i32
    %c0_i32_0 = arith.constant 0 : i32
    %c0_i32_1 = arith.constant 0 : i32
    return %c0_i32, %c0_i32_0 : i32, i32
  }
  func.func @transform_5(%arg0: i32) -> (i32, i32) {
    %c0_i32 = arith.constant 0 : i32
    %c0_i32_0 = arith.constant 0 : i32
    %c0_i32_1 = arith.constant 0 : i32
    return %c0_i32, %c0_i32_0 : i32, i32
  }
  func.func @transform_6(%arg0: i32) -> (i32, i32) {
    %c0_i32 = arith.constant 0 : i32
    %c0_i32_0 = arith.constant 0 : i32
    %c0_i32_1 = arith.constant 0 : i32
    return %c0_i32, %c0_i32_0 : i32, i32
  }
  func.func @transform_7(%arg0: i32) -> (i32, i32) {
    %c0_i32 = arith.constant 0 : i32
    %c0_i32_0 = arith.constant 0 : i32
    %c0_i32_1 = arith.constant 0 : i32
    return %c0_i32, %c0_i32_0 : i32, i32
  }
  func.func @transform_8(%arg0: i32) -> (i32, i32) {
    %c0_i32 = arith.constant 0 : i32
    %c0_i32_0 = arith.constant 0 : i32
    %c0_i32_1 = arith.constant 0 : i32
    return %c0_i32, %c0_i32_0 : i32, i32
  }
  func.func @transform_9(%arg0: i32) -> (i32, i32) {
    %c0_i32 = arith.constant 0 : i32
    %c0_i32_0 = arith.constant 0 : i32
    %c0_i32_1 = arith.constant 0 : i32
    return %c0_i32, %c0_i32_0 : i32, i32
  }
  func.func @transform_10(%arg0: i32) -> (i32, i32) {
    %c0_i32 = arith.constant 0 : i32
    %c0_i32_0 = arith.constant 0 : i32
    %c0_i32_1 = arith.constant 0 : i32
    return %c0_i32, %c0_i32_0 : i32, i32
  }
}

</mosaic_0001>

<llo_original>
// kernel: video_lstm_forward.1
$region0: #{video_lstm_forward.1}
  #allocation0 [shape = 'u32[]', space=smem, size = 0x4, offset = 0x4, fixed_abs, tag = 'smem constant byte address 0x4 - core index']
  #allocation1 [shape = 'u32[144,128]{1,0:T(1,128)}', space=vmem, size = 0x12000, scoped, tag = 'internal scratch']
  %s0 = inlined_call_operand.vmem [shape: bf16[4096,64], index: 0, kind: input, shape index: {}]
  %s1 = inlined_call_operand.vmem [shape: bf16[64,64], index: 1, kind: input, shape index: {}]
  %s2 = inlined_call_operand.vmem [shape: f32[1,64], index: 2, kind: input, shape index: {}]
  %s3 = inlined_call_operand.vmem [shape: f32[64,128], index: 3, kind: input, shape index: {}]
  %s4 = inlined_call_operand.vmem [shape: f32[1,128], index: 4, kind: input, shape index: {}]
  %s5 = inlined_call_operand.vmem [shape: f32[64,256], index: 5, kind: input, shape index: {}]
  %s6 = inlined_call_operand.vmem [shape: f32[32,128], index: 6, kind: input, shape index: {}]
  %s7 = inlined_call_operand.vmem [shape: f32[1,128], index: 7, kind: input, shape index: {}]
  %s8 = inlined_call_operand.vmem [shape: f32[32,2], index: 8, kind: input, shape index: {}]
  %s9 = inlined_call_operand.vmem [shape: f32[1,2], index: 9, kind: input, shape index: {}]
  %s10 = inlined_call_operand.hbm [shape: f32[2,2], index: 10, kind: output, shape index: {}]
  %s11 = sld [smem:[#allocation0]]
  $region50: #{video_lstm_forward.1} parent=0
    _
  %s13 = ssub.s32 1, %s11
  %s14 = scalar_select 0, %s13, %s11
  $region1: #{video_lstm_forward.1} parent=0
    #allocation2 [shape = 'u8[1024]{0}', space=vmem, size = 0x400, scoped, tag = 'output window, operand 0, single buffered']
    #allocation3 [shape = 's32[1]{0}', space=sflag, size = 0x4, scoped, tag = 'scoped memory for video_lstm_forward.1']
    %15 = vsyncpa [#allocation3], 0
    // Predicated region
    $region2: #{video_lstm_forward.1} parent=1 // pred_check
      _
    $region3: #{video_lstm_forward.1} parent=1 // pred_check_branch
      %17 = sbr.rel (0) target = $region5
    $region4: #{video_lstm_forward.1} parent=1 // pred_region
      _
    $region5: #{video_lstm_forward.1} parent=1 // pred_fallthru
      _
    // Predicated region
    $region6: #{video_lstm_forward.1} parent=1 // pred_check
      _
    $region7: #{video_lstm_forward.1} parent=1 // pred_check_branch
      %19 = sbr.rel (0) target = $region9
    $region8: #{video_lstm_forward.1} parent=1 // pred_region
      _
    $region9: #{video_lstm_forward.1} parent=1 // pred_fallthru
      _
    // Predicated region
    $region10: #{video_lstm_forward.1} parent=1 // pred_check
      _
    $region11: #{video_lstm_forward.1} parent=1 // pred_check_branch
      %21 = sbr.rel (0) target = $region13
    $region12: #{video_lstm_forward.1} parent=1 // pred_region
      _
    $region13: #{video_lstm_forward.1} parent=1 // pred_fallthru
      _
    // Predicated region
    $region14: #{video_lstm_forward.1} parent=1 // pred_check
      _
    $region15: #{video_lstm_forward.1} parent=1 // pred_check_branch
      %23 = sbr.rel (0) target = $region17
    $region16: #{video_lstm_forward.1} parent=1 // pred_region
      _
    $region17: #{video_lstm_forward.1} parent=1 // pred_fallthru
      _
    // Predicated region
    $region18: #{video_lstm_forward.1} parent=1 // pred_check
      _
    $region19: #{video_lstm_forward.1} parent=1 // pred_check_branch
      %25 = sbr.rel (0) target = $region21
    $region20: #{video_lstm_forward.1} parent=1 // pred_region
      _
    $region21: #{video_lstm_forward.1} parent=1 // pred_fallthru
      _
    // Predicated region
    $region22: #{video_lstm_forward.1} parent=1 // pred_check
      _
    $region23: #{video_lstm_forward.1} parent=1 // pred_check_branch
      %27 = sbr.rel (0) target = $region25
    $region24: #{video_lstm_forward.1} parent=1 // pred_region
      _
    $region25: #{video_lstm_forward.1} parent=1 // pred_fallthru
      _
    // Predicated region
    $region26: #{video_lstm_forward.1} parent=1 // pred_check
      _
    $region27: #{video_lstm_forward.1} parent=1 // pred_check_branch
      %29 = sbr.rel (0) target = $region29
    $region28: #{video_lstm_forward.1} parent=1 // pred_region
      _
    $region29: #{video_lstm_forward.1} parent=1 // pred_fallthru
      _
    // Predicated region
    $region30: #{video_lstm_forward.1} parent=1 // pred_check
      _
    $region31: #{video_lstm_forward.1} parent=1 // pred_check_branch
      %31 = sbr.rel (0) target = $region33
    $region32: #{video_lstm_forward.1} parent=1 // pred_region
      _
    $region33: #{video_lstm_forward.1} parent=1 // pred_fallthru
      _
    // Predicated region
    $region34: #{video_lstm_forward.1} parent=1 // pred_check
      _
    $region35: #{video_lstm_forward.1} parent=1 // pred_check_branch
      %33 = sbr.rel (0) target = $region37
    $region36: #{video_lstm_forward.1} parent=1 // pred_region
      _
    $region37: #{video_lstm_forward.1} parent=1 // pred_fallthru
      _
    // Predicated region
    $region38: #{video_lstm_forward.1} parent=1 // pred_check
      _
    $region39: #{video_lstm_forward.1} parent=1 // pred_check_branch
      %35 = sbr.rel (0) target = $region41
    $region40: #{video_lstm_forward.1} parent=1 // pred_region
      _
    $region41: #{video_lstm_forward.1} parent=1 // pred_fallthru
      _
    %v37 = vld [vmem:[%s0] sm:$0xf]
    %v38 = vld [vmem:[%s0 + $0x4] sm:$0xf]
    %v39 = vld [vmem:[%s0 + $0x8] sm:$0xf]
    %v40 = vld [vmem:[%s0 + $0xc] sm:$0xf]
    %v41 = vld [vmem:[%s0 + $0x10] sm:$0xf]
    %v42 = vld [vmem:[%s0 + $0x14] sm:$0xf]
    %v43 = vld [vmem:[%s0 + $0x18] sm:$0xf]
    %v44 = vld [vmem:[%s0 + $0x1c] sm:$0xf]
    %v45 = vld [vmem:[%s0 + $0x20] sm:$0xf]
    %v46 = vld [vmem:[%s0 + $0x24] sm:$0xf]
    %v47 = vld [vmem:[%s0 + $0x28] sm:$0xf]
    %v48 = vld [vmem:[%s0 + $0x2c] sm:$0xf]
    %v49 = vld [vmem:[%s0 + $0x30] sm:$0xf]
    %v50 = vld [vmem:[%s0 + $0x34] sm:$0xf]
    %v51 = vld [vmem:[%s0 + $0x38] sm:$0xf]
    %v52 = vld [vmem:[%s0 + $0x3c] sm:$0xf]
    %v53 = vld [vmem:[%s0 + $0x40] sm:$0xf]
    %v54 = vld [vmem:[%s0 + $0x44] sm:$0xf]
    %v55 = vld [vmem:[%s0 + $0x48] sm:$0xf]
    %v56 = vld [vmem:[%s0 + $0x4c] sm:$0xf]
    %v57 = vld [vmem:[%s0 + $0x50] sm:$0xf]
    %v58 = vld [vmem:[%s0 + $0x54] sm:$0xf]
    %v59 = vld [vmem:[%s0 + $0x58] sm:$0xf]
    %v60 = vld [vmem:[%s0 + $0x5c] sm:$0xf]
    %v61 = vld [vmem:[%s0 + $0x60] sm:$0xf]
    %v62 = vld [vmem:[%s0 + $0x64] sm:$0xf]
    %v63 = vld [vmem:[%s0 + $0x68] sm:$0xf]
    %v64 = vld [vmem:[%s0 + $0x6c] sm:$0xf]
    %v65 = vld [vmem:[%s0 + $0x70] sm:$0xf]
    %v66 = vld [vmem:[%s0 + $0x74] sm:$0xf]
    %v67 = vld [vmem:[%s0 + $0x78] sm:$0xf]
    %v68 = vld [vmem:[%s0 + $0x7c] sm:$0xf]
    %v69 = vld [vmem:[%s0 + $0x80] sm:$0xf]
    %v70 = vld [vmem:[%s0 + $0x84] sm:$0xf]
    %v71 = vld [vmem:[%s0 + $0x88] sm:$0xf]
    %v72 = vld [vmem:[%s0 + $0x8c] sm:$0xf]
    %v73 = vld [vmem:[%s0 + $0x90] sm:$0xf]
    %v74 = vld [vmem:[%s0 + $0x94] sm:$0xf]
    %v75 = vld [vmem:[%s0 + $0x98] sm:$0xf]
    %v76 = vld [vmem:[%s0 + $0x9c] sm:$0xf]
    %v77 = vld [vmem:[%s0 + $0xa0] sm:$0xf]
    %v78 = vld [vmem:[%s0 + $0xa4] sm:$0xf]
    %v79 = vld [vmem:[%s0 + $0xa8] sm:$0xf]
    %v80 = vld [vmem:[%s0 + $0xac] sm:$0xf]
    %v81 = vld [vmem:[%s0 + $0xb0] sm:$0xf]
    %v82 = vld [vmem:[%s0 + $0xb4] sm:$0xf]
    %v83 = vld [vmem:[%s0 + $0xb8] sm:$0xf]
    %v84 = vld [vmem:[%s0 + $0xbc] sm:$0xf]
    %v85 = vld [vmem:[%s0 + $0xc0] sm:$0xf]
    %v86 = vld [vmem:[%s0 + $0xc4] sm:$0xf]
    %v87 = vld [vmem:[%s0 + $0xc8] sm:$0xf]
    %v88 = vld [vmem:[%s0 + $0xcc] sm:$0xf]
    %v89 = vld [vmem:[%s0 + $0xd0] sm:$0xf]
    %v90 = vld [vmem:[%s0 + $0xd4] sm:$0xf]
    %v91 = vld [vmem:[%s0 + $0xd8] sm:$0xf]
    %v92 = vld [vmem:[%s0 + $0xdc] sm:$0xf]
    %v93 = vld [vmem:[%s0 + $0xe0] sm:$0xf]
    %v94 = vld [vmem:[%s0 + $0xe4] sm:$0xf]
    %v95 = vld [vmem:[%s0 + $0xe8] sm:$0xf]
    %v96 = vld [vmem:[%s0 + $0xec] sm:$0xf]
    %v97 = vld [vmem:[%s0 + $0xf0] sm:$0xf]
    %v98 = vld [vmem:[%s0 + $0xf4] sm:$0xf]
    %v99 = vld [vmem:[%s0 + $0xf8] sm:$0xf]
    %v100 = vld [vmem:[%s0 + $0xfc] sm:$0xf]
    %v101 = vld [vmem:[%s0 + $0x100] sm:$0xf]
    %v102 = vld [vmem:[%s0 + $0x104] sm:$0xf]
    %v103 = vld [vmem:[%s0 + $0x108] sm:$0xf]
    %v104 = vld [vmem:[%s0 + $0x10c] sm:$0xf]
    %v105 = vld [vmem:[%s0 + $0x110] sm:$0xf]
    %v106 = vld [vmem:[%s0 + $0x114] sm:$0xf]
    %v107 = vld [vmem:[%s0 + $0x118] sm:$0xf]
    %v108 = vld [vmem:[%s0 + $0x11c] sm:$0xf]
    %v109 = vld [vmem:[%s0 + $0x120] sm:$0xf]
    %v110 = vld [vmem:[%s0 + $0x124] sm:$0xf]
    %v111 = vld [vmem:[%s0 + $0x128] sm:$0xf]
    %v112 = vld [vmem:[%s0 + $0x12c] sm:$0xf]
    %v113 = vld [vmem:[%s0 + $0x130] sm:$0xf]
    %v114 = vld [vmem:[%s0 + $0x134] sm:$0xf]
    %v115 = vld [vmem:[%s0 + $0x138] sm:$0xf]
    %v116 = vld [vmem:[%s0 + $0x13c] sm:$0xf]
    %v117 = vld [vmem:[%s0 + $0x140] sm:$0xf]
    %v118 = vld [vmem:[%s0 + $0x144] sm:$0xf]
    %v119 = vld [vmem:[%s0 + $0x148] sm:$0xf]
    %v120 = vld [vmem:[%s0 + $0x14c] sm:$0xf]
    %v121 = vld [vmem:[%s0 + $0x150] sm:$0xf]
    %v122 = vld [vmem:[%s0 + $0x154] sm:$0xf]
    %v123 = vld [vmem:[%s0 + $0x158] sm:$0xf]
    %v124 = vld [vmem:[%s0 + $0x15c] sm:$0xf]
    %v125 = vld [vmem:[%s0 + $0x160] sm:$0xf]
    %v126 = vld [vmem:[%s0 + $0x164] sm:$0xf]
    %v127 = vld [vmem:[%s0 + $0x168] sm:$0xf]
    %v128 = vld [vmem:[%s0 + $0x16c] sm:$0xf]
    %v129 = vld [vmem:[%s0 + $0x170] sm:$0xf]
    %v130 = vld [vmem:[%s0 + $0x174] sm:$0xf]
    %v131 = vld [vmem:[%s0 + $0x178] sm:$0xf]
    %v132 = vld [vmem:[%s0 + $0x17c] sm:$0xf]
    %v133 = vld [vmem:[%s0 + $0x180] sm:$0xf]
    %v134 = vld [vmem:[%s0 + $0x184] sm:$0xf]
    %v135 = vld [vmem:[%s0 + $0x188] sm:$0xf]
    %v136 = vld [vmem:[%s0 + $0x18c] sm:$0xf]
    %v137 = vld [vmem:[%s0 + $0x190] sm:$0xf]
    %v138 = vld [vmem:[%s0 + $0x194] sm:$0xf]
    %v139 = vld [vmem:[%s0 + $0x198] sm:$0xf]
    %v140 = vld [vmem:[%s0 + $0x19c] sm:$0xf]
    %v141 = vld [vmem:[%s0 + $0x1a0] sm:$0xf]
    %v142 = vld [vmem:[%s0 + $0x1a4] sm:$0xf]
    %v143 = vld [vmem:[%s0 + $0x1a8] sm:$0xf]
    %v144 = vld [vmem:[%s0 + $0x1ac] sm:$0xf]
    %v145 = vld [vmem:[%s0 + $0x1b0] sm:$0xf]
    %v146 = vld [vmem:[%s0 + $0x1b4] sm:$0xf]
    %v147 = vld [vmem:[%s0 + $0x1b8] sm:$0xf]
    %v148 = vld [vmem:[%s0 + $0x1bc] sm:$0xf]
    %v149 = vld [vmem:[%s0 + $0x1c0] sm:$0xf]
    %v150 = vld [vmem:[%s0 + $0x1c4] sm:$0xf]
    %v151 = vld [vmem:[%s0 + $0x1c8] sm:$0xf]
    %v152 = vld [vmem:[%s0 + $0x1cc] sm:$0xf]
    %v153 = vld [vmem:[%s0 + $0x1d0] sm:$0xf]
    %v154 = vld [vmem:[%s0 + $0x1d4] sm:$0xf]
    %v155 = vld [vmem:[%s0 + $0x1d8] sm:$0xf]
    %v156 = vld [vmem:[%s0 + $0x1dc] sm:$0xf]
    %v157 = vld [vmem:[%s0 + $0x1e0] sm:$0xf]
    %v158 = vld [vmem:[%s0 + $0x1e4] sm:$0xf]
    %v159 = vld [vmem:[%s0 + $0x1e8] sm:$0xf]
    %v160 = vld [vmem:[%s0 + $0x1ec] sm:$0xf]
    %v161 = vld [vmem:[%s0 + $0x1f0] sm:$0xf]
    %v162 = vld [vmem:[%s0 + $0x1f4] sm:$0xf]
    %v163 = vld [vmem:[%s0 + $0x1f8] sm:$0xf]
    %v164 = vld [vmem:[%s0 + $0x1fc] sm:$0xf]
    %v165 = vld [vmem:[%s0 + $0x200] sm:$0xf]
    %v166 = vld [vmem:[%s0 + $0x204] sm:$0xf]
    %v167 = vld [vmem:[%s0 + $0x208] sm:$0xf]
    %v168 = vld [vmem:[%s0 + $0x20c] sm:$0xf]
    %v169 = vld [vmem:[%s0 + $0x210] sm:$0xf]
    %v170 = vld [vmem:[%s0 + $0x214] sm:$0xf]
    %v171 = vld [vmem:[%s0 + $0x218] sm:$0xf]
    %v172 = vld [vmem:[%s0 + $0x21c] sm:$0xf]
    %v173 = vld [vmem:[%s0 + $0x220] sm:$0xf]
    %v174 = vld [vmem:[%s0 + $0x224] sm:$0xf]
    %v175 = vld [vmem:[%s0 + $0x228] sm:$0xf]
    %v176 = vld [vmem:[%s0 + $0x22c] sm:$0xf]
    %v177 = vld [vmem:[%s0 + $0x230] sm:$0xf]
    %v178 = vld [vmem:[%s0 + $0x234] sm:$0xf]
    %v179 = vld [vmem:[%s0 + $0x238] sm:$0xf]
    %v180 = vld [vmem:[%s0 + $0x23c] sm:$0xf]
    %v181 = vld [vmem:[%s0 + $0x240] sm:$0xf]
    %v182 = vld [vmem:[%s0 + $0x244] sm:$0xf]
    %v183 = vld [vmem:[%s0 + $0x248] sm:$0xf]
    %v184 = vld [vmem:[%s0 + $0x24c] sm:$0xf]
    %v185 = vld [vmem:[%s0 + $0x250] sm:$0xf]
    %v186 = vld [vmem:[%s0 + $0x254] sm:$0xf]
    %v187 = vld [vmem:[%s0 + $0x258] sm:$0xf]
    %v188 = vld [vmem:[%s0 + $0x25c] sm:$0xf]
    %v189 = vld [vmem:[%s0 + $0x260] sm:$0xf]
    %v190 = vld [vmem:[%s0 + $0x264] sm:$0xf]
    %v191 = vld [vmem:[%s0 + $0x268] sm:$0xf]
    %v192 = vld [vmem:[%s0 + $0x26c] sm:$0xf]
    %v193 = vld [vmem:[%s0 + $0x270] sm:$0xf]
    %v194 = vld [vmem:[%s0 + $0x274] sm:$0xf]
    %v195 = vld [vmem:[%s0 + $0x278] sm:$0xf]
    %v196 = vld [vmem:[%s0 + $0x27c] sm:$0xf]
    %v197 = vld [vmem:[%s0 + $0x280] sm:$0xf]
    %v198 = vld [vmem:[%s0 + $0x284] sm:$0xf]
    %v199 = vld [vmem:[%s0 + $0x288] sm:$0xf]
    %v200 = vld [vmem:[%s0 + $0x28c] sm:$0xf]
    %v201 = vld [vmem:[%s0 + $0x290] sm:$0xf]
    %v202 = vld [vmem:[%s0 + $0x294] sm:$0xf]
    %v203 = vld [vmem:[%s0 + $0x298] sm:$0xf]
    %v204 = vld [vmem:[%s0 + $0x29c] sm:$0xf]
    %v205 = vld [vmem:[%s0 + $0x2a0] sm:$0xf]
    %v206 = vld [vmem:[%s0 + $0x2a4] sm:$0xf]
    %v207 = vld [vmem:[%s0 + $0x2a8] sm:$0xf]
    %v208 = vld [vmem:[%s0 + $0x2ac] sm:$0xf]
    %v209 = vld [vmem:[%s0 + $0x2b0] sm:$0xf]
    %v210 = vld [vmem:[%s0 + $0x2b4] sm:$0xf]
    %v211 = vld [vmem:[%s0 + $0x2b8] sm:$0xf]
    %v212 = vld [vmem:[%s0 + $0x2bc] sm:$0xf]
    %v213 = vld [vmem:[%s0 + $0x2c0] sm:$0xf]
    %v214 = vld [vmem:[%s0 + $0x2c4] sm:$0xf]
    %v215 = vld [vmem:[%s0 + $0x2c8] sm:$0xf]
    %v216 = vld [vmem:[%s0 + $0x2cc] sm:$0xf]
    %v217 = vld [vmem:[%s0 + $0x2d0] sm:$0xf]
    %v218 = vld [vmem:[%s0 + $0x2d4] sm:$0xf]
    %v219 = vld [vmem:[%s0 + $0x2d8] sm:$0xf]
    %v220 = vld [vmem:[%s0 + $0x2dc] sm:$0xf]
    %v221 = vld [vmem:[%s0 + $0x2e0] sm:$0xf]
    %v222 = vld [vmem:[%s0 + $0x2e4] sm:$0xf]
    %v223 = vld [vmem:[%s0 + $0x2e8] sm:$0xf]
    %v224 = vld [vmem:[%s0 + $0x2ec] sm:$0xf]
    %v225 = vld [vmem:[%s0 + $0x2f0] sm:$0xf]
    %v226 = vld [vmem:[%s0 + $0x2f4] sm:$0xf]
    %v227 = vld [vmem:[%s0 + $0x2f8] sm:$0xf]
    %v228 = vld [vmem:[%s0 + $0x2fc] sm:$0xf]
    %v229 = vld [vmem:[%s0 + $0x300] sm:$0xf]
    %v230 = vld [vmem:[%s0 + $0x304] sm:$0xf]
    %v231 = vld [vmem:[%s0 + $0x308] sm:$0xf]
    %v232 = vld [vmem:[%s0 + $0x30c] sm:$0xf]
    %v233 = vld [vmem:[%s0 + $0x310] sm:$0xf]
    %v234 = vld [vmem:[%s0 + $0x314] sm:$0xf]
    %v235 = vld [vmem:[%s0 + $0x318] sm:$0xf]
    %v236 = vld [vmem:[%s0 + $0x31c] sm:$0xf]
    %v237 = vld [vmem:[%s0 + $0x320] sm:$0xf]
    %v238 = vld [vmem:[%s0 + $0x324] sm:$0xf]
    %v239 = vld [vmem:[%s0 + $0x328] sm:$0xf]
    %v240 = vld [vmem:[%s0 + $0x32c] sm:$0xf]
    %v241 = vld [vmem:[%s0 + $0x330] sm:$0xf]
    %v242 = vld [vmem:[%s0 + $0x334] sm:$0xf]
    %v243 = vld [vmem:[%s0 + $0x338] sm:$0xf]
    %v244 = vld [vmem:[%s0 + $0x33c] sm:$0xf]
    %v245 = vld [vmem:[%s0 + $0x340] sm:$0xf]
    %v246 = vld [vmem:[%s0 + $0x344] sm:$0xf]
    %v247 = vld [vmem:[%s0 + $0x348] sm:$0xf]
    %v248 = vld [vmem:[%s0 + $0x34c] sm:$0xf]
    %v249 = vld [vmem:[%s0 + $0x350] sm:$0xf]
    %v250 = vld [vmem:[%s0 + $0x354] sm:$0xf]
    %v251 = vld [vmem:[%s0 + $0x358] sm:$0xf]
    %v252 = vld [vmem:[%s0 + $0x35c] sm:$0xf]
    %v253 = vld [vmem:[%s0 + $0x360] sm:$0xf]
    %v254 = vld [vmem:[%s0 + $0x364] sm:$0xf]
    %v255 = vld [vmem:[%s0 + $0x368] sm:$0xf]
    %v256 = vld [vmem:[%s0 + $0x36c] sm:$0xf]
    %v257 = vld [vmem:[%s0 + $0x370] sm:$0xf]
    %v258 = vld [vmem:[%s0 + $0x374] sm:$0xf]
    %v259 = vld [vmem:[%s0 + $0x378] sm:$0xf]
    %v260 = vld [vmem:[%s0 + $0x37c] sm:$0xf]
    %v261 = vld [vmem:[%s0 + $0x380] sm:$0xf]
    %v262 = vld [vmem:[%s0 + $0x384] sm:$0xf]
    %v263 = vld [vmem:[%s0 + $0x388] sm:$0xf]
    %v264 = vld [vmem:[%s0 + $0x38c] sm:$0xf]
    %v265 = vld [vmem:[%s0 + $0x390] sm:$0xf]
    %v266 = vld [vmem:[%s0 + $0x394] sm:$0xf]
    %v267 = vld [vmem:[%s0 + $0x398] sm:$0xf]
    %v268 = vld [vmem:[%s0 + $0x39c] sm:$0xf]
    %v269 = vld [vmem:[%s0 + $0x3a0] sm:$0xf]
    %v270 = vld [vmem:[%s0 + $0x3a4] sm:$0xf]
    %v271 = vld [vmem:[%s0 + $0x3a8] sm:$0xf]
    %v272 = vld [vmem:[%s0 + $0x3ac] sm:$0xf]
    %v273 = vld [vmem:[%s0 + $0x3b0] sm:$0xf]
    %v274 = vld [vmem:[%s0 + $0x3b4] sm:$0xf]
    %v275 = vld [vmem:[%s0 + $0x3b8] sm:$0xf]
    %v276 = vld [vmem:[%s0 + $0x3bc] sm:$0xf]
    %v277 = vld [vmem:[%s0 + $0x3c0] sm:$0xf]
    %v278 = vld [vmem:[%s0 + $0x3c4] sm:$0xf]
    %v279 = vld [vmem:[%s0 + $0x3c8] sm:$0xf]
    %v280 = vld [vmem:[%s0 + $0x3cc] sm:$0xf]
    %v281 = vld [vmem:[%s0 + $0x3d0] sm:$0xf]
    %v282 = vld [vmem:[%s0 + $0x3d4] sm:$0xf]
    %v283 = vld [vmem:[%s0 + $0x3d8] sm:$0xf]
    %v284 = vld [vmem:[%s0 + $0x3dc] sm:$0xf]
    %v285 = vld [vmem:[%s0 + $0x3e0] sm:$0xf]
    %v286 = vld [vmem:[%s0 + $0x3e4] sm:$0xf]
    %v287 = vld [vmem:[%s0 + $0x3e8] sm:$0xf]
    %v288 = vld [vmem:[%s0 + $0x3ec] sm:$0xf]
    %v289 = vld [vmem:[%s0 + $0x3f0] sm:$0xf]
    %v290 = vld [vmem:[%s0 + $0x3f4] sm:$0xf]
    %v291 = vld [vmem:[%s0 + $0x3f8] sm:$0xf]
    %v292 = vld [vmem:[%s0 + $0x3fc] sm:$0xf]
    %v293 = vld [vmem:[%s0 + $0x400] sm:$0xf]
    %v294 = vld [vmem:[%s0 + $0x404] sm:$0xf]
    %v295 = vld [vmem:[%s0 + $0x408] sm:$0xf]
    %v296 = vld [vmem:[%s0 + $0x40c] sm:$0xf]
    %v297 = vld [vmem:[%s0 + $0x410] sm:$0xf]
    %v298 = vld [vmem:[%s0 + $0x414] sm:$0xf]
    %v299 = vld [vmem:[%s0 + $0x418] sm:$0xf]
    %v300 = vld [vmem:[%s0 + $0x41c] sm:$0xf]
    %v301 = vld [vmem:[%s0 + $0x420] sm:$0xf]
    %v302 = vld [vmem:[%s0 + $0x424] sm:$0xf]
    %v303 = vld [vmem:[%s0 + $0x428] sm:$0xf]
    %v304 = vld [vmem:[%s0 + $0x42c] sm:$0xf]
    %v305 = vld [vmem:[%s0 + $0x430] sm:$0xf]
    %v306 = vld [vmem:[%s0 + $0x434] sm:$0xf]
    %v307 = vld [vmem:[%s0 + $0x438] sm:$0xf]
    %v308 = vld [vmem:[%s0 + $0x43c] sm:$0xf]
    %v309 = vld [vmem:[%s0 + $0x440] sm:$0xf]
    %v310 = vld [vmem:[%s0 + $0x444] sm:$0xf]
    %v311 = vld [vmem:[%s0 + $0x448] sm:$0xf]
    %v312 = vld [vmem:[%s0 + $0x44c] sm:$0xf]
    %v313 = vld [vmem:[%s0 + $0x450] sm:$0xf]
    %v314 = vld [vmem:[%s0 + $0x454] sm:$0xf]
    %v315 = vld [vmem:[%s0 + $0x458] sm:$0xf]
    %v316 = vld [vmem:[%s0 + $0x45c] sm:$0xf]
    %v317 = vld [vmem:[%s0 + $0x460] sm:$0xf]
    %v318 = vld [vmem:[%s0 + $0x464] sm:$0xf]
    %v319 = vld [vmem:[%s0 + $0x468] sm:$0xf]
    %v320 = vld [vmem:[%s0 + $0x46c] sm:$0xf]
    %v321 = vld [vmem:[%s0 + $0x470] sm:$0xf]
    %v322 = vld [vmem:[%s0 + $0x474] sm:$0xf]
    %v323 = vld [vmem:[%s0 + $0x478] sm:$0xf]
    %v324 = vld [vmem:[%s0 + $0x47c] sm:$0xf]
    %v325 = vld [vmem:[%s0 + $0x480] sm:$0xf]
    %v326 = vld [vmem:[%s0 + $0x484] sm:$0xf]
    %v327 = vld [vmem:[%s0 + $0x488] sm:$0xf]
    %v328 = vld [vmem:[%s0 + $0x48c] sm:$0xf]
    %v329 = vld [vmem:[%s0 + $0x490] sm:$0xf]
    %v330 = vld [vmem:[%s0 + $0x494] sm:$0xf]
    %v331 = vld [vmem:[%s0 + $0x498] sm:$0xf]
    %v332 = vld [vmem:[%s0 + $0x49c] sm:$0xf]
    %v333 = vld [vmem:[%s0 + $0x4a0] sm:$0xf]
    %v334 = vld [vmem:[%s0 + $0x4a4] sm:$0xf]
    %v335 = vld [vmem:[%s0 + $0x4a8] sm:$0xf]
    %v336 = vld [vmem:[%s0 + $0x4ac] sm:$0xf]
    %v337 = vld [vmem:[%s0 + $0x4b0] sm:$0xf]
    %v338 = vld [vmem:[%s0 + $0x4b4] sm:$0xf]
    %v339 = vld [vmem:[%s0 + $0x4b8] sm:$0xf]
    %v340 = vld [vmem:[%s0 + $0x4bc] sm:$0xf]
    %v341 = vld [vmem:[%s0 + $0x4c0] sm:$0xf]
    %v342 = vld [vmem:[%s0 + $0x4c4] sm:$0xf]
    %v343 = vld [vmem:[%s0 + $0x4c8] sm:$0xf]
    %v344 = vld [vmem:[%s0 + $0x4cc] sm:$0xf]
    %v345 = vld [vmem:[%s0 + $0x4d0] sm:$0xf]
    %v346 = vld [vmem:[%s0 + $0x4d4] sm:$0xf]
    %v347 = vld [vmem:[%s0 + $0x4d8] sm:$0xf]
    %v348 = vld [vmem:[%s0 + $0x4dc] sm:$0xf]
    %v349 = vld [vmem:[%s0 + $0x4e0] sm:$0xf]
    %v350 = vld [vmem:[%s0 + $0x4e4] sm:$0xf]
    %v351 = vld [vmem:[%s0 + $0x4e8] sm:$0xf]
    %v352 = vld [vmem:[%s0 + $0x4ec] sm:$0xf]
    %v353 = vld [vmem:[%s0 + $0x4f0] sm:$0xf]
    %v354 = vld [vmem:[%s0 + $0x4f4] sm:$0xf]
    %v355 = vld [vmem:[%s0 + $0x4f8] sm:$0xf]
    %v356 = vld [vmem:[%s0 + $0x4fc] sm:$0xf]
    %v357 = vld [vmem:[%s0 + $0x500] sm:$0xf]
    %v358 = vld [vmem:[%s0 + $0x504] sm:$0xf]
    %v359 = vld [vmem:[%s0 + $0x508] sm:$0xf]
    %v360 = vld [vmem:[%s0 + $0x50c] sm:$0xf]
    %v361 = vld [vmem:[%s0 + $0x510] sm:$0xf]
    %v362 = vld [vmem:[%s0 + $0x514] sm:$0xf]
    %v363 = vld [vmem:[%s0 + $0x518] sm:$0xf]
    %v364 = vld [vmem:[%s0 + $0x51c] sm:$0xf]
    %v365 = vld [vmem:[%s0 + $0x520] sm:$0xf]
    %v366 = vld [vmem:[%s0 + $0x524] sm:$0xf]
    %v367 = vld [vmem:[%s0 + $0x528] sm:$0xf]
    %v368 = vld [vmem:[%s0 + $0x52c] sm:$0xf]
    %v369 = vld [vmem:[%s0 + $0x530] sm:$0xf]
    %v370 = vld [vmem:[%s0 + $0x534] sm:$0xf]
    %v371 = vld [vmem:[%s0 + $0x538] sm:$0xf]
    %v372 = vld [vmem:[%s0 + $0x53c] sm:$0xf]
    %v373 = vld [vmem:[%s0 + $0x540] sm:$0xf]
    %v374 = vld [vmem:[%s0 + $0x544] sm:$0xf]
    %v375 = vld [vmem:[%s0 + $0x548] sm:$0xf]
    %v376 = vld [vmem:[%s0 + $0x54c] sm:$0xf]
    %v377 = vld [vmem:[%s0 + $0x550] sm:$0xf]
    %v378 = vld [vmem:[%s0 + $0x554] sm:$0xf]
    %v379 = vld [vmem:[%s0 + $0x558] sm:$0xf]
    %v380 = vld [vmem:[%s0 + $0x55c] sm:$0xf]
    %v381 = vld [vmem:[%s0 + $0x560] sm:$0xf]
    %v382 = vld [vmem:[%s0 + $0x564] sm:$0xf]
    %v383 = vld [vmem:[%s0 + $0x568] sm:$0xf]
    %v384 = vld [vmem:[%s0 + $0x56c] sm:$0xf]
    %v385 = vld [vmem:[%s0 + $0x570] sm:$0xf]
    %v386 = vld [vmem:[%s0 + $0x574] sm:$0xf]
    %v387 = vld [vmem:[%s0 + $0x578] sm:$0xf]
    %v388 = vld [vmem:[%s0 + $0x57c] sm:$0xf]
    %v389 = vld [vmem:[%s0 + $0x580] sm:$0xf]
    %v390 = vld [vmem:[%s0 + $0x584] sm:$0xf]
    %v391 = vld [vmem:[%s0 + $0x588] sm:$0xf]
    %v392 = vld [vmem:[%s0 + $0x58c] sm:$0xf]
    %v393 = vld [vmem:[%s0 + $0x590] sm:$0xf]
    %v394 = vld [vmem:[%s0 + $0x594] sm:$0xf]
    %v395 = vld [vmem:[%s0 + $0x598] sm:$0xf]
    %v396 = vld [vmem:[%s0 + $0x59c] sm:$0xf]
    %v397 = vld [vmem:[%s0 + $0x5a0] sm:$0xf]
    %v398 = vld [vmem:[%s0 + $0x5a4] sm:$0xf]
    %v399 = vld [vmem:[%s0 + $0x5a8] sm:$0xf]
    %v400 = vld [vmem:[%s0 + $0x5ac] sm:$0xf]
    %v401 = vld [vmem:[%s0 + $0x5b0] sm:$0xf]
    %v402 = vld [vmem:[%s0 + $0x5b4] sm:$0xf]
    %v403 = vld [vmem:[%s0 + $0x5b8] sm:$0xf]
    %v404 = vld [vmem:[%s0 + $0x5bc] sm:$0xf]
    %v405 = vld [vmem:[%s0 + $0x5c0] sm:$0xf]
    %v406 = vld [vmem:[%s0 + $0x5c4] sm:$0xf]
    %v407 = vld [vmem:[%s0 + $0x5c8] sm:$0xf]
    %v408 = vld [vmem:[%s0 + $0x5cc] sm:$0xf]
    %v409 = vld [vmem:[%s0 + $0x5d0] sm:$0xf]
    %v410 = vld [vmem:[%s0 + $0x5d4] sm:$0xf]
    %v411 = vld [vmem:[%s0 + $0x5d8] sm:$0xf]
    %v412 = vld [vmem:[%s0 + $0x5dc] sm:$0xf]
    %v413 = vld [vmem:[%s0 + $0x5e0] sm:$0xf]
    %v414 = vld [vmem:[%s0 + $0x5e4] sm:$0xf]
    %v415 = vld [vmem:[%s0 + $0x5e8] sm:$0xf]
    %v416 = vld [vmem:[%s0 + $0x5ec] sm:$0xf]
    %v417 = vld [vmem:[%s0 + $0x5f0] sm:$0xf]
    %v418 = vld [vmem:[%s0 + $0x5f4] sm:$0xf]
    %v419 = vld [vmem:[%s0 + $0x5f8] sm:$0xf]
    %v420 = vld [vmem:[%s0 + $0x5fc] sm:$0xf]
    %v421 = vld [vmem:[%s0 + $0x600] sm:$0xf]
    %v422 = vld [vmem:[%s0 + $0x604] sm:$0xf]
    %v423 = vld [vmem:[%s0 + $0x608] sm:$0xf]
    %v424 = vld [vmem:[%s0 + $0x60c] sm:$0xf]
    %v425 = vld [vmem:[%s0 + $0x610] sm:$0xf]
    %v426 = vld [vmem:[%s0 + $0x614] sm:$0xf]
    %v427 = vld [vmem:[%s0 + $0x618] sm:$0xf]
    %v428 = vld [vmem:[%s0 + $0x61c] sm:$0xf]
    %v429 = vld [vmem:[%s0 + $0x620] sm:$0xf]
    %v430 = vld [vmem:[%s0 + $0x624] sm:$0xf]
    %v431 = vld [vmem:[%s0 + $0x628] sm:$0xf]
    %v432 = vld [vmem:[%s0 + $0x62c] sm:$0xf]
    %v433 = vld [vmem:[%s0 + $0x630] sm:$0xf]
    %v434 = vld [vmem:[%s0 + $0x634] sm:$0xf]
    %v435 = vld [vmem:[%s0 + $0x638] sm:$0xf]
    %v436 = vld [vmem:[%s0 + $0x63c] sm:$0xf]
    %v437 = vld [vmem:[%s0 + $0x640] sm:$0xf]
    %v438 = vld [vmem:[%s0 + $0x644] sm:$0xf]
    %v439 = vld [vmem:[%s0 + $0x648] sm:$0xf]
    %v440 = vld [vmem:[%s0 + $0x64c] sm:$0xf]
    %v441 = vld [vmem:[%s0 + $0x650] sm:$0xf]
    %v442 = vld [vmem:[%s0 + $0x654] sm:$0xf]
    %v443 = vld [vmem:[%s0 + $0x658] sm:$0xf]
    %v444 = vld [vmem:[%s0 + $0x65c] sm:$0xf]
    %v445 = vld [vmem:[%s0 + $0x660] sm:$0xf]
    %v446 = vld [vmem:[%s0 + $0x664] sm:$0xf]
    %v447 = vld [vmem:[%s0 + $0x668] sm:$0xf]
    %v448 = vld [vmem:[%s0 + $0x66c] sm:$0xf]
    %v449 = vld [vmem:[%s0 + $0x670] sm:$0xf]
    %v450 = vld [vmem:[%s0 + $0x674] sm:$0xf]
    %v451 = vld [vmem:[%s0 + $0x678] sm:$0xf]
    %v452 = vld [vmem:[%s0 + $0x67c] sm:$0xf]
    %v453 = vld [vmem:[%s0 + $0x680] sm:$0xf]
    %v454 = vld [vmem:[%s0 + $0x684] sm:$0xf]
    %v455 = vld [vmem:[%s0 + $0x688] sm:$0xf]
    %v456 = vld [vmem:[%s0 + $0x68c] sm:$0xf]
    %v457 = vld [vmem:[%s0 + $0x690] sm:$0xf]
    %v458 = vld [vmem:[%s0 + $0x694] sm:$0xf]
    %v459 = vld [vmem:[%s0 + $0x698] sm:$0xf]
    %v460 = vld [vmem:[%s0 + $0x69c] sm:$0xf]
    %v461 = vld [vmem:[%s0 + $0x6a0] sm:$0xf]
    %v462 = vld [vmem:[%s0 + $0x6a4] sm:$0xf]
    %v463 = vld [vmem:[%s0 + $0x6a8] sm:$0xf]
    %v464 = vld [vmem:[%s0 + $0x6ac] sm:$0xf]
    %v465 = vld [vmem:[%s0 + $0x6b0] sm:$0xf]
    %v466 = vld [vmem:[%s0 + $0x6b4] sm:$0xf]
    %v467 = vld [vmem:[%s0 + $0x6b8] sm:$0xf]
    %v468 = vld [vmem:[%s0 + $0x6bc] sm:$0xf]
    %v469 = vld [vmem:[%s0 + $0x6c0] sm:$0xf]
    %v470 = vld [vmem:[%s0 + $0x6c4] sm:$0xf]
    %v471 = vld [vmem:[%s0 + $0x6c8] sm:$0xf]
    %v472 = vld [vmem:[%s0 + $0x6cc] sm:$0xf]
    %v473 = vld [vmem:[%s0 + $0x6d0] sm:$0xf]
    %v474 = vld [vmem:[%s0 + $0x6d4] sm:$0xf]
    %v475 = vld [vmem:[%s0 + $0x6d8] sm:$0xf]
    %v476 = vld [vmem:[%s0 + $0x6dc] sm:$0xf]
    %v477 = vld [vmem:[%s0 + $0x6e0] sm:$0xf]
    %v478 = vld [vmem:[%s0 + $0x6e4] sm:$0xf]
    %v479 = vld [vmem:[%s0 + $0x6e8] sm:$0xf]
    %v480 = vld [vmem:[%s0 + $0x6ec] sm:$0xf]
    %v481 = vld [vmem:[%s0 + $0x6f0] sm:$0xf]
    %v482 = vld [vmem:[%s0 + $0x6f4] sm:$0xf]
    %v483 = vld [vmem:[%s0 + $0x6f8] sm:$0xf]
    %v484 = vld [vmem:[%s0 + $0x6fc] sm:$0xf]
    %v485 = vld [vmem:[%s0 + $0x700] sm:$0xf]
    %v486 = vld [vmem:[%s0 + $0x704] sm:$0xf]
    %v487 = vld [vmem:[%s0 + $0x708] sm:$0xf]
    %v488 = vld [vmem:[%s0 + $0x70c] sm:$0xf]
    %v489 = vld [vmem:[%s0 + $0x710] sm:$0xf]
    %v490 = vld [vmem:[%s0 + $0x714] sm:$0xf]
    %v491 = vld [vmem:[%s0 + $0x718] sm:$0xf]
    %v492 = vld [vmem:[%s0 + $0x71c] sm:$0xf]
    %v493 = vld [vmem:[%s0 + $0x720] sm:$0xf]
    %v494 = vld [vmem:[%s0 + $0x724] sm:$0xf]
    %v495 = vld [vmem:[%s0 + $0x728] sm:$0xf]
    %v496 = vld [vmem:[%s0 + $0x72c] sm:$0xf]
    %v497 = vld [vmem:[%s0 + $0x730] sm:$0xf]
    %v498 = vld [vmem:[%s0 + $0x734] sm:$0xf]
    %v499 = vld [vmem:[%s0 + $0x738] sm:$0xf]
    %v500 = vld [vmem:[%s0 + $0x73c] sm:$0xf]
    %v501 = vld [vmem:[%s0 + $0x740] sm:$0xf]
    %v502 = vld [vmem:[%s0 + $0x744] sm:$0xf]
    %v503 = vld [vmem:[%s0 + $0x748] sm:$0xf]
    %v504 = vld [vmem:[%s0 + $0x74c] sm:$0xf]
    %v505 = vld [vmem:[%s0 + $0x750] sm:$0xf]
    %v506 = vld [vmem:[%s0 + $0x754] sm:$0xf]
    %v507 = vld [vmem:[%s0 + $0x758] sm:$0xf]
    %v508 = vld [vmem:[%s0 + $0x75c] sm:$0xf]
    %v509 = vld [vmem:[%s0 + $0x760] sm:$0xf]
    %v510 = vld [vmem:[%s0 + $0x764] sm:$0xf]
    %v511 = vld [vmem:[%s0 + $0x768] sm:$0xf]
    %v512 = vld [vmem:[%s0 + $0x76c] sm:$0xf]
    %v513 = vld [vmem:[%s0 + $0x770] sm:$0xf]
    %v514 = vld [vmem:[%s0 + $0x774] sm:$0xf]
    %v515 = vld [vmem:[%s0 + $0x778] sm:$0xf]
    %v516 = vld [vmem:[%s0 + $0x77c] sm:$0xf]
    %v517 = vld [vmem:[%s0 + $0x780] sm:$0xf]
    %v518 = vld [vmem:[%s0 + $0x784] sm:$0xf]
    %v519 = vld [vmem:[%s0 + $0x788] sm:$0xf]
    %v520 = vld [vmem:[%s0 + $0x78c] sm:$0xf]
    %v521 = vld [vmem:[%s0 + $0x790] sm:$0xf]
    %v522 = vld [vmem:[%s0 + $0x794] sm:$0xf]
    %v523 = vld [vmem:[%s0 + $0x798] sm:$0xf]
    %v524 = vld [vmem:[%s0 + $0x79c] sm:$0xf]
    %v525 = vld [vmem:[%s0 + $0x7a0] sm:$0xf]
    %v526 = vld [vmem:[%s0 + $0x7a4] sm:$0xf]
    %v527 = vld [vmem:[%s0 + $0x7a8] sm:$0xf]
    %v528 = vld [vmem:[%s0 + $0x7ac] sm:$0xf]
    %v529 = vld [vmem:[%s0 + $0x7b0] sm:$0xf]
    %v530 = vld [vmem:[%s0 + $0x7b4] sm:$0xf]
    %v531 = vld [vmem:[%s0 + $0x7b8] sm:$0xf]
    %v532 = vld [vmem:[%s0 + $0x7bc] sm:$0xf]
    %v533 = vld [vmem:[%s0 + $0x7c0] sm:$0xf]
    %v534 = vld [vmem:[%s0 + $0x7c4] sm:$0xf]
    %v535 = vld [vmem:[%s0 + $0x7c8] sm:$0xf]
    %v536 = vld [vmem:[%s0 + $0x7cc] sm:$0xf]
    %v537 = vld [vmem:[%s0 + $0x7d0] sm:$0xf]
    %v538 = vld [vmem:[%s0 + $0x7d4] sm:$0xf]
    %v539 = vld [vmem:[%s0 + $0x7d8] sm:$0xf]
    %v540 = vld [vmem:[%s0 + $0x7dc] sm:$0xf]
    %v541 = vld [vmem:[%s0 + $0x7e0] sm:$0xf]
    %v542 = vld [vmem:[%s0 + $0x7e4] sm:$0xf]
    %v543 = vld [vmem:[%s0 + $0x7e8] sm:$0xf]
    %v544 = vld [vmem:[%s0 + $0x7ec] sm:$0xf]
    %v545 = vld [vmem:[%s0 + $0x7f0] sm:$0xf]
    %v546 = vld [vmem:[%s0 + $0x7f4] sm:$0xf]
    %v547 = vld [vmem:[%s0 + $0x7f8] sm:$0xf]
    %v548 = vld [vmem:[%s0 + $0x7fc] sm:$0xf]
    %v549 = vld [vmem:[%s1] sm:$0xf]
    %v550 = vld [vmem:[%s1 + $0x4] sm:$0xf]
    %v551 = vld [vmem:[%s1 + $0x8] sm:$0xf]
    %v552 = vld [vmem:[%s1 + $0xc] sm:$0xf]
    %v553 = vld [vmem:[%s1 + $0x10] sm:$0xf]
    %v554 = vld [vmem:[%s1 + $0x14] sm:$0xf]
    %v555 = vld [vmem:[%s1 + $0x18] sm:$0xf]
    %v556 = vld [vmem:[%s1 + $0x1c] sm:$0xf]
    %v557 = vld [vmem:[%s2] sm:$0x1]
    %v559 = vlaneseq
    %v560 = vshrl.u32 %v559, 7
    %v561 = vsub.s32 0, %v560
    %v562 = vrot.slane %v557, %v561
    %v1076 = vunpack.c.l.b16 %v37
    %v1077 = vunpack.c.l.b16 %v38
    %v1078 = vunpack.c.l.b16 %v39
    %v1079 = vunpack.c.l.b16 %v40
    %v1080 = vunpack.c.l.b16 %v41
    %v1081 = vunpack.c.l.b16 %v42
    %v1082 = vunpack.c.l.b16 %v43
    %v1083 = vunpack.c.l.b16 %v44
    %v1084 = vunpack.c.l.b16 %v45
    %v1085 = vunpack.c.l.b16 %v46
    %v1086 = vunpack.c.l.b16 %v47
    %v1087 = vunpack.c.l.b16 %v48
    %v1088 = vunpack.c.l.b16 %v49
    %v1089 = vunpack.c.l.b16 %v50
    %v1090 = vunpack.c.l.b16 %v51
    %v1091 = vunpack.c.l.b16 %v52
    %v1092 = vunpack.c.l.b16 %v53
    %v1093 = vunpack.c.l.b16 %v54
    %v1094 = vunpack.c.l.b16 %v55
    %v1095 = vunpack.c.l.b16 %v56
    %v1096 = vunpack.c.l.b16 %v57
    %v1097 = vunpack.c.l.b16 %v58
    %v1098 = vunpack.c.l.b16 %v59
    %v1099 = vunpack.c.l.b16 %v60
    %v1100 = vunpack.c.l.b16 %v61
    %v1101 = vunpack.c.l.b16 %v62
    %v1102 = vunpack.c.l.b16 %v63
    %v1103 = vunpack.c.l.b16 %v64
    %v1104 = vunpack.c.l.b16 %v65
    %v1105 = vunpack.c.l.b16 %v66
    %v1106 = vunpack.c.l.b16 %v67
    %v1107 = vunpack.c.l.b16 %v68
    %v1108 = vunpack.c.l.b16 %v69
    %v1109 = vunpack.c.l.b16 %v70
    %v1110 = vunpack.c.l.b16 %v71
    %v1111 = vunpack.c.l.b16 %v72
    %v1112 = vunpack.c.l.b16 %v73
    %v1113 = vunpack.c.l.b16 %v74
    %v1114 = vunpack.c.l.b16 %v75
    %v1115 = vunpack.c.l.b16 %v76
    %v1116 = vunpack.c.l.b16 %v77
    %v1117 = vunpack.c.l.b16 %v78
    %v1118 = vunpack.c.l.b16 %v79
    %v1119 = vunpack.c.l.b16 %v80
    %v1120 = vunpack.c.l.b16 %v81
    %v1121 = vunpack.c.l.b16 %v82
    %v1122 = vunpack.c.l.b16 %v83
    %v1123 = vunpack.c.l.b16 %v84
    %v1124 = vunpack.c.l.b16 %v85
    %v1125 = vunpack.c.l.b16 %v86
    %v1126 = vunpack.c.l.b16 %v87
    %v1127 = vunpack.c.l.b16 %v88
    %v1128 = vunpack.c.l.b16 %v89
    %v1129 = vunpack.c.l.b16 %v90
    %v1130 = vunpack.c.l.b16 %v91
    %v1131 = vunpack.c.l.b16 %v92
    %v1132 = vunpack.c.l.b16 %v93
    %v1133 = vunpack.c.l.b16 %v94
    %v1134 = vunpack.c.l.b16 %v95
    %v1135 = vunpack.c.l.b16 %v96
    %v1136 = vunpack.c.l.b16 %v97
    %v1137 = vunpack.c.l.b16 %v98
    %v1138 = vunpack.c.l.b16 %v99
    %v1139 = vunpack.c.l.b16 %v100
    %v1140 = vunpack.c.l.b16 %v101
    %v1141 = vunpack.c.l.b16 %v102
    %v1142 = vunpack.c.l.b16 %v103
    %v1143 = vunpack.c.l.b16 %v104
    %v1144 = vunpack.c.l.b16 %v105
    %v1145 = vunpack.c.l.b16 %v106
    %v1146 = vunpack.c.l.b16 %v107
    %v1147 = vunpack.c.l.b16 %v108
    %v1148 = vunpack.c.l.b16 %v109
    %v1149 = vunpack.c.l.b16 %v110
    %v1150 = vunpack.c.l.b16 %v111
    %v1151 = vunpack.c.l.b16 %v112
    %v1152 = vunpack.c.l.b16 %v113
    %v1153 = vunpack.c.l.b16 %v114
    %v1154 = vunpack.c.l.b16 %v115
    %v1155 = vunpack.c.l.b16 %v116
    %v1156 = vunpack.c.l.b16 %v117
    %v1157 = vunpack.c.l.b16 %v118
    %v1158 = vunpack.c.l.b16 %v119
    %v1159 = vunpack.c.l.b16 %v120
    %v1160 = vunpack.c.l.b16 %v121
    %v1161 = vunpack.c.l.b16 %v122
    %v1162 = vunpack.c.l.b16 %v123
    %v1163 = vunpack.c.l.b16 %v124
    %v1164 = vunpack.c.l.b16 %v125
    %v1165 = vunpack.c.l.b16 %v126
    %v1166 = vunpack.c.l.b16 %v127
    %v1167 = vunpack.c.l.b16 %v128
    %v1168 = vunpack.c.l.b16 %v129
    %v1169 = vunpack.c.l.b16 %v130
    %v1170 = vunpack.c.l.b16 %v131
    %v1171 = vunpack.c.l.b16 %v132
    %v1172 = vunpack.c.l.b16 %v133
    %v1173 = vunpack.c.l.b16 %v134
    %v1174 = vunpack.c.l.b16 %v135
    %v1175 = vunpack.c.l.b16 %v136
    %v1176 = vunpack.c.l.b16 %v137
    %v1177 = vunpack.c.l.b16 %v138
    %v1178 = vunpack.c.l.b16 %v139
    %v1179 = vunpack.c.l.b16 %v140
    %v1180 = vunpack.c.l.b16 %v141
    %v1181 = vunpack.c.l.b16 %v142
    %v1182 = vunpack.c.l.b16 %v143
    %v1183 = vunpack.c.l.b16 %v144
    %v1184 = vunpack.c.l.b16 %v145
    %v1185 = vunpack.c.l.b16 %v146
    %v1186 = vunpack.c.l.b16 %v147
    %v1187 = vunpack.c.l.b16 %v148
    %v1188 = vunpack.c.l.b16 %v149
    %v1189 = vunpack.c.l.b16 %v150
    %v1190 = vunpack.c.l.b16 %v151
    %v1191 = vunpack.c.l.b16 %v152
    %v1192 = vunpack.c.l.b16 %v153
    %v1193 = vunpack.c.l.b16 %v154
    %v1194 = vunpack.c.l.b16 %v155
    %v1195 = vunpack.c.l.b16 %v156
    %v1196 = vunpack.c.l.b16 %v157
    %v1197 = vunpack.c.l.b16 %v158
    %v1198 = vunpack.c.l.b16 %v159
    %v1199 = vunpack.c.l.b16 %v160
    %v1200 = vunpack.c.l.b16 %v161
    %v1201 = vunpack.c.l.b16 %v162
    %v1202 = vunpack.c.l.b16 %v163
    %v1203 = vunpack.c.l.b16 %v164
    %v1204 = vunpack.c.l.b16 %v165
    %v1205 = vunpack.c.l.b16 %v166
    %v1206 = vunpack.c.l.b16 %v167
    %v1207 = vunpack.c.l.b16 %v168
    %v1208 = vunpack.c.l.b16 %v169
    %v1209 = vunpack.c.l.b16 %v170
    %v1210 = vunpack.c.l.b16 %v171
    %v1211 = vunpack.c.l.b16 %v172
    %v1212 = vunpack.c.l.b16 %v173
    %v1213 = vunpack.c.l.b16 %v174
    %v1214 = vunpack.c.l.b16 %v175
    %v1215 = vunpack.c.l.b16 %v176
    %v1216 = vunpack.c.l.b16 %v177
    %v1217 = vunpack.c.l.b16 %v178
    %v1218 = vunpack.c.l.b16 %v179
    %v1219 = vunpack.c.l.b16 %v180
    %v1220 = vunpack.c.l.b16 %v181
    %v1221 = vunpack.c.l.b16 %v182
    %v1222 = vunpack.c.l.b16 %v183
    %v1223 = vunpack.c.l.b16 %v184
    %v1224 = vunpack.c.l.b16 %v185
    %v1225 = vunpack.c.l.b16 %v186
    %v1226 = vunpack.c.l.b16 %v187
    %v1227 = vunpack.c.l.b16 %v188
    %v1228 = vunpack.c.l.b16 %v189
    %v1229 = vunpack.c.l.b16 %v190
    %v1230 = vunpack.c.l.b16 %v191
    %v1231 = vunpack.c.l.b16 %v192
    %v1232 = vunpack.c.l.b16 %v193
    %v1233 = vunpack.c.l.b16 %v194
    %v1234 = vunpack.c.l.b16 %v195
    %v1235 = vunpack.c.l.b16 %v196
    %v1236 = vunpack.c.l.b16 %v197
    %v1237 = vunpack.c.l.b16 %v198
    %v1238 = vunpack.c.l.b16 %v199
    %v1239 = vunpack.c.l.b16 %v200
    %v1240 = vunpack.c.l.b16 %v201
    %v1241 = vunpack.c.l.b16 %v202
    %v1242 = vunpack.c.l.b16 %v203
    %v1243 = vunpack.c.l.b16 %v204
    %v1244 = vunpack.c.l.b16 %v205
    %v1245 = vunpack.c.l.b16 %v206
    %v1246 = vunpack.c.l.b16 %v207
    %v1247 = vunpack.c.l.b16 %v208
    %v1248 = vunpack.c.l.b16 %v209
    %v1249 = vunpack.c.l.b16 %v210
    %v1250 = vunpack.c.l.b16 %v211
    %v1251 = vunpack.c.l.b16 %v212
    %v1252 = vunpack.c.l.b16 %v213
    %v1253 = vunpack.c.l.b16 %v214
    %v1254 = vunpack.c.l.b16 %v215
    %v1255 = vunpack.c.l.b16 %v216
    %v1256 = vunpack.c.l.b16 %v217
    %v1257 = vunpack.c.l.b16 %v218
    %v1258 = vunpack.c.l.b16 %v219
    %v1259 = vunpack.c.l.b16 %v220
    %v1260 = vunpack.c.l.b16 %v221
    %v1261 = vunpack.c.l.b16 %v222
    %v1262 = vunpack.c.l.b16 %v223
    %v1263 = vunpack.c.l.b16 %v224
    %v1264 = vunpack.c.l.b16 %v225
    %v1265 = vunpack.c.l.b16 %v226
    %v1266 = vunpack.c.l.b16 %v227
    %v1267 = vunpack.c.l.b16 %v228
    %v1268 = vunpack.c.l.b16 %v229
    %v1269 = vunpack.c.l.b16 %v230
    %v1270 = vunpack.c.l.b16 %v231
    %v1271 = vunpack.c.l.b16 %v232
    %v1272 = vunpack.c.l.b16 %v233
    %v1273 = vunpack.c.l.b16 %v234
    %v1274 = vunpack.c.l.b16 %v235
    %v1275 = vunpack.c.l.b16 %v236
    %v1276 = vunpack.c.l.b16 %v237
    %v1277 = vunpack.c.l.b16 %v238
    %v1278 = vunpack.c.l.b16 %v239
    %v1279 = vunpack.c.l.b16 %v240
    %v1280 = vunpack.c.l.b16 %v241
    %v1281 = vunpack.c.l.b16 %v242
    %v1282 = vunpack.c.l.b16 %v243
    %v1283 = vunpack.c.l.b16 %v244
    %v1284 = vunpack.c.l.b16 %v245
    %v1285 = vunpack.c.l.b16 %v246
    %v1286 = vunpack.c.l.b16 %v247
    %v1287 = vunpack.c.l.b16 %v248
    %v1288 = vunpack.c.l.b16 %v249
    %v1289 = vunpack.c.l.b16 %v250
    %v1290 = vunpack.c.l.b16 %v251
    %v1291 = vunpack.c.l.b16 %v252
    %v1292 = vunpack.c.l.b16 %v253
    %v1293 = vunpack.c.l.b16 %v254
    %v1294 = vunpack.c.l.b16 %v255
    %v1295 = vunpack.c.l.b16 %v256
    %v1296 = vunpack.c.l.b16 %v257
    %v1297 = vunpack.c.l.b16 %v258
    %v1298 = vunpack.c.l.b16 %v259
    %v1299 = vunpack.c.l.b16 %v260
    %v1300 = vunpack.c.l.b16 %v261
    %v1301 = vunpack.c.l.b16 %v262
    %v1302 = vunpack.c.l.b16 %v263
    %v1303 = vunpack.c.l.b16 %v264
    %v1304 = vunpack.c.l.b16 %v265
    %v1305 = vunpack.c.l.b16 %v266
    %v1306 = vunpack.c.l.b16 %v267
    %v1307 = vunpack.c.l.b16 %v268
    %v1308 = vunpack.c.l.b16 %v269
    %v1309 = vunpack.c.l.b16 %v270
    %v1310 = vunpack.c.l.b16 %v271
    %v1311 = vunpack.c.l.b16 %v272
    %v1312 = vunpack.c.l.b16 %v273
    %v1313 = vunpack.c.l.b16 %v274
    %v1314 = vunpack.c.l.b16 %v275
    %v1315 = vunpack.c.l.b16 %v276
    %v1316 = vunpack.c.l.b16 %v277
    %v1317 = vunpack.c.l.b16 %v278
    %v1318 = vunpack.c.l.b16 %v279
    %v1319 = vunpack.c.l.b16 %v280
    %v1320 = vunpack.c.l.b16 %v281
    %v1321 = vunpack.c.l.b16 %v282
    %v1322 = vunpack.c.l.b16 %v283
    %v1323 = vunpack.c.l.b16 %v284
    %v1324 = vunpack.c.l.b16 %v285
    %v1325 = vunpack.c.l.b16 %v286
    %v1326 = vunpack.c.l.b16 %v287
    %v1327 = vunpack.c.l.b16 %v288
    %v1328 = vunpack.c.l.b16 %v289
    %v1329 = vunpack.c.l.b16 %v290
    %v1330 = vunpack.c.l.b16 %v291
    %v1331 = vunpack.c.l.b16 %v292
    %v1332 = vunpack.c.l.b16 %v293
    %v1333 = vunpack.c.l.b16 %v294
    %v1334 = vunpack.c.l.b16 %v295
    %v1335 = vunpack.c.l.b16 %v296
    %v1336 = vunpack.c.l.b16 %v297
    %v1337 = vunpack.c.l.b16 %v298
    %v1338 = vunpack.c.l.b16 %v299
    %v1339 = vunpack.c.l.b16 %v300
    %v1340 = vunpack.c.l.b16 %v301
    %v1341 = vunpack.c.l.b16 %v302
    %v1342 = vunpack.c.l.b16 %v303
    %v1343 = vunpack.c.l.b16 %v304
    %v1344 = vunpack.c.l.b16 %v305
    %v1345 = vunpack.c.l.b16 %v306
    %v1346 = vunpack.c.l.b16 %v307
    %v1347 = vunpack.c.l.b16 %v308
    %v1348 = vunpack.c.l.b16 %v309
    %v1349 = vunpack.c.l.b16 %v310
    %v1350 = vunpack.c.l.b16 %v311
    %v1351 = vunpack.c.l.b16 %v312
    %v1352 = vunpack.c.l.b16 %v313
    %v1353 = vunpack.c.l.b16 %v314
    %v1354 = vunpack.c.l.b16 %v315
    %v1355 = vunpack.c.l.b16 %v316
    %v1356 = vunpack.c.l.b16 %v317
    %v1357 = vunpack.c.l.b16 %v318
    %v1358 = vunpack.c.l.b16 %v319
    %v1359 = vunpack.c.l.b16 %v320
    %v1360 = vunpack.c.l.b16 %v321
    %v1361 = vunpack.c.l.b16 %v322
    %v1362 = vunpack.c.l.b16 %v323
    %v1363 = vunpack.c.l.b16 %v324
    %v1364 = vunpack.c.l.b16 %v325
    %v1365 = vunpack.c.l.b16 %v326
    %v1366 = vunpack.c.l.b16 %v327
    %v1367 = vunpack.c.l.b16 %v328
    %v1368 = vunpack.c.l.b16 %v329
    %v1369 = vunpack.c.l.b16 %v330
    %v1370 = vunpack.c.l.b16 %v331
    %v1371 = vunpack.c.l.b16 %v332
    %v1372 = vunpack.c.l.b16 %v333
    %v1373 = vunpack.c.l.b16 %v334
    %v1374 = vunpack.c.l.b16 %v335
    %v1375 = vunpack.c.l.b16 %v336
    %v1376 = vunpack.c.l.b16 %v337
    %v1377 = vunpack.c.l.b16 %v338
    %v1378 = vunpack.c.l.b16 %v339
    %v1379 = vunpack.c.l.b16 %v340
    %v1380 = vunpack.c.l.b16 %v341
    %v1381 = vunpack.c.l.b16 %v342
    %v1382 = vunpack.c.l.b16 %v343
    %v1383 = vunpack.c.l.b16 %v344
    %v1384 = vunpack.c.l.b16 %v345
    %v1385 = vunpack.c.l.b16 %v346
    %v1386 = vunpack.c.l.b16 %v347
    %v1387 = vunpack.c.l.b16 %v348
    %v1388 = vunpack.c.l.b16 %v349
    %v1389 = vunpack.c.l.b16 %v350
    %v1390 = vunpack.c.l.b16 %v351
    %v1391 = vunpack.c.l.b16 %v352
    %v1392 = vunpack.c.l.b16 %v353
    %v1393 = vunpack.c.l.b16 %v354
    %v1394 = vunpack.c.l.b16 %v355
    %v1395 = vunpack.c.l.b16 %v356
    %v1396 = vunpack.c.l.b16 %v357
    %v1397 = vunpack.c.l.b16 %v358
    %v1398 = vunpack.c.l.b16 %v359
    %v1399 = vunpack.c.l.b16 %v360
    %v1400 = vunpack.c.l.b16 %v361
    %v1401 = vunpack.c.l.b16 %v362
    %v1402 = vunpack.c.l.b16 %v363
    %v1403 = vunpack.c.l.b16 %v364
    %v1404 = vunpack.c.l.b16 %v365
    %v1405 = vunpack.c.l.b16 %v366
    %v1406 = vunpack.c.l.b16 %v367
    %v1407 = vunpack.c.l.b16 %v368
    %v1408 = vunpack.c.l.b16 %v369
    %v1409 = vunpack.c.l.b16 %v370
    %v1410 = vunpack.c.l.b16 %v371
    %v1411 = vunpack.c.l.b16 %v372
    %v1412 = vunpack.c.l.b16 %v373
    %v1413 = vunpack.c.l.b16 %v374
    %v1414 = vunpack.c.l.b16 %v375
    %v1415 = vunpack.c.l.b16 %v376
    %v1416 = vunpack.c.l.b16 %v377
    %v1417 = vunpack.c.l.b16 %v378
    %v1418 = vunpack.c.l.b16 %v379
    %v1419 = vunpack.c.l.b16 %v380
    %v1420 = vunpack.c.l.b16 %v381
    %v1421 = vunpack.c.l.b16 %v382
    %v1422 = vunpack.c.l.b16 %v383
    %v1423 = vunpack.c.l.b16 %v384
    %v1424 = vunpack.c.l.b16 %v385
    %v1425 = vunpack.c.l.b16 %v386
    %v1426 = vunpack.c.l.b16 %v387
    %v1427 = vunpack.c.l.b16 %v388
    %v1428 = vunpack.c.l.b16 %v389
    %v1429 = vunpack.c.l.b16 %v390
    %v1430 = vunpack.c.l.b16 %v391
    %v1431 = vunpack.c.l.b16 %v392
    %v1432 = vunpack.c.l.b16 %v393
    %v1433 = vunpack.c.l.b16 %v394
    %v1434 = vunpack.c.l.b16 %v395
    %v1435 = vunpack.c.l.b16 %v396
    %v1436 = vunpack.c.l.b16 %v397
    %v1437 = vunpack.c.l.b16 %v398
    %v1438 = vunpack.c.l.b16 %v399
    %v1439 = vunpack.c.l.b16 %v400
    %v1440 = vunpack.c.l.b16 %v401
    %v1441 = vunpack.c.l.b16 %v402
    %v1442 = vunpack.c.l.b16 %v403
    %v1443 = vunpack.c.l.b16 %v404
    %v1444 = vunpack.c.l.b16 %v405
    %v1445 = vunpack.c.l.b16 %v406
    %v1446 = vunpack.c.l.b16 %v407
    %v1447 = vunpack.c.l.b16 %v408
    %v1448 = vunpack.c.l.b16 %v409
    %v1449 = vunpack.c.l.b16 %v410
    %v1450 = vunpack.c.l.b16 %v411
    %v1451 = vunpack.c.l.b16 %v412
    %v1452 = vunpack.c.l.b16 %v413
    %v1453 = vunpack.c.l.b16 %v414
    %v1454 = vunpack.c.l.b16 %v415
    %v1455 = vunpack.c.l.b16 %v416
    %v1456 = vunpack.c.l.b16 %v417
    %v1457 = vunpack.c.l.b16 %v418
    %v1458 = vunpack.c.l.b16 %v419
    %v1459 = vunpack.c.l.b16 %v420
    %v1460 = vunpack.c.l.b16 %v421
    %v1461 = vunpack.c.l.b16 %v422
    %v1462 = vunpack.c.l.b16 %v423
    %v1463 = vunpack.c.l.b16 %v424
    %v1464 = vunpack.c.l.b16 %v425
    %v1465 = vunpack.c.l.b16 %v426
    %v1466 = vunpack.c.l.b16 %v427
    %v1467 = vunpack.c.l.b16 %v428
    %v1468 = vunpack.c.l.b16 %v429
    %v1469 = vunpack.c.l.b16 %v430
    %v1470 = vunpack.c.l.b16 %v431
    %v1471 = vunpack.c.l.b16 %v432
    %v1472 = vunpack.c.l.b16 %v433
    %v1473 = vunpack.c.l.b16 %v434
    %v1474 = vunpack.c.l.b16 %v435
    %v1475 = vunpack.c.l.b16 %v436
    %v1476 = vunpack.c.l.b16 %v437
    %v1477 = vunpack.c.l.b16 %v438
    %v1478 = vunpack.c.l.b16 %v439
    %v1479 = vunpack.c.l.b16 %v440
    %v1480 = vunpack.c.l.b16 %v441
    %v1481 = vunpack.c.l.b16 %v442
    %v1482 = vunpack.c.l.b16 %v443
    %v1483 = vunpack.c.l.b16 %v444
    %v1484 = vunpack.c.l.b16 %v445
    %v1485 = vunpack.c.l.b16 %v446
    %v1486 = vunpack.c.l.b16 %v447
    %v1487 = vunpack.c.l.b16 %v448
    %v1488 = vunpack.c.l.b16 %v449
    %v1489 = vunpack.c.l.b16 %v450
    %v1490 = vunpack.c.l.b16 %v451
    %v1491 = vunpack.c.l.b16 %v452
    %v1492 = vunpack.c.l.b16 %v453
    %v1493 = vunpack.c.l.b16 %v454
    %v1494 = vunpack.c.l.b16 %v455
    %v1495 = vunpack.c.l.b16 %v456
    %v1496 = vunpack.c.l.b16 %v457
    %v1497 = vunpack.c.l.b16 %v458
    %v1498 = vunpack.c.l.b16 %v459
    %v1499 = vunpack.c.l.b16 %v460
    %v1500 = vunpack.c.l.b16 %v461
    %v1501 = vunpack.c.l.b16 %v462
    %v1502 = vunpack.c.l.b16 %v463
    %v1503 = vunpack.c.l.b16 %v464
    %v1504 = vunpack.c.l.b16 %v465
    %v1505 = vunpack.c.l.b16 %v466
    %v1506 = vunpack.c.l.b16 %v467
    %v1507 = vunpack.c.l.b16 %v468
    %v1508 = vunpack.c.l.b16 %v469
    %v1509 = vunpack.c.l.b16 %v470
    %v1510 = vunpack.c.l.b16 %v471
    %v1511 = vunpack.c.l.b16 %v472
    %v1512 = vunpack.c.l.b16 %v473
    %v1513 = vunpack.c.l.b16 %v474
    %v1514 = vunpack.c.l.b16 %v475
    %v1515 = vunpack.c.l.b16 %v476
    %v1516 = vunpack.c.l.b16 %v477
    %v1517 = vunpack.c.l.b16 %v478
    %v1518 = vunpack.c.l.b16 %v479
    %v1519 = vunpack.c.l.b16 %v480
    %v1520 = vunpack.c.l.b16 %v481
    %v1521 = vunpack.c.l.b16 %v482
    %v1522 = vunpack.c.l.b16 %v483
    %v1523 = vunpack.c.l.b16 %v484
    %v1524 = vunpack.c.l.b16 %v485
    %v1525 = vunpack.c.l.b16 %v486
    %v1526 = vunpack.c.l.b16 %v487
    %v1527 = vunpack.c.l.b16 %v488
    %v1528 = vunpack.c.l.b16 %v489
    %v1529 = vunpack.c.l.b16 %v490
    %v1530 = vunpack.c.l.b16 %v491
    %v1531 = vunpack.c.l.b16 %v492
    %v1532 = vunpack.c.l.b16 %v493
    %v1533 = vunpack.c.l.b16 %v494
    %v1534 = vunpack.c.l.b16 %v495
    %v1535 = vunpack.c.l.b16 %v496
    %v1536 = vunpack.c.l.b16 %v497
    %v1537 = vunpack.c.l.b16 %v498
    %v1538 = vunpack.c.l.b16 %v499
    %v1539 = vunpack.c.l.b16 %v500
    %v1540 = vunpack.c.l.b16 %v501
    %v1541 = vunpack.c.l.b16 %v502
    %v1542 = vunpack.c.l.b16 %v503
    %v1543 = vunpack.c.l.b16 %v504
    %v1544 = vunpack.c.l.b16 %v505
    %v1545 = vunpack.c.l.b16 %v506
    %v1546 = vunpack.c.l.b16 %v507
    %v1547 = vunpack.c.l.b16 %v508
    %v1548 = vunpack.c.l.b16 %v509
    %v1549 = vunpack.c.l.b16 %v510
    %v1550 = vunpack.c.l.b16 %v511
    %v1551 = vunpack.c.l.b16 %v512
    %v1552 = vunpack.c.l.b16 %v513
    %v1553 = vunpack.c.l.b16 %v514
    %v1554 = vunpack.c.l.b16 %v515
    %v1555 = vunpack.c.l.b16 %v516
    %v1556 = vunpack.c.l.b16 %v517
    %v1557 = vunpack.c.l.b16 %v518
    %v1558 = vunpack.c.l.b16 %v519
    %v1559 = vunpack.c.l.b16 %v520
    %v1560 = vunpack.c.l.b16 %v521
    %v1561 = vunpack.c.l.b16 %v522
    %v1562 = vunpack.c.l.b16 %v523
    %v1563 = vunpack.c.l.b16 %v524
    %v1564 = vunpack.c.l.b16 %v525
    %v1565 = vunpack.c.l.b16 %v526
    %v1566 = vunpack.c.l.b16 %v527
    %v1567 = vunpack.c.l.b16 %v528
    %v1568 = vunpack.c.l.b16 %v529
    %v1569 = vunpack.c.l.b16 %v530
    %v1570 = vunpack.c.l.b16 %v531
    %v1571 = vunpack.c.l.b16 %v532
    %v1572 = vunpack.c.l.b16 %v533
    %v1573 = vunpack.c.l.b16 %v534
    %v1574 = vunpack.c.l.b16 %v535
    %v1575 = vunpack.c.l.b16 %v536
    %v1576 = vunpack.c.l.b16 %v537
    %v1577 = vunpack.c.l.b16 %v538
    %v1578 = vunpack.c.l.b16 %v539
    %v1579 = vunpack.c.l.b16 %v540
    %v1580 = vunpack.c.l.b16 %v541
    %v1581 = vunpack.c.l.b16 %v542
    %v1582 = vunpack.c.l.b16 %v543
    %v1583 = vunpack.c.l.b16 %v544
    %v1584 = vunpack.c.l.b16 %v545
    %v1585 = vunpack.c.l.b16 %v546
    %v1586 = vunpack.c.l.b16 %v547
    %v1587 = vunpack.c.l.b16 %v548
    %v1588 = vpack.c.b16 %v1077, %v1076
    %v1589 = vpack.c.b16 %v1079, %v1078
    %v1590 = vpack.c.b16 %v1081, %v1080
    %v1591 = vpack.c.b16 %v1083, %v1082
    %v1592 = vpack.c.b16 %v1085, %v1084
    %v1593 = vpack.c.b16 %v1087, %v1086
    %v1594 = vpack.c.b16 %v1089, %v1088
    %v1595 = vpack.c.b16 %v1091, %v1090
    %v1596 = vpack.c.b16 %v1093, %v1092
    %v1597 = vpack.c.b16 %v1095, %v1094
    %v1598 = vpack.c.b16 %v1097, %v1096
    %v1599 = vpack.c.b16 %v1099, %v1098
    %v1600 = vpack.c.b16 %v1101, %v1100
    %v1601 = vpack.c.b16 %v1103, %v1102
    %v1602 = vpack.c.b16 %v1105, %v1104
    %v1603 = vpack.c.b16 %v1107, %v1106
    %v1604 = vpack.c.b16 %v1109, %v1108
    %v1605 = vpack.c.b16 %v1111, %v1110
    %v1606 = vpack.c.b16 %v1113, %v1112
    %v1607 = vpack.c.b16 %v1115, %v1114
    %v1608 = vpack.c.b16 %v1117, %v1116
    %v1609 = vpack.c.b16 %v1119, %v1118
    %v1610 = vpack.c.b16 %v1121, %v1120
    %v1611 = vpack.c.b16 %v1123, %v1122
    %v1612 = vpack.c.b16 %v1125, %v1124
    %v1613 = vpack.c.b16 %v1127, %v1126
    %v1614 = vpack.c.b16 %v1129, %v1128
    %v1615 = vpack.c.b16 %v1131, %v1130
    %v1616 = vpack.c.b16 %v1133, %v1132
    %v1617 = vpack.c.b16 %v1135, %v1134
    %v1618 = vpack.c.b16 %v1137, %v1136
    %v1619 = vpack.c.b16 %v1139, %v1138
    %v1620 = vpack.c.b16 %v1141, %v1140
    %v1621 = vpack.c.b16 %v1143, %v1142
    %v1622 = vpack.c.b16 %v1145, %v1144
    %v1623 = vpack.c.b16 %v1147, %v1146
    %v1624 = vpack.c.b16 %v1149, %v1148
    %v1625 = vpack.c.b16 %v1151, %v1150
    %v1626 = vpack.c.b16 %v1153, %v1152
    %v1627 = vpack.c.b16 %v1155, %v1154
    %v1628 = vpack.c.b16 %v1157, %v1156
    %v1629 = vpack.c.b16 %v1159, %v1158
    %v1630 = vpack.c.b16 %v1161, %v1160
    %v1631 = vpack.c.b16 %v1163, %v1162
    %v1632 = vpack.c.b16 %v1165, %v1164
    %v1633 = vpack.c.b16 %v1167, %v1166
    %v1634 = vpack.c.b16 %v1169, %v1168
    %v1635 = vpack.c.b16 %v1171, %v1170
    %v1636 = vpack.c.b16 %v1173, %v1172
    %v1637 = vpack.c.b16 %v1175, %v1174
    %v1638 = vpack.c.b16 %v1177, %v1176
    %v1639 = vpack.c.b16 %v1179, %v1178
    %v1640 = vpack.c.b16 %v1181, %v1180
    %v1641 = vpack.c.b16 %v1183, %v1182
    %v1642 = vpack.c.b16 %v1185, %v1184
    %v1643 = vpack.c.b16 %v1187, %v1186
    %v1644 = vpack.c.b16 %v1189, %v1188
    %v1645 = vpack.c.b16 %v1191, %v1190
    %v1646 = vpack.c.b16 %v1193, %v1192
    %v1647 = vpack.c.b16 %v1195, %v1194
    %v1648 = vpack.c.b16 %v1197, %v1196
    %v1649 = vpack.c.b16 %v1199, %v1198
    %v1650 = vpack.c.b16 %v1201, %v1200
    %v1651 = vpack.c.b16 %v1203, %v1202
    %v1652 = vpack.c.b16 %v1205, %v1204
    %v1653 = vpack.c.b16 %v1207, %v1206
    %v1654 = vpack.c.b16 %v1209, %v1208
    %v1655 = vpack.c.b16 %v1211, %v1210
    %v1656 = vpack.c.b16 %v1213, %v1212
    %v1657 = vpack.c.b16 %v1215, %v1214
    %v1658 = vpack.c.b16 %v1217, %v1216
    %v1659 = vpack.c.b16 %v1219, %v1218
    %v1660 = vpack.c.b16 %v1221, %v1220
    %v1661 = vpack.c.b16 %v1223, %v1222
    %v1662 = vpack.c.b16 %v1225, %v1224
    %v1663 = vpack.c.b16 %v1227, %v1226
    %v1664 = vpack.c.b16 %v1229, %v1228
    %v1665 = vpack.c.b16 %v1231, %v1230
    %v1666 = vpack.c.b16 %v1233, %v1232
    %v1667 = vpack.c.b16 %v1235, %v1234
    %v1668 = vpack.c.b16 %v1237, %v1236
    %v1669 = vpack.c.b16 %v1239, %v1238
    %v1670 = vpack.c.b16 %v1241, %v1240
    %v1671 = vpack.c.b16 %v1243, %v1242
    %v1672 = vpack.c.b16 %v1245, %v1244
    %v1673 = vpack.c.b16 %v1247, %v1246
    %v1674 = vpack.c.b16 %v1249, %v1248
    %v1675 = vpack.c.b16 %v1251, %v1250
    %v1676 = vpack.c.b16 %v1253, %v1252
    %v1677 = vpack.c.b16 %v1255, %v1254
    %v1678 = vpack.c.b16 %v1257, %v1256
    %v1679 = vpack.c.b16 %v1259, %v1258
    %v1680 = vpack.c.b16 %v1261, %v1260
    %v1681 = vpack.c.b16 %v1263, %v1262
    %v1682 = vpack.c.b16 %v1265, %v1264
    %v1683 = vpack.c.b16 %v1267, %v1266
    %v1684 = vpack.c.b16 %v1269, %v1268
    %v1685 = vpack.c.b16 %v1271, %v1270
    %v1686 = vpack.c.b16 %v1273, %v1272
    %v1687 = vpack.c.b16 %v1275, %v1274
    %v1688 = vpack.c.b16 %v1277, %v1276
    %v1689 = vpack.c.b16 %v1279, %v1278
    %v1690 = vpack.c.b16 %v1281, %v1280
    %v1691 = vpack.c.b16 %v1283, %v1282
    %v1692 = vpack.c.b16 %v1285, %v1284
    %v1693 = vpack.c.b16 %v1287, %v1286
    %v1694 = vpack.c.b16 %v1289, %v1288
    %v1695 = vpack.c.b16 %v1291, %v1290
    %v1696 = vpack.c.b16 %v1293, %v1292
    %v1697 = vpack.c.b16 %v1295, %v1294
    %v1698 = vpack.c.b16 %v1297, %v1296
    %v1699 = vpack.c.b16 %v1299, %v1298
    %v1700 = vpack.c.b16 %v1301, %v1300
    %v1701 = vpack.c.b16 %v1303, %v1302
    %v1702 = vpack.c.b16 %v1305, %v1304
    %v1703 = vpack.c.b16 %v1307, %v1306
    %v1704 = vpack.c.b16 %v1309, %v1308
    %v1705 = vpack.c.b16 %v1311, %v1310
    %v1706 = vpack.c.b16 %v1313, %v1312
    %v1707 = vpack.c.b16 %v1315, %v1314
    %v1708 = vpack.c.b16 %v1317, %v1316
    %v1709 = vpack.c.b16 %v1319, %v1318
    %v1710 = vpack.c.b16 %v1321, %v1320
    %v1711 = vpack.c.b16 %v1323, %v1322
    %v1712 = vpack.c.b16 %v1325, %v1324
    %v1713 = vpack.c.b16 %v1327, %v1326
    %v1714 = vpack.c.b16 %v1329, %v1328
    %v1715 = vpack.c.b16 %v1331, %v1330
    %v1716 = vpack.c.b16 %v1333, %v1332
    %v1717 = vpack.c.b16 %v1335, %v1334
    %v1718 = vpack.c.b16 %v1337, %v1336
    %v1719 = vpack.c.b16 %v1339, %v1338
    %v1720 = vpack.c.b16 %v1341, %v1340
    %v1721 = vpack.c.b16 %v1343, %v1342
    %v1722 = vpack.c.b16 %v1345, %v1344
    %v1723 = vpack.c.b16 %v1347, %v1346
    %v1724 = vpack.c.b16 %v1349, %v1348
    %v1725 = vpack.c.b16 %v1351, %v1350
    %v1726 = vpack.c.b16 %v1353, %v1352
    %v1727 = vpack.c.b16 %v1355, %v1354
    %v1728 = vpack.c.b16 %v1357, %v1356
    %v1729 = vpack.c.b16 %v1359, %v1358
    %v1730 = vpack.c.b16 %v1361, %v1360
    %v1731 = vpack.c.b16 %v1363, %v1362
    %v1732 = vpack.c.b16 %v1365, %v1364
    %v1733 = vpack.c.b16 %v1367, %v1366
    %v1734 = vpack.c.b16 %v1369, %v1368
    %v1735 = vpack.c.b16 %v1371, %v1370
    %v1736 = vpack.c.b16 %v1373, %v1372
    %v1737 = vpack.c.b16 %v1375, %v1374
    %v1738 = vpack.c.b16 %v1377, %v1376
    %v1739 = vpack.c.b16 %v1379, %v1378
    %v1740 = vpack.c.b16 %v1381, %v1380
    %v1741 = vpack.c.b16 %v1383, %v1382
    %v1742 = vpack.c.b16 %v1385, %v1384
    %v1743 = vpack.c.b16 %v1387, %v1386
    %v1744 = vpack.c.b16 %v1389, %v1388
    %v1745 = vpack.c.b16 %v1391, %v1390
    %v1746 = vpack.c.b16 %v1393, %v1392
    %v1747 = vpack.c.b16 %v1395, %v1394
    %v1748 = vpack.c.b16 %v1397, %v1396
    %v1749 = vpack.c.b16 %v1399, %v1398
    %v1750 = vpack.c.b16 %v1401, %v1400
    %v1751 = vpack.c.b16 %v1403, %v1402
    %v1752 = vpack.c.b16 %v1405, %v1404
    %v1753 = vpack.c.b16 %v1407, %v1406
    %v1754 = vpack.c.b16 %v1409, %v1408
    %v1755 = vpack.c.b16 %v1411, %v1410
    %v1756 = vpack.c.b16 %v1413, %v1412
    %v1757 = vpack.c.b16 %v1415, %v1414
    %v1758 = vpack.c.b16 %v1417, %v1416
    %v1759 = vpack.c.b16 %v1419, %v1418
    %v1760 = vpack.c.b16 %v1421, %v1420
    %v1761 = vpack.c.b16 %v1423, %v1422
    %v1762 = vpack.c.b16 %v1425, %v1424
    %v1763 = vpack.c.b16 %v1427, %v1426
    %v1764 = vpack.c.b16 %v1429, %v1428
    %v1765 = vpack.c.b16 %v1431, %v1430
    %v1766 = vpack.c.b16 %v1433, %v1432
    %v1767 = vpack.c.b16 %v1435, %v1434
    %v1768 = vpack.c.b16 %v1437, %v1436
    %v1769 = vpack.c.b16 %v1439, %v1438
    %v1770 = vpack.c.b16 %v1441, %v1440
    %v1771 = vpack.c.b16 %v1443, %v1442
    %v1772 = vpack.c.b16 %v1445, %v1444
    %v1773 = vpack.c.b16 %v1447, %v1446
    %v1774 = vpack.c.b16 %v1449, %v1448
    %v1775 = vpack.c.b16 %v1451, %v1450
    %v1776 = vpack.c.b16 %v1453, %v1452
    %v1777 = vpack.c.b16 %v1455, %v1454
    %v1778 = vpack.c.b16 %v1457, %v1456
    %v1779 = vpack.c.b16 %v1459, %v1458
    %v1780 = vpack.c.b16 %v1461, %v1460
    %v1781 = vpack.c.b16 %v1463, %v1462
    %v1782 = vpack.c.b16 %v1465, %v1464
    %v1783 = vpack.c.b16 %v1467, %v1466
    %v1784 = vpack.c.b16 %v1469, %v1468
    %v1785 = vpack.c.b16 %v1471, %v1470
    %v1786 = vpack.c.b16 %v1473, %v1472
    %v1787 = vpack.c.b16 %v1475, %v1474
    %v1788 = vpack.c.b16 %v1477, %v1476
    %v1789 = vpack.c.b16 %v1479, %v1478
    %v1790 = vpack.c.b16 %v1481, %v1480
    %v1791 = vpack.c.b16 %v1483, %v1482
    %v1792 = vpack.c.b16 %v1485, %v1484
    %v1793 = vpack.c.b16 %v1487, %v1486
    %v1794 = vpack.c.b16 %v1489, %v1488
    %v1795 = vpack.c.b16 %v1491, %v1490
    %v1796 = vpack.c.b16 %v1493, %v1492
    %v1797 = vpack.c.b16 %v1495, %v1494
    %v1798 = vpack.c.b16 %v1497, %v1496
    %v1799 = vpack.c.b16 %v1499, %v1498
    %v1800 = vpack.c.b16 %v1501, %v1500
    %v1801 = vpack.c.b16 %v1503, %v1502
    %v1802 = vpack.c.b16 %v1505, %v1504
    %v1803 = vpack.c.b16 %v1507, %v1506
    %v1804 = vpack.c.b16 %v1509, %v1508
    %v1805 = vpack.c.b16 %v1511, %v1510
    %v1806 = vpack.c.b16 %v1513, %v1512
    %v1807 = vpack.c.b16 %v1515, %v1514
    %v1808 = vpack.c.b16 %v1517, %v1516
    %v1809 = vpack.c.b16 %v1519, %v1518
    %v1810 = vpack.c.b16 %v1521, %v1520
    %v1811 = vpack.c.b16 %v1523, %v1522
    %v1812 = vpack.c.b16 %v1525, %v1524
    %v1813 = vpack.c.b16 %v1527, %v1526
    %v1814 = vpack.c.b16 %v1529, %v1528
    %v1815 = vpack.c.b16 %v1531, %v1530
    %v1816 = vpack.c.b16 %v1533, %v1532
    %v1817 = vpack.c.b16 %v1535, %v1534
    %v1818 = vpack.c.b16 %v1537, %v1536
    %v1819 = vpack.c.b16 %v1539, %v1538
    %v1820 = vpack.c.b16 %v1541, %v1540
    %v1821 = vpack.c.b16 %v1543, %v1542
    %v1822 = vpack.c.b16 %v1545, %v1544
    %v1823 = vpack.c.b16 %v1547, %v1546
    %v1824 = vpack.c.b16 %v1549, %v1548
    %v1825 = vpack.c.b16 %v1551, %v1550
    %v1826 = vpack.c.b16 %v1553, %v1552
    %v1827 = vpack.c.b16 %v1555, %v1554
    %v1828 = vpack.c.b16 %v1557, %v1556
    %v1829 = vpack.c.b16 %v1559, %v1558
    %v1830 = vpack.c.b16 %v1561, %v1560
    %v1831 = vpack.c.b16 %v1563, %v1562
    %v1832 = vpack.c.b16 %v1565, %v1564
    %v1833 = vpack.c.b16 %v1567, %v1566
    %v1834 = vpack.c.b16 %v1569, %v1568
    %v1835 = vpack.c.b16 %v1571, %v1570
    %v1836 = vpack.c.b16 %v1573, %v1572
    %v1837 = vpack.c.b16 %v1575, %v1574
    %v1838 = vpack.c.b16 %v1577, %v1576
    %v1839 = vpack.c.b16 %v1579, %v1578
    %v1840 = vpack.c.b16 %v1581, %v1580
    %v1841 = vpack.c.b16 %v1583, %v1582
    %v1842 = vpack.c.b16 %v1585, %v1584
    %v1843 = vpack.c.b16 %v1587, %v1586
    %v1852 = vunpack.c.l.b16 %v549
    %v1853 = vunpack.c.l.b16 %v550
    %v1854 = vunpack.c.l.b16 %v551
    %v1855 = vunpack.c.l.b16 %v552
    %v1856 = vunpack.c.l.b16 %v553
    %v1857 = vunpack.c.l.b16 %v554
    %v1858 = vunpack.c.l.b16 %v555
    %v1859 = vunpack.c.l.b16 %v556
    %v1860 = vpack.c.b16 %v1853, %v1852
    %v1861 = vpack.c.b16 %v1855, %v1854
    %v1862 = vpack.c.b16 %v1857, %v1856
    %v1863 = vpack.c.b16 %v1859, %v1858
    %vm1868 = vcmask 523264
    %v1870 = vsel %vm1868, %v1588, 0
    %v1873 = vsel %vm1868, %v1589, 0
    %v1876 = vsel %vm1868, %v1590, 0
    %v1879 = vsel %vm1868, %v1591, 0
    %v1882 = vsel %vm1868, %v1592, 0
    %v1885 = vsel %vm1868, %v1593, 0
    %v1888 = vsel %vm1868, %v1594, 0
    %v1891 = vsel %vm1868, %v1595, 0
    %v1894 = vsel %vm1868, %v1596, 0
    %v1897 = vsel %vm1868, %v1597, 0
    %v1900 = vsel %vm1868, %v1598, 0
    %v1903 = vsel %vm1868, %v1599, 0
    %v1906 = vsel %vm1868, %v1600, 0
    %v1909 = vsel %vm1868, %v1601, 0
    %v1912 = vsel %vm1868, %v1602, 0
    %v1915 = vsel %vm1868, %v1603, 0
    %v1918 = vsel %vm1868, %v1604, 0
    %v1921 = vsel %vm1868, %v1605, 0
    %v1924 = vsel %vm1868, %v1606, 0
    %v1927 = vsel %vm1868, %v1607, 0
    %v1930 = vsel %vm1868, %v1608, 0
    %v1933 = vsel %vm1868, %v1609, 0
    %v1936 = vsel %vm1868, %v1610, 0
    %v1939 = vsel %vm1868, %v1611, 0
    %v1942 = vsel %vm1868, %v1612, 0
    %v1945 = vsel %vm1868, %v1613, 0
    %v1948 = vsel %vm1868, %v1614, 0
    %v1951 = vsel %vm1868, %v1615, 0
    %v1954 = vsel %vm1868, %v1616, 0
    %v1957 = vsel %vm1868, %v1617, 0
    %v1960 = vsel %vm1868, %v1618, 0
    %v1963 = vsel %vm1868, %v1619, 0
    %v1966 = vsel %vm1868, %v1620, 0
    %v1969 = vsel %vm1868, %v1621, 0
    %v1972 = vsel %vm1868, %v1622, 0
    %v1975 = vsel %vm1868, %v1623, 0
    %v1978 = vsel %vm1868, %v1624, 0
    %v1981 = vsel %vm1868, %v1625, 0
    %v1984 = vsel %vm1868, %v1626, 0
    %v1987 = vsel %vm1868, %v1627, 0
    %v1990 = vsel %vm1868, %v1628, 0
    %v1993 = vsel %vm1868, %v1629, 0
    %v1996 = vsel %vm1868, %v1630, 0
    %v1999 = vsel %vm1868, %v1631, 0
    %v2002 = vsel %vm1868, %v1632, 0
    %v2005 = vsel %vm1868, %v1633, 0
    %v2008 = vsel %vm1868, %v1634, 0
    %v2011 = vsel %vm1868, %v1635, 0
    %v2014 = vsel %vm1868, %v1636, 0
    %v2017 = vsel %vm1868, %v1637, 0
    %v2020 = vsel %vm1868, %v1638, 0
    %v2023 = vsel %vm1868, %v1639, 0
    %v2026 = vsel %vm1868, %v1640, 0
    %v2029 = vsel %vm1868, %v1641, 0
    %v2032 = vsel %vm1868, %v1642, 0
    %v2035 = vsel %vm1868, %v1643, 0
    %v2038 = vsel %vm1868, %v1644, 0
    %v2041 = vsel %vm1868, %v1645, 0
    %v2044 = vsel %vm1868, %v1646, 0
    %v2047 = vsel %vm1868, %v1647, 0
    %v2050 = vsel %vm1868, %v1648, 0
    %v2053 = vsel %vm1868, %v1649, 0
    %v2056 = vsel %vm1868, %v1650, 0
    %v2059 = vsel %vm1868, %v1651, 0
    %v2062 = vsel %vm1868, %v1652, 0
    %v2065 = vsel %vm1868, %v1653, 0
    %v2068 = vsel %vm1868, %v1654, 0
    %v2071 = vsel %vm1868, %v1655, 0
    %v2074 = vsel %vm1868, %v1656, 0
    %v2077 = vsel %vm1868, %v1657, 0
    %v2080 = vsel %vm1868, %v1658, 0
    %v2083 = vsel %vm1868, %v1659, 0
    %v2086 = vsel %vm1868, %v1660, 0
    %v2089 = vsel %vm1868, %v1661, 0
    %v2092 = vsel %vm1868, %v1662, 0
    %v2095 = vsel %vm1868, %v1663, 0
    %v2098 = vsel %vm1868, %v1664, 0
    %v2101 = vsel %vm1868, %v1665, 0
    %v2104 = vsel %vm1868, %v1666, 0
    %v2107 = vsel %vm1868, %v1667, 0
    %v2110 = vsel %vm1868, %v1668, 0
    %v2113 = vsel %vm1868, %v1669, 0
    %v2116 = vsel %vm1868, %v1670, 0
    %v2119 = vsel %vm1868, %v1671, 0
    %v2122 = vsel %vm1868, %v1672, 0
    %v2125 = vsel %vm1868, %v1673, 0
    %v2128 = vsel %vm1868, %v1674, 0
    %v2131 = vsel %vm1868, %v1675, 0
    %v2134 = vsel %vm1868, %v1676, 0
    %v2137 = vsel %vm1868, %v1677, 0
    %v2140 = vsel %vm1868, %v1678, 0
    %v2143 = vsel %vm1868, %v1679, 0
    %v2146 = vsel %vm1868, %v1680, 0
    %v2149 = vsel %vm1868, %v1681, 0
    %v2152 = vsel %vm1868, %v1682, 0
    %v2155 = vsel %vm1868, %v1683, 0
    %v2158 = vsel %vm1868, %v1684, 0
    %v2161 = vsel %vm1868, %v1685, 0
    %v2164 = vsel %vm1868, %v1686, 0
    %v2167 = vsel %vm1868, %v1687, 0
    %v2170 = vsel %vm1868, %v1688, 0
    %v2173 = vsel %vm1868, %v1689, 0
    %v2176 = vsel %vm1868, %v1690, 0
    %v2179 = vsel %vm1868, %v1691, 0
    %v2182 = vsel %vm1868, %v1692, 0
    %v2185 = vsel %vm1868, %v1693, 0
    %v2188 = vsel %vm1868, %v1694, 0
    %v2191 = vsel %vm1868, %v1695, 0
    %v2194 = vsel %vm1868, %v1696, 0
    %v2197 = vsel %vm1868, %v1697, 0
    %v2200 = vsel %vm1868, %v1698, 0
    %v2203 = vsel %vm1868, %v1699, 0
    %v2206 = vsel %vm1868, %v1700, 0
    %v2209 = vsel %vm1868, %v1701, 0
    %v2212 = vsel %vm1868, %v1702, 0
    %v2215 = vsel %vm1868, %v1703, 0
    %v2218 = vsel %vm1868, %v1704, 0
    %v2221 = vsel %vm1868, %v1705, 0
    %v2224 = vsel %vm1868, %v1706, 0
    %v2227 = vsel %vm1868, %v1707, 0
    %v2230 = vsel %vm1868, %v1708, 0
    %v2233 = vsel %vm1868, %v1709, 0
    %v2236 = vsel %vm1868, %v1710, 0
    %v2239 = vsel %vm1868, %v1711, 0
    %v2242 = vsel %vm1868, %v1712, 0
    %v2245 = vsel %vm1868, %v1713, 0
    %v2248 = vsel %vm1868, %v1714, 0
    %v2251 = vsel %vm1868, %v1715, 0
    %v2254 = vsel %vm1868, %v1716, 0
    %v2257 = vsel %vm1868, %v1717, 0
    %v2260 = vsel %vm1868, %v1718, 0
    %v2263 = vsel %vm1868, %v1719, 0
    %v2266 = vsel %vm1868, %v1720, 0
    %v2269 = vsel %vm1868, %v1721, 0
    %v2272 = vsel %vm1868, %v1722, 0
    %v2275 = vsel %vm1868, %v1723, 0
    %v2278 = vsel %vm1868, %v1724, 0
    %v2281 = vsel %vm1868, %v1725, 0
    %v2284 = vsel %vm1868, %v1726, 0
    %v2287 = vsel %vm1868, %v1727, 0
    %v2290 = vsel %vm1868, %v1728, 0
    %v2293 = vsel %vm1868, %v1729, 0
    %v2296 = vsel %vm1868, %v1730, 0
    %v2299 = vsel %vm1868, %v1731, 0
    %v2302 = vsel %vm1868, %v1732, 0
    %v2305 = vsel %vm1868, %v1733, 0
    %v2308 = vsel %vm1868, %v1734, 0
    %v2311 = vsel %vm1868, %v1735, 0
    %v2314 = vsel %vm1868, %v1736, 0
    %v2317 = vsel %vm1868, %v1737, 0
    %v2320 = vsel %vm1868, %v1738, 0
    %v2323 = vsel %vm1868, %v1739, 0
    %v2326 = vsel %vm1868, %v1740, 0
    %v2329 = vsel %vm1868, %v1741, 0
    %v2332 = vsel %vm1868, %v1742, 0
    %v2335 = vsel %vm1868, %v1743, 0
    %v2338 = vsel %vm1868, %v1744, 0
    %v2341 = vsel %vm1868, %v1745, 0
    %v2344 = vsel %vm1868, %v1746, 0
    %v2347 = vsel %vm1868, %v1747, 0
    %v2350 = vsel %vm1868, %v1748, 0
    %v2353 = vsel %vm1868, %v1749, 0
    %v2356 = vsel %vm1868, %v1750, 0
    %v2359 = vsel %vm1868, %v1751, 0
    %v2362 = vsel %vm1868, %v1752, 0
    %v2365 = vsel %vm1868, %v1753, 0
    %v2368 = vsel %vm1868, %v1754, 0
    %v2371 = vsel %vm1868, %v1755, 0
    %v2374 = vsel %vm1868, %v1756, 0
    %v2377 = vsel %vm1868, %v1757, 0
    %v2380 = vsel %vm1868, %v1758, 0
    %v2383 = vsel %vm1868, %v1759, 0
    %v2386 = vsel %vm1868, %v1760, 0
    %v2389 = vsel %vm1868, %v1761, 0
    %v2392 = vsel %vm1868, %v1762, 0
    %v2395 = vsel %vm1868, %v1763, 0
    %v2398 = vsel %vm1868, %v1764, 0
    %v2401 = vsel %vm1868, %v1765, 0
    %v2404 = vsel %vm1868, %v1766, 0
    %v2407 = vsel %vm1868, %v1767, 0
    %v2410 = vsel %vm1868, %v1768, 0
    %v2413 = vsel %vm1868, %v1769, 0
    %v2416 = vsel %vm1868, %v1770, 0
    %v2419 = vsel %vm1868, %v1771, 0
    %v2422 = vsel %vm1868, %v1772, 0
    %v2425 = vsel %vm1868, %v1773, 0
    %v2428 = vsel %vm1868, %v1774, 0
    %v2431 = vsel %vm1868, %v1775, 0
    %v2434 = vsel %vm1868, %v1776, 0
    %v2437 = vsel %vm1868, %v1777, 0
    %v2440 = vsel %vm1868, %v1778, 0
    %v2443 = vsel %vm1868, %v1779, 0
    %v2446 = vsel %vm1868, %v1780, 0
    %v2449 = vsel %vm1868, %v1781, 0
    %v2452 = vsel %vm1868, %v1782, 0
    %v2455 = vsel %vm1868, %v1783, 0
    %v2458 = vsel %vm1868, %v1784, 0
    %v2461 = vsel %vm1868, %v1785, 0
    %v2464 = vsel %vm1868, %v1786, 0
    %v2467 = vsel %vm1868, %v1787, 0
    %v2470 = vsel %vm1868, %v1788, 0
    %v2473 = vsel %vm1868, %v1789, 0
    %v2476 = vsel %vm1868, %v1790, 0
    %v2479 = vsel %vm1868, %v1791, 0
    %v2482 = vsel %vm1868, %v1792, 0
    %v2485 = vsel %vm1868, %v1793, 0
    %v2488 = vsel %vm1868, %v1794, 0
    %v2491 = vsel %vm1868, %v1795, 0
    %v2494 = vsel %vm1868, %v1796, 0
    %v2497 = vsel %vm1868, %v1797, 0
    %v2500 = vsel %vm1868, %v1798, 0
    %v2503 = vsel %vm1868, %v1799, 0
    %v2506 = vsel %vm1868, %v1800, 0
    %v2509 = vsel %vm1868, %v1801, 0
    %v2512 = vsel %vm1868, %v1802, 0
    %v2515 = vsel %vm1868, %v1803, 0
    %v2518 = vsel %vm1868, %v1804, 0
    %v2521 = vsel %vm1868, %v1805, 0
    %v2524 = vsel %vm1868, %v1806, 0
    %v2527 = vsel %vm1868, %v1807, 0
    %v2530 = vsel %vm1868, %v1808, 0
    %v2533 = vsel %vm1868, %v1809, 0
    %v2536 = vsel %vm1868, %v1810, 0
    %v2539 = vsel %vm1868, %v1811, 0
    %v2542 = vsel %vm1868, %v1812, 0
    %v2545 = vsel %vm1868, %v1813, 0
    %v2548 = vsel %vm1868, %v1814, 0
    %v2551 = vsel %vm1868, %v1815, 0
    %v2554 = vsel %vm1868, %v1816, 0
    %v2557 = vsel %vm1868, %v1817, 0
    %v2560 = vsel %vm1868, %v1818, 0
    %v2563 = vsel %vm1868, %v1819, 0
    %v2566 = vsel %vm1868, %v1820, 0
    %v2569 = vsel %vm1868, %v1821, 0
    %v2572 = vsel %vm1868, %v1822, 0
    %v2575 = vsel %vm1868, %v1823, 0
    %v2578 = vsel %vm1868, %v1824, 0
    %v2581 = vsel %vm1868, %v1825, 0
    %v2584 = vsel %vm1868, %v1826, 0
    %v2587 = vsel %vm1868, %v1827, 0
    %v2590 = vsel %vm1868, %v1828, 0
    %v2593 = vsel %vm1868, %v1829, 0
    %v2596 = vsel %vm1868, %v1830, 0
    %v2599 = vsel %vm1868, %v1831, 0
    %v2602 = vsel %vm1868, %v1832, 0
    %v2605 = vsel %vm1868, %v1833, 0
    %v2608 = vsel %vm1868, %v1834, 0
    %v2611 = vsel %vm1868, %v1835, 0
    %v2614 = vsel %vm1868, %v1836, 0
    %v2617 = vsel %vm1868, %v1837, 0
    %v2620 = vsel %vm1868, %v1838, 0
    %v2623 = vsel %vm1868, %v1839, 0
    %v2626 = vsel %vm1868, %v1840, 0
    %v2629 = vsel %vm1868, %v1841, 0
    %v2632 = vsel %vm1868, %v1842, 0
    %v2635 = vsel %vm1868, %v1843, 0
    %2637 = vmatprep.subr.bf16.mxu0 0
    %2638 = vmatpush1.bf16.msra.mxu0 0
    %2639 = vmatprep.subr.bf16.mxu0 0
    %2640 = vmatpush1.bf16.msra.mxu0 0
    %2641 = vmatprep.subr.bf16.mxu0 0
    %2642 = vmatpush1.bf16.msra.mxu0 0
    %2643 = vmatprep.subr.bf16.mxu0 0
    %2644 = vmatpush1.bf16.msra.mxu0 0
    %2645 = vmatprep.subr.bf16.mxu0 0
    %2646 = vmatpush1.bf16.msra.mxu0 %v1863
    %2647 = vmatprep.subr.bf16.mxu0 0
    %2648 = vmatpush1.bf16.msra.mxu0 %v1862
    %2649 = vmatprep.subr.bf16.mxu0 0
    %2650 = vmatpush1.bf16.msra.mxu0 %v1861
    %2651 = vmatprep.subr.bf16.mxu0 0
    %2652 = vmatpush1.bf16.msra.mxu0 %v1860
    %2653 = vmatprep.subr.bf16.mxu0 0
    %2654 = vmatpush2.bf16.msra.mxu0 0
    %2655 = vmatprep.subr.bf16.mxu0 0
    %2656 = vmatpush2.bf16.msra.mxu0 0
    %2657 = vmatprep.subr.bf16.mxu0 0
    %2658 = vmatpush2.bf16.msra.mxu0 0
    %2659 = vmatprep.subr.bf16.mxu0 0
    %2660 = vmatpush2.bf16.msra.mxu0 0
    %2661 = vmatprep.subr.bf16.mxu0 0
    %2662 = vmatpush2.bf16.msra.mxu0 0
    %2663 = vmatprep.subr.bf16.mxu0 0
    %2664 = vmatpush2.bf16.msra.mxu0 0
    %2665 = vmatprep.subr.bf16.mxu0 0
    %2666 = vmatpush2.bf16.msra.mxu0 0
    %2667 = vmatprep.subr.bf16.mxu0 0
    %2668 = vmatpush2.bf16.msra.mxu0 0
    %2669 = vmatprep.mubr.bf16.mxu0 0
    %2670 = vmatmul.mubr.bf16.gmra.mxu0 %v1870
    %v2671 = vpop.f32.mrf.mxu0
    %v2672 = vadd.f32 %v562, %v2671
    %v2673 = vpop.f32.mrf.mxu0
    %v2674 = vpop.f32.mrf.mxu0
    %v2675 = vadd.f32 %v562, %v2674
    %v2676 = vpop.f32.mrf.mxu0
    %2677 = vmatprep.mubr.bf16.mxu0 0
    %2678 = vmatmul.mubr.bf16.gmra.mxu0 %v1873
    %v2679 = vpop.f32.mrf.mxu0
    %v2680 = vadd.f32 %v562, %v2679
    %v2681 = vpop.f32.mrf.mxu0
    %v2682 = vpop.f32.mrf.mxu0
    %v2683 = vadd.f32 %v562, %v2682
    %v2684 = vpop.f32.mrf.mxu0
    %2685 = vmatprep.mubr.bf16.mxu0 0
    %2686 = vmatmul.mubr.bf16.gmra.mxu0 %v1876
    %v2687 = vpop.f32.mrf.mxu0
    %v2688 = vadd.f32 %v562, %v2687
    %v2689 = vpop.f32.mrf.mxu0
    %v2690 = vpop.f32.mrf.mxu0
    %v2691 = vadd.f32 %v562, %v2690
    %v2692 = vpop.f32.mrf.mxu0
    %2693 = vmatprep.mubr.bf16.mxu0 0
    %2694 = vmatmul.mubr.bf16.gmra.mxu0 %v1879
    %v2695 = vpop.f32.mrf.mxu0
    %v2696 = vadd.f32 %v562, %v2695
    %v2697 = vpop.f32.mrf.mxu0
    %v2698 = vpop.f32.mrf.mxu0
    %v2699 = vadd.f32 %v562, %v2698
    %v2700 = vpop.f32.mrf.mxu0
    %2701 = vmatprep.mubr.bf16.mxu0 0
    %2702 = vmatmul.mubr.bf16.gmra.mxu0 %v1882
    %v2703 = vpop.f32.mrf.mxu0
    %v2704 = vadd.f32 %v562, %v2703
    %v2705 = vpop.f32.mrf.mxu0
    %v2706 = vpop.f32.mrf.mxu0
    %v2707 = vadd.f32 %v562, %v2706
    %v2708 = vpop.f32.mrf.mxu0
    %2709 = vmatprep.mubr.bf16.mxu0 0
    %2710 = vmatmul.mubr.bf16.gmra.mxu0 %v1885
    %v2711 = vpop.f32.mrf.mxu0
    %v2712 = vadd.f32 %v562, %v2711
    %v2713 = vpop.f32.mrf.mxu0
    %v2714 = vpop.f32.mrf.mxu0
    %v2715 = vadd.f32 %v562, %v2714
    %v2716 = vpop.f32.mrf.mxu0
    %2717 = vmatprep.mubr.bf16.mxu0 0
    %2718 = vmatmul.mubr.bf16.gmra.mxu0 %v1888
    %v2719 = vpop.f32.mrf.mxu0
    %v2720 = vadd.f32 %v562, %v2719
    %v2721 = vpop.f32.mrf.mxu0
    %v2722 = vpop.f32.mrf.mxu0
    %v2723 = vadd.f32 %v562, %v2722
    %v2724 = vpop.f32.mrf.mxu0
    %2725 = vmatprep.mubr.bf16.mxu0 0
    %2726 = vmatmul.mubr.bf16.gmra.mxu0 %v1891
    %v2727 = vpop.f32.mrf.mxu0
    %v2728 = vadd.f32 %v562, %v2727
    %v2729 = vpop.f32.mrf.mxu0
    %v2730 = vpop.f32.mrf.mxu0
    %v2731 = vadd.f32 %v562, %v2730
    %v2732 = vpop.f32.mrf.mxu0
    %2733 = vmatprep.mubr.bf16.mxu0 0
    %2734 = vmatmul.mubr.bf16.gmra.mxu0 %v1894
    %v2735 = vpop.f32.mrf.mxu0
    %v2736 = vadd.f32 %v562, %v2735
    %v2737 = vpop.f32.mrf.mxu0
    %v2738 = vpop.f32.mrf.mxu0
    %v2739 = vadd.f32 %v562, %v2738
    %v2740 = vpop.f32.mrf.mxu0
    %2741 = vmatprep.mubr.bf16.mxu0 0
    %2742 = vmatmul.mubr.bf16.gmra.mxu0 %v1897
    %v2743 = vpop.f32.mrf.mxu0
    %v2744 = vadd.f32 %v562, %v2743
    %v2745 = vpop.f32.mrf.mxu0
    %v2746 = vpop.f32.mrf.mxu0
    %v2747 = vadd.f32 %v562, %v2746
    %v2748 = vpop.f32.mrf.mxu0
    %2749 = vmatprep.mubr.bf16.mxu0 0
    %2750 = vmatmul.mubr.bf16.gmra.mxu0 %v1900
    %v2751 = vpop.f32.mrf.mxu0
    %v2752 = vadd.f32 %v562, %v2751
    %v2753 = vpop.f32.mrf.mxu0
    %v2754 = vpop.f32.mrf.mxu0
    %v2755 = vadd.f32 %v562, %v2754
    %v2756 = vpop.f32.mrf.mxu0
    %2757 = vmatprep.mubr.bf16.mxu0 0
    %2758 = vmatmul.mubr.bf16.gmra.mxu0 %v1903
    %v2759 = vpop.f32.mrf.mxu0
    %v2760 = vadd.f32 %v562, %v2759
    %v2761 = vpop.f32.mrf.mxu0
    %v2762 = vpop.f32.mrf.mxu0
    %v2763 = vadd.f32 %v562, %v2762
    %v2764 = vpop.f32.mrf.mxu0
    %2765 = vmatprep.mubr.bf16.mxu0 0
    %2766 = vmatmul.mubr.bf16.gmra.mxu0 %v1906
    %v2767 = vpop.f32.mrf.mxu0
    %v2768 = vadd.f32 %v562, %v2767
    %v2769 = vpop.f32.mrf.mxu0
    %v2770 = vpop.f32.mrf.mxu0
    %v2771 = vadd.f32 %v562, %v2770
    %v2772 = vpop.f32.mrf.mxu0
    %2773 = vmatprep.mubr.bf16.mxu0 0
    %2774 = vmatmul.mubr.bf16.gmra.mxu0 %v1909
    %v2775 = vpop.f32.mrf.mxu0
    %v2776 = vadd.f32 %v562, %v2775
    %v2777 = vpop.f32.mrf.mxu0
    %v2778 = vpop.f32.mrf.mxu0
    %v2779 = vadd.f32 %v562, %v2778
    %v2780 = vpop.f32.mrf.mxu0
    %2781 = vmatprep.mubr.bf16.mxu0 0
    %2782 = vmatmul.mubr.bf16.gmra.mxu0 %v1912
    %v2783 = vpop.f32.mrf.mxu0
    %v2784 = vadd.f32 %v562, %v2783
    %v2785 = vpop.f32.mrf.mxu0
    %v2786 = vpop.f32.mrf.mxu0
    %v2787 = vadd.f32 %v562, %v2786
    %v2788 = vpop.f32.mrf.mxu0
    %2789 = vmatprep.mubr.bf16.mxu0 0
    %2790 = vmatmul.mubr.bf16.gmra.mxu0 %v1915
    %v2791 = vpop.f32.mrf.mxu0
    %v2792 = vadd.f32 %v562, %v2791
    %v2793 = vpop.f32.mrf.mxu0
    %v2794 = vpop.f32.mrf.mxu0
    %v2795 = vadd.f32 %v562, %v2794
    %v2796 = vpop.f32.mrf.mxu0
    %2797 = vmatprep.mubr.bf16.mxu0 0
    %2798 = vmatmul.mubr.bf16.gmra.mxu0 %v1918
    %v2799 = vpop.f32.mrf.mxu0
    %v2800 = vadd.f32 %v562, %v2799
    %v2801 = vpop.f32.mrf.mxu0
    %v2802 = vpop.f32.mrf.mxu0
    %v2803 = vadd.f32 %v562, %v2802
    %v2804 = vpop.f32.mrf.mxu0
    %2805 = vmatprep.mubr.bf16.mxu0 0
    %2806 = vmatmul.mubr.bf16.gmra.mxu0 %v1921
    %v2807 = vpop.f32.mrf.mxu0
    %v2808 = vadd.f32 %v562, %v2807
    %v2809 = vpop.f32.mrf.mxu0
    %v2810 = vpop.f32.mrf.mxu0
    %v2811 = vadd.f32 %v562, %v2810
    %v2812 = vpop.f32.mrf.mxu0
    %2813 = vmatprep.mubr.bf16.mxu0 0
    %2814 = vmatmul.mubr.bf16.gmra.mxu0 %v1924
    %v2815 = vpop.f32.mrf.mxu0
    %v2816 = vadd.f32 %v562, %v2815
    %v2817 = vpop.f32.mrf.mxu0
    %v2818 = vpop.f32.mrf.mxu0
    %v2819 = vadd.f32 %v562, %v2818
    %v2820 = vpop.f32.mrf.mxu0
    %2821 = vmatprep.mubr.bf16.mxu0 0
    %2822 = vmatmul.mubr.bf16.gmra.mxu0 %v1927
    %v2823 = vpop.f32.mrf.mxu0
    %v2824 = vadd.f32 %v562, %v2823
    %v2825 = vpop.f32.mrf.mxu0
    %v2826 = vpop.f32.mrf.mxu0
    %v2827 = vadd.f32 %v562, %v2826
    %v2828 = vpop.f32.mrf.mxu0
    %2829 = vmatprep.mubr.bf16.mxu0 0
    %2830 = vmatmul.mubr.bf16.gmra.mxu0 %v1930
    %v2831 = vpop.f32.mrf.mxu0
    %v2832 = vadd.f32 %v562, %v2831
    %v2833 = vpop.f32.mrf.mxu0
    %v2834 = vpop.f32.mrf.mxu0
    %v2835 = vadd.f32 %v562, %v2834
    %v2836 = vpop.f32.mrf.mxu0
    %2837 = vmatprep.mubr.bf16.mxu0 0
    %2838 = vmatmul.mubr.bf16.gmra.mxu0 %v1933
    %v2839 = vpop.f32.mrf.mxu0
    %v2840 = vadd.f32 %v562, %v2839
    %v2841 = vpop.f32.mrf.mxu0
    %v2842 = vpop.f32.mrf.mxu0
    %v2843 = vadd.f32 %v562, %v2842
    %v2844 = vpop.f32.mrf.mxu0
    %2845 = vmatprep.mubr.bf16.mxu0 0
    %2846 = vmatmul.mubr.bf16.gmra.mxu0 %v1936
    %v2847 = vpop.f32.mrf.mxu0
    %v2848 = vadd.f32 %v562, %v2847
    %v2849 = vpop.f32.mrf.mxu0
    %v2850 = vpop.f32.mrf.mxu0
    %v2851 = vadd.f32 %v562, %v2850
    %v2852 = vpop.f32.mrf.mxu0
    %2853 = vmatprep.mubr.bf16.mxu0 0
    %2854 = vmatmul.mubr.bf16.gmra.mxu0 %v1939
    %v2855 = vpop.f32.mrf.mxu0
    %v2856 = vadd.f32 %v562, %v2855
    %v2857 = vpop.f32.mrf.mxu0
    %v2858 = vpop.f32.mrf.mxu0
    %v2859 = vadd.f32 %v562, %v2858
    %v2860 = vpop.f32.mrf.mxu0
    %2861 = vmatprep.mubr.bf16.mxu0 0
    %2862 = vmatmul.mubr.bf16.gmra.mxu0 %v1942
    %v2863 = vpop.f32.mrf.mxu0
    %v2864 = vadd.f32 %v562, %v2863
    %v2865 = vpop.f32.mrf.mxu0
    %v2866 = vpop.f32.mrf.mxu0
    %v2867 = vadd.f32 %v562, %v2866
    %v2868 = vpop.f32.mrf.mxu0
    %2869 = vmatprep.mubr.bf16.mxu0 0
    %2870 = vmatmul.mubr.bf16.gmra.mxu0 %v1945
    %v2871 = vpop.f32.mrf.mxu0
    %v2872 = vadd.f32 %v562, %v2871
    %v2873 = vpop.f32.mrf.mxu0
    %v2874 = vpop.f32.mrf.mxu0
    %v2875 = vadd.f32 %v562, %v2874
    %v2876 = vpop.f32.mrf.mxu0
    %2877 = vmatprep.mubr.bf16.mxu0 0
    %2878 = vmatmul.mubr.bf16.gmra.mxu0 %v1948
    %v2879 = vpop.f32.mrf.mxu0
    %v2880 = vadd.f32 %v562, %v2879
    %v2881 = vpop.f32.mrf.mxu0
    %v2882 = vpop.f32.mrf.mxu0
    %v2883 = vadd.f32 %v562, %v2882
    %v2884 = vpop.f32.mrf.mxu0
    %2885 = vmatprep.mubr.bf16.mxu0 0
    %2886 = vmatmul.mubr.bf16.gmra.mxu0 %v1951
    %v2887 = vpop.f32.mrf.mxu0
    %v2888 = vadd.f32 %v562, %v2887
    %v2889 = vpop.f32.mrf.mxu0
    %v2890 = vpop.f32.mrf.mxu0
    %v2891 = vadd.f32 %v562, %v2890
    %v2892 = vpop.f32.mrf.mxu0
    %2893 = vmatprep.mubr.bf16.mxu0 0
    %2894 = vmatmul.mubr.bf16.gmra.mxu0 %v1954
    %v2895 = vpop.f32.mrf.mxu0
    %v2896 = vadd.f32 %v562, %v2895
    %v2897 = vpop.f32.mrf.mxu0
    %v2898 = vpop.f32.mrf.mxu0
    %v2899 = vadd.f32 %v562, %v2898
    %v2900 = vpop.f32.mrf.mxu0
    %2901 = vmatprep.mubr.bf16.mxu0 0
    %2902 = vmatmul.mubr.bf16.gmra.mxu0 %v1957
    %v2903 = vpop.f32.mrf.mxu0
    %v2904 = vadd.f32 %v562, %v2903
    %v2905 = vpop.f32.mrf.mxu0
    %v2906 = vpop.f32.mrf.mxu0
    %v2907 = vadd.f32 %v562, %v2906
    %v2908 = vpop.f32.mrf.mxu0
    %2909 = vmatprep.mubr.bf16.mxu0 0
    %2910 = vmatmul.mubr.bf16.gmra.mxu0 %v1960
    %v2911 = vpop.f32.mrf.mxu0
    %v2912 = vadd.f32 %v562, %v2911
    %v2913 = vpop.f32.mrf.mxu0
    %v2914 = vpop.f32.mrf.mxu0
    %v2915 = vadd.f32 %v562, %v2914
    %v2916 = vpop.f32.mrf.mxu0
    %2917 = vmatprep.mubr.bf16.mxu0 0
    %2918 = vmatmul.mubr.bf16.gmra.mxu0 %v1963
    %v2919 = vpop.f32.mrf.mxu0
    %v2920 = vadd.f32 %v562, %v2919
    %v2921 = vpop.f32.mrf.mxu0
    %v2922 = vpop.f32.mrf.mxu0
    %v2923 = vadd.f32 %v562, %v2922
    %v2924 = vpop.f32.mrf.mxu0
    %2925 = vmatprep.mubr.bf16.mxu0 0
    %2926 = vmatmul.mubr.bf16.gmra.mxu0 %v1966
    %v2927 = vpop.f32.mrf.mxu0
    %v2928 = vadd.f32 %v562, %v2927
    %v2929 = vpop.f32.mrf.mxu0
    %v2930 = vpop.f32.mrf.mxu0
    %v2931 = vadd.f32 %v562, %v2930
    %v2932 = vpop.f32.mrf.mxu0
    %2933 = vmatprep.mubr.bf16.mxu0 0
    %2934 = vmatmul.mubr.bf16.gmra.mxu0 %v1969
    %v2935 = vpop.f32.mrf.mxu0
    %v2936 = vadd.f32 %v562, %v2935
    %v2937 = vpop.f32.mrf.mxu0
    %v2938 = vpop.f32.mrf.mxu0
    %v2939 = vadd.f32 %v562, %v2938
    %v2940 = vpop.f32.mrf.mxu0
    %2941 = vmatprep.mubr.bf16.mxu0 0
    %2942 = vmatmul.mubr.bf16.gmra.mxu0 %v1972
    %v2943 = vpop.f32.mrf.mxu0
    %v2944 = vadd.f32 %v562, %v2943
    %v2945 = vpop.f32.mrf.mxu0
    %v2946 = vpop.f32.mrf.mxu0
    %v2947 = vadd.f32 %v562, %v2946
    %v2948 = vpop.f32.mrf.mxu0
    %2949 = vmatprep.mubr.bf16.mxu0 0
    %2950 = vmatmul.mubr.bf16.gmra.mxu0 %v1975
    %v2951 = vpop.f32.mrf.mxu0
    %v2952 = vadd.f32 %v562, %v2951
    %v2953 = vpop.f32.mrf.mxu0
    %v2954 = vpop.f32.mrf.mxu0
    %v2955 = vadd.f32 %v562, %v2954
    %v2956 = vpop.f32.mrf.mxu0
    %2957 = vmatprep.mubr.bf16.mxu0 0
    %2958 = vmatmul.mubr.bf16.gmra.mxu0 %v1978
    %v2959 = vpop.f32.mrf.mxu0
    %v2960 = vadd.f32 %v562, %v2959
    %v2961 = vpop.f32.mrf.mxu0
    %v2962 = vpop.f32.mrf.mxu0
    %v2963 = vadd.f32 %v562, %v2962
    %v2964 = vpop.f32.mrf.mxu0
    %2965 = vmatprep.mubr.bf16.mxu0 0
    %2966 = vmatmul.mubr.bf16.gmra.mxu0 %v1981
    %v2967 = vpop.f32.mrf.mxu0
    %v2968 = vadd.f32 %v562, %v2967
    %v2969 = vpop.f32.mrf.mxu0
    %v2970 = vpop.f32.mrf.mxu0
    %v2971 = vadd.f32 %v562, %v2970
    %v2972 = vpop.f32.mrf.mxu0
    %2973 = vmatprep.mubr.bf16.mxu0 0
    %2974 = vmatmul.mubr.bf16.gmra.mxu0 %v1984
    %v2975 = vpop.f32.mrf.mxu0
    %v2976 = vadd.f32 %v562, %v2975
    %v2977 = vpop.f32.mrf.mxu0
    %v2978 = vpop.f32.mrf.mxu0
    %v2979 = vadd.f32 %v562, %v2978
    %v2980 = vpop.f32.mrf.mxu0
    %2981 = vmatprep.mubr.bf16.mxu0 0
    %2982 = vmatmul.mubr.bf16.gmra.mxu0 %v1987
    %v2983 = vpop.f32.mrf.mxu0
    %v2984 = vadd.f32 %v562, %v2983
    %v2985 = vpop.f32.mrf.mxu0
    %v2986 = vpop.f32.mrf.mxu0
    %v2987 = vadd.f32 %v562, %v2986
    %v2988 = vpop.f32.mrf.mxu0
    %2989 = vmatprep.mubr.bf16.mxu0 0
    %2990 = vmatmul.mubr.bf16.gmra.mxu0 %v1990
    %v2991 = vpop.f32.mrf.mxu0
    %v2992 = vadd.f32 %v562, %v2991
    %v2993 = vpop.f32.mrf.mxu0
    %v2994 = vpop.f32.mrf.mxu0
    %v2995 = vadd.f32 %v562, %v2994
    %v2996 = vpop.f32.mrf.mxu0
    %2997 = vmatprep.mubr.bf16.mxu0 0
    %2998 = vmatmul.mubr.bf16.gmra.mxu0 %v1993
    %v2999 = vpop.f32.mrf.mxu0
    %v3000 = vadd.f32 %v562, %v2999
    %v3001 = vpop.f32.mrf.mxu0
    %v3002 = vpop.f32.mrf.mxu0
    %v3003 = vadd.f32 %v562, %v3002
    %v3004 = vpop.f32.mrf.mxu0
    %3005 = vmatprep.mubr.bf16.mxu0 0
    %3006 = vmatmul.mubr.bf16.gmra.mxu0 %v1996
    %v3007 = vpop.f32.mrf.mxu0
    %v3008 = vadd.f32 %v562, %v3007
    %v3009 = vpop.f32.mrf.mxu0
    %v3010 = vpop.f32.mrf.mxu0
    %v3011 = vadd.f32 %v562, %v3010
    %v3012 = vpop.f32.mrf.mxu0
    %3013 = vmatprep.mubr.bf16.mxu0 0
    %3014 = vmatmul.mubr.bf16.gmra.mxu0 %v1999
    %v3015 = vpop.f32.mrf.mxu0
    %v3016 = vadd.f32 %v562, %v3015
    %v3017 = vpop.f32.mrf.mxu0
    %v3018 = vpop.f32.mrf.mxu0
    %v3019 = vadd.f32 %v562, %v3018
    %v3020 = vpop.f32.mrf.mxu0
    %3021 = vmatprep.mubr.bf16.mxu0 0
    %3022 = vmatmul.mubr.bf16.gmra.mxu0 %v2002
    %v3023 = vpop.f32.mrf.mxu0
    %v3024 = vadd.f32 %v562, %v3023
    %v3025 = vpop.f32.mrf.mxu0
    %v3026 = vpop.f32.mrf.mxu0
    %v3027 = vadd.f32 %v562, %v3026
    %v3028 = vpop.f32.mrf.mxu0
    %3029 = vmatprep.mubr.bf16.mxu0 0
    %3030 = vmatmul.mubr.bf16.gmra.mxu0 %v2005
    %v3031 = vpop.f32.mrf.mxu0
    %v3032 = vadd.f32 %v562, %v3031
    %v3033 = vpop.f32.mrf.mxu0
    %v3034 = vpop.f32.mrf.mxu0
    %v3035 = vadd.f32 %v562, %v3034
    %v3036 = vpop.f32.mrf.mxu0
    %3037 = vmatprep.mubr.bf16.mxu0 0
    %3038 = vmatmul.mubr.bf16.gmra.mxu0 %v2008
    %v3039 = vpop.f32.mrf.mxu0
    %v3040 = vadd.f32 %v562, %v3039
    %v3041 = vpop.f32.mrf.mxu0
    %v3042 = vpop.f32.mrf.mxu0
    %v3043 = vadd.f32 %v562, %v3042
    %v3044 = vpop.f32.mrf.mxu0
    %3045 = vmatprep.mubr.bf16.mxu0 0
    %3046 = vmatmul.mubr.bf16.gmra.mxu0 %v2011
    %v3047 = vpop.f32.mrf.mxu0
    %v3048 = vadd.f32 %v562, %v3047
    %v3049 = vpop.f32.mrf.mxu0
    %v3050 = vpop.f32.mrf.mxu0
    %v3051 = vadd.f32 %v562, %v3050
    %v3052 = vpop.f32.mrf.mxu0
    %3053 = vmatprep.mubr.bf16.mxu0 0
    %3054 = vmatmul.mubr.bf16.gmra.mxu0 %v2014
    %v3055 = vpop.f32.mrf.mxu0
    %v3056 = vadd.f32 %v562, %v3055
    %v3057 = vpop.f32.mrf.mxu0
    %v3058 = vpop.f32.mrf.mxu0
    %v3059 = vadd.f32 %v562, %v3058
    %v3060 = vpop.f32.mrf.mxu0
    %3061 = vmatprep.mubr.bf16.mxu0 0
    %3062 = vmatmul.mubr.bf16.gmra.mxu0 %v2017
    %v3063 = vpop.f32.mrf.mxu0
    %v3064 = vadd.f32 %v562, %v3063
    %v3065 = vpop.f32.mrf.mxu0
    %v3066 = vpop.f32.mrf.mxu0
    %v3067 = vadd.f32 %v562, %v3066
    %v3068 = vpop.f32.mrf.mxu0
    %3069 = vmatprep.mubr.bf16.mxu0 0
    %3070 = vmatmul.mubr.bf16.gmra.mxu0 %v2020
    %v3071 = vpop.f32.mrf.mxu0
    %v3072 = vadd.f32 %v562, %v3071
    %v3073 = vpop.f32.mrf.mxu0
    %v3074 = vpop.f32.mrf.mxu0
    %v3075 = vadd.f32 %v562, %v3074
    %v3076 = vpop.f32.mrf.mxu0
    %3077 = vmatprep.mubr.bf16.mxu0 0
    %3078 = vmatmul.mubr.bf16.gmra.mxu0 %v2023
    %v3079 = vpop.f32.mrf.mxu0
    %v3080 = vadd.f32 %v562, %v3079
    %v3081 = vpop.f32.mrf.mxu0
    %v3082 = vpop.f32.mrf.mxu0
    %v3083 = vadd.f32 %v562, %v3082
    %v3084 = vpop.f32.mrf.mxu0
    %3085 = vmatprep.mubr.bf16.mxu0 0
    %3086 = vmatmul.mubr.bf16.gmra.mxu0 %v2026
    %v3087 = vpop.f32.mrf.mxu0
    %v3088 = vadd.f32 %v562, %v3087
    %v3089 = vpop.f32.mrf.mxu0
    %v3090 = vpop.f32.mrf.mxu0
    %v3091 = vadd.f32 %v562, %v3090
    %v3092 = vpop.f32.mrf.mxu0
    %3093 = vmatprep.mubr.bf16.mxu0 0
    %3094 = vmatmul.mubr.bf16.gmra.mxu0 %v2029
    %v3095 = vpop.f32.mrf.mxu0
    %v3096 = vadd.f32 %v562, %v3095
    %v3097 = vpop.f32.mrf.mxu0
    %v3098 = vpop.f32.mrf.mxu0
    %v3099 = vadd.f32 %v562, %v3098
    %v3100 = vpop.f32.mrf.mxu0
    %3101 = vmatprep.mubr.bf16.mxu0 0
    %3102 = vmatmul.mubr.bf16.gmra.mxu0 %v2032
    %v3103 = vpop.f32.mrf.mxu0
    %v3104 = vadd.f32 %v562, %v3103
    %v3105 = vpop.f32.mrf.mxu0
    %v3106 = vpop.f32.mrf.mxu0
    %v3107 = vadd.f32 %v562, %v3106
    %v3108 = vpop.f32.mrf.mxu0
    %3109 = vmatprep.mubr.bf16.mxu0 0
    %3110 = vmatmul.mubr.bf16.gmra.mxu0 %v2035
    %v3111 = vpop.f32.mrf.mxu0
    %v3112 = vadd.f32 %v562, %v3111
    %v3113 = vpop.f32.mrf.mxu0
    %v3114 = vpop.f32.mrf.mxu0
    %v3115 = vadd.f32 %v562, %v3114
    %v3116 = vpop.f32.mrf.mxu0
    %3117 = vmatprep.mubr.bf16.mxu0 0
    %3118 = vmatmul.mubr.bf16.gmra.mxu0 %v2038
    %v3119 = vpop.f32.mrf.mxu0
    %v3120 = vadd.f32 %v562, %v3119
    %v3121 = vpop.f32.mrf.mxu0
    %v3122 = vpop.f32.mrf.mxu0
    %v3123 = vadd.f32 %v562, %v3122
    %v3124 = vpop.f32.mrf.mxu0
    %3125 = vmatprep.mubr.bf16.mxu0 0
    %3126 = vmatmul.mubr.bf16.gmra.mxu0 %v2041
    %v3127 = vpop.f32.mrf.mxu0
    %v3128 = vadd.f32 %v562, %v3127
    %v3129 = vpop.f32.mrf.mxu0
    %v3130 = vpop.f32.mrf.mxu0
    %v3131 = vadd.f32 %v562, %v3130
    %v3132 = vpop.f32.mrf.mxu0
    %3133 = vmatprep.mubr.bf16.mxu0 0
    %3134 = vmatmul.mubr.bf16.gmra.mxu0 %v2044
    %v3135 = vpop.f32.mrf.mxu0
    %v3136 = vadd.f32 %v562, %v3135
    %v3137 = vpop.f32.mrf.mxu0
    %v3138 = vpop.f32.mrf.mxu0
    %v3139 = vadd.f32 %v562, %v3138
    %v3140 = vpop.f32.mrf.mxu0
    %3141 = vmatprep.mubr.bf16.mxu0 0
    %3142 = vmatmul.mubr.bf16.gmra.mxu0 %v2047
    %v3143 = vpop.f32.mrf.mxu0
    %v3144 = vadd.f32 %v562, %v3143
    %v3145 = vpop.f32.mrf.mxu0
    %v3146 = vpop.f32.mrf.mxu0
    %v3147 = vadd.f32 %v562, %v3146
    %v3148 = vpop.f32.mrf.mxu0
    %3149 = vmatprep.mubr.bf16.mxu0 0
    %3150 = vmatmul.mubr.bf16.gmra.mxu0 %v2050
    %v3151 = vpop.f32.mrf.mxu0
    %v3152 = vadd.f32 %v562, %v3151
    %v3153 = vpop.f32.mrf.mxu0
    %v3154 = vpop.f32.mrf.mxu0
    %v3155 = vadd.f32 %v562, %v3154
    %v3156 = vpop.f32.mrf.mxu0
    %3157 = vmatprep.mubr.bf16.mxu0 0
    %3158 = vmatmul.mubr.bf16.gmra.mxu0 %v2053
    %v3159 = vpop.f32.mrf.mxu0
    %v3160 = vadd.f32 %v562, %v3159
    %v3161 = vpop.f32.mrf.mxu0
    %v3162 = vpop.f32.mrf.mxu0
    %v3163 = vadd.f32 %v562, %v3162
    %v3164 = vpop.f32.mrf.mxu0
    %3165 = vmatprep.mubr.bf16.mxu0 0
    %3166 = vmatmul.mubr.bf16.gmra.mxu0 %v2056
    %v3167 = vpop.f32.mrf.mxu0
    %v3168 = vadd.f32 %v562, %v3167
    %v3169 = vpop.f32.mrf.mxu0
    %v3170 = vpop.f32.mrf.mxu0
    %v3171 = vadd.f32 %v562, %v3170
    %v3172 = vpop.f32.mrf.mxu0
    %3173 = vmatprep.mubr.bf16.mxu0 0
    %3174 = vmatmul.mubr.bf16.gmra.mxu0 %v2059
    %v3175 = vpop.f32.mrf.mxu0
    %v3176 = vadd.f32 %v562, %v3175
    %v3177 = vpop.f32.mrf.mxu0
    %v3178 = vpop.f32.mrf.mxu0
    %v3179 = vadd.f32 %v562, %v3178
    %v3180 = vpop.f32.mrf.mxu0
    %3181 = vmatprep.mubr.bf16.mxu0 0
    %3182 = vmatmul.mubr.bf16.gmra.mxu0 %v2062
    %v3183 = vpop.f32.mrf.mxu0
    %v3184 = vadd.f32 %v562, %v3183
    %v3185 = vpop.f32.mrf.mxu0
    %v3186 = vpop.f32.mrf.mxu0
    %v3187 = vadd.f32 %v562, %v3186
    %v3188 = vpop.f32.mrf.mxu0
    %3189 = vmatprep.mubr.bf16.mxu0 0
    %3190 = vmatmul.mubr.bf16.gmra.mxu0 %v2065
    %v3191 = vpop.f32.mrf.mxu0
    %v3192 = vadd.f32 %v562, %v3191
    %v3193 = vpop.f32.mrf.mxu0
    %v3194 = vpop.f32.mrf.mxu0
    %v3195 = vadd.f32 %v562, %v3194
    %v3196 = vpop.f32.mrf.mxu0
    %3197 = vmatprep.mubr.bf16.mxu0 0
    %3198 = vmatmul.mubr.bf16.gmra.mxu0 %v2068
    %v3199 = vpop.f32.mrf.mxu0
    %v3200 = vadd.f32 %v562, %v3199
    %v3201 = vpop.f32.mrf.mxu0
    %v3202 = vpop.f32.mrf.mxu0
    %v3203 = vadd.f32 %v562, %v3202
    %v3204 = vpop.f32.mrf.mxu0
    %3205 = vmatprep.mubr.bf16.mxu0 0
    %3206 = vmatmul.mubr.bf16.gmra.mxu0 %v2071
    %v3207 = vpop.f32.mrf.mxu0
    %v3208 = vadd.f32 %v562, %v3207
    %v3209 = vpop.f32.mrf.mxu0
    %v3210 = vpop.f32.mrf.mxu0
    %v3211 = vadd.f32 %v562, %v3210
    %v3212 = vpop.f32.mrf.mxu0
    %3213 = vmatprep.mubr.bf16.mxu0 0
    %3214 = vmatmul.mubr.bf16.gmra.mxu0 %v2074
    %v3215 = vpop.f32.mrf.mxu0
    %v3216 = vadd.f32 %v562, %v3215
    %v3217 = vpop.f32.mrf.mxu0
    %v3218 = vpop.f32.mrf.mxu0
    %v3219 = vadd.f32 %v562, %v3218
    %v3220 = vpop.f32.mrf.mxu0
    %3221 = vmatprep.mubr.bf16.mxu0 0
    %3222 = vmatmul.mubr.bf16.gmra.mxu0 %v2077
    %v3223 = vpop.f32.mrf.mxu0
    %v3224 = vadd.f32 %v562, %v3223
    %v3225 = vpop.f32.mrf.mxu0
    %v3226 = vpop.f32.mrf.mxu0
    %v3227 = vadd.f32 %v562, %v3226
    %v3228 = vpop.f32.mrf.mxu0
    %3229 = vmatprep.mubr.bf16.mxu0 0
    %3230 = vmatmul.mubr.bf16.gmra.mxu0 %v2080
    %v3231 = vpop.f32.mrf.mxu0
    %v3232 = vadd.f32 %v562, %v3231
    %v3233 = vpop.f32.mrf.mxu0
    %v3234 = vpop.f32.mrf.mxu0
    %v3235 = vadd.f32 %v562, %v3234
    %v3236 = vpop.f32.mrf.mxu0
    %3237 = vmatprep.mubr.bf16.mxu0 0
    %3238 = vmatmul.mubr.bf16.gmra.mxu0 %v2083
    %v3239 = vpop.f32.mrf.mxu0
    %v3240 = vadd.f32 %v562, %v3239
    %v3241 = vpop.f32.mrf.mxu0
    %v3242 = vpop.f32.mrf.mxu0
    %v3243 = vadd.f32 %v562, %v3242
    %v3244 = vpop.f32.mrf.mxu0
    %3245 = vmatprep.mubr.bf16.mxu0 0
    %3246 = vmatmul.mubr.bf16.gmra.mxu0 %v2086
    %v3247 = vpop.f32.mrf.mxu0
    %v3248 = vadd.f32 %v562, %v3247
    %v3249 = vpop.f32.mrf.mxu0
    %v3250 = vpop.f32.mrf.mxu0
    %v3251 = vadd.f32 %v562, %v3250
    %v3252 = vpop.f32.mrf.mxu0
    %3253 = vmatprep.mubr.bf16.mxu0 0
    %3254 = vmatmul.mubr.bf16.gmra.mxu0 %v2089
    %v3255 = vpop.f32.mrf.mxu0
    %v3256 = vadd.f32 %v562, %v3255
    %v3257 = vpop.f32.mrf.mxu0
    %v3258 = vpop.f32.mrf.mxu0
    %v3259 = vadd.f32 %v562, %v3258
    %v3260 = vpop.f32.mrf.mxu0
    %3261 = vmatprep.mubr.bf16.mxu0 0
    %3262 = vmatmul.mubr.bf16.gmra.mxu0 %v2092
    %v3263 = vpop.f32.mrf.mxu0
    %v3264 = vadd.f32 %v562, %v3263
    %v3265 = vpop.f32.mrf.mxu0
    %v3266 = vpop.f32.mrf.mxu0
    %v3267 = vadd.f32 %v562, %v3266
    %v3268 = vpop.f32.mrf.mxu0
    %3269 = vmatprep.mubr.bf16.mxu0 0
    %3270 = vmatmul.mubr.bf16.gmra.mxu0 %v2095
    %v3271 = vpop.f32.mrf.mxu0
    %v3272 = vadd.f32 %v562, %v3271
    %v3273 = vpop.f32.mrf.mxu0
    %v3274 = vpop.f32.mrf.mxu0
    %v3275 = vadd.f32 %v562, %v3274
    %v3276 = vpop.f32.mrf.mxu0
    %3277 = vmatprep.mubr.bf16.mxu0 0
    %3278 = vmatmul.mubr.bf16.gmra.mxu0 %v2098
    %v3279 = vpop.f32.mrf.mxu0
    %v3280 = vadd.f32 %v562, %v3279
    %v3281 = vpop.f32.mrf.mxu0
    %v3282 = vpop.f32.mrf.mxu0
    %v3283 = vadd.f32 %v562, %v3282
    %v3284 = vpop.f32.mrf.mxu0
    %3285 = vmatprep.mubr.bf16.mxu0 0
    %3286 = vmatmul.mubr.bf16.gmra.mxu0 %v2101
    %v3287 = vpop.f32.mrf.mxu0
    %v3288 = vadd.f32 %v562, %v3287
    %v3289 = vpop.f32.mrf.mxu0
    %v3290 = vpop.f32.mrf.mxu0
    %v3291 = vadd.f32 %v562, %v3290
    %v3292 = vpop.f32.mrf.mxu0
    %3293 = vmatprep.mubr.bf16.mxu0 0
    %3294 = vmatmul.mubr.bf16.gmra.mxu0 %v2104
    %v3295 = vpop.f32.mrf.mxu0
    %v3296 = vadd.f32 %v562, %v3295
    %v3297 = vpop.f32.mrf.mxu0
    %v3298 = vpop.f32.mrf.mxu0
    %v3299 = vadd.f32 %v562, %v3298
    %v3300 = vpop.f32.mrf.mxu0
    %3301 = vmatprep.mubr.bf16.mxu0 0
    %3302 = vmatmul.mubr.bf16.gmra.mxu0 %v2107
    %v3303 = vpop.f32.mrf.mxu0
    %v3304 = vadd.f32 %v562, %v3303
    %v3305 = vpop.f32.mrf.mxu0
    %v3306 = vpop.f32.mrf.mxu0
    %v3307 = vadd.f32 %v562, %v3306
    %v3308 = vpop.f32.mrf.mxu0
    %3309 = vmatprep.mubr.bf16.mxu0 0
    %3310 = vmatmul.mubr.bf16.gmra.mxu0 %v2110
    %v3311 = vpop.f32.mrf.mxu0
    %v3312 = vadd.f32 %v562, %v3311
    %v3313 = vpop.f32.mrf.mxu0
    %v3314 = vpop.f32.mrf.mxu0
    %v3315 = vadd.f32 %v562, %v3314
    %v3316 = vpop.f32.mrf.mxu0
    %3317 = vmatprep.mubr.bf16.mxu0 0
    %3318 = vmatmul.mubr.bf16.gmra.mxu0 %v2113
    %v3319 = vpop.f32.mrf.mxu0
    %v3320 = vadd.f32 %v562, %v3319
    %v3321 = vpop.f32.mrf.mxu0
    %v3322 = vpop.f32.mrf.mxu0
    %v3323 = vadd.f32 %v562, %v3322
    %v3324 = vpop.f32.mrf.mxu0
    %3325 = vmatprep.mubr.bf16.mxu0 0
    %3326 = vmatmul.mubr.bf16.gmra.mxu0 %v2116
    %v3327 = vpop.f32.mrf.mxu0
    %v3328 = vadd.f32 %v562, %v3327
    %v3329 = vpop.f32.mrf.mxu0
    %v3330 = vpop.f32.mrf.mxu0
    %v3331 = vadd.f32 %v562, %v3330
    %v3332 = vpop.f32.mrf.mxu0
    %3333 = vmatprep.mubr.bf16.mxu0 0
    %3334 = vmatmul.mubr.bf16.gmra.mxu0 %v2119
    %v3335 = vpop.f32.mrf.mxu0
    %v3336 = vadd.f32 %v562, %v3335
    %v3337 = vpop.f32.mrf.mxu0
    %v3338 = vpop.f32.mrf.mxu0
    %v3339 = vadd.f32 %v562, %v3338
    %v3340 = vpop.f32.mrf.mxu0
    %3341 = vmatprep.mubr.bf16.mxu0 0
    %3342 = vmatmul.mubr.bf16.gmra.mxu0 %v2122
    %v3343 = vpop.f32.mrf.mxu0
    %v3344 = vadd.f32 %v562, %v3343
    %v3345 = vpop.f32.mrf.mxu0
    %v3346 = vpop.f32.mrf.mxu0
    %v3347 = vadd.f32 %v562, %v3346
    %v3348 = vpop.f32.mrf.mxu0
    %3349 = vmatprep.mubr.bf16.mxu0 0
    %3350 = vmatmul.mubr.bf16.gmra.mxu0 %v2125
    %v3351 = vpop.f32.mrf.mxu0
    %v3352 = vadd.f32 %v562, %v3351
    %v3353 = vpop.f32.mrf.mxu0
    %v3354 = vpop.f32.mrf.mxu0
    %v3355 = vadd.f32 %v562, %v3354
    %v3356 = vpop.f32.mrf.mxu0
    %3357 = vmatprep.mubr.bf16.mxu0 0
    %3358 = vmatmul.mubr.bf16.gmra.mxu0 %v2128
    %v3359 = vpop.f32.mrf.mxu0
    %v3360 = vadd.f32 %v562, %v3359
    %v3361 = vpop.f32.mrf.mxu0
    %v3362 = vpop.f32.mrf.mxu0
    %v3363 = vadd.f32 %v562, %v3362
    %v3364 = vpop.f32.mrf.mxu0
    %3365 = vmatprep.mubr.bf16.mxu0 0
    %3366 = vmatmul.mubr.bf16.gmra.mxu0 %v2131
    %v3367 = vpop.f32.mrf.mxu0
    %v3368 = vadd.f32 %v562, %v3367
    %v3369 = vpop.f32.mrf.mxu0
    %v3370 = vpop.f32.mrf.mxu0
    %v3371 = vadd.f32 %v562, %v3370
    %v3372 = vpop.f32.mrf.mxu0
    %3373 = vmatprep.mubr.bf16.mxu0 0
    %3374 = vmatmul.mubr.bf16.gmra.mxu0 %v2134
    %v3375 = vpop.f32.mrf.mxu0
    %v3376 = vadd.f32 %v562, %v3375
    %v3377 = vpop.f32.mrf.mxu0
    %v3378 = vpop.f32.mrf.mxu0
    %v3379 = vadd.f32 %v562, %v3378
    %v3380 = vpop.f32.mrf.mxu0
    %3381 = vmatprep.mubr.bf16.mxu0 0
    %3382 = vmatmul.mubr.bf16.gmra.mxu0 %v2137
    %v3383 = vpop.f32.mrf.mxu0
    %v3384 = vadd.f32 %v562, %v3383
    %v3385 = vpop.f32.mrf.mxu0
    %v3386 = vpop.f32.mrf.mxu0
    %v3387 = vadd.f32 %v562, %v3386
    %v3388 = vpop.f32.mrf.mxu0
    %3389 = vmatprep.mubr.bf16.mxu0 0
    %3390 = vmatmul.mubr.bf16.gmra.mxu0 %v2140
    %v3391 = vpop.f32.mrf.mxu0
    %v3392 = vadd.f32 %v562, %v3391
    %v3393 = vpop.f32.mrf.mxu0
    %v3394 = vpop.f32.mrf.mxu0
    %v3395 = vadd.f32 %v562, %v3394
    %v3396 = vpop.f32.mrf.mxu0
    %3397 = vmatprep.mubr.bf16.mxu0 0
    %3398 = vmatmul.mubr.bf16.gmra.mxu0 %v2143
    %v3399 = vpop.f32.mrf.mxu0
    %v3400 = vadd.f32 %v562, %v3399
    %v3401 = vpop.f32.mrf.mxu0
    %v3402 = vpop.f32.mrf.mxu0
    %v3403 = vadd.f32 %v562, %v3402
    %v3404 = vpop.f32.mrf.mxu0
    %3405 = vmatprep.mubr.bf16.mxu0 0
    %3406 = vmatmul.mubr.bf16.gmra.mxu0 %v2146
    %v3407 = vpop.f32.mrf.mxu0
    %v3408 = vadd.f32 %v562, %v3407
    %v3409 = vpop.f32.mrf.mxu0
    %v3410 = vpop.f32.mrf.mxu0
    %v3411 = vadd.f32 %v562, %v3410
    %v3412 = vpop.f32.mrf.mxu0
    %3413 = vmatprep.mubr.bf16.mxu0 0
    %3414 = vmatmul.mubr.bf16.gmra.mxu0 %v2149
    %v3415 = vpop.f32.mrf.mxu0
    %v3416 = vadd.f32 %v562, %v3415
    %v3417 = vpop.f32.mrf.mxu0
    %v3418 = vpop.f32.mrf.mxu0
    %v3419 = vadd.f32 %v562, %v3418
    %v3420 = vpop.f32.mrf.mxu0
    %3421 = vmatprep.mubr.bf16.mxu0 0
    %3422 = vmatmul.mubr.bf16.gmra.mxu0 %v2152
    %v3423 = vpop.f32.mrf.mxu0
    %v3424 = vadd.f32 %v562, %v3423
    %v3425 = vpop.f32.mrf.mxu0
    %v3426 = vpop.f32.mrf.mxu0
    %v3427 = vadd.f32 %v562, %v3426
    %v3428 = vpop.f32.mrf.mxu0
    %3429 = vmatprep.mubr.bf16.mxu0 0
    %3430 = vmatmul.mubr.bf16.gmra.mxu0 %v2155
    %v3431 = vpop.f32.mrf.mxu0
    %v3432 = vadd.f32 %v562, %v3431
    %v3433 = vpop.f32.mrf.mxu0
    %v3434 = vpop.f32.mrf.mxu0
    %v3435 = vadd.f32 %v562, %v3434
    %v3436 = vpop.f32.mrf.mxu0
    %3437 = vmatprep.mubr.bf16.mxu0 0
    %3438 = vmatmul.mubr.bf16.gmra.mxu0 %v2158
    %v3439 = vpop.f32.mrf.mxu0
    %v3440 = vadd.f32 %v562, %v3439
    %v3441 = vpop.f32.mrf.mxu0
    %v3442 = vpop.f32.mrf.mxu0
    %v3443 = vadd.f32 %v562, %v3442
    %v3444 = vpop.f32.mrf.mxu0
    %3445 = vmatprep.mubr.bf16.mxu0 0
    %3446 = vmatmul.mubr.bf16.gmra.mxu0 %v2161
    %v3447 = vpop.f32.mrf.mxu0
    %v3448 = vadd.f32 %v562, %v3447
    %v3449 = vpop.f32.mrf.mxu0
    %v3450 = vpop.f32.mrf.mxu0
    %v3451 = vadd.f32 %v562, %v3450
    %v3452 = vpop.f32.mrf.mxu0
    %3453 = vmatprep.mubr.bf16.mxu0 0
    %3454 = vmatmul.mubr.bf16.gmra.mxu0 %v2164
    %v3455 = vpop.f32.mrf.mxu0
    %v3456 = vadd.f32 %v562, %v3455
    %v3457 = vpop.f32.mrf.mxu0
    %v3458 = vpop.f32.mrf.mxu0
    %v3459 = vadd.f32 %v562, %v3458
    %v3460 = vpop.f32.mrf.mxu0
    %3461 = vmatprep.mubr.bf16.mxu0 0
    %3462 = vmatmul.mubr.bf16.gmra.mxu0 %v2167
    %v3463 = vpop.f32.mrf.mxu0
    %v3464 = vadd.f32 %v562, %v3463
    %v3465 = vpop.f32.mrf.mxu0
    %v3466 = vpop.f32.mrf.mxu0
    %v3467 = vadd.f32 %v562, %v3466
    %v3468 = vpop.f32.mrf.mxu0
    %3469 = vmatprep.mubr.bf16.mxu0 0
    %3470 = vmatmul.mubr.bf16.gmra.mxu0 %v2170
    %v3471 = vpop.f32.mrf.mxu0
    %v3472 = vadd.f32 %v562, %v3471
    %v3473 = vpop.f32.mrf.mxu0
    %v3474 = vpop.f32.mrf.mxu0
    %v3475 = vadd.f32 %v562, %v3474
    %v3476 = vpop.f32.mrf.mxu0
    %3477 = vmatprep.mubr.bf16.mxu0 0
    %3478 = vmatmul.mubr.bf16.gmra.mxu0 %v2173
    %v3479 = vpop.f32.mrf.mxu0
    %v3480 = vadd.f32 %v562, %v3479
    %v3481 = vpop.f32.mrf.mxu0
    %v3482 = vpop.f32.mrf.mxu0
    %v3483 = vadd.f32 %v562, %v3482
    %v3484 = vpop.f32.mrf.mxu0
    %3485 = vmatprep.mubr.bf16.mxu0 0
    %3486 = vmatmul.mubr.bf16.gmra.mxu0 %v2176
    %v3487 = vpop.f32.mrf.mxu0
    %v3488 = vadd.f32 %v562, %v3487
    %v3489 = vpop.f32.mrf.mxu0
    %v3490 = vpop.f32.mrf.mxu0
    %v3491 = vadd.f32 %v562, %v3490
    %v3492 = vpop.f32.mrf.mxu0
    %3493 = vmatprep.mubr.bf16.mxu0 0
    %3494 = vmatmul.mubr.bf16.gmra.mxu0 %v2179
    %v3495 = vpop.f32.mrf.mxu0
    %v3496 = vadd.f32 %v562, %v3495
    %v3497 = vpop.f32.mrf.mxu0
    %v3498 = vpop.f32.mrf.mxu0
    %v3499 = vadd.f32 %v562, %v3498
    %v3500 = vpop.f32.mrf.mxu0
    %3501 = vmatprep.mubr.bf16.mxu0 0
    %3502 = vmatmul.mubr.bf16.gmra.mxu0 %v2182
    %v3503 = vpop.f32.mrf.mxu0
    %v3504 = vadd.f32 %v562, %v3503
    %v3505 = vpop.f32.mrf.mxu0
    %v3506 = vpop.f32.mrf.mxu0
    %v3507 = vadd.f32 %v562, %v3506
    %v3508 = vpop.f32.mrf.mxu0
    %3509 = vmatprep.mubr.bf16.mxu0 0
    %3510 = vmatmul.mubr.bf16.gmra.mxu0 %v2185
    %v3511 = vpop.f32.mrf.mxu0
    %v3512 = vadd.f32 %v562, %v3511
    %v3513 = vpop.f32.mrf.mxu0
    %v3514 = vpop.f32.mrf.mxu0
    %v3515 = vadd.f32 %v562, %v3514
    %v3516 = vpop.f32.mrf.mxu0
    %3517 = vmatprep.mubr.bf16.mxu0 0
    %3518 = vmatmul.mubr.bf16.gmra.mxu0 %v2188
    %v3519 = vpop.f32.mrf.mxu0
    %v3520 = vadd.f32 %v562, %v3519
    %v3521 = vpop.f32.mrf.mxu0
    %v3522 = vpop.f32.mrf.mxu0
    %v3523 = vadd.f32 %v562, %v3522
    %v3524 = vpop.f32.mrf.mxu0
    %3525 = vmatprep.mubr.bf16.mxu0 0
    %3526 = vmatmul.mubr.bf16.gmra.mxu0 %v2191
    %v3527 = vpop.f32.mrf.mxu0
    %v3528 = vadd.f32 %v562, %v3527
    %v3529 = vpop.f32.mrf.mxu0
    %v3530 = vpop.f32.mrf.mxu0
    %v3531 = vadd.f32 %v562, %v3530
    %v3532 = vpop.f32.mrf.mxu0
    %3533 = vmatprep.mubr.bf16.mxu0 0
    %3534 = vmatmul.mubr.bf16.gmra.mxu0 %v2194
    %v3535 = vpop.f32.mrf.mxu0
    %v3536 = vadd.f32 %v562, %v3535
    %v3537 = vpop.f32.mrf.mxu0
    %v3538 = vpop.f32.mrf.mxu0
    %v3539 = vadd.f32 %v562, %v3538
    %v3540 = vpop.f32.mrf.mxu0
    %3541 = vmatprep.mubr.bf16.mxu0 0
    %3542 = vmatmul.mubr.bf16.gmra.mxu0 %v2197
    %v3543 = vpop.f32.mrf.mxu0
    %v3544 = vadd.f32 %v562, %v3543
    %v3545 = vpop.f32.mrf.mxu0
    %v3546 = vpop.f32.mrf.mxu0
    %v3547 = vadd.f32 %v562, %v3546
    %v3548 = vpop.f32.mrf.mxu0
    %3549 = vmatprep.mubr.bf16.mxu0 0
    %3550 = vmatmul.mubr.bf16.gmra.mxu0 %v2200
    %v3551 = vpop.f32.mrf.mxu0
    %v3552 = vadd.f32 %v562, %v3551
    %v3553 = vpop.f32.mrf.mxu0
    %v3554 = vpop.f32.mrf.mxu0
    %v3555 = vadd.f32 %v562, %v3554
    %v3556 = vpop.f32.mrf.mxu0
    %3557 = vmatprep.mubr.bf16.mxu0 0
    %3558 = vmatmul.mubr.bf16.gmra.mxu0 %v2203
    %v3559 = vpop.f32.mrf.mxu0
    %v3560 = vadd.f32 %v562, %v3559
    %v3561 = vpop.f32.mrf.mxu0
    %v3562 = vpop.f32.mrf.mxu0
    %v3563 = vadd.f32 %v562, %v3562
    %v3564 = vpop.f32.mrf.mxu0
    %3565 = vmatprep.mubr.bf16.mxu0 0
    %3566 = vmatmul.mubr.bf16.gmra.mxu0 %v2206
    %v3567 = vpop.f32.mrf.mxu0
    %v3568 = vadd.f32 %v562, %v3567
    %v3569 = vpop.f32.mrf.mxu0
    %v3570 = vpop.f32.mrf.mxu0
    %v3571 = vadd.f32 %v562, %v3570
    %v3572 = vpop.f32.mrf.mxu0
    %3573 = vmatprep.mubr.bf16.mxu0 0
    %3574 = vmatmul.mubr.bf16.gmra.mxu0 %v2209
    %v3575 = vpop.f32.mrf.mxu0
    %v3576 = vadd.f32 %v562, %v3575
    %v3577 = vpop.f32.mrf.mxu0
    %v3578 = vpop.f32.mrf.mxu0
    %v3579 = vadd.f32 %v562, %v3578
    %v3580 = vpop.f32.mrf.mxu0
    %3581 = vmatprep.mubr.bf16.mxu0 0
    %3582 = vmatmul.mubr.bf16.gmra.mxu0 %v2212
    %v3583 = vpop.f32.mrf.mxu0
    %v3584 = vadd.f32 %v562, %v3583
    %v3585 = vpop.f32.mrf.mxu0
    %v3586 = vpop.f32.mrf.mxu0
    %v3587 = vadd.f32 %v562, %v3586
    %v3588 = vpop.f32.mrf.mxu0
    %3589 = vmatprep.mubr.bf16.mxu0 0
    %3590 = vmatmul.mubr.bf16.gmra.mxu0 %v2215
    %v3591 = vpop.f32.mrf.mxu0
    %v3592 = vadd.f32 %v562, %v3591
    %v3593 = vpop.f32.mrf.mxu0
    %v3594 = vpop.f32.mrf.mxu0
    %v3595 = vadd.f32 %v562, %v3594
    %v3596 = vpop.f32.mrf.mxu0
    %3597 = vmatprep.mubr.bf16.mxu0 0
    %3598 = vmatmul.mubr.bf16.gmra.mxu0 %v2218
    %v3599 = vpop.f32.mrf.mxu0
    %v3600 = vadd.f32 %v562, %v3599
    %v3601 = vpop.f32.mrf.mxu0
    %v3602 = vpop.f32.mrf.mxu0
    %v3603 = vadd.f32 %v562, %v3602
    %v3604 = vpop.f32.mrf.mxu0
    %3605 = vmatprep.mubr.bf16.mxu0 0
    %3606 = vmatmul.mubr.bf16.gmra.mxu0 %v2221
    %v3607 = vpop.f32.mrf.mxu0
    %v3608 = vadd.f32 %v562, %v3607
    %v3609 = vpop.f32.mrf.mxu0
    %v3610 = vpop.f32.mrf.mxu0
    %v3611 = vadd.f32 %v562, %v3610
    %v3612 = vpop.f32.mrf.mxu0
    %3613 = vmatprep.mubr.bf16.mxu0 0
    %3614 = vmatmul.mubr.bf16.gmra.mxu0 %v2224
    %v3615 = vpop.f32.mrf.mxu0
    %v3616 = vadd.f32 %v562, %v3615
    %v3617 = vpop.f32.mrf.mxu0
    %v3618 = vpop.f32.mrf.mxu0
    %v3619 = vadd.f32 %v562, %v3618
    %v3620 = vpop.f32.mrf.mxu0
    %3621 = vmatprep.mubr.bf16.mxu0 0
    %3622 = vmatmul.mubr.bf16.gmra.mxu0 %v2227
    %v3623 = vpop.f32.mrf.mxu0
    %v3624 = vadd.f32 %v562, %v3623
    %v3625 = vpop.f32.mrf.mxu0
    %v3626 = vpop.f32.mrf.mxu0
    %v3627 = vadd.f32 %v562, %v3626
    %v3628 = vpop.f32.mrf.mxu0
    %3629 = vmatprep.mubr.bf16.mxu0 0
    %3630 = vmatmul.mubr.bf16.gmra.mxu0 %v2230
    %v3631 = vpop.f32.mrf.mxu0
    %v3632 = vadd.f32 %v562, %v3631
    %v3633 = vpop.f32.mrf.mxu0
    %v3634 = vpop.f32.mrf.mxu0
    %v3635 = vadd.f32 %v562, %v3634
    %v3636 = vpop.f32.mrf.mxu0
    %3637 = vmatprep.mubr.bf16.mxu0 0
    %3638 = vmatmul.mubr.bf16.gmra.mxu0 %v2233
    %v3639 = vpop.f32.mrf.mxu0
    %v3640 = vadd.f32 %v562, %v3639
    %v3641 = vpop.f32.mrf.mxu0
    %v3642 = vpop.f32.mrf.mxu0
    %v3643 = vadd.f32 %v562, %v3642
    %v3644 = vpop.f32.mrf.mxu0
    %3645 = vmatprep.mubr.bf16.mxu0 0
    %3646 = vmatmul.mubr.bf16.gmra.mxu0 %v2236
    %v3647 = vpop.f32.mrf.mxu0
    %v3648 = vadd.f32 %v562, %v3647
    %v3649 = vpop.f32.mrf.mxu0
    %v3650 = vpop.f32.mrf.mxu0
    %v3651 = vadd.f32 %v562, %v3650
    %v3652 = vpop.f32.mrf.mxu0
    %3653 = vmatprep.mubr.bf16.mxu0 0
    %3654 = vmatmul.mubr.bf16.gmra.mxu0 %v2239
    %v3655 = vpop.f32.mrf.mxu0
    %v3656 = vadd.f32 %v562, %v3655
    %v3657 = vpop.f32.mrf.mxu0
    %v3658 = vpop.f32.mrf.mxu0
    %v3659 = vadd.f32 %v562, %v3658
    %v3660 = vpop.f32.mrf.mxu0
    %3661 = vmatprep.mubr.bf16.mxu0 0
    %3662 = vmatmul.mubr.bf16.gmra.mxu0 %v2242
    %v3663 = vpop.f32.mrf.mxu0
    %v3664 = vadd.f32 %v562, %v3663
    %v3665 = vpop.f32.mrf.mxu0
    %v3666 = vpop.f32.mrf.mxu0
    %v3667 = vadd.f32 %v562, %v3666
    %v3668 = vpop.f32.mrf.mxu0
    %3669 = vmatprep.mubr.bf16.mxu0 0
    %3670 = vmatmul.mubr.bf16.gmra.mxu0 %v2245
    %v3671 = vpop.f32.mrf.mxu0
    %v3672 = vadd.f32 %v562, %v3671
    %v3673 = vpop.f32.mrf.mxu0
    %v3674 = vpop.f32.mrf.mxu0
    %v3675 = vadd.f32 %v562, %v3674
    %v3676 = vpop.f32.mrf.mxu0
    %3677 = vmatprep.mubr.bf16.mxu0 0
    %3678 = vmatmul.mubr.bf16.gmra.mxu0 %v2248
    %v3679 = vpop.f32.mrf.mxu0
    %v3680 = vadd.f32 %v562, %v3679
    %v3681 = vpop.f32.mrf.mxu0
    %v3682 = vpop.f32.mrf.mxu0
    %v3683 = vadd.f32 %v562, %v3682
    %v3684 = vpop.f32.mrf.mxu0
    %3685 = vmatprep.mubr.bf16.mxu0 0
    %3686 = vmatmul.mubr.bf16.gmra.mxu0 %v2251
    %v3687 = vpop.f32.mrf.mxu0
    %v3688 = vadd.f32 %v562, %v3687
    %v3689 = vpop.f32.mrf.mxu0
    %v3690 = vpop.f32.mrf.mxu0
    %v3691 = vadd.f32 %v562, %v3690
    %v3692 = vpop.f32.mrf.mxu0
    %3693 = vmatprep.mubr.bf16.mxu0 0
    %3694 = vmatmul.mubr.bf16.gmra.mxu0 %v2254
    %v3695 = vpop.f32.mrf.mxu0
    %v3696 = vadd.f32 %v562, %v3695
    %v3697 = vpop.f32.mrf.mxu0
    %v3698 = vpop.f32.mrf.mxu0
    %v3699 = vadd.f32 %v562, %v3698
    %v3700 = vpop.f32.mrf.mxu0
    %3701 = vmatprep.mubr.bf16.mxu0 0
    %3702 = vmatmul.mubr.bf16.gmra.mxu0 %v2257
    %v3703 = vpop.f32.mrf.mxu0
    %v3704 = vadd.f32 %v562, %v3703
    %v3705 = vpop.f32.mrf.mxu0
    %v3706 = vpop.f32.mrf.mxu0
    %v3707 = vadd.f32 %v562, %v3706
    %v3708 = vpop.f32.mrf.mxu0
    %3709 = vmatprep.mubr.bf16.mxu0 0
    %3710 = vmatmul.mubr.bf16.gmra.mxu0 %v2260
    %v3711 = vpop.f32.mrf.mxu0
    %v3712 = vadd.f32 %v562, %v3711
    %v3713 = vpop.f32.mrf.mxu0
    %v3714 = vpop.f32.mrf.mxu0
    %v3715 = vadd.f32 %v562, %v3714
    %v3716 = vpop.f32.mrf.mxu0
    %3717 = vmatprep.mubr.bf16.mxu0 0
    %3718 = vmatmul.mubr.bf16.gmra.mxu0 %v2263
    %v3719 = vpop.f32.mrf.mxu0
    %v3720 = vadd.f32 %v562, %v3719
    %v3721 = vpop.f32.mrf.mxu0
    %v3722 = vpop.f32.mrf.mxu0
    %v3723 = vadd.f32 %v562, %v3722
    %v3724 = vpop.f32.mrf.mxu0
    %3725 = vmatprep.mubr.bf16.mxu0 0
    %3726 = vmatmul.mubr.bf16.gmra.mxu0 %v2266
    %v3727 = vpop.f32.mrf.mxu0
    %v3728 = vadd.f32 %v562, %v3727
    %v3729 = vpop.f32.mrf.mxu0
    %v3730 = vpop.f32.mrf.mxu0
    %v3731 = vadd.f32 %v562, %v3730
    %v3732 = vpop.f32.mrf.mxu0
    %3733 = vmatprep.mubr.bf16.mxu0 0
    %3734 = vmatmul.mubr.bf16.gmra.mxu0 %v2269
    %v3735 = vpop.f32.mrf.mxu0
    %v3736 = vadd.f32 %v562, %v3735
    %v3737 = vpop.f32.mrf.mxu0
    %v3738 = vpop.f32.mrf.mxu0
    %v3739 = vadd.f32 %v562, %v3738
    %v3740 = vpop.f32.mrf.mxu0
    %3741 = vmatprep.mubr.bf16.mxu0 0
    %3742 = vmatmul.mubr.bf16.gmra.mxu0 %v2272
    %v3743 = vpop.f32.mrf.mxu0
    %v3744 = vadd.f32 %v562, %v3743
    %v3745 = vpop.f32.mrf.mxu0
    %v3746 = vpop.f32.mrf.mxu0
    %v3747 = vadd.f32 %v562, %v3746
    %v3748 = vpop.f32.mrf.mxu0
    %3749 = vmatprep.mubr.bf16.mxu0 0
    %3750 = vmatmul.mubr.bf16.gmra.mxu0 %v2275
    %v3751 = vpop.f32.mrf.mxu0
    %v3752 = vadd.f32 %v562, %v3751
    %v3753 = vpop.f32.mrf.mxu0
    %v3754 = vpop.f32.mrf.mxu0
    %v3755 = vadd.f32 %v562, %v3754
    %v3756 = vpop.f32.mrf.mxu0
    %3757 = vmatprep.mubr.bf16.mxu0 0
    %3758 = vmatmul.mubr.bf16.gmra.mxu0 %v2278
    %v3759 = vpop.f32.mrf.mxu0
    %v3760 = vadd.f32 %v562, %v3759
    %v3761 = vpop.f32.mrf.mxu0
    %v3762 = vpop.f32.mrf.mxu0
    %v3763 = vadd.f32 %v562, %v3762
    %v3764 = vpop.f32.mrf.mxu0
    %3765 = vmatprep.mubr.bf16.mxu0 0
    %3766 = vmatmul.mubr.bf16.gmra.mxu0 %v2281
    %v3767 = vpop.f32.mrf.mxu0
    %v3768 = vadd.f32 %v562, %v3767
    %v3769 = vpop.f32.mrf.mxu0
    %v3770 = vpop.f32.mrf.mxu0
    %v3771 = vadd.f32 %v562, %v3770
    %v3772 = vpop.f32.mrf.mxu0
    %3773 = vmatprep.mubr.bf16.mxu0 0
    %3774 = vmatmul.mubr.bf16.gmra.mxu0 %v2284
    %v3775 = vpop.f32.mrf.mxu0
    %v3776 = vadd.f32 %v562, %v3775
    %v3777 = vpop.f32.mrf.mxu0
    %v3778 = vpop.f32.mrf.mxu0
    %v3779 = vadd.f32 %v562, %v3778
    %v3780 = vpop.f32.mrf.mxu0
    %3781 = vmatprep.mubr.bf16.mxu0 0
    %3782 = vmatmul.mubr.bf16.gmra.mxu0 %v2287
    %v3783 = vpop.f32.mrf.mxu0
    %v3784 = vadd.f32 %v562, %v3783
    %v3785 = vpop.f32.mrf.mxu0
    %v3786 = vpop.f32.mrf.mxu0
    %v3787 = vadd.f32 %v562, %v3786
    %v3788 = vpop.f32.mrf.mxu0
    %3789 = vmatprep.mubr.bf16.mxu0 0
    %3790 = vmatmul.mubr.bf16.gmra.mxu0 %v2290
    %v3791 = vpop.f32.mrf.mxu0
    %v3792 = vadd.f32 %v562, %v3791
    %v3793 = vpop.f32.mrf.mxu0
    %v3794 = vpop.f32.mrf.mxu0
    %v3795 = vadd.f32 %v562, %v3794
    %v3796 = vpop.f32.mrf.mxu0
    %3797 = vmatprep.mubr.bf16.mxu0 0
    %3798 = vmatmul.mubr.bf16.gmra.mxu0 %v2293
    %v3799 = vpop.f32.mrf.mxu0
    %v3800 = vadd.f32 %v562, %v3799
    %v3801 = vpop.f32.mrf.mxu0
    %v3802 = vpop.f32.mrf.mxu0
    %v3803 = vadd.f32 %v562, %v3802
    %v3804 = vpop.f32.mrf.mxu0
    %3805 = vmatprep.mubr.bf16.mxu0 0
    %3806 = vmatmul.mubr.bf16.gmra.mxu0 %v2296
    %v3807 = vpop.f32.mrf.mxu0
    %v3808 = vadd.f32 %v562, %v3807
    %v3809 = vpop.f32.mrf.mxu0
    %v3810 = vpop.f32.mrf.mxu0
    %v3811 = vadd.f32 %v562, %v3810
    %v3812 = vpop.f32.mrf.mxu0
    %3813 = vmatprep.mubr.bf16.mxu0 0
    %3814 = vmatmul.mubr.bf16.gmra.mxu0 %v2299
    %v3815 = vpop.f32.mrf.mxu0
    %v3816 = vadd.f32 %v562, %v3815
    %v3817 = vpop.f32.mrf.mxu0
    %v3818 = vpop.f32.mrf.mxu0
    %v3819 = vadd.f32 %v562, %v3818
    %v3820 = vpop.f32.mrf.mxu0
    %3821 = vmatprep.mubr.bf16.mxu0 0
    %3822 = vmatmul.mubr.bf16.gmra.mxu0 %v2302
    %v3823 = vpop.f32.mrf.mxu0
    %v3824 = vadd.f32 %v562, %v3823
    %v3825 = vpop.f32.mrf.mxu0
    %v3826 = vpop.f32.mrf.mxu0
    %v3827 = vadd.f32 %v562, %v3826
    %v3828 = vpop.f32.mrf.mxu0
    %3829 = vmatprep.mubr.bf16.mxu0 0
    %3830 = vmatmul.mubr.bf16.gmra.mxu0 %v2305
    %v3831 = vpop.f32.mrf.mxu0
    %v3832 = vadd.f32 %v562, %v3831
    %v3833 = vpop.f32.mrf.mxu0
    %v3834 = vpop.f32.mrf.mxu0
    %v3835 = vadd.f32 %v562, %v3834
    %v3836 = vpop.f32.mrf.mxu0
    %3837 = vmatprep.mubr.bf16.mxu0 0
    %3838 = vmatmul.mubr.bf16.gmra.mxu0 %v2308
    %v3839 = vpop.f32.mrf.mxu0
    %v3840 = vadd.f32 %v562, %v3839
    %v3841 = vpop.f32.mrf.mxu0
    %v3842 = vpop.f32.mrf.mxu0
    %v3843 = vadd.f32 %v562, %v3842
    %v3844 = vpop.f32.mrf.mxu0
    %3845 = vmatprep.mubr.bf16.mxu0 0
    %3846 = vmatmul.mubr.bf16.gmra.mxu0 %v2311
    %v3847 = vpop.f32.mrf.mxu0
    %v3848 = vadd.f32 %v562, %v3847
    %v3849 = vpop.f32.mrf.mxu0
    %v3850 = vpop.f32.mrf.mxu0
    %v3851 = vadd.f32 %v562, %v3850
    %v3852 = vpop.f32.mrf.mxu0
    %3853 = vmatprep.mubr.bf16.mxu0 0
    %3854 = vmatmul.mubr.bf16.gmra.mxu0 %v2314
    %v3855 = vpop.f32.mrf.mxu0
    %v3856 = vadd.f32 %v562, %v3855
    %v3857 = vpop.f32.mrf.mxu0
    %v3858 = vpop.f32.mrf.mxu0
    %v3859 = vadd.f32 %v562, %v3858
    %v3860 = vpop.f32.mrf.mxu0
    %3861 = vmatprep.mubr.bf16.mxu0 0
    %3862 = vmatmul.mubr.bf16.gmra.mxu0 %v2317
    %v3863 = vpop.f32.mrf.mxu0
    %v3864 = vadd.f32 %v562, %v3863
    %v3865 = vpop.f32.mrf.mxu0
    %v3866 = vpop.f32.mrf.mxu0
    %v3867 = vadd.f32 %v562, %v3866
    %v3868 = vpop.f32.mrf.mxu0
    %3869 = vmatprep.mubr.bf16.mxu0 0
    %3870 = vmatmul.mubr.bf16.gmra.mxu0 %v2320
    %v3871 = vpop.f32.mrf.mxu0
    %v3872 = vadd.f32 %v562, %v3871
    %v3873 = vpop.f32.mrf.mxu0
    %v3874 = vpop.f32.mrf.mxu0
    %v3875 = vadd.f32 %v562, %v3874
    %v3876 = vpop.f32.mrf.mxu0
    %3877 = vmatprep.mubr.bf16.mxu0 0
    %3878 = vmatmul.mubr.bf16.gmra.mxu0 %v2323
    %v3879 = vpop.f32.mrf.mxu0
    %v3880 = vadd.f32 %v562, %v3879
    %v3881 = vpop.f32.mrf.mxu0
    %v3882 = vpop.f32.mrf.mxu0
    %v3883 = vadd.f32 %v562, %v3882
    %v3884 = vpop.f32.mrf.mxu0
    %3885 = vmatprep.mubr.bf16.mxu0 0
    %3886 = vmatmul.mubr.bf16.gmra.mxu0 %v2326
    %v3887 = vpop.f32.mrf.mxu0
    %v3888 = vadd.f32 %v562, %v3887
    %v3889 = vpop.f32.mrf.mxu0
    %v3890 = vpop.f32.mrf.mxu0
    %v3891 = vadd.f32 %v562, %v3890
    %v3892 = vpop.f32.mrf.mxu0
    %3893 = vmatprep.mubr.bf16.mxu0 0
    %3894 = vmatmul.mubr.bf16.gmra.mxu0 %v2329
    %v3895 = vpop.f32.mrf.mxu0
    %v3896 = vadd.f32 %v562, %v3895
    %v3897 = vpop.f32.mrf.mxu0
    %v3898 = vpop.f32.mrf.mxu0
    %v3899 = vadd.f32 %v562, %v3898
    %v3900 = vpop.f32.mrf.mxu0
    %3901 = vmatprep.mubr.bf16.mxu0 0
    %3902 = vmatmul.mubr.bf16.gmra.mxu0 %v2332
    %v3903 = vpop.f32.mrf.mxu0
    %v3904 = vadd.f32 %v562, %v3903
    %v3905 = vpop.f32.mrf.mxu0
    %v3906 = vpop.f32.mrf.mxu0
    %v3907 = vadd.f32 %v562, %v3906
    %v3908 = vpop.f32.mrf.mxu0
    %3909 = vmatprep.mubr.bf16.mxu0 0
    %3910 = vmatmul.mubr.bf16.gmra.mxu0 %v2335
    %v3911 = vpop.f32.mrf.mxu0
    %v3912 = vadd.f32 %v562, %v3911
    %v3913 = vpop.f32.mrf.mxu0
    %v3914 = vpop.f32.mrf.mxu0
    %v3915 = vadd.f32 %v562, %v3914
    %v3916 = vpop.f32.mrf.mxu0
    %3917 = vmatprep.mubr.bf16.mxu0 0
    %3918 = vmatmul.mubr.bf16.gmra.mxu0 %v2338
    %v3919 = vpop.f32.mrf.mxu0
    %v3920 = vadd.f32 %v562, %v3919
    %v3921 = vpop.f32.mrf.mxu0
    %v3922 = vpop.f32.mrf.mxu0
    %v3923 = vadd.f32 %v562, %v3922
    %v3924 = vpop.f32.mrf.mxu0
    %3925 = vmatprep.mubr.bf16.mxu0 0
    %3926 = vmatmul.mubr.bf16.gmra.mxu0 %v2341
    %v3927 = vpop.f32.mrf.mxu0
    %v3928 = vadd.f32 %v562, %v3927
    %v3929 = vpop.f32.mrf.mxu0
    %v3930 = vpop.f32.mrf.mxu0
    %v3931 = vadd.f32 %v562, %v3930
    %v3932 = vpop.f32.mrf.mxu0
    %3933 = vmatprep.mubr.bf16.mxu0 0
    %3934 = vmatmul.mubr.bf16.gmra.mxu0 %v2344
    %v3935 = vpop.f32.mrf.mxu0
    %v3936 = vadd.f32 %v562, %v3935
    %v3937 = vpop.f32.mrf.mxu0
    %v3938 = vpop.f32.mrf.mxu0
    %v3939 = vadd.f32 %v562, %v3938
    %v3940 = vpop.f32.mrf.mxu0
    %3941 = vmatprep.mubr.bf16.mxu0 0
    %3942 = vmatmul.mubr.bf16.gmra.mxu0 %v2347
    %v3943 = vpop.f32.mrf.mxu0
    %v3944 = vadd.f32 %v562, %v3943
    %v3945 = vpop.f32.mrf.mxu0
    %v3946 = vpop.f32.mrf.mxu0
    %v3947 = vadd.f32 %v562, %v3946
    %v3948 = vpop.f32.mrf.mxu0
    %3949 = vmatprep.mubr.bf16.mxu0 0
    %3950 = vmatmul.mubr.bf16.gmra.mxu0 %v2350
    %v3951 = vpop.f32.mrf.mxu0
    %v3952 = vadd.f32 %v562, %v3951
    %v3953 = vpop.f32.mrf.mxu0
    %v3954 = vpop.f32.mrf.mxu0
    %v3955 = vadd.f32 %v562, %v3954
    %v3956 = vpop.f32.mrf.mxu0
    %3957 = vmatprep.mubr.bf16.mxu0 0
    %3958 = vmatmul.mubr.bf16.gmra.mxu0 %v2353
    %v3959 = vpop.f32.mrf.mxu0
    %v3960 = vadd.f32 %v562, %v3959
    %v3961 = vpop.f32.mrf.mxu0
    %v3962 = vpop.f32.mrf.mxu0
    %v3963 = vadd.f32 %v562, %v3962
    %v3964 = vpop.f32.mrf.mxu0
    %3965 = vmatprep.mubr.bf16.mxu0 0
    %3966 = vmatmul.mubr.bf16.gmra.mxu0 %v2356
    %v3967 = vpop.f32.mrf.mxu0
    %v3968 = vadd.f32 %v562, %v3967
    %v3969 = vpop.f32.mrf.mxu0
    %v3970 = vpop.f32.mrf.mxu0
    %v3971 = vadd.f32 %v562, %v3970
    %v3972 = vpop.f32.mrf.mxu0
    %3973 = vmatprep.mubr.bf16.mxu0 0
    %3974 = vmatmul.mubr.bf16.gmra.mxu0 %v2359
    %v3975 = vpop.f32.mrf.mxu0
    %v3976 = vadd.f32 %v562, %v3975
    %v3977 = vpop.f32.mrf.mxu0
    %v3978 = vpop.f32.mrf.mxu0
    %v3979 = vadd.f32 %v562, %v3978
    %v3980 = vpop.f32.mrf.mxu0
    %3981 = vmatprep.mubr.bf16.mxu0 0
    %3982 = vmatmul.mubr.bf16.gmra.mxu0 %v2362
    %v3983 = vpop.f32.mrf.mxu0
    %v3984 = vadd.f32 %v562, %v3983
    %v3985 = vpop.f32.mrf.mxu0
    %v3986 = vpop.f32.mrf.mxu0
    %v3987 = vadd.f32 %v562, %v3986
    %v3988 = vpop.f32.mrf.mxu0
    %3989 = vmatprep.mubr.bf16.mxu0 0
    %3990 = vmatmul.mubr.bf16.gmra.mxu0 %v2365
    %v3991 = vpop.f32.mrf.mxu0
    %v3992 = vadd.f32 %v562, %v3991
    %v3993 = vpop.f32.mrf.mxu0
    %v3994 = vpop.f32.mrf.mxu0
    %v3995 = vadd.f32 %v562, %v3994
    %v3996 = vpop.f32.mrf.mxu0
    %3997 = vmatprep.mubr.bf16.mxu0 0
    %3998 = vmatmul.mubr.bf16.gmra.mxu0 %v2368
    %v3999 = vpop.f32.mrf.mxu0
    %v4000 = vadd.f32 %v562, %v3999
    %v4001 = vpop.f32.mrf.mxu0
    %v4002 = vpop.f32.mrf.mxu0
    %v4003 = vadd.f32 %v562, %v4002
    %v4004 = vpop.f32.mrf.mxu0
    %4005 = vmatprep.mubr.bf16.mxu0 0
    %4006 = vmatmul.mubr.bf16.gmra.mxu0 %v2371
    %v4007 = vpop.f32.mrf.mxu0
    %v4008 = vadd.f32 %v562, %v4007
    %v4009 = vpop.f32.mrf.mxu0
    %v4010 = vpop.f32.mrf.mxu0
    %v4011 = vadd.f32 %v562, %v4010
    %v4012 = vpop.f32.mrf.mxu0
    %4013 = vmatprep.mubr.bf16.mxu0 0
    %4014 = vmatmul.mubr.bf16.gmra.mxu0 %v2374
    %v4015 = vpop.f32.mrf.mxu0
    %v4016 = vadd.f32 %v562, %v4015
    %v4017 = vpop.f32.mrf.mxu0
    %v4018 = vpop.f32.mrf.mxu0
    %v4019 = vadd.f32 %v562, %v4018
    %v4020 = vpop.f32.mrf.mxu0
    %4021 = vmatprep.mubr.bf16.mxu0 0
    %4022 = vmatmul.mubr.bf16.gmra.mxu0 %v2377
    %v4023 = vpop.f32.mrf.mxu0
    %v4024 = vadd.f32 %v562, %v4023
    %v4025 = vpop.f32.mrf.mxu0
    %v4026 = vpop.f32.mrf.mxu0
    %v4027 = vadd.f32 %v562, %v4026
    %v4028 = vpop.f32.mrf.mxu0
    %4029 = vmatprep.mubr.bf16.mxu0 0
    %4030 = vmatmul.mubr.bf16.gmra.mxu0 %v2380
    %v4031 = vpop.f32.mrf.mxu0
    %v4032 = vadd.f32 %v562, %v4031
    %v4033 = vpop.f32.mrf.mxu0
    %v4034 = vpop.f32.mrf.mxu0
    %v4035 = vadd.f32 %v562, %v4034
    %v4036 = vpop.f32.mrf.mxu0
    %4037 = vmatprep.mubr.bf16.mxu0 0
    %4038 = vmatmul.mubr.bf16.gmra.mxu0 %v2383
    %v4039 = vpop.f32.mrf.mxu0
    %v4040 = vadd.f32 %v562, %v4039
    %v4041 = vpop.f32.mrf.mxu0
    %v4042 = vpop.f32.mrf.mxu0
    %v4043 = vadd.f32 %v562, %v4042
    %v4044 = vpop.f32.mrf.mxu0
    %4045 = vmatprep.mubr.bf16.mxu0 0
    %4046 = vmatmul.mubr.bf16.gmra.mxu0 %v2386
    %v4047 = vpop.f32.mrf.mxu0
    %v4048 = vadd.f32 %v562, %v4047
    %v4049 = vpop.f32.mrf.mxu0
    %v4050 = vpop.f32.mrf.mxu0
    %v4051 = vadd.f32 %v562, %v4050
    %v4052 = vpop.f32.mrf.mxu0
    %4053 = vmatprep.mubr.bf16.mxu0 0
    %4054 = vmatmul.mubr.bf16.gmra.mxu0 %v2389
    %v4055 = vpop.f32.mrf.mxu0
    %v4056 = vadd.f32 %v562, %v4055
    %v4057 = vpop.f32.mrf.mxu0
    %v4058 = vpop.f32.mrf.mxu0
    %v4059 = vadd.f32 %v562, %v4058
    %v4060 = vpop.f32.mrf.mxu0
    %4061 = vmatprep.mubr.bf16.mxu0 0
    %4062 = vmatmul.mubr.bf16.gmra.mxu0 %v2392
    %v4063 = vpop.f32.mrf.mxu0
    %v4064 = vadd.f32 %v562, %v4063
    %v4065 = vpop.f32.mrf.mxu0
    %v4066 = vpop.f32.mrf.mxu0
    %v4067 = vadd.f32 %v562, %v4066
    %v4068 = vpop.f32.mrf.mxu0
    %4069 = vmatprep.mubr.bf16.mxu0 0
    %4070 = vmatmul.mubr.bf16.gmra.mxu0 %v2395
    %v4071 = vpop.f32.mrf.mxu0
    %v4072 = vadd.f32 %v562, %v4071
    %v4073 = vpop.f32.mrf.mxu0
    %v4074 = vpop.f32.mrf.mxu0
    %v4075 = vadd.f32 %v562, %v4074
    %v4076 = vpop.f32.mrf.mxu0
    %4077 = vmatprep.mubr.bf16.mxu0 0
    %4078 = vmatmul.mubr.bf16.gmra.mxu0 %v2398
    %v4079 = vpop.f32.mrf.mxu0
    %v4080 = vadd.f32 %v562, %v4079
    %v4081 = vpop.f32.mrf.mxu0
    %v4082 = vpop.f32.mrf.mxu0
    %v4083 = vadd.f32 %v562, %v4082
    %v4084 = vpop.f32.mrf.mxu0
    %4085 = vmatprep.mubr.bf16.mxu0 0
    %4086 = vmatmul.mubr.bf16.gmra.mxu0 %v2401
    %v4087 = vpop.f32.mrf.mxu0
    %v4088 = vadd.f32 %v562, %v4087
    %v4089 = vpop.f32.mrf.mxu0
    %v4090 = vpop.f32.mrf.mxu0
    %v4091 = vadd.f32 %v562, %v4090
    %v4092 = vpop.f32.mrf.mxu0
    %4093 = vmatprep.mubr.bf16.mxu0 0
    %4094 = vmatmul.mubr.bf16.gmra.mxu0 %v2404
    %v4095 = vpop.f32.mrf.mxu0
    %v4096 = vadd.f32 %v562, %v4095
    %v4097 = vpop.f32.mrf.mxu0
    %v4098 = vpop.f32.mrf.mxu0
    %v4099 = vadd.f32 %v562, %v4098
    %v4100 = vpop.f32.mrf.mxu0
    %4101 = vmatprep.mubr.bf16.mxu0 0
    %4102 = vmatmul.mubr.bf16.gmra.mxu0 %v2407
    %v4103 = vpop.f32.mrf.mxu0
    %v4104 = vadd.f32 %v562, %v4103
    %v4105 = vpop.f32.mrf.mxu0
    %v4106 = vpop.f32.mrf.mxu0
    %v4107 = vadd.f32 %v562, %v4106
    %v4108 = vpop.f32.mrf.mxu0
    %4109 = vmatprep.mubr.bf16.mxu0 0
    %4110 = vmatmul.mubr.bf16.gmra.mxu0 %v2410
    %v4111 = vpop.f32.mrf.mxu0
    %v4112 = vadd.f32 %v562, %v4111
    %v4113 = vpop.f32.mrf.mxu0
    %v4114 = vpop.f32.mrf.mxu0
    %v4115 = vadd.f32 %v562, %v4114
    %v4116 = vpop.f32.mrf.mxu0
    %4117 = vmatprep.mubr.bf16.mxu0 0
    %4118 = vmatmul.mubr.bf16.gmra.mxu0 %v2413
    %v4119 = vpop.f32.mrf.mxu0
    %v4120 = vadd.f32 %v562, %v4119
    %v4121 = vpop.f32.mrf.mxu0
    %v4122 = vpop.f32.mrf.mxu0
    %v4123 = vadd.f32 %v562, %v4122
    %v4124 = vpop.f32.mrf.mxu0
    %4125 = vmatprep.mubr.bf16.mxu0 0
    %4126 = vmatmul.mubr.bf16.gmra.mxu0 %v2416
    %v4127 = vpop.f32.mrf.mxu0
    %v4128 = vadd.f32 %v562, %v4127
    %v4129 = vpop.f32.mrf.mxu0
    %v4130 = vpop.f32.mrf.mxu0
    %v4131 = vadd.f32 %v562, %v4130
    %v4132 = vpop.f32.mrf.mxu0
    %4133 = vmatprep.mubr.bf16.mxu0 0
    %4134 = vmatmul.mubr.bf16.gmra.mxu0 %v2419
    %v4135 = vpop.f32.mrf.mxu0
    %v4136 = vadd.f32 %v562, %v4135
    %v4137 = vpop.f32.mrf.mxu0
    %v4138 = vpop.f32.mrf.mxu0
    %v4139 = vadd.f32 %v562, %v4138
    %v4140 = vpop.f32.mrf.mxu0
    %4141 = vmatprep.mubr.bf16.mxu0 0
    %4142 = vmatmul.mubr.bf16.gmra.mxu0 %v2422
    %v4143 = vpop.f32.mrf.mxu0
    %v4144 = vadd.f32 %v562, %v4143
    %v4145 = vpop.f32.mrf.mxu0
    %v4146 = vpop.f32.mrf.mxu0
    %v4147 = vadd.f32 %v562, %v4146
    %v4148 = vpop.f32.mrf.mxu0
    %4149 = vmatprep.mubr.bf16.mxu0 0
    %4150 = vmatmul.mubr.bf16.gmra.mxu0 %v2425
    %v4151 = vpop.f32.mrf.mxu0
    %v4152 = vadd.f32 %v562, %v4151
    %v4153 = vpop.f32.mrf.mxu0
    %v4154 = vpop.f32.mrf.mxu0
    %v4155 = vadd.f32 %v562, %v4154
    %v4156 = vpop.f32.mrf.mxu0
    %4157 = vmatprep.mubr.bf16.mxu0 0
    %4158 = vmatmul.mubr.bf16.gmra.mxu0 %v2428
    %v4159 = vpop.f32.mrf.mxu0
    %v4160 = vadd.f32 %v562, %v4159
    %v4161 = vpop.f32.mrf.mxu0
    %v4162 = vpop.f32.mrf.mxu0
    %v4163 = vadd.f32 %v562, %v4162
    %v4164 = vpop.f32.mrf.mxu0
    %4165 = vmatprep.mubr.bf16.mxu0 0
    %4166 = vmatmul.mubr.bf16.gmra.mxu0 %v2431
    %v4167 = vpop.f32.mrf.mxu0
    %v4168 = vadd.f32 %v562, %v4167
    %v4169 = vpop.f32.mrf.mxu0
    %v4170 = vpop.f32.mrf.mxu0
    %v4171 = vadd.f32 %v562, %v4170
    %v4172 = vpop.f32.mrf.mxu0
    %4173 = vmatprep.mubr.bf16.mxu0 0
    %4174 = vmatmul.mubr.bf16.gmra.mxu0 %v2434
    %v4175 = vpop.f32.mrf.mxu0
    %v4176 = vadd.f32 %v562, %v4175
    %v4177 = vpop.f32.mrf.mxu0
    %v4178 = vpop.f32.mrf.mxu0
    %v4179 = vadd.f32 %v562, %v4178
    %v4180 = vpop.f32.mrf.mxu0
    %4181 = vmatprep.mubr.bf16.mxu0 0
    %4182 = vmatmul.mubr.bf16.gmra.mxu0 %v2437
    %v4183 = vpop.f32.mrf.mxu0
    %v4184 = vadd.f32 %v562, %v4183
    %v4185 = vpop.f32.mrf.mxu0
    %v4186 = vpop.f32.mrf.mxu0
    %v4187 = vadd.f32 %v562, %v4186
    %v4188 = vpop.f32.mrf.mxu0
    %4189 = vmatprep.mubr.bf16.mxu0 0
    %4190 = vmatmul.mubr.bf16.gmra.mxu0 %v2440
    %v4191 = vpop.f32.mrf.mxu0
    %v4192 = vadd.f32 %v562, %v4191
    %v4193 = vpop.f32.mrf.mxu0
    %v4194 = vpop.f32.mrf.mxu0
    %v4195 = vadd.f32 %v562, %v4194
    %v4196 = vpop.f32.mrf.mxu0
    %4197 = vmatprep.mubr.bf16.mxu0 0
    %4198 = vmatmul.mubr.bf16.gmra.mxu0 %v2443
    %v4199 = vpop.f32.mrf.mxu0
    %v4200 = vadd.f32 %v562, %v4199
    %v4201 = vpop.f32.mrf.mxu0
    %v4202 = vpop.f32.mrf.mxu0
    %v4203 = vadd.f32 %v562, %v4202
    %v4204 = vpop.f32.mrf.mxu0
    %4205 = vmatprep.mubr.bf16.mxu0 0
    %4206 = vmatmul.mubr.bf16.gmra.mxu0 %v2446
    %v4207 = vpop.f32.mrf.mxu0
    %v4208 = vadd.f32 %v562, %v4207
    %v4209 = vpop.f32.mrf.mxu0
    %v4210 = vpop.f32.mrf.mxu0
    %v4211 = vadd.f32 %v562, %v4210
    %v4212 = vpop.f32.mrf.mxu0
    %4213 = vmatprep.mubr.bf16.mxu0 0
    %4214 = vmatmul.mubr.bf16.gmra.mxu0 %v2449
    %v4215 = vpop.f32.mrf.mxu0
    %v4216 = vadd.f32 %v562, %v4215
    %v4217 = vpop.f32.mrf.mxu0
    %v4218 = vpop.f32.mrf.mxu0
    %v4219 = vadd.f32 %v562, %v4218
    %v4220 = vpop.f32.mrf.mxu0
    %4221 = vmatprep.mubr.bf16.mxu0 0
    %4222 = vmatmul.mubr.bf16.gmra.mxu0 %v2452
    %v4223 = vpop.f32.mrf.mxu0
    %v4224 = vadd.f32 %v562, %v4223
    %v4225 = vpop.f32.mrf.mxu0
    %v4226 = vpop.f32.mrf.mxu0
    %v4227 = vadd.f32 %v562, %v4226
    %v4228 = vpop.f32.mrf.mxu0
    %4229 = vmatprep.mubr.bf16.mxu0 0
    %4230 = vmatmul.mubr.bf16.gmra.mxu0 %v2455
    %v4231 = vpop.f32.mrf.mxu0
    %v4232 = vadd.f32 %v562, %v4231
    %v4233 = vpop.f32.mrf.mxu0
    %v4234 = vpop.f32.mrf.mxu0
    %v4235 = vadd.f32 %v562, %v4234
    %v4236 = vpop.f32.mrf.mxu0
    %4237 = vmatprep.mubr.bf16.mxu0 0
    %4238 = vmatmul.mubr.bf16.gmra.mxu0 %v2458
    %v4239 = vpop.f32.mrf.mxu0
    %v4240 = vadd.f32 %v562, %v4239
    %v4241 = vpop.f32.mrf.mxu0
    %v4242 = vpop.f32.mrf.mxu0
    %v4243 = vadd.f32 %v562, %v4242
    %v4244 = vpop.f32.mrf.mxu0
    %4245 = vmatprep.mubr.bf16.mxu0 0
    %4246 = vmatmul.mubr.bf16.gmra.mxu0 %v2461
    %v4247 = vpop.f32.mrf.mxu0
    %v4248 = vadd.f32 %v562, %v4247
    %v4249 = vpop.f32.mrf.mxu0
    %v4250 = vpop.f32.mrf.mxu0
    %v4251 = vadd.f32 %v562, %v4250
    %v4252 = vpop.f32.mrf.mxu0
    %4253 = vmatprep.mubr.bf16.mxu0 0
    %4254 = vmatmul.mubr.bf16.gmra.mxu0 %v2464
    %v4255 = vpop.f32.mrf.mxu0
    %v4256 = vadd.f32 %v562, %v4255
    %v4257 = vpop.f32.mrf.mxu0
    %v4258 = vpop.f32.mrf.mxu0
    %v4259 = vadd.f32 %v562, %v4258
    %v4260 = vpop.f32.mrf.mxu0
    %4261 = vmatprep.mubr.bf16.mxu0 0
    %4262 = vmatmul.mubr.bf16.gmra.mxu0 %v2467
    %v4263 = vpop.f32.mrf.mxu0
    %v4264 = vadd.f32 %v562, %v4263
    %v4265 = vpop.f32.mrf.mxu0
    %v4266 = vpop.f32.mrf.mxu0
    %v4267 = vadd.f32 %v562, %v4266
    %v4268 = vpop.f32.mrf.mxu0
    %4269 = vmatprep.mubr.bf16.mxu0 0
    %4270 = vmatmul.mubr.bf16.gmra.mxu0 %v2470
    %v4271 = vpop.f32.mrf.mxu0
    %v4272 = vadd.f32 %v562, %v4271
    %v4273 = vpop.f32.mrf.mxu0
    %v4274 = vpop.f32.mrf.mxu0
    %v4275 = vadd.f32 %v562, %v4274
    %v4276 = vpop.f32.mrf.mxu0
    %4277 = vmatprep.mubr.bf16.mxu0 0
    %4278 = vmatmul.mubr.bf16.gmra.mxu0 %v2473
    %v4279 = vpop.f32.mrf.mxu0
    %v4280 = vadd.f32 %v562, %v4279
    %v4281 = vpop.f32.mrf.mxu0
    %v4282 = vpop.f32.mrf.mxu0
    %v4283 = vadd.f32 %v562, %v4282
    %v4284 = vpop.f32.mrf.mxu0
    %4285 = vmatprep.mubr.bf16.mxu0 0
    %4286 = vmatmul.mubr.bf16.gmra.mxu0 %v2476
    %v4287 = vpop.f32.mrf.mxu0
    %v4288 = vadd.f32 %v562, %v4287
    %v4289 = vpop.f32.mrf.mxu0
    %v4290 = vpop.f32.mrf.mxu0
    %v4291 = vadd.f32 %v562, %v4290
    %v4292 = vpop.f32.mrf.mxu0
    %4293 = vmatprep.mubr.bf16.mxu0 0
    %4294 = vmatmul.mubr.bf16.gmra.mxu0 %v2479
    %v4295 = vpop.f32.mrf.mxu0
    %v4296 = vadd.f32 %v562, %v4295
    %v4297 = vpop.f32.mrf.mxu0
    %v4298 = vpop.f32.mrf.mxu0
    %v4299 = vadd.f32 %v562, %v4298
    %v4300 = vpop.f32.mrf.mxu0
    %4301 = vmatprep.mubr.bf16.mxu0 0
    %4302 = vmatmul.mubr.bf16.gmra.mxu0 %v2482
    %v4303 = vpop.f32.mrf.mxu0
    %v4304 = vadd.f32 %v562, %v4303
    %v4305 = vpop.f32.mrf.mxu0
    %v4306 = vpop.f32.mrf.mxu0
    %v4307 = vadd.f32 %v562, %v4306
    %v4308 = vpop.f32.mrf.mxu0
    %4309 = vmatprep.mubr.bf16.mxu0 0
    %4310 = vmatmul.mubr.bf16.gmra.mxu0 %v2485
    %v4311 = vpop.f32.mrf.mxu0
    %v4312 = vadd.f32 %v562, %v4311
    %v4313 = vpop.f32.mrf.mxu0
    %v4314 = vpop.f32.mrf.mxu0
    %v4315 = vadd.f32 %v562, %v4314
    %v4316 = vpop.f32.mrf.mxu0
    %4317 = vmatprep.mubr.bf16.mxu0 0
    %4318 = vmatmul.mubr.bf16.gmra.mxu0 %v2488
    %v4319 = vpop.f32.mrf.mxu0
    %v4320 = vadd.f32 %v562, %v4319
    %v4321 = vpop.f32.mrf.mxu0
    %v4322 = vpop.f32.mrf.mxu0
    %v4323 = vadd.f32 %v562, %v4322
    %v4324 = vpop.f32.mrf.mxu0
    %4325 = vmatprep.mubr.bf16.mxu0 0
    %4326 = vmatmul.mubr.bf16.gmra.mxu0 %v2491
    %v4327 = vpop.f32.mrf.mxu0
    %v4328 = vadd.f32 %v562, %v4327
    %v4329 = vpop.f32.mrf.mxu0
    %v4330 = vpop.f32.mrf.mxu0
    %v4331 = vadd.f32 %v562, %v4330
    %v4332 = vpop.f32.mrf.mxu0
    %4333 = vmatprep.mubr.bf16.mxu0 0
    %4334 = vmatmul.mubr.bf16.gmra.mxu0 %v2494
    %v4335 = vpop.f32.mrf.mxu0
    %v4336 = vadd.f32 %v562, %v4335
    %v4337 = vpop.f32.mrf.mxu0
    %v4338 = vpop.f32.mrf.mxu0
    %v4339 = vadd.f32 %v562, %v4338
    %v4340 = vpop.f32.mrf.mxu0
    %4341 = vmatprep.mubr.bf16.mxu0 0
    %4342 = vmatmul.mubr.bf16.gmra.mxu0 %v2497
    %v4343 = vpop.f32.mrf.mxu0
    %v4344 = vadd.f32 %v562, %v4343
    %v4345 = vpop.f32.mrf.mxu0
    %v4346 = vpop.f32.mrf.mxu0
    %v4347 = vadd.f32 %v562, %v4346
    %v4348 = vpop.f32.mrf.mxu0
    %4349 = vmatprep.mubr.bf16.mxu0 0
    %4350 = vmatmul.mubr.bf16.gmra.mxu0 %v2500
    %v4351 = vpop.f32.mrf.mxu0
    %v4352 = vadd.f32 %v562, %v4351
    %v4353 = vpop.f32.mrf.mxu0
    %v4354 = vpop.f32.mrf.mxu0
    %v4355 = vadd.f32 %v562, %v4354
    %v4356 = vpop.f32.mrf.mxu0
    %4357 = vmatprep.mubr.bf16.mxu0 0
    %4358 = vmatmul.mubr.bf16.gmra.mxu0 %v2503
    %v4359 = vpop.f32.mrf.mxu0
    %v4360 = vadd.f32 %v562, %v4359
    %v4361 = vpop.f32.mrf.mxu0
    %v4362 = vpop.f32.mrf.mxu0
    %v4363 = vadd.f32 %v562, %v4362
    %v4364 = vpop.f32.mrf.mxu0
    %4365 = vmatprep.mubr.bf16.mxu0 0
    %4366 = vmatmul.mubr.bf16.gmra.mxu0 %v2506
    %v4367 = vpop.f32.mrf.mxu0
    %v4368 = vadd.f32 %v562, %v4367
    %v4369 = vpop.f32.mrf.mxu0
    %v4370 = vpop.f32.mrf.mxu0
    %v4371 = vadd.f32 %v562, %v4370
    %v4372 = vpop.f32.mrf.mxu0
    %4373 = vmatprep.mubr.bf16.mxu0 0
    %4374 = vmatmul.mubr.bf16.gmra.mxu0 %v2509
    %v4375 = vpop.f32.mrf.mxu0
    %v4376 = vadd.f32 %v562, %v4375
    %v4377 = vpop.f32.mrf.mxu0
    %v4378 = vpop.f32.mrf.mxu0
    %v4379 = vadd.f32 %v562, %v4378
    %v4380 = vpop.f32.mrf.mxu0
    %4381 = vmatprep.mubr.bf16.mxu0 0
    %4382 = vmatmul.mubr.bf16.gmra.mxu0 %v2512
    %v4383 = vpop.f32.mrf.mxu0
    %v4384 = vadd.f32 %v562, %v4383
    %v4385 = vpop.f32.mrf.mxu0
    %v4386 = vpop.f32.mrf.mxu0
    %v4387 = vadd.f32 %v562, %v4386
    %v4388 = vpop.f32.mrf.mxu0
    %4389 = vmatprep.mubr.bf16.mxu0 0
    %4390 = vmatmul.mubr.bf16.gmra.mxu0 %v2515
    %v4391 = vpop.f32.mrf.mxu0
    %v4392 = vadd.f32 %v562, %v4391
    %v4393 = vpop.f32.mrf.mxu0
    %v4394 = vpop.f32.mrf.mxu0
    %v4395 = vadd.f32 %v562, %v4394
    %v4396 = vpop.f32.mrf.mxu0
    %4397 = vmatprep.mubr.bf16.mxu0 0
    %4398 = vmatmul.mubr.bf16.gmra.mxu0 %v2518
    %v4399 = vpop.f32.mrf.mxu0
    %v4400 = vadd.f32 %v562, %v4399
    %v4401 = vpop.f32.mrf.mxu0
    %v4402 = vpop.f32.mrf.mxu0
    %v4403 = vadd.f32 %v562, %v4402
    %v4404 = vpop.f32.mrf.mxu0
    %4405 = vmatprep.mubr.bf16.mxu0 0
    %4406 = vmatmul.mubr.bf16.gmra.mxu0 %v2521
    %v4407 = vpop.f32.mrf.mxu0
    %v4408 = vadd.f32 %v562, %v4407
    %v4409 = vpop.f32.mrf.mxu0
    %v4410 = vpop.f32.mrf.mxu0
    %v4411 = vadd.f32 %v562, %v4410
    %v4412 = vpop.f32.mrf.mxu0
    %4413 = vmatprep.mubr.bf16.mxu0 0
    %4414 = vmatmul.mubr.bf16.gmra.mxu0 %v2524
    %v4415 = vpop.f32.mrf.mxu0
    %v4416 = vadd.f32 %v562, %v4415
    %v4417 = vpop.f32.mrf.mxu0
    %v4418 = vpop.f32.mrf.mxu0
    %v4419 = vadd.f32 %v562, %v4418
    %v4420 = vpop.f32.mrf.mxu0
    %4421 = vmatprep.mubr.bf16.mxu0 0
    %4422 = vmatmul.mubr.bf16.gmra.mxu0 %v2527
    %v4423 = vpop.f32.mrf.mxu0
    %v4424 = vadd.f32 %v562, %v4423
    %v4425 = vpop.f32.mrf.mxu0
    %v4426 = vpop.f32.mrf.mxu0
    %v4427 = vadd.f32 %v562, %v4426
    %v4428 = vpop.f32.mrf.mxu0
    %4429 = vmatprep.mubr.bf16.mxu0 0
    %4430 = vmatmul.mubr.bf16.gmra.mxu0 %v2530
    %v4431 = vpop.f32.mrf.mxu0
    %v4432 = vadd.f32 %v562, %v4431
    %v4433 = vpop.f32.mrf.mxu0
    %v4434 = vpop.f32.mrf.mxu0
    %v4435 = vadd.f32 %v562, %v4434
    %v4436 = vpop.f32.mrf.mxu0
    %4437 = vmatprep.mubr.bf16.mxu0 0
    %4438 = vmatmul.mubr.bf16.gmra.mxu0 %v2533
    %v4439 = vpop.f32.mrf.mxu0
    %v4440 = vadd.f32 %v562, %v4439
    %v4441 = vpop.f32.mrf.mxu0
    %v4442 = vpop.f32.mrf.mxu0
    %v4443 = vadd.f32 %v562, %v4442
    %v4444 = vpop.f32.mrf.mxu0
    %4445 = vmatprep.mubr.bf16.mxu0 0
    %4446 = vmatmul.mubr.bf16.gmra.mxu0 %v2536
    %v4447 = vpop.f32.mrf.mxu0
    %v4448 = vadd.f32 %v562, %v4447
    %v4449 = vpop.f32.mrf.mxu0
    %v4450 = vpop.f32.mrf.mxu0
    %v4451 = vadd.f32 %v562, %v4450
    %v4452 = vpop.f32.mrf.mxu0
    %4453 = vmatprep.mubr.bf16.mxu0 0
    %4454 = vmatmul.mubr.bf16.gmra.mxu0 %v2539
    %v4455 = vpop.f32.mrf.mxu0
    %v4456 = vadd.f32 %v562, %v4455
    %v4457 = vpop.f32.mrf.mxu0
    %v4458 = vpop.f32.mrf.mxu0
    %v4459 = vadd.f32 %v562, %v4458
    %v4460 = vpop.f32.mrf.mxu0
    %4461 = vmatprep.mubr.bf16.mxu0 0
    %4462 = vmatmul.mubr.bf16.gmra.mxu0 %v2542
    %v4463 = vpop.f32.mrf.mxu0
    %v4464 = vadd.f32 %v562, %v4463
    %v4465 = vpop.f32.mrf.mxu0
    %v4466 = vpop.f32.mrf.mxu0
    %v4467 = vadd.f32 %v562, %v4466
    %v4468 = vpop.f32.mrf.mxu0
    %4469 = vmatprep.mubr.bf16.mxu0 0
    %4470 = vmatmul.mubr.bf16.gmra.mxu0 %v2545
    %v4471 = vpop.f32.mrf.mxu0
    %v4472 = vadd.f32 %v562, %v4471
    %v4473 = vpop.f32.mrf.mxu0
    %v4474 = vpop.f32.mrf.mxu0
    %v4475 = vadd.f32 %v562, %v4474
    %v4476 = vpop.f32.mrf.mxu0
    %4477 = vmatprep.mubr.bf16.mxu0 0
    %4478 = vmatmul.mubr.bf16.gmra.mxu0 %v2548
    %v4479 = vpop.f32.mrf.mxu0
    %v4480 = vadd.f32 %v562, %v4479
    %v4481 = vpop.f32.mrf.mxu0
    %v4482 = vpop.f32.mrf.mxu0
    %v4483 = vadd.f32 %v562, %v4482
    %v4484 = vpop.f32.mrf.mxu0
    %4485 = vmatprep.mubr.bf16.mxu0 0
    %4486 = vmatmul.mubr.bf16.gmra.mxu0 %v2551
    %v4487 = vpop.f32.mrf.mxu0
    %v4488 = vadd.f32 %v562, %v4487
    %v4489 = vpop.f32.mrf.mxu0
    %v4490 = vpop.f32.mrf.mxu0
    %v4491 = vadd.f32 %v562, %v4490
    %v4492 = vpop.f32.mrf.mxu0
    %4493 = vmatprep.mubr.bf16.mxu0 0
    %4494 = vmatmul.mubr.bf16.gmra.mxu0 %v2554
    %v4495 = vpop.f32.mrf.mxu0
    %v4496 = vadd.f32 %v562, %v4495
    %v4497 = vpop.f32.mrf.mxu0
    %v4498 = vpop.f32.mrf.mxu0
    %v4499 = vadd.f32 %v562, %v4498
    %v4500 = vpop.f32.mrf.mxu0
    %4501 = vmatprep.mubr.bf16.mxu0 0
    %4502 = vmatmul.mubr.bf16.gmra.mxu0 %v2557
    %v4503 = vpop.f32.mrf.mxu0
    %v4504 = vadd.f32 %v562, %v4503
    %v4505 = vpop.f32.mrf.mxu0
    %v4506 = vpop.f32.mrf.mxu0
    %v4507 = vadd.f32 %v562, %v4506
    %v4508 = vpop.f32.mrf.mxu0
    %4509 = vmatprep.mubr.bf16.mxu0 0
    %4510 = vmatmul.mubr.bf16.gmra.mxu0 %v2560
    %v4511 = vpop.f32.mrf.mxu0
    %v4512 = vadd.f32 %v562, %v4511
    %v4513 = vpop.f32.mrf.mxu0
    %v4514 = vpop.f32.mrf.mxu0
    %v4515 = vadd.f32 %v562, %v4514
    %v4516 = vpop.f32.mrf.mxu0
    %4517 = vmatprep.mubr.bf16.mxu0 0
    %4518 = vmatmul.mubr.bf16.gmra.mxu0 %v2563
    %v4519 = vpop.f32.mrf.mxu0
    %v4520 = vadd.f32 %v562, %v4519
    %v4521 = vpop.f32.mrf.mxu0
    %v4522 = vpop.f32.mrf.mxu0
    %v4523 = vadd.f32 %v562, %v4522
    %v4524 = vpop.f32.mrf.mxu0
    %4525 = vmatprep.mubr.bf16.mxu0 0
    %4526 = vmatmul.mubr.bf16.gmra.mxu0 %v2566
    %v4527 = vpop.f32.mrf.mxu0
    %v4528 = vadd.f32 %v562, %v4527
    %v4529 = vpop.f32.mrf.mxu0
    %v4530 = vpop.f32.mrf.mxu0
    %v4531 = vadd.f32 %v562, %v4530
    %v4532 = vpop.f32.mrf.mxu0
    %4533 = vmatprep.mubr.bf16.mxu0 0
    %4534 = vmatmul.mubr.bf16.gmra.mxu0 %v2569
    %v4535 = vpop.f32.mrf.mxu0
    %v4536 = vadd.f32 %v562, %v4535
    %v4537 = vpop.f32.mrf.mxu0
    %v4538 = vpop.f32.mrf.mxu0
    %v4539 = vadd.f32 %v562, %v4538
    %v4540 = vpop.f32.mrf.mxu0
    %4541 = vmatprep.mubr.bf16.mxu0 0
    %4542 = vmatmul.mubr.bf16.gmra.mxu0 %v2572
    %v4543 = vpop.f32.mrf.mxu0
    %v4544 = vadd.f32 %v562, %v4543
    %v4545 = vpop.f32.mrf.mxu0
    %v4546 = vpop.f32.mrf.mxu0
    %v4547 = vadd.f32 %v562, %v4546
    %v4548 = vpop.f32.mrf.mxu0
    %4549 = vmatprep.mubr.bf16.mxu0 0
    %4550 = vmatmul.mubr.bf16.gmra.mxu0 %v2575
    %v4551 = vpop.f32.mrf.mxu0
    %v4552 = vadd.f32 %v562, %v4551
    %v4553 = vpop.f32.mrf.mxu0
    %v4554 = vpop.f32.mrf.mxu0
    %v4555 = vadd.f32 %v562, %v4554
    %v4556 = vpop.f32.mrf.mxu0
    %4557 = vmatprep.mubr.bf16.mxu0 0
    %4558 = vmatmul.mubr.bf16.gmra.mxu0 %v2578
    %v4559 = vpop.f32.mrf.mxu0
    %v4560 = vadd.f32 %v562, %v4559
    %v4561 = vpop.f32.mrf.mxu0
    %v4562 = vpop.f32.mrf.mxu0
    %v4563 = vadd.f32 %v562, %v4562
    %v4564 = vpop.f32.mrf.mxu0
    %4565 = vmatprep.mubr.bf16.mxu0 0
    %4566 = vmatmul.mubr.bf16.gmra.mxu0 %v2581
    %v4567 = vpop.f32.mrf.mxu0
    %v4568 = vadd.f32 %v562, %v4567
    %v4569 = vpop.f32.mrf.mxu0
    %v4570 = vpop.f32.mrf.mxu0
    %v4571 = vadd.f32 %v562, %v4570
    %v4572 = vpop.f32.mrf.mxu0
    %4573 = vmatprep.mubr.bf16.mxu0 0
    %4574 = vmatmul.mubr.bf16.gmra.mxu0 %v2584
    %v4575 = vpop.f32.mrf.mxu0
    %v4576 = vadd.f32 %v562, %v4575
    %v4577 = vpop.f32.mrf.mxu0
    %v4578 = vpop.f32.mrf.mxu0
    %v4579 = vadd.f32 %v562, %v4578
    %v4580 = vpop.f32.mrf.mxu0
    %4581 = vmatprep.mubr.bf16.mxu0 0
    %4582 = vmatmul.mubr.bf16.gmra.mxu0 %v2587
    %v4583 = vpop.f32.mrf.mxu0
    %v4584 = vadd.f32 %v562, %v4583
    %v4585 = vpop.f32.mrf.mxu0
    %v4586 = vpop.f32.mrf.mxu0
    %v4587 = vadd.f32 %v562, %v4586
    %v4588 = vpop.f32.mrf.mxu0
    %4589 = vmatprep.mubr.bf16.mxu0 0
    %4590 = vmatmul.mubr.bf16.gmra.mxu0 %v2590
    %v4591 = vpop.f32.mrf.mxu0
    %v4592 = vadd.f32 %v562, %v4591
    %v4593 = vpop.f32.mrf.mxu0
    %v4594 = vpop.f32.mrf.mxu0
    %v4595 = vadd.f32 %v562, %v4594
    %v4596 = vpop.f32.mrf.mxu0
    %4597 = vmatprep.mubr.bf16.mxu0 0
    %4598 = vmatmul.mubr.bf16.gmra.mxu0 %v2593
    %v4599 = vpop.f32.mrf.mxu0
    %v4600 = vadd.f32 %v562, %v4599
    %v4601 = vpop.f32.mrf.mxu0
    %v4602 = vpop.f32.mrf.mxu0
    %v4603 = vadd.f32 %v562, %v4602
    %v4604 = vpop.f32.mrf.mxu0
    %4605 = vmatprep.mubr.bf16.mxu0 0
    %4606 = vmatmul.mubr.bf16.gmra.mxu0 %v2596
    %v4607 = vpop.f32.mrf.mxu0
    %v4608 = vadd.f32 %v562, %v4607
    %v4609 = vpop.f32.mrf.mxu0
    %v4610 = vpop.f32.mrf.mxu0
    %v4611 = vadd.f32 %v562, %v4610
    %v4612 = vpop.f32.mrf.mxu0
    %4613 = vmatprep.mubr.bf16.mxu0 0
    %4614 = vmatmul.mubr.bf16.gmra.mxu0 %v2599
    %v4615 = vpop.f32.mrf.mxu0
    %v4616 = vadd.f32 %v562, %v4615
    %v4617 = vpop.f32.mrf.mxu0
    %v4618 = vpop.f32.mrf.mxu0
    %v4619 = vadd.f32 %v562, %v4618
    %v4620 = vpop.f32.mrf.mxu0
    %4621 = vmatprep.mubr.bf16.mxu0 0
    %4622 = vmatmul.mubr.bf16.gmra.mxu0 %v2602
    %v4623 = vpop.f32.mrf.mxu0
    %v4624 = vadd.f32 %v562, %v4623
    %v4625 = vpop.f32.mrf.mxu0
    %v4626 = vpop.f32.mrf.mxu0
    %v4627 = vadd.f32 %v562, %v4626
    %v4628 = vpop.f32.mrf.mxu0
    %4629 = vmatprep.mubr.bf16.mxu0 0
    %4630 = vmatmul.mubr.bf16.gmra.mxu0 %v2605
    %v4631 = vpop.f32.mrf.mxu0
    %v4632 = vadd.f32 %v562, %v4631
    %v4633 = vpop.f32.mrf.mxu0
    %v4634 = vpop.f32.mrf.mxu0
    %v4635 = vadd.f32 %v562, %v4634
    %v4636 = vpop.f32.mrf.mxu0
    %4637 = vmatprep.mubr.bf16.mxu0 0
    %4638 = vmatmul.mubr.bf16.gmra.mxu0 %v2608
    %v4639 = vpop.f32.mrf.mxu0
    %v4640 = vadd.f32 %v562, %v4639
    %v4641 = vpop.f32.mrf.mxu0
    %v4642 = vpop.f32.mrf.mxu0
    %v4643 = vadd.f32 %v562, %v4642
    %v4644 = vpop.f32.mrf.mxu0
    %4645 = vmatprep.mubr.bf16.mxu0 0
    %4646 = vmatmul.mubr.bf16.gmra.mxu0 %v2611
    %v4647 = vpop.f32.mrf.mxu0
    %v4648 = vadd.f32 %v562, %v4647
    %v4649 = vpop.f32.mrf.mxu0
    %v4650 = vpop.f32.mrf.mxu0
    %v4651 = vadd.f32 %v562, %v4650
    %v4652 = vpop.f32.mrf.mxu0
    %4653 = vmatprep.mubr.bf16.mxu0 0
    %4654 = vmatmul.mubr.bf16.gmra.mxu0 %v2614
    %v4655 = vpop.f32.mrf.mxu0
    %v4656 = vadd.f32 %v562, %v4655
    %v4657 = vpop.f32.mrf.mxu0
    %v4658 = vpop.f32.mrf.mxu0
    %v4659 = vadd.f32 %v562, %v4658
    %v4660 = vpop.f32.mrf.mxu0
    %4661 = vmatprep.mubr.bf16.mxu0 0
    %4662 = vmatmul.mubr.bf16.gmra.mxu0 %v2617
    %v4663 = vpop.f32.mrf.mxu0
    %v4664 = vadd.f32 %v562, %v4663
    %v4665 = vpop.f32.mrf.mxu0
    %v4666 = vpop.f32.mrf.mxu0
    %v4667 = vadd.f32 %v562, %v4666
    %v4668 = vpop.f32.mrf.mxu0
    %4669 = vmatprep.mubr.bf16.mxu0 0
    %4670 = vmatmul.mubr.bf16.gmra.mxu0 %v2620
    %v4671 = vpop.f32.mrf.mxu0
    %v4672 = vadd.f32 %v562, %v4671
    %v4673 = vpop.f32.mrf.mxu0
    %v4674 = vpop.f32.mrf.mxu0
    %v4675 = vadd.f32 %v562, %v4674
    %v4676 = vpop.f32.mrf.mxu0
    %4677 = vmatprep.mubr.bf16.mxu0 0
    %4678 = vmatmul.mubr.bf16.gmra.mxu0 %v2623
    %v4679 = vpop.f32.mrf.mxu0
    %v4680 = vadd.f32 %v562, %v4679
    %v4681 = vpop.f32.mrf.mxu0
    %v4682 = vpop.f32.mrf.mxu0
    %v4683 = vadd.f32 %v562, %v4682
    %v4684 = vpop.f32.mrf.mxu0
    %4685 = vmatprep.mubr.bf16.mxu0 0
    %4686 = vmatmul.mubr.bf16.gmra.mxu0 %v2626
    %v4687 = vpop.f32.mrf.mxu0
    %v4688 = vadd.f32 %v562, %v4687
    %v4689 = vpop.f32.mrf.mxu0
    %v4690 = vpop.f32.mrf.mxu0
    %v4691 = vadd.f32 %v562, %v4690
    %v4692 = vpop.f32.mrf.mxu0
    %4693 = vmatprep.mubr.bf16.mxu0 0
    %4694 = vmatmul.mubr.bf16.gmra.mxu0 %v2629
    %v4695 = vpop.f32.mrf.mxu0
    %v4696 = vadd.f32 %v562, %v4695
    %v4697 = vpop.f32.mrf.mxu0
    %v4698 = vpop.f32.mrf.mxu0
    %v4699 = vadd.f32 %v562, %v4698
    %v4700 = vpop.f32.mrf.mxu0
    %4701 = vmatprep.mubr.bf16.mxu0 0
    %4702 = vmatmul.mubr.bf16.gmra.mxu0 %v2632
    %v4703 = vpop.f32.mrf.mxu0
    %v4704 = vadd.f32 %v562, %v4703
    %v4705 = vpop.f32.mrf.mxu0
    %v4706 = vpop.f32.mrf.mxu0
    %v4707 = vadd.f32 %v562, %v4706
    %v4708 = vpop.f32.mrf.mxu0
    %4709 = vmatprep.mubr.bf16.mxu0 0
    %4710 = vmatmul.mubr.bf16.gmra.mxu0 %v2635
    %v4711 = vpop.f32.mrf.mxu0
    %v4712 = vadd.f32 %v562, %v4711
    %v4713 = vpop.f32.mrf.mxu0
    %v4714 = vpop.f32.mrf.mxu0
    %v4715 = vadd.f32 %v562, %v4714
    %v4716 = vpop.f32.mrf.mxu0
    %4717 = vdwg.mxu0
    %v4718 = vmax.f32 %v2672, 0.0
    %v4719 = vmax.f32 %v2675, 0.0
    %v4720 = vmax.f32 %v2680, 0.0
    %v4721 = vmax.f32 %v2683, 0.0
    %v4722 = vmax.f32 %v2688, 0.0
    %v4723 = vmax.f32 %v2691, 0.0
    %v4724 = vmax.f32 %v2696, 0.0
    %v4725 = vmax.f32 %v2699, 0.0
    %v4726 = vmax.f32 %v2704, 0.0
    %v4727 = vmax.f32 %v2707, 0.0
    %v4728 = vmax.f32 %v2712, 0.0
    %v4729 = vmax.f32 %v2715, 0.0
    %v4730 = vmax.f32 %v2720, 0.0
    %v4731 = vmax.f32 %v2723, 0.0
    %v4732 = vmax.f32 %v2728, 0.0
    %v4733 = vmax.f32 %v2731, 0.0
    %v4734 = vmax.f32 %v2736, 0.0
    %v4735 = vmax.f32 %v2739, 0.0
    %v4736 = vmax.f32 %v2744, 0.0
    %v4737 = vmax.f32 %v2747, 0.0
    %v4738 = vmax.f32 %v2752, 0.0
    %v4739 = vmax.f32 %v2755, 0.0
    %v4740 = vmax.f32 %v2760, 0.0
    %v4741 = vmax.f32 %v2763, 0.0
    %v4742 = vmax.f32 %v2768, 0.0
    %v4743 = vmax.f32 %v2771, 0.0
    %v4744 = vmax.f32 %v2776, 0.0
    %v4745 = vmax.f32 %v2779, 0.0
    %v4746 = vmax.f32 %v2784, 0.0
    %v4747 = vmax.f32 %v2787, 0.0
    %v4748 = vmax.f32 %v2792, 0.0
    %v4749 = vmax.f32 %v2795, 0.0
    %v4750 = vmax.f32 %v2800, 0.0
    %v4751 = vmax.f32 %v2803, 0.0
    %v4752 = vmax.f32 %v2808, 0.0
    %v4753 = vmax.f32 %v2811, 0.0
    %v4754 = vmax.f32 %v2816, 0.0
    %v4755 = vmax.f32 %v2819, 0.0
    %v4756 = vmax.f32 %v2824, 0.0
    %v4757 = vmax.f32 %v2827, 0.0
    %v4758 = vmax.f32 %v2832, 0.0
    %v4759 = vmax.f32 %v2835, 0.0
    %v4760 = vmax.f32 %v2840, 0.0
    %v4761 = vmax.f32 %v2843, 0.0
    %v4762 = vmax.f32 %v2848, 0.0
    %v4763 = vmax.f32 %v2851, 0.0
    %v4764 = vmax.f32 %v2856, 0.0
    %v4765 = vmax.f32 %v2859, 0.0
    %v4766 = vmax.f32 %v2864, 0.0
    %v4767 = vmax.f32 %v2867, 0.0
    %v4768 = vmax.f32 %v2872, 0.0
    %v4769 = vmax.f32 %v2875, 0.0
    %v4770 = vmax.f32 %v2880, 0.0
    %v4771 = vmax.f32 %v2883, 0.0
    %v4772 = vmax.f32 %v2888, 0.0
    %v4773 = vmax.f32 %v2891, 0.0
    %v4774 = vmax.f32 %v2896, 0.0
    %v4775 = vmax.f32 %v2899, 0.0
    %v4776 = vmax.f32 %v2904, 0.0
    %v4777 = vmax.f32 %v2907, 0.0
    %v4778 = vmax.f32 %v2912, 0.0
    %v4779 = vmax.f32 %v2915, 0.0
    %v4780 = vmax.f32 %v2920, 0.0
    %v4781 = vmax.f32 %v2923, 0.0
    %v4782 = vmax.f32 %v2928, 0.0
    %v4783 = vmax.f32 %v2931, 0.0
    %v4784 = vmax.f32 %v2936, 0.0
    %v4785 = vmax.f32 %v2939, 0.0
    %v4786 = vmax.f32 %v2944, 0.0
    %v4787 = vmax.f32 %v2947, 0.0
    %v4788 = vmax.f32 %v2952, 0.0
    %v4789 = vmax.f32 %v2955, 0.0
    %v4790 = vmax.f32 %v2960, 0.0
    %v4791 = vmax.f32 %v2963, 0.0
    %v4792 = vmax.f32 %v2968, 0.0
    %v4793 = vmax.f32 %v2971, 0.0
    %v4794 = vmax.f32 %v2976, 0.0
    %v4795 = vmax.f32 %v2979, 0.0
    %v4796 = vmax.f32 %v2984, 0.0
    %v4797 = vmax.f32 %v2987, 0.0
    %v4798 = vmax.f32 %v2992, 0.0
    %v4799 = vmax.f32 %v2995, 0.0
    %v4800 = vmax.f32 %v3000, 0.0
    %v4801 = vmax.f32 %v3003, 0.0
    %v4802 = vmax.f32 %v3008, 0.0
    %v4803 = vmax.f32 %v3011, 0.0
    %v4804 = vmax.f32 %v3016, 0.0
    %v4805 = vmax.f32 %v3019, 0.0
    %v4806 = vmax.f32 %v3024, 0.0
    %v4807 = vmax.f32 %v3027, 0.0
    %v4808 = vmax.f32 %v3032, 0.0
    %v4809 = vmax.f32 %v3035, 0.0
    %v4810 = vmax.f32 %v3040, 0.0
    %v4811 = vmax.f32 %v3043, 0.0
    %v4812 = vmax.f32 %v3048, 0.0
    %v4813 = vmax.f32 %v3051, 0.0
    %v4814 = vmax.f32 %v3056, 0.0
    %v4815 = vmax.f32 %v3059, 0.0
    %v4816 = vmax.f32 %v3064, 0.0
    %v4817 = vmax.f32 %v3067, 0.0
    %v4818 = vmax.f32 %v3072, 0.0
    %v4819 = vmax.f32 %v3075, 0.0
    %v4820 = vmax.f32 %v3080, 0.0
    %v4821 = vmax.f32 %v3083, 0.0
    %v4822 = vmax.f32 %v3088, 0.0
    %v4823 = vmax.f32 %v3091, 0.0
    %v4824 = vmax.f32 %v3096, 0.0
    %v4825 = vmax.f32 %v3099, 0.0
    %v4826 = vmax.f32 %v3104, 0.0
    %v4827 = vmax.f32 %v3107, 0.0
    %v4828 = vmax.f32 %v3112, 0.0
    %v4829 = vmax.f32 %v3115, 0.0
    %v4830 = vmax.f32 %v3120, 0.0
    %v4831 = vmax.f32 %v3123, 0.0
    %v4832 = vmax.f32 %v3128, 0.0
    %v4833 = vmax.f32 %v3131, 0.0
    %v4834 = vmax.f32 %v3136, 0.0
    %v4835 = vmax.f32 %v3139, 0.0
    %v4836 = vmax.f32 %v3144, 0.0
    %v4837 = vmax.f32 %v3147, 0.0
    %v4838 = vmax.f32 %v3152, 0.0
    %v4839 = vmax.f32 %v3155, 0.0
    %v4840 = vmax.f32 %v3160, 0.0
    %v4841 = vmax.f32 %v3163, 0.0
    %v4842 = vmax.f32 %v3168, 0.0
    %v4843 = vmax.f32 %v3171, 0.0
    %v4844 = vmax.f32 %v3176, 0.0
    %v4845 = vmax.f32 %v3179, 0.0
    %v4846 = vmax.f32 %v3184, 0.0
    %v4847 = vmax.f32 %v3187, 0.0
    %v4848 = vmax.f32 %v3192, 0.0
    %v4849 = vmax.f32 %v3195, 0.0
    %v4850 = vmax.f32 %v3200, 0.0
    %v4851 = vmax.f32 %v3203, 0.0
    %v4852 = vmax.f32 %v3208, 0.0
    %v4853 = vmax.f32 %v3211, 0.0
    %v4854 = vmax.f32 %v3216, 0.0
    %v4855 = vmax.f32 %v3219, 0.0
    %v4856 = vmax.f32 %v3224, 0.0
    %v4857 = vmax.f32 %v3227, 0.0
    %v4858 = vmax.f32 %v3232, 0.0
    %v4859 = vmax.f32 %v3235, 0.0
    %v4860 = vmax.f32 %v3240, 0.0
    %v4861 = vmax.f32 %v3243, 0.0
    %v4862 = vmax.f32 %v3248, 0.0
    %v4863 = vmax.f32 %v3251, 0.0
    %v4864 = vmax.f32 %v3256, 0.0
    %v4865 = vmax.f32 %v3259, 0.0
    %v4866 = vmax.f32 %v3264, 0.0
    %v4867 = vmax.f32 %v3267, 0.0
    %v4868 = vmax.f32 %v3272, 0.0
    %v4869 = vmax.f32 %v3275, 0.0
    %v4870 = vmax.f32 %v3280, 0.0
    %v4871 = vmax.f32 %v3283, 0.0
    %v4872 = vmax.f32 %v3288, 0.0
    %v4873 = vmax.f32 %v3291, 0.0
    %v4874 = vmax.f32 %v3296, 0.0
    %v4875 = vmax.f32 %v3299, 0.0
    %v4876 = vmax.f32 %v3304, 0.0
    %v4877 = vmax.f32 %v3307, 0.0
    %v4878 = vmax.f32 %v3312, 0.0
    %v4879 = vmax.f32 %v3315, 0.0
    %v4880 = vmax.f32 %v3320, 0.0
    %v4881 = vmax.f32 %v3323, 0.0
    %v4882 = vmax.f32 %v3328, 0.0
    %v4883 = vmax.f32 %v3331, 0.0
    %v4884 = vmax.f32 %v3336, 0.0
    %v4885 = vmax.f32 %v3339, 0.0
    %v4886 = vmax.f32 %v3344, 0.0
    %v4887 = vmax.f32 %v3347, 0.0
    %v4888 = vmax.f32 %v3352, 0.0
    %v4889 = vmax.f32 %v3355, 0.0
    %v4890 = vmax.f32 %v3360, 0.0
    %v4891 = vmax.f32 %v3363, 0.0
    %v4892 = vmax.f32 %v3368, 0.0
    %v4893 = vmax.f32 %v3371, 0.0
    %v4894 = vmax.f32 %v3376, 0.0
    %v4895 = vmax.f32 %v3379, 0.0
    %v4896 = vmax.f32 %v3384, 0.0
    %v4897 = vmax.f32 %v3387, 0.0
    %v4898 = vmax.f32 %v3392, 0.0
    %v4899 = vmax.f32 %v3395, 0.0
    %v4900 = vmax.f32 %v3400, 0.0
    %v4901 = vmax.f32 %v3403, 0.0
    %v4902 = vmax.f32 %v3408, 0.0
    %v4903 = vmax.f32 %v3411, 0.0
    %v4904 = vmax.f32 %v3416, 0.0
    %v4905 = vmax.f32 %v3419, 0.0
    %v4906 = vmax.f32 %v3424, 0.0
    %v4907 = vmax.f32 %v3427, 0.0
    %v4908 = vmax.f32 %v3432, 0.0
    %v4909 = vmax.f32 %v3435, 0.0
    %v4910 = vmax.f32 %v3440, 0.0
    %v4911 = vmax.f32 %v3443, 0.0
    %v4912 = vmax.f32 %v3448, 0.0
    %v4913 = vmax.f32 %v3451, 0.0
    %v4914 = vmax.f32 %v3456, 0.0
    %v4915 = vmax.f32 %v3459, 0.0
    %v4916 = vmax.f32 %v3464, 0.0
    %v4917 = vmax.f32 %v3467, 0.0
    %v4918 = vmax.f32 %v3472, 0.0
    %v4919 = vmax.f32 %v3475, 0.0
    %v4920 = vmax.f32 %v3480, 0.0
    %v4921 = vmax.f32 %v3483, 0.0
    %v4922 = vmax.f32 %v3488, 0.0
    %v4923 = vmax.f32 %v3491, 0.0
    %v4924 = vmax.f32 %v3496, 0.0
    %v4925 = vmax.f32 %v3499, 0.0
    %v4926 = vmax.f32 %v3504, 0.0
    %v4927 = vmax.f32 %v3507, 0.0
    %v4928 = vmax.f32 %v3512, 0.0
    %v4929 = vmax.f32 %v3515, 0.0
    %v4930 = vmax.f32 %v3520, 0.0
    %v4931 = vmax.f32 %v3523, 0.0
    %v4932 = vmax.f32 %v3528, 0.0
    %v4933 = vmax.f32 %v3531, 0.0
    %v4934 = vmax.f32 %v3536, 0.0
    %v4935 = vmax.f32 %v3539, 0.0
    %v4936 = vmax.f32 %v3544, 0.0
    %v4937 = vmax.f32 %v3547, 0.0
    %v4938 = vmax.f32 %v3552, 0.0
    %v4939 = vmax.f32 %v3555, 0.0
    %v4940 = vmax.f32 %v3560, 0.0
    %v4941 = vmax.f32 %v3563, 0.0
    %v4942 = vmax.f32 %v3568, 0.0
    %v4943 = vmax.f32 %v3571, 0.0
    %v4944 = vmax.f32 %v3576, 0.0
    %v4945 = vmax.f32 %v3579, 0.0
    %v4946 = vmax.f32 %v3584, 0.0
    %v4947 = vmax.f32 %v3587, 0.0
    %v4948 = vmax.f32 %v3592, 0.0
    %v4949 = vmax.f32 %v3595, 0.0
    %v4950 = vmax.f32 %v3600, 0.0
    %v4951 = vmax.f32 %v3603, 0.0
    %v4952 = vmax.f32 %v3608, 0.0
    %v4953 = vmax.f32 %v3611, 0.0
    %v4954 = vmax.f32 %v3616, 0.0
    %v4955 = vmax.f32 %v3619, 0.0
    %v4956 = vmax.f32 %v3624, 0.0
    %v4957 = vmax.f32 %v3627, 0.0
    %v4958 = vmax.f32 %v3632, 0.0
    %v4959 = vmax.f32 %v3635, 0.0
    %v4960 = vmax.f32 %v3640, 0.0
    %v4961 = vmax.f32 %v3643, 0.0
    %v4962 = vmax.f32 %v3648, 0.0
    %v4963 = vmax.f32 %v3651, 0.0
    %v4964 = vmax.f32 %v3656, 0.0
    %v4965 = vmax.f32 %v3659, 0.0
    %v4966 = vmax.f32 %v3664, 0.0
    %v4967 = vmax.f32 %v3667, 0.0
    %v4968 = vmax.f32 %v3672, 0.0
    %v4969 = vmax.f32 %v3675, 0.0
    %v4970 = vmax.f32 %v3680, 0.0
    %v4971 = vmax.f32 %v3683, 0.0
    %v4972 = vmax.f32 %v3688, 0.0
    %v4973 = vmax.f32 %v3691, 0.0
    %v4974 = vmax.f32 %v3696, 0.0
    %v4975 = vmax.f32 %v3699, 0.0
    %v4976 = vmax.f32 %v3704, 0.0
    %v4977 = vmax.f32 %v3707, 0.0
    %v4978 = vmax.f32 %v3712, 0.0
    %v4979 = vmax.f32 %v3715, 0.0
    %v4980 = vmax.f32 %v3720, 0.0
    %v4981 = vmax.f32 %v3723, 0.0
    %v4982 = vmax.f32 %v3728, 0.0
    %v4983 = vmax.f32 %v3731, 0.0
    %v4984 = vmax.f32 %v3736, 0.0
    %v4985 = vmax.f32 %v3739, 0.0
    %v4986 = vmax.f32 %v3744, 0.0
    %v4987 = vmax.f32 %v3747, 0.0
    %v4988 = vmax.f32 %v3752, 0.0
    %v4989 = vmax.f32 %v3755, 0.0
    %v4990 = vmax.f32 %v3760, 0.0
    %v4991 = vmax.f32 %v3763, 0.0
    %v4992 = vmax.f32 %v3768, 0.0
    %v4993 = vmax.f32 %v3771, 0.0
    %v4994 = vmax.f32 %v3776, 0.0
    %v4995 = vmax.f32 %v3779, 0.0
    %v4996 = vmax.f32 %v3784, 0.0
    %v4997 = vmax.f32 %v3787, 0.0
    %v4998 = vmax.f32 %v3792, 0.0
    %v4999 = vmax.f32 %v3795, 0.0
    %v5000 = vmax.f32 %v3800, 0.0
    %v5001 = vmax.f32 %v3803, 0.0
    %v5002 = vmax.f32 %v3808, 0.0
    %v5003 = vmax.f32 %v3811, 0.0
    %v5004 = vmax.f32 %v3816, 0.0
    %v5005 = vmax.f32 %v3819, 0.0
    %v5006 = vmax.f32 %v3824, 0.0
    %v5007 = vmax.f32 %v3827, 0.0
    %v5008 = vmax.f32 %v3832, 0.0
    %v5009 = vmax.f32 %v3835, 0.0
    %v5010 = vmax.f32 %v3840, 0.0
    %v5011 = vmax.f32 %v3843, 0.0
    %v5012 = vmax.f32 %v3848, 0.0
    %v5013 = vmax.f32 %v3851, 0.0
    %v5014 = vmax.f32 %v3856, 0.0
    %v5015 = vmax.f32 %v3859, 0.0
    %v5016 = vmax.f32 %v3864, 0.0
    %v5017 = vmax.f32 %v3867, 0.0
    %v5018 = vmax.f32 %v3872, 0.0
    %v5019 = vmax.f32 %v3875, 0.0
    %v5020 = vmax.f32 %v3880, 0.0
    %v5021 = vmax.f32 %v3883, 0.0
    %v5022 = vmax.f32 %v3888, 0.0
    %v5023 = vmax.f32 %v3891, 0.0
    %v5024 = vmax.f32 %v3896, 0.0
    %v5025 = vmax.f32 %v3899, 0.0
    %v5026 = vmax.f32 %v3904, 0.0
    %v5027 = vmax.f32 %v3907, 0.0
    %v5028 = vmax.f32 %v3912, 0.0
    %v5029 = vmax.f32 %v3915, 0.0
    %v5030 = vmax.f32 %v3920, 0.0
    %v5031 = vmax.f32 %v3923, 0.0
    %v5032 = vmax.f32 %v3928, 0.0
    %v5033 = vmax.f32 %v3931, 0.0
    %v5034 = vmax.f32 %v3936, 0.0
    %v5035 = vmax.f32 %v3939, 0.0
    %v5036 = vmax.f32 %v3944, 0.0
    %v5037 = vmax.f32 %v3947, 0.0
    %v5038 = vmax.f32 %v3952, 0.0
    %v5039 = vmax.f32 %v3955, 0.0
    %v5040 = vmax.f32 %v3960, 0.0
    %v5041 = vmax.f32 %v3963, 0.0
    %v5042 = vmax.f32 %v3968, 0.0
    %v5043 = vmax.f32 %v3971, 0.0
    %v5044 = vmax.f32 %v3976, 0.0
    %v5045 = vmax.f32 %v3979, 0.0
    %v5046 = vmax.f32 %v3984, 0.0
    %v5047 = vmax.f32 %v3987, 0.0
    %v5048 = vmax.f32 %v3992, 0.0
    %v5049 = vmax.f32 %v3995, 0.0
    %v5050 = vmax.f32 %v4000, 0.0
    %v5051 = vmax.f32 %v4003, 0.0
    %v5052 = vmax.f32 %v4008, 0.0
    %v5053 = vmax.f32 %v4011, 0.0
    %v5054 = vmax.f32 %v4016, 0.0
    %v5055 = vmax.f32 %v4019, 0.0
    %v5056 = vmax.f32 %v4024, 0.0
    %v5057 = vmax.f32 %v4027, 0.0
    %v5058 = vmax.f32 %v4032, 0.0
    %v5059 = vmax.f32 %v4035, 0.0
    %v5060 = vmax.f32 %v4040, 0.0
    %v5061 = vmax.f32 %v4043, 0.0
    %v5062 = vmax.f32 %v4048, 0.0
    %v5063 = vmax.f32 %v4051, 0.0
    %v5064 = vmax.f32 %v4056, 0.0
    %v5065 = vmax.f32 %v4059, 0.0
    %v5066 = vmax.f32 %v4064, 0.0
    %v5067 = vmax.f32 %v4067, 0.0
    %v5068 = vmax.f32 %v4072, 0.0
    %v5069 = vmax.f32 %v4075, 0.0
    %v5070 = vmax.f32 %v4080, 0.0
    %v5071 = vmax.f32 %v4083, 0.0
    %v5072 = vmax.f32 %v4088, 0.0
    %v5073 = vmax.f32 %v4091, 0.0
    %v5074 = vmax.f32 %v4096, 0.0
    %v5075 = vmax.f32 %v4099, 0.0
    %v5076 = vmax.f32 %v4104, 0.0
    %v5077 = vmax.f32 %v4107, 0.0
    %v5078 = vmax.f32 %v4112, 0.0
    %v5079 = vmax.f32 %v4115, 0.0
    %v5080 = vmax.f32 %v4120, 0.0
    %v5081 = vmax.f32 %v4123, 0.0
    %v5082 = vmax.f32 %v4128, 0.0
    %v5083 = vmax.f32 %v4131, 0.0
    %v5084 = vmax.f32 %v4136, 0.0
    %v5085 = vmax.f32 %v4139, 0.0
    %v5086 = vmax.f32 %v4144, 0.0
    %v5087 = vmax.f32 %v4147, 0.0
    %v5088 = vmax.f32 %v4152, 0.0
    %v5089 = vmax.f32 %v4155, 0.0
    %v5090 = vmax.f32 %v4160, 0.0
    %v5091 = vmax.f32 %v4163, 0.0
    %v5092 = vmax.f32 %v4168, 0.0
    %v5093 = vmax.f32 %v4171, 0.0
    %v5094 = vmax.f32 %v4176, 0.0
    %v5095 = vmax.f32 %v4179, 0.0
    %v5096 = vmax.f32 %v4184, 0.0
    %v5097 = vmax.f32 %v4187, 0.0
    %v5098 = vmax.f32 %v4192, 0.0
    %v5099 = vmax.f32 %v4195, 0.0
    %v5100 = vmax.f32 %v4200, 0.0
    %v5101 = vmax.f32 %v4203, 0.0
    %v5102 = vmax.f32 %v4208, 0.0
    %v5103 = vmax.f32 %v4211, 0.0
    %v5104 = vmax.f32 %v4216, 0.0
    %v5105 = vmax.f32 %v4219, 0.0
    %v5106 = vmax.f32 %v4224, 0.0
    %v5107 = vmax.f32 %v4227, 0.0
    %v5108 = vmax.f32 %v4232, 0.0
    %v5109 = vmax.f32 %v4235, 0.0
    %v5110 = vmax.f32 %v4240, 0.0
    %v5111 = vmax.f32 %v4243, 0.0
    %v5112 = vmax.f32 %v4248, 0.0
    %v5113 = vmax.f32 %v4251, 0.0
    %v5114 = vmax.f32 %v4256, 0.0
    %v5115 = vmax.f32 %v4259, 0.0
    %v5116 = vmax.f32 %v4264, 0.0
    %v5117 = vmax.f32 %v4267, 0.0
    %v5118 = vmax.f32 %v4272, 0.0
    %v5119 = vmax.f32 %v4275, 0.0
    %v5120 = vmax.f32 %v4280, 0.0
    %v5121 = vmax.f32 %v4283, 0.0
    %v5122 = vmax.f32 %v4288, 0.0
    %v5123 = vmax.f32 %v4291, 0.0
    %v5124 = vmax.f32 %v4296, 0.0
    %v5125 = vmax.f32 %v4299, 0.0
    %v5126 = vmax.f32 %v4304, 0.0
    %v5127 = vmax.f32 %v4307, 0.0
    %v5128 = vmax.f32 %v4312, 0.0
    %v5129 = vmax.f32 %v4315, 0.0
    %v5130 = vmax.f32 %v4320, 0.0
    %v5131 = vmax.f32 %v4323, 0.0
    %v5132 = vmax.f32 %v4328, 0.0
    %v5133 = vmax.f32 %v4331, 0.0
    %v5134 = vmax.f32 %v4336, 0.0
    %v5135 = vmax.f32 %v4339, 0.0
    %v5136 = vmax.f32 %v4344, 0.0
    %v5137 = vmax.f32 %v4347, 0.0
    %v5138 = vmax.f32 %v4352, 0.0
    %v5139 = vmax.f32 %v4355, 0.0
    %v5140 = vmax.f32 %v4360, 0.0
    %v5141 = vmax.f32 %v4363, 0.0
    %v5142 = vmax.f32 %v4368, 0.0
    %v5143 = vmax.f32 %v4371, 0.0
    %v5144 = vmax.f32 %v4376, 0.0
    %v5145 = vmax.f32 %v4379, 0.0
    %v5146 = vmax.f32 %v4384, 0.0
    %v5147 = vmax.f32 %v4387, 0.0
    %v5148 = vmax.f32 %v4392, 0.0
    %v5149 = vmax.f32 %v4395, 0.0
    %v5150 = vmax.f32 %v4400, 0.0
    %v5151 = vmax.f32 %v4403, 0.0
    %v5152 = vmax.f32 %v4408, 0.0
    %v5153 = vmax.f32 %v4411, 0.0
    %v5154 = vmax.f32 %v4416, 0.0
    %v5155 = vmax.f32 %v4419, 0.0
    %v5156 = vmax.f32 %v4424, 0.0
    %v5157 = vmax.f32 %v4427, 0.0
    %v5158 = vmax.f32 %v4432, 0.0
    %v5159 = vmax.f32 %v4435, 0.0
    %v5160 = vmax.f32 %v4440, 0.0
    %v5161 = vmax.f32 %v4443, 0.0
    %v5162 = vmax.f32 %v4448, 0.0
    %v5163 = vmax.f32 %v4451, 0.0
    %v5164 = vmax.f32 %v4456, 0.0
    %v5165 = vmax.f32 %v4459, 0.0
    %v5166 = vmax.f32 %v4464, 0.0
    %v5167 = vmax.f32 %v4467, 0.0
    %v5168 = vmax.f32 %v4472, 0.0
    %v5169 = vmax.f32 %v4475, 0.0
    %v5170 = vmax.f32 %v4480, 0.0
    %v5171 = vmax.f32 %v4483, 0.0
    %v5172 = vmax.f32 %v4488, 0.0
    %v5173 = vmax.f32 %v4491, 0.0
    %v5174 = vmax.f32 %v4496, 0.0
    %v5175 = vmax.f32 %v4499, 0.0
    %v5176 = vmax.f32 %v4504, 0.0
    %v5177 = vmax.f32 %v4507, 0.0
    %v5178 = vmax.f32 %v4512, 0.0
    %v5179 = vmax.f32 %v4515, 0.0
    %v5180 = vmax.f32 %v4520, 0.0
    %v5181 = vmax.f32 %v4523, 0.0
    %v5182 = vmax.f32 %v4528, 0.0
    %v5183 = vmax.f32 %v4531, 0.0
    %v5184 = vmax.f32 %v4536, 0.0
    %v5185 = vmax.f32 %v4539, 0.0
    %v5186 = vmax.f32 %v4544, 0.0
    %v5187 = vmax.f32 %v4547, 0.0
    %v5188 = vmax.f32 %v4552, 0.0
    %v5189 = vmax.f32 %v4555, 0.0
    %v5190 = vmax.f32 %v4560, 0.0
    %v5191 = vmax.f32 %v4563, 0.0
    %v5192 = vmax.f32 %v4568, 0.0
    %v5193 = vmax.f32 %v4571, 0.0
    %v5194 = vmax.f32 %v4576, 0.0
    %v5195 = vmax.f32 %v4579, 0.0
    %v5196 = vmax.f32 %v4584, 0.0
    %v5197 = vmax.f32 %v4587, 0.0
    %v5198 = vmax.f32 %v4592, 0.0
    %v5199 = vmax.f32 %v4595, 0.0
    %v5200 = vmax.f32 %v4600, 0.0
    %v5201 = vmax.f32 %v4603, 0.0
    %v5202 = vmax.f32 %v4608, 0.0
    %v5203 = vmax.f32 %v4611, 0.0
    %v5204 = vmax.f32 %v4616, 0.0
    %v5205 = vmax.f32 %v4619, 0.0
    %v5206 = vmax.f32 %v4624, 0.0
    %v5207 = vmax.f32 %v4627, 0.0
    %v5208 = vmax.f32 %v4632, 0.0
    %v5209 = vmax.f32 %v4635, 0.0
    %v5210 = vmax.f32 %v4640, 0.0
    %v5211 = vmax.f32 %v4643, 0.0
    %v5212 = vmax.f32 %v4648, 0.0
    %v5213 = vmax.f32 %v4651, 0.0
    %v5214 = vmax.f32 %v4656, 0.0
    %v5215 = vmax.f32 %v4659, 0.0
    %v5216 = vmax.f32 %v4664, 0.0
    %v5217 = vmax.f32 %v4667, 0.0
    %v5218 = vmax.f32 %v4672, 0.0
    %v5219 = vmax.f32 %v4675, 0.0
    %v5220 = vmax.f32 %v4680, 0.0
    %v5221 = vmax.f32 %v4683, 0.0
    %v5222 = vmax.f32 %v4688, 0.0
    %v5223 = vmax.f32 %v4691, 0.0
    %v5224 = vmax.f32 %v4696, 0.0
    %v5225 = vmax.f32 %v4699, 0.0
    %v5226 = vmax.f32 %v4704, 0.0
    %v5227 = vmax.f32 %v4707, 0.0
    %v5228 = vmax.f32 %v4712, 0.0
    %v5229 = vmax.f32 %v4715, 0.0
    %v5230 = vsel %vm1868, %v4718, 0.0
    %v5231 = vsel %vm1868, %v4719, 0.0
    %v5232 = vadd.f32 %v5230, %v5231
    %v5233 = vsel %vm1868, %v4720, 0.0
    %v5234 = vadd.f32 %v5232, %v5233
    %v5235 = vsel %vm1868, %v4721, 0.0
    %v5236 = vadd.f32 %v5234, %v5235
    %v5237 = vsel %vm1868, %v4722, 0.0
    %v5238 = vadd.f32 %v5236, %v5237
    %v5239 = vsel %vm1868, %v4723, 0.0
    %v5240 = vadd.f32 %v5238, %v5239
    %v5241 = vsel %vm1868, %v4724, 0.0
    %v5242 = vadd.f32 %v5240, %v5241
    %v5243 = vsel %vm1868, %v4725, 0.0
    %v5244 = vadd.f32 %v5242, %v5243
    %v5245 = vsel %vm1868, %v4726, 0.0
    %v5246 = vadd.f32 %v5244, %v5245
    %v5247 = vsel %vm1868, %v4727, 0.0
    %v5248 = vadd.f32 %v5246, %v5247
    %v5249 = vsel %vm1868, %v4728, 0.0
    %v5250 = vadd.f32 %v5248, %v5249
    %v5251 = vsel %vm1868, %v4729, 0.0
    %v5252 = vadd.f32 %v5250, %v5251
    %v5253 = vsel %vm1868, %v4730, 0.0
    %v5254 = vadd.f32 %v5252, %v5253
    %v5255 = vsel %vm1868, %v4731, 0.0
    %v5256 = vadd.f32 %v5254, %v5255
    %v5257 = vsel %vm1868, %v4732, 0.0
    %v5258 = vadd.f32 %v5256, %v5257
    %v5259 = vsel %vm1868, %v4733, 0.0
    %v5260 = vadd.f32 %v5258, %v5259
    %v5261 = vsel %vm1868, %v4734, 0.0
    %v5262 = vadd.f32 %v5260, %v5261
    %v5263 = vsel %vm1868, %v4735, 0.0
    %v5264 = vadd.f32 %v5262, %v5263
    %v5265 = vsel %vm1868, %v4736, 0.0
    %v5266 = vadd.f32 %v5264, %v5265
    %v5267 = vsel %vm1868, %v4737, 0.0
    %v5268 = vadd.f32 %v5266, %v5267
    %v5269 = vsel %vm1868, %v4738, 0.0
    %v5270 = vadd.f32 %v5268, %v5269
    %v5271 = vsel %vm1868, %v4739, 0.0
    %v5272 = vadd.f32 %v5270, %v5271
    %v5273 = vsel %vm1868, %v4740, 0.0
    %v5274 = vadd.f32 %v5272, %v5273
    %v5275 = vsel %vm1868, %v4741, 0.0
    %v5276 = vadd.f32 %v5274, %v5275
    %v5277 = vsel %vm1868, %v4742, 0.0
    %v5278 = vadd.f32 %v5276, %v5277
    %v5279 = vsel %vm1868, %v4743, 0.0
    %v5280 = vadd.f32 %v5278, %v5279
    %v5281 = vsel %vm1868, %v4744, 0.0
    %v5282 = vadd.f32 %v5280, %v5281
    %v5283 = vsel %vm1868, %v4745, 0.0
    %v5284 = vadd.f32 %v5282, %v5283
    %v5285 = vsel %vm1868, %v4746, 0.0
    %v5286 = vadd.f32 %v5284, %v5285
    %v5287 = vsel %vm1868, %v4747, 0.0
    %v5288 = vadd.f32 %v5286, %v5287
    %v5289 = vsel %vm1868, %v4748, 0.0
    %v5290 = vadd.f32 %v5288, %v5289
    %v5291 = vsel %vm1868, %v4749, 0.0
    %v5292 = vadd.f32 %v5290, %v5291
    %v5293 = vrot.slane %v5292, 4
    %v5294 = vadd.f32 %v5292, %v5293
    %v5295 = vrot.slane %v5294, 2
    %v5296 = vadd.f32 %v5294, %v5295
    %v5297 = vrot.slane %v5296, 1
    %v5298 = vadd.f32 %v5296, %v5297
    %v5299 = vsel %vm1868, %v4750, 0.0
    %v5300 = vsel %vm1868, %v4751, 0.0
    %v5301 = vadd.f32 %v5299, %v5300
    %v5302 = vsel %vm1868, %v4752, 0.0
    %v5303 = vadd.f32 %v5301, %v5302
    %v5304 = vsel %vm1868, %v4753, 0.0
    %v5305 = vadd.f32 %v5303, %v5304
    %v5306 = vsel %vm1868, %v4754, 0.0
    %v5307 = vadd.f32 %v5305, %v5306
    %v5308 = vsel %vm1868, %v4755, 0.0
    %v5309 = vadd.f32 %v5307, %v5308
    %v5310 = vsel %vm1868, %v4756, 0.0
    %v5311 = vadd.f32 %v5309, %v5310
    %v5312 = vsel %vm1868, %v4757, 0.0
    %v5313 = vadd.f32 %v5311, %v5312
    %v5314 = vsel %vm1868, %v4758, 0.0
    %v5315 = vadd.f32 %v5313, %v5314
    %v5316 = vsel %vm1868, %v4759, 0.0
    %v5317 = vadd.f32 %v5315, %v5316
    %v5318 = vsel %vm1868, %v4760, 0.0
    %v5319 = vadd.f32 %v5317, %v5318
    %v5320 = vsel %vm1868, %v4761, 0.0
    %v5321 = vadd.f32 %v5319, %v5320
    %v5322 = vsel %vm1868, %v4762, 0.0
    %v5323 = vadd.f32 %v5321, %v5322
    %v5324 = vsel %vm1868, %v4763, 0.0
    %v5325 = vadd.f32 %v5323, %v5324
    %v5326 = vsel %vm1868, %v4764, 0.0
    %v5327 = vadd.f32 %v5325, %v5326
    %v5328 = vsel %vm1868, %v4765, 0.0
    %v5329 = vadd.f32 %v5327, %v5328
    %v5330 = vsel %vm1868, %v4766, 0.0
    %v5331 = vadd.f32 %v5329, %v5330
    %v5332 = vsel %vm1868, %v4767, 0.0
    %v5333 = vadd.f32 %v5331, %v5332
    %v5334 = vsel %vm1868, %v4768, 0.0
    %v5335 = vadd.f32 %v5333, %v5334
    %v5336 = vsel %vm1868, %v4769, 0.0
    %v5337 = vadd.f32 %v5335, %v5336
    %v5338 = vsel %vm1868, %v4770, 0.0
    %v5339 = vadd.f32 %v5337, %v5338
    %v5340 = vsel %vm1868, %v4771, 0.0
    %v5341 = vadd.f32 %v5339, %v5340
    %v5342 = vsel %vm1868, %v4772, 0.0
    %v5343 = vadd.f32 %v5341, %v5342
    %v5344 = vsel %vm1868, %v4773, 0.0
    %v5345 = vadd.f32 %v5343, %v5344
    %v5346 = vsel %vm1868, %v4774, 0.0
    %v5347 = vadd.f32 %v5345, %v5346
    %v5348 = vsel %vm1868, %v4775, 0.0
    %v5349 = vadd.f32 %v5347, %v5348
    %v5350 = vsel %vm1868, %v4776, 0.0
    %v5351 = vadd.f32 %v5349, %v5350
    %v5352 = vsel %vm1868, %v4777, 0.0
    %v5353 = vadd.f32 %v5351, %v5352
    %v5354 = vsel %vm1868, %v4778, 0.0
    %v5355 = vadd.f32 %v5353, %v5354
    %v5356 = vsel %vm1868, %v4779, 0.0
    %v5357 = vadd.f32 %v5355, %v5356
    %v5358 = vsel %vm1868, %v4780, 0.0
    %v5359 = vadd.f32 %v5357, %v5358
    %v5360 = vsel %vm1868, %v4781, 0.0
    %v5361 = vadd.f32 %v5359, %v5360
    %v5362 = vrot.slane %v5361, 4
    %v5363 = vadd.f32 %v5361, %v5362
    %v5364 = vrot.slane %v5363, 2
    %v5365 = vadd.f32 %v5363, %v5364
    %v5366 = vrot.slane %v5365, 1
    %v5367 = vadd.f32 %v5365, %v5366
    %v5368 = vsel %vm1868, %v4782, 0.0
    %v5369 = vsel %vm1868, %v4783, 0.0
    %v5370 = vadd.f32 %v5368, %v5369
    %v5371 = vsel %vm1868, %v4784, 0.0
    %v5372 = vadd.f32 %v5370, %v5371
    %v5373 = vsel %vm1868, %v4785, 0.0
    %v5374 = vadd.f32 %v5372, %v5373
    %v5375 = vsel %vm1868, %v4786, 0.0
    %v5376 = vadd.f32 %v5374, %v5375
    %v5377 = vsel %vm1868, %v4787, 0.0
    %v5378 = vadd.f32 %v5376, %v5377
    %v5379 = vsel %vm1868, %v4788, 0.0
    %v5380 = vadd.f32 %v5378, %v5379
    %v5381 = vsel %vm1868, %v4789, 0.0
    %v5382 = vadd.f32 %v5380, %v5381
    %v5383 = vsel %vm1868, %v4790, 0.0
    %v5384 = vadd.f32 %v5382, %v5383
    %v5385 = vsel %vm1868, %v4791, 0.0
    %v5386 = vadd.f32 %v5384, %v5385
    %v5387 = vsel %vm1868, %v4792, 0.0
    %v5388 = vadd.f32 %v5386, %v5387
    %v5389 = vsel %vm1868, %v4793, 0.0
    %v5390 = vadd.f32 %v5388, %v5389
    %v5391 = vsel %vm1868, %v4794, 0.0
    %v5392 = vadd.f32 %v5390, %v5391
    %v5393 = vsel %vm1868, %v4795, 0.0
    %v5394 = vadd.f32 %v5392, %v5393
    %v5395 = vsel %vm1868, %v4796, 0.0
    %v5396 = vadd.f32 %v5394, %v5395
    %v5397 = vsel %vm1868, %v4797, 0.0
    %v5398 = vadd.f32 %v5396, %v5397
    %v5399 = vsel %vm1868, %v4798, 0.0
    %v5400 = vadd.f32 %v5398, %v5399
    %v5401 = vsel %vm1868, %v4799, 0.0
    %v5402 = vadd.f32 %v5400, %v5401
    %v5403 = vsel %vm1868, %v4800, 0.0
    %v5404 = vadd.f32 %v5402, %v5403
    %v5405 = vsel %vm1868, %v4801, 0.0
    %v5406 = vadd.f32 %v5404, %v5405
    %v5407 = vsel %vm1868, %v4802, 0.0
    %v5408 = vadd.f32 %v5406, %v5407
    %v5409 = vsel %vm1868, %v4803, 0.0
    %v5410 = vadd.f32 %v5408, %v5409
    %v5411 = vsel %vm1868, %v4804, 0.0
    %v5412 = vadd.f32 %v5410, %v5411
    %v5413 = vsel %vm1868, %v4805, 0.0
    %v5414 = vadd.f32 %v5412, %v5413
    %v5415 = vsel %vm1868, %v4806, 0.0
    %v5416 = vadd.f32 %v5414, %v5415
    %v5417 = vsel %vm1868, %v4807, 0.0
    %v5418 = vadd.f32 %v5416, %v5417
    %v5419 = vsel %vm1868, %v4808, 0.0
    %v5420 = vadd.f32 %v5418, %v5419
    %v5421 = vsel %vm1868, %v4809, 0.0
    %v5422 = vadd.f32 %v5420, %v5421
    %v5423 = vsel %vm1868, %v4810, 0.0
    %v5424 = vadd.f32 %v5422, %v5423
    %v5425 = vsel %vm1868, %v4811, 0.0
    %v5426 = vadd.f32 %v5424, %v5425
    %v5427 = vsel %vm1868, %v4812, 0.0
    %v5428 = vadd.f32 %v5426, %v5427
    %v5429 = vsel %vm1868, %v4813, 0.0
    %v5430 = vadd.f32 %v5428, %v5429
    %v5431 = vrot.slane %v5430, 4
    %v5432 = vadd.f32 %v5430, %v5431
    %v5433 = vrot.slane %v5432, 2
    %v5434 = vadd.f32 %v5432, %v5433
    %v5435 = vrot.slane %v5434, 1
    %v5436 = vadd.f32 %v5434, %v5435
    %v5437 = vsel %vm1868, %v4814, 0.0
    %v5438 = vsel %vm1868, %v4815, 0.0
    %v5439 = vadd.f32 %v5437, %v5438
    %v5440 = vsel %vm1868, %v4816, 0.0
    %v5441 = vadd.f32 %v5439, %v5440
    %v5442 = vsel %vm1868, %v4817, 0.0
    %v5443 = vadd.f32 %v5441, %v5442
    %v5444 = vsel %vm1868, %v4818, 0.0
    %v5445 = vadd.f32 %v5443, %v5444
    %v5446 = vsel %vm1868, %v4819, 0.0
    %v5447 = vadd.f32 %v5445, %v5446
    %v5448 = vsel %vm1868, %v4820, 0.0
    %v5449 = vadd.f32 %v5447, %v5448
    %v5450 = vsel %vm1868, %v4821, 0.0
    %v5451 = vadd.f32 %v5449, %v5450
    %v5452 = vsel %vm1868, %v4822, 0.0
    %v5453 = vadd.f32 %v5451, %v5452
    %v5454 = vsel %vm1868, %v4823, 0.0
    %v5455 = vadd.f32 %v5453, %v5454
    %v5456 = vsel %vm1868, %v4824, 0.0
    %v5457 = vadd.f32 %v5455, %v5456
    %v5458 = vsel %vm1868, %v4825, 0.0
    %v5459 = vadd.f32 %v5457, %v5458
    %v5460 = vsel %vm1868, %v4826, 0.0
    %v5461 = vadd.f32 %v5459, %v5460
    %v5462 = vsel %vm1868, %v4827, 0.0
    %v5463 = vadd.f32 %v5461, %v5462
    %v5464 = vsel %vm1868, %v4828, 0.0
    %v5465 = vadd.f32 %v5463, %v5464
    %v5466 = vsel %vm1868, %v4829, 0.0
    %v5467 = vadd.f32 %v5465, %v5466
    %v5468 = vsel %vm1868, %v4830, 0.0
    %v5469 = vadd.f32 %v5467, %v5468
    %v5470 = vsel %vm1868, %v4831, 0.0
    %v5471 = vadd.f32 %v5469, %v5470
    %v5472 = vsel %vm1868, %v4832, 0.0
    %v5473 = vadd.f32 %v5471, %v5472
    %v5474 = vsel %vm1868, %v4833, 0.0
    %v5475 = vadd.f32 %v5473, %v5474
    %v5476 = vsel %vm1868, %v4834, 0.0
    %v5477 = vadd.f32 %v5475, %v5476
    %v5478 = vsel %vm1868, %v4835, 0.0
    %v5479 = vadd.f32 %v5477, %v5478
    %v5480 = vsel %vm1868, %v4836, 0.0
    %v5481 = vadd.f32 %v5479, %v5480
    %v5482 = vsel %vm1868, %v4837, 0.0
    %v5483 = vadd.f32 %v5481, %v5482
    %v5484 = vsel %vm1868, %v4838, 0.0
    %v5485 = vadd.f32 %v5483, %v5484
    %v5486 = vsel %vm1868, %v4839, 0.0
    %v5487 = vadd.f32 %v5485, %v5486
    %v5488 = vsel %vm1868, %v4840, 0.0
    %v5489 = vadd.f32 %v5487, %v5488
    %v5490 = vsel %vm1868, %v4841, 0.0
    %v5491 = vadd.f32 %v5489, %v5490
    %v5492 = vsel %vm1868, %v4842, 0.0
    %v5493 = vadd.f32 %v5491, %v5492
    %v5494 = vsel %vm1868, %v4843, 0.0
    %v5495 = vadd.f32 %v5493, %v5494
    %v5496 = vsel %vm1868, %v4844, 0.0
    %v5497 = vadd.f32 %v5495, %v5496
    %v5498 = vsel %vm1868, %v4845, 0.0
    %v5499 = vadd.f32 %v5497, %v5498
    %v5500 = vrot.slane %v5499, 4
    %v5501 = vadd.f32 %v5499, %v5500
    %v5502 = vrot.slane %v5501, 2
    %v5503 = vadd.f32 %v5501, %v5502
    %v5504 = vrot.slane %v5503, 1
    %v5505 = vadd.f32 %v5503, %v5504
    %v5506 = vsel %vm1868, %v4846, 0.0
    %v5507 = vsel %vm1868, %v4847, 0.0
    %v5508 = vadd.f32 %v5506, %v5507
    %v5509 = vsel %vm1868, %v4848, 0.0
    %v5510 = vadd.f32 %v5508, %v5509
    %v5511 = vsel %vm1868, %v4849, 0.0
    %v5512 = vadd.f32 %v5510, %v5511
    %v5513 = vsel %vm1868, %v4850, 0.0
    %v5514 = vadd.f32 %v5512, %v5513
    %v5515 = vsel %vm1868, %v4851, 0.0
    %v5516 = vadd.f32 %v5514, %v5515
    %v5517 = vsel %vm1868, %v4852, 0.0
    %v5518 = vadd.f32 %v5516, %v5517
    %v5519 = vsel %vm1868, %v4853, 0.0
    %v5520 = vadd.f32 %v5518, %v5519
    %v5521 = vsel %vm1868, %v4854, 0.0
    %v5522 = vadd.f32 %v5520, %v5521
    %v5523 = vsel %vm1868, %v4855, 0.0
    %v5524 = vadd.f32 %v5522, %v5523
    %v5525 = vsel %vm1868, %v4856, 0.0
    %v5526 = vadd.f32 %v5524, %v5525
    %v5527 = vsel %vm1868, %v4857, 0.0
    %v5528 = vadd.f32 %v5526, %v5527
    %v5529 = vsel %vm1868, %v4858, 0.0
    %v5530 = vadd.f32 %v5528, %v5529
    %v5531 = vsel %vm1868, %v4859, 0.0
    %v5532 = vadd.f32 %v5530, %v5531
    %v5533 = vsel %vm1868, %v4860, 0.0
    %v5534 = vadd.f32 %v5532, %v5533
    %v5535 = vsel %vm1868, %v4861, 0.0
    %v5536 = vadd.f32 %v5534, %v5535
    %v5537 = vsel %vm1868, %v4862, 0.0
    %v5538 = vadd.f32 %v5536, %v5537
    %v5539 = vsel %vm1868, %v4863, 0.0
    %v5540 = vadd.f32 %v5538, %v5539
    %v5541 = vsel %vm1868, %v4864, 0.0
    %v5542 = vadd.f32 %v5540, %v5541
    %v5543 = vsel %vm1868, %v4865, 0.0
    %v5544 = vadd.f32 %v5542, %v5543
    %v5545 = vsel %vm1868, %v4866, 0.0
    %v5546 = vadd.f32 %v5544, %v5545
    %v5547 = vsel %vm1868, %v4867, 0.0
    %v5548 = vadd.f32 %v5546, %v5547
    %v5549 = vsel %vm1868, %v4868, 0.0
    %v5550 = vadd.f32 %v5548, %v5549
    %v5551 = vsel %vm1868, %v4869, 0.0
    %v5552 = vadd.f32 %v5550, %v5551
    %v5553 = vsel %vm1868, %v4870, 0.0
    %v5554 = vadd.f32 %v5552, %v5553
    %v5555 = vsel %vm1868, %v4871, 0.0
    %v5556 = vadd.f32 %v5554, %v5555
    %v5557 = vsel %vm1868, %v4872, 0.0
    %v5558 = vadd.f32 %v5556, %v5557
    %v5559 = vsel %vm1868, %v4873, 0.0
    %v5560 = vadd.f32 %v5558, %v5559
    %v5561 = vsel %vm1868, %v4874, 0.0
    %v5562 = vadd.f32 %v5560, %v5561
    %v5563 = vsel %vm1868, %v4875, 0.0
    %v5564 = vadd.f32 %v5562, %v5563
    %v5565 = vsel %vm1868, %v4876, 0.0
    %v5566 = vadd.f32 %v5564, %v5565
    %v5567 = vsel %vm1868, %v4877, 0.0
    %v5568 = vadd.f32 %v5566, %v5567
    %v5569 = vrot.slane %v5568, 4
    %v5570 = vadd.f32 %v5568, %v5569
    %v5571 = vrot.slane %v5570, 2
    %v5572 = vadd.f32 %v5570, %v5571
    %v5573 = vrot.slane %v5572, 1
    %v5574 = vadd.f32 %v5572, %v5573
    %v5575 = vsel %vm1868, %v4878, 0.0
    %v5576 = vsel %vm1868, %v4879, 0.0
    %v5577 = vadd.f32 %v5575, %v5576
    %v5578 = vsel %vm1868, %v4880, 0.0
    %v5579 = vadd.f32 %v5577, %v5578
    %v5580 = vsel %vm1868, %v4881, 0.0
    %v5581 = vadd.f32 %v5579, %v5580
    %v5582 = vsel %vm1868, %v4882, 0.0
    %v5583 = vadd.f32 %v5581, %v5582
    %v5584 = vsel %vm1868, %v4883, 0.0
    %v5585 = vadd.f32 %v5583, %v5584
    %v5586 = vsel %vm1868, %v4884, 0.0
    %v5587 = vadd.f32 %v5585, %v5586
    %v5588 = vsel %vm1868, %v4885, 0.0
    %v5589 = vadd.f32 %v5587, %v5588
    %v5590 = vsel %vm1868, %v4886, 0.0
    %v5591 = vadd.f32 %v5589, %v5590
    %v5592 = vsel %vm1868, %v4887, 0.0
    %v5593 = vadd.f32 %v5591, %v5592
    %v5594 = vsel %vm1868, %v4888, 0.0
    %v5595 = vadd.f32 %v5593, %v5594
    %v5596 = vsel %vm1868, %v4889, 0.0
    %v5597 = vadd.f32 %v5595, %v5596
    %v5598 = vsel %vm1868, %v4890, 0.0
    %v5599 = vadd.f32 %v5597, %v5598
    %v5600 = vsel %vm1868, %v4891, 0.0
    %v5601 = vadd.f32 %v5599, %v5600
    %v5602 = vsel %vm1868, %v4892, 0.0
    %v5603 = vadd.f32 %v5601, %v5602
    %v5604 = vsel %vm1868, %v4893, 0.0
    %v5605 = vadd.f32 %v5603, %v5604
    %v5606 = vsel %vm1868, %v4894, 0.0
    %v5607 = vadd.f32 %v5605, %v5606
    %v5608 = vsel %vm1868, %v4895, 0.0
    %v5609 = vadd.f32 %v5607, %v5608
    %v5610 = vsel %vm1868, %v4896, 0.0
    %v5611 = vadd.f32 %v5609, %v5610
    %v5612 = vsel %vm1868, %v4897, 0.0
    %v5613 = vadd.f32 %v5611, %v5612
    %v5614 = vsel %vm1868, %v4898, 0.0
    %v5615 = vadd.f32 %v5613, %v5614
    %v5616 = vsel %vm1868, %v4899, 0.0
    %v5617 = vadd.f32 %v5615, %v5616
    %v5618 = vsel %vm1868, %v4900, 0.0
    %v5619 = vadd.f32 %v5617, %v5618
    %v5620 = vsel %vm1868, %v4901, 0.0
    %v5621 = vadd.f32 %v5619, %v5620
    %v5622 = vsel %vm1868, %v4902, 0.0
    %v5623 = vadd.f32 %v5621, %v5622
    %v5624 = vsel %vm1868, %v4903, 0.0
    %v5625 = vadd.f32 %v5623, %v5624
    %v5626 = vsel %vm1868, %v4904, 0.0
    %v5627 = vadd.f32 %v5625, %v5626
    %v5628 = vsel %vm1868, %v4905, 0.0
    %v5629 = vadd.f32 %v5627, %v5628
    %v5630 = vsel %vm1868, %v4906, 0.0
    %v5631 = vadd.f32 %v5629, %v5630
    %v5632 = vsel %vm1868, %v4907, 0.0
    %v5633 = vadd.f32 %v5631, %v5632
    %v5634 = vsel %vm1868, %v4908, 0.0
    %v5635 = vadd.f32 %v5633, %v5634
    %v5636 = vsel %vm1868, %v4909, 0.0
    %v5637 = vadd.f32 %v5635, %v5636
    %v5638 = vrot.slane %v5637, 4
    %v5639 = vadd.f32 %v5637, %v5638
    %v5640 = vrot.slane %v5639, 2
    %v5641 = vadd.f32 %v5639, %v5640
    %v5642 = vrot.slane %v5641, 1
    %v5643 = vadd.f32 %v5641, %v5642
    %v5644 = vsel %vm1868, %v4910, 0.0
    %v5645 = vsel %vm1868, %v4911, 0.0
    %v5646 = vadd.f32 %v5644, %v5645
    %v5647 = vsel %vm1868, %v4912, 0.0
    %v5648 = vadd.f32 %v5646, %v5647
    %v5649 = vsel %vm1868, %v4913, 0.0
    %v5650 = vadd.f32 %v5648, %v5649
    %v5651 = vsel %vm1868, %v4914, 0.0
    %v5652 = vadd.f32 %v5650, %v5651
    %v5653 = vsel %vm1868, %v4915, 0.0
    %v5654 = vadd.f32 %v5652, %v5653
    %v5655 = vsel %vm1868, %v4916, 0.0
    %v5656 = vadd.f32 %v5654, %v5655
    %v5657 = vsel %vm1868, %v4917, 0.0
    %v5658 = vadd.f32 %v5656, %v5657
    %v5659 = vsel %vm1868, %v4918, 0.0
    %v5660 = vadd.f32 %v5658, %v5659
    %v5661 = vsel %vm1868, %v4919, 0.0
    %v5662 = vadd.f32 %v5660, %v5661
    %v5663 = vsel %vm1868, %v4920, 0.0
    %v5664 = vadd.f32 %v5662, %v5663
    %v5665 = vsel %vm1868, %v4921, 0.0
    %v5666 = vadd.f32 %v5664, %v5665
    %v5667 = vsel %vm1868, %v4922, 0.0
    %v5668 = vadd.f32 %v5666, %v5667
    %v5669 = vsel %vm1868, %v4923, 0.0
    %v5670 = vadd.f32 %v5668, %v5669
    %v5671 = vsel %vm1868, %v4924, 0.0
    %v5672 = vadd.f32 %v5670, %v5671
    %v5673 = vsel %vm1868, %v4925, 0.0
    %v5674 = vadd.f32 %v5672, %v5673
    %v5675 = vsel %vm1868, %v4926, 0.0
    %v5676 = vadd.f32 %v5674, %v5675
    %v5677 = vsel %vm1868, %v4927, 0.0
    %v5678 = vadd.f32 %v5676, %v5677
    %v5679 = vsel %vm1868, %v4928, 0.0
    %v5680 = vadd.f32 %v5678, %v5679
    %v5681 = vsel %vm1868, %v4929, 0.0
    %v5682 = vadd.f32 %v5680, %v5681
    %v5683 = vsel %vm1868, %v4930, 0.0
    %v5684 = vadd.f32 %v5682, %v5683
    %v5685 = vsel %vm1868, %v4931, 0.0
    %v5686 = vadd.f32 %v5684, %v5685
    %v5687 = vsel %vm1868, %v4932, 0.0
    %v5688 = vadd.f32 %v5686, %v5687
    %v5689 = vsel %vm1868, %v4933, 0.0
    %v5690 = vadd.f32 %v5688, %v5689
    %v5691 = vsel %vm1868, %v4934, 0.0
    %v5692 = vadd.f32 %v5690, %v5691
    %v5693 = vsel %vm1868, %v4935, 0.0
    %v5694 = vadd.f32 %v5692, %v5693
    %v5695 = vsel %vm1868, %v4936, 0.0
    %v5696 = vadd.f32 %v5694, %v5695
    %v5697 = vsel %vm1868, %v4937, 0.0
    %v5698 = vadd.f32 %v5696, %v5697
    %v5699 = vsel %vm1868, %v4938, 0.0
    %v5700 = vadd.f32 %v5698, %v5699
    %v5701 = vsel %vm1868, %v4939, 0.0
    %v5702 = vadd.f32 %v5700, %v5701
    %v5703 = vsel %vm1868, %v4940, 0.0
    %v5704 = vadd.f32 %v5702, %v5703
    %v5705 = vsel %vm1868, %v4941, 0.0
    %v5706 = vadd.f32 %v5704, %v5705
    %v5707 = vrot.slane %v5706, 4
    %v5708 = vadd.f32 %v5706, %v5707
    %v5709 = vrot.slane %v5708, 2
    %v5710 = vadd.f32 %v5708, %v5709
    %v5711 = vrot.slane %v5710, 1
    %v5712 = vadd.f32 %v5710, %v5711
    %v5713 = vsel %vm1868, %v4942, 0.0
    %v5714 = vsel %vm1868, %v4943, 0.0
    %v5715 = vadd.f32 %v5713, %v5714
    %v5716 = vsel %vm1868, %v4944, 0.0
    %v5717 = vadd.f32 %v5715, %v5716
    %v5718 = vsel %vm1868, %v4945, 0.0
    %v5719 = vadd.f32 %v5717, %v5718
    %v5720 = vsel %vm1868, %v4946, 0.0
    %v5721 = vadd.f32 %v5719, %v5720
    %v5722 = vsel %vm1868, %v4947, 0.0
    %v5723 = vadd.f32 %v5721, %v5722
    %v5724 = vsel %vm1868, %v4948, 0.0
    %v5725 = vadd.f32 %v5723, %v5724
    %v5726 = vsel %vm1868, %v4949, 0.0
    %v5727 = vadd.f32 %v5725, %v5726
    %v5728 = vsel %vm1868, %v4950, 0.0
    %v5729 = vadd.f32 %v5727, %v5728
    %v5730 = vsel %vm1868, %v4951, 0.0
    %v5731 = vadd.f32 %v5729, %v5730
    %v5732 = vsel %vm1868, %v4952, 0.0
    %v5733 = vadd.f32 %v5731, %v5732
    %v5734 = vsel %vm1868, %v4953, 0.0
    %v5735 = vadd.f32 %v5733, %v5734
    %v5736 = vsel %vm1868, %v4954, 0.0
    %v5737 = vadd.f32 %v5735, %v5736
    %v5738 = vsel %vm1868, %v4955, 0.0
    %v5739 = vadd.f32 %v5737, %v5738
    %v5740 = vsel %vm1868, %v4956, 0.0
    %v5741 = vadd.f32 %v5739, %v5740
    %v5742 = vsel %vm1868, %v4957, 0.0
    %v5743 = vadd.f32 %v5741, %v5742
    %v5744 = vsel %vm1868, %v4958, 0.0
    %v5745 = vadd.f32 %v5743, %v5744
    %v5746 = vsel %vm1868, %v4959, 0.0
    %v5747 = vadd.f32 %v5745, %v5746
    %v5748 = vsel %vm1868, %v4960, 0.0
    %v5749 = vadd.f32 %v5747, %v5748
    %v5750 = vsel %vm1868, %v4961, 0.0
    %v5751 = vadd.f32 %v5749, %v5750
    %v5752 = vsel %vm1868, %v4962, 0.0
    %v5753 = vadd.f32 %v5751, %v5752
    %v5754 = vsel %vm1868, %v4963, 0.0
    %v5755 = vadd.f32 %v5753, %v5754
    %v5756 = vsel %vm1868, %v4964, 0.0
    %v5757 = vadd.f32 %v5755, %v5756
    %v5758 = vsel %vm1868, %v4965, 0.0
    %v5759 = vadd.f32 %v5757, %v5758
    %v5760 = vsel %vm1868, %v4966, 0.0
    %v5761 = vadd.f32 %v5759, %v5760
    %v5762 = vsel %vm1868, %v4967, 0.0
    %v5763 = vadd.f32 %v5761, %v5762
    %v5764 = vsel %vm1868, %v4968, 0.0
    %v5765 = vadd.f32 %v5763, %v5764
    %v5766 = vsel %vm1868, %v4969, 0.0
    %v5767 = vadd.f32 %v5765, %v5766
    %v5768 = vsel %vm1868, %v4970, 0.0
    %v5769 = vadd.f32 %v5767, %v5768
    %v5770 = vsel %vm1868, %v4971, 0.0
    %v5771 = vadd.f32 %v5769, %v5770
    %v5772 = vsel %vm1868, %v4972, 0.0
    %v5773 = vadd.f32 %v5771, %v5772
    %v5774 = vsel %vm1868, %v4973, 0.0
    %v5775 = vadd.f32 %v5773, %v5774
    %v5776 = vrot.slane %v5775, 4
    %v5777 = vadd.f32 %v5775, %v5776
    %v5778 = vrot.slane %v5777, 2
    %v5779 = vadd.f32 %v5777, %v5778
    %v5780 = vrot.slane %v5779, 1
    %v5781 = vadd.f32 %v5779, %v5780
    %v5782 = vsel %vm1868, %v4974, 0.0
    %v5783 = vsel %vm1868, %v4975, 0.0
    %v5784 = vadd.f32 %v5782, %v5783
    %v5785 = vsel %vm1868, %v4976, 0.0
    %v5786 = vadd.f32 %v5784, %v5785
    %v5787 = vsel %vm1868, %v4977, 0.0
    %v5788 = vadd.f32 %v5786, %v5787
    %v5789 = vsel %vm1868, %v4978, 0.0
    %v5790 = vadd.f32 %v5788, %v5789
    %v5791 = vsel %vm1868, %v4979, 0.0
    %v5792 = vadd.f32 %v5790, %v5791
    %v5793 = vsel %vm1868, %v4980, 0.0
    %v5794 = vadd.f32 %v5792, %v5793
    %v5795 = vsel %vm1868, %v4981, 0.0
    %v5796 = vadd.f32 %v5794, %v5795
    %v5797 = vsel %vm1868, %v4982, 0.0
    %v5798 = vadd.f32 %v5796, %v5797
    %v5799 = vsel %vm1868, %v4983, 0.0
    %v5800 = vadd.f32 %v5798, %v5799
    %v5801 = vsel %vm1868, %v4984, 0.0
    %v5802 = vadd.f32 %v5800, %v5801
    %v5803 = vsel %vm1868, %v4985, 0.0
    %v5804 = vadd.f32 %v5802, %v5803
    %v5805 = vsel %vm1868, %v4986, 0.0
    %v5806 = vadd.f32 %v5804, %v5805
    %v5807 = vsel %vm1868, %v4987, 0.0
    %v5808 = vadd.f32 %v5806, %v5807
    %v5809 = vsel %vm1868, %v4988, 0.0
    %v5810 = vadd.f32 %v5808, %v5809
    %v5811 = vsel %vm1868, %v4989, 0.0
    %v5812 = vadd.f32 %v5810, %v5811
    %v5813 = vsel %vm1868, %v4990, 0.0
    %v5814 = vadd.f32 %v5812, %v5813
    %v5815 = vsel %vm1868, %v4991, 0.0
    %v5816 = vadd.f32 %v5814, %v5815
    %v5817 = vsel %vm1868, %v4992, 0.0
    %v5818 = vadd.f32 %v5816, %v5817
    %v5819 = vsel %vm1868, %v4993, 0.0
    %v5820 = vadd.f32 %v5818, %v5819
    %v5821 = vsel %vm1868, %v4994, 0.0
    %v5822 = vadd.f32 %v5820, %v5821
    %v5823 = vsel %vm1868, %v4995, 0.0
    %v5824 = vadd.f32 %v5822, %v5823
    %v5825 = vsel %vm1868, %v4996, 0.0
    %v5826 = vadd.f32 %v5824, %v5825
    %v5827 = vsel %vm1868, %v4997, 0.0
    %v5828 = vadd.f32 %v5826, %v5827
    %v5829 = vsel %vm1868, %v4998, 0.0
    %v5830 = vadd.f32 %v5828, %v5829
    %v5831 = vsel %vm1868, %v4999, 0.0
    %v5832 = vadd.f32 %v5830, %v5831
    %v5833 = vsel %vm1868, %v5000, 0.0
    %v5834 = vadd.f32 %v5832, %v5833
    %v5835 = vsel %vm1868, %v5001, 0.0
    %v5836 = vadd.f32 %v5834, %v5835
    %v5837 = vsel %vm1868, %v5002, 0.0
    %v5838 = vadd.f32 %v5836, %v5837
    %v5839 = vsel %vm1868, %v5003, 0.0
    %v5840 = vadd.f32 %v5838, %v5839
    %v5841 = vsel %vm1868, %v5004, 0.0
    %v5842 = vadd.f32 %v5840, %v5841
    %v5843 = vsel %vm1868, %v5005, 0.0
    %v5844 = vadd.f32 %v5842, %v5843
    %v5845 = vrot.slane %v5844, 4
    %v5846 = vadd.f32 %v5844, %v5845
    %v5847 = vrot.slane %v5846, 2
    %v5848 = vadd.f32 %v5846, %v5847
    %v5849 = vrot.slane %v5848, 1
    %v5850 = vadd.f32 %v5848, %v5849
    %v5851 = vsel %vm1868, %v5006, 0.0
    %v5852 = vsel %vm1868, %v5007, 0.0
    %v5853 = vadd.f32 %v5851, %v5852
    %v5854 = vsel %vm1868, %v5008, 0.0
    %v5855 = vadd.f32 %v5853, %v5854
    %v5856 = vsel %vm1868, %v5009, 0.0
    %v5857 = vadd.f32 %v5855, %v5856
    %v5858 = vsel %vm1868, %v5010, 0.0
    %v5859 = vadd.f32 %v5857, %v5858
    %v5860 = vsel %vm1868, %v5011, 0.0
    %v5861 = vadd.f32 %v5859, %v5860
    %v5862 = vsel %vm1868, %v5012, 0.0
    %v5863 = vadd.f32 %v5861, %v5862
    %v5864 = vsel %vm1868, %v5013, 0.0
    %v5865 = vadd.f32 %v5863, %v5864
    %v5866 = vsel %vm1868, %v5014, 0.0
    %v5867 = vadd.f32 %v5865, %v5866
    %v5868 = vsel %vm1868, %v5015, 0.0
    %v5869 = vadd.f32 %v5867, %v5868
    %v5870 = vsel %vm1868, %v5016, 0.0
    %v5871 = vadd.f32 %v5869, %v5870
    %v5872 = vsel %vm1868, %v5017, 0.0
    %v5873 = vadd.f32 %v5871, %v5872
    %v5874 = vsel %vm1868, %v5018, 0.0
    %v5875 = vadd.f32 %v5873, %v5874
    %v5876 = vsel %vm1868, %v5019, 0.0
    %v5877 = vadd.f32 %v5875, %v5876
    %v5878 = vsel %vm1868, %v5020, 0.0
    %v5879 = vadd.f32 %v5877, %v5878
    %v5880 = vsel %vm1868, %v5021, 0.0
    %v5881 = vadd.f32 %v5879, %v5880
    %v5882 = vsel %vm1868, %v5022, 0.0
    %v5883 = vadd.f32 %v5881, %v5882
    %v5884 = vsel %vm1868, %v5023, 0.0
    %v5885 = vadd.f32 %v5883, %v5884
    %v5886 = vsel %vm1868, %v5024, 0.0
    %v5887 = vadd.f32 %v5885, %v5886
    %v5888 = vsel %vm1868, %v5025, 0.0
    %v5889 = vadd.f32 %v5887, %v5888
    %v5890 = vsel %vm1868, %v5026, 0.0
    %v5891 = vadd.f32 %v5889, %v5890
    %v5892 = vsel %vm1868, %v5027, 0.0
    %v5893 = vadd.f32 %v5891, %v5892
    %v5894 = vsel %vm1868, %v5028, 0.0
    %v5895 = vadd.f32 %v5893, %v5894
    %v5896 = vsel %vm1868, %v5029, 0.0
    %v5897 = vadd.f32 %v5895, %v5896
    %v5898 = vsel %vm1868, %v5030, 0.0
    %v5899 = vadd.f32 %v5897, %v5898
    %v5900 = vsel %vm1868, %v5031, 0.0
    %v5901 = vadd.f32 %v5899, %v5900
    %v5902 = vsel %vm1868, %v5032, 0.0
    %v5903 = vadd.f32 %v5901, %v5902
    %v5904 = vsel %vm1868, %v5033, 0.0
    %v5905 = vadd.f32 %v5903, %v5904
    %v5906 = vsel %vm1868, %v5034, 0.0
    %v5907 = vadd.f32 %v5905, %v5906
    %v5908 = vsel %vm1868, %v5035, 0.0
    %v5909 = vadd.f32 %v5907, %v5908
    %v5910 = vsel %vm1868, %v5036, 0.0
    %v5911 = vadd.f32 %v5909, %v5910
    %v5912 = vsel %vm1868, %v5037, 0.0
    %v5913 = vadd.f32 %v5911, %v5912
    %v5914 = vrot.slane %v5913, 4
    %v5915 = vadd.f32 %v5913, %v5914
    %v5916 = vrot.slane %v5915, 2
    %v5917 = vadd.f32 %v5915, %v5916
    %v5918 = vrot.slane %v5917, 1
    %v5919 = vadd.f32 %v5917, %v5918
    %v5920 = vsel %vm1868, %v5038, 0.0
    %v5921 = vsel %vm1868, %v5039, 0.0
    %v5922 = vadd.f32 %v5920, %v5921
    %v5923 = vsel %vm1868, %v5040, 0.0
    %v5924 = vadd.f32 %v5922, %v5923
    %v5925 = vsel %vm1868, %v5041, 0.0
    %v5926 = vadd.f32 %v5924, %v5925
    %v5927 = vsel %vm1868, %v5042, 0.0
    %v5928 = vadd.f32 %v5926, %v5927
    %v5929 = vsel %vm1868, %v5043, 0.0
    %v5930 = vadd.f32 %v5928, %v5929
    %v5931 = vsel %vm1868, %v5044, 0.0
    %v5932 = vadd.f32 %v5930, %v5931
    %v5933 = vsel %vm1868, %v5045, 0.0
    %v5934 = vadd.f32 %v5932, %v5933
    %v5935 = vsel %vm1868, %v5046, 0.0
    %v5936 = vadd.f32 %v5934, %v5935
    %v5937 = vsel %vm1868, %v5047, 0.0
    %v5938 = vadd.f32 %v5936, %v5937
    %v5939 = vsel %vm1868, %v5048, 0.0
    %v5940 = vadd.f32 %v5938, %v5939
    %v5941 = vsel %vm1868, %v5049, 0.0
    %v5942 = vadd.f32 %v5940, %v5941
    %v5943 = vsel %vm1868, %v5050, 0.0
    %v5944 = vadd.f32 %v5942, %v5943
    %v5945 = vsel %vm1868, %v5051, 0.0
    %v5946 = vadd.f32 %v5944, %v5945
    %v5947 = vsel %vm1868, %v5052, 0.0
    %v5948 = vadd.f32 %v5946, %v5947
    %v5949 = vsel %vm1868, %v5053, 0.0
    %v5950 = vadd.f32 %v5948, %v5949
    %v5951 = vsel %vm1868, %v5054, 0.0
    %v5952 = vadd.f32 %v5950, %v5951
    %v5953 = vsel %vm1868, %v5055, 0.0
    %v5954 = vadd.f32 %v5952, %v5953
    %v5955 = vsel %vm1868, %v5056, 0.0
    %v5956 = vadd.f32 %v5954, %v5955
    %v5957 = vsel %vm1868, %v5057, 0.0
    %v5958 = vadd.f32 %v5956, %v5957
    %v5959 = vsel %vm1868, %v5058, 0.0
    %v5960 = vadd.f32 %v5958, %v5959
    %v5961 = vsel %vm1868, %v5059, 0.0
    %v5962 = vadd.f32 %v5960, %v5961
    %v5963 = vsel %vm1868, %v5060, 0.0
    %v5964 = vadd.f32 %v5962, %v5963
    %v5965 = vsel %vm1868, %v5061, 0.0
    %v5966 = vadd.f32 %v5964, %v5965
    %v5967 = vsel %vm1868, %v5062, 0.0
    %v5968 = vadd.f32 %v5966, %v5967
    %v5969 = vsel %vm1868, %v5063, 0.0
    %v5970 = vadd.f32 %v5968, %v5969
    %v5971 = vsel %vm1868, %v5064, 0.0
    %v5972 = vadd.f32 %v5970, %v5971
    %v5973 = vsel %vm1868, %v5065, 0.0
    %v5974 = vadd.f32 %v5972, %v5973
    %v5975 = vsel %vm1868, %v5066, 0.0
    %v5976 = vadd.f32 %v5974, %v5975
    %v5977 = vsel %vm1868, %v5067, 0.0
    %v5978 = vadd.f32 %v5976, %v5977
    %v5979 = vsel %vm1868, %v5068, 0.0
    %v5980 = vadd.f32 %v5978, %v5979
    %v5981 = vsel %vm1868, %v5069, 0.0
    %v5982 = vadd.f32 %v5980, %v5981
    %v5983 = vrot.slane %v5982, 4
    %v5984 = vadd.f32 %v5982, %v5983
    %v5985 = vrot.slane %v5984, 2
    %v5986 = vadd.f32 %v5984, %v5985
    %v5987 = vrot.slane %v5986, 1
    %v5988 = vadd.f32 %v5986, %v5987
    %v5989 = vsel %vm1868, %v5070, 0.0
    %v5990 = vsel %vm1868, %v5071, 0.0
    %v5991 = vadd.f32 %v5989, %v5990
    %v5992 = vsel %vm1868, %v5072, 0.0
    %v5993 = vadd.f32 %v5991, %v5992
    %v5994 = vsel %vm1868, %v5073, 0.0
    %v5995 = vadd.f32 %v5993, %v5994
    %v5996 = vsel %vm1868, %v5074, 0.0
    %v5997 = vadd.f32 %v5995, %v5996
    %v5998 = vsel %vm1868, %v5075, 0.0
    %v5999 = vadd.f32 %v5997, %v5998
    %v6000 = vsel %vm1868, %v5076, 0.0
    %v6001 = vadd.f32 %v5999, %v6000
    %v6002 = vsel %vm1868, %v5077, 0.0
    %v6003 = vadd.f32 %v6001, %v6002
    %v6004 = vsel %vm1868, %v5078, 0.0
    %v6005 = vadd.f32 %v6003, %v6004
    %v6006 = vsel %vm1868, %v5079, 0.0
    %v6007 = vadd.f32 %v6005, %v6006
    %v6008 = vsel %vm1868, %v5080, 0.0
    %v6009 = vadd.f32 %v6007, %v6008
    %v6010 = vsel %vm1868, %v5081, 0.0
    %v6011 = vadd.f32 %v6009, %v6010
    %v6012 = vsel %vm1868, %v5082, 0.0
    %v6013 = vadd.f32 %v6011, %v6012
    %v6014 = vsel %vm1868, %v5083, 0.0
    %v6015 = vadd.f32 %v6013, %v6014
    %v6016 = vsel %vm1868, %v5084, 0.0
    %v6017 = vadd.f32 %v6015, %v6016
    %v6018 = vsel %vm1868, %v5085, 0.0
    %v6019 = vadd.f32 %v6017, %v6018
    %v6020 = vsel %vm1868, %v5086, 0.0
    %v6021 = vadd.f32 %v6019, %v6020
    %v6022 = vsel %vm1868, %v5087, 0.0
    %v6023 = vadd.f32 %v6021, %v6022
    %v6024 = vsel %vm1868, %v5088, 0.0
    %v6025 = vadd.f32 %v6023, %v6024
    %v6026 = vsel %vm1868, %v5089, 0.0
    %v6027 = vadd.f32 %v6025, %v6026
    %v6028 = vsel %vm1868, %v5090, 0.0
    %v6029 = vadd.f32 %v6027, %v6028
    %v6030 = vsel %vm1868, %v5091, 0.0
    %v6031 = vadd.f32 %v6029, %v6030
    %v6032 = vsel %vm1868, %v5092, 0.0
    %v6033 = vadd.f32 %v6031, %v6032
    %v6034 = vsel %vm1868, %v5093, 0.0
    %v6035 = vadd.f32 %v6033, %v6034
    %v6036 = vsel %vm1868, %v5094, 0.0
    %v6037 = vadd.f32 %v6035, %v6036
    %v6038 = vsel %vm1868, %v5095, 0.0
    %v6039 = vadd.f32 %v6037, %v6038
    %v6040 = vsel %vm1868, %v5096, 0.0
    %v6041 = vadd.f32 %v6039, %v6040
    %v6042 = vsel %vm1868, %v5097, 0.0
    %v6043 = vadd.f32 %v6041, %v6042
    %v6044 = vsel %vm1868, %v5098, 0.0
    %v6045 = vadd.f32 %v6043, %v6044
    %v6046 = vsel %vm1868, %v5099, 0.0
    %v6047 = vadd.f32 %v6045, %v6046
    %v6048 = vsel %vm1868, %v5100, 0.0
    %v6049 = vadd.f32 %v6047, %v6048
    %v6050 = vsel %vm1868, %v5101, 0.0
    %v6051 = vadd.f32 %v6049, %v6050
    %v6052 = vrot.slane %v6051, 4
    %v6053 = vadd.f32 %v6051, %v6052
    %v6054 = vrot.slane %v6053, 2
    %v6055 = vadd.f32 %v6053, %v6054
    %v6056 = vrot.slane %v6055, 1
    %v6057 = vadd.f32 %v6055, %v6056
    %v6058 = vsel %vm1868, %v5102, 0.0
    %v6059 = vsel %vm1868, %v5103, 0.0
    %v6060 = vadd.f32 %v6058, %v6059
    %v6061 = vsel %vm1868, %v5104, 0.0
    %v6062 = vadd.f32 %v6060, %v6061
    %v6063 = vsel %vm1868, %v5105, 0.0
    %v6064 = vadd.f32 %v6062, %v6063
    %v6065 = vsel %vm1868, %v5106, 0.0
    %v6066 = vadd.f32 %v6064, %v6065
    %v6067 = vsel %vm1868, %v5107, 0.0
    %v6068 = vadd.f32 %v6066, %v6067
    %v6069 = vsel %vm1868, %v5108, 0.0
    %v6070 = vadd.f32 %v6068, %v6069
    %v6071 = vsel %vm1868, %v5109, 0.0
    %v6072 = vadd.f32 %v6070, %v6071
    %v6073 = vsel %vm1868, %v5110, 0.0
    %v6074 = vadd.f32 %v6072, %v6073
    %v6075 = vsel %vm1868, %v5111, 0.0
    %v6076 = vadd.f32 %v6074, %v6075
    %v6077 = vsel %vm1868, %v5112, 0.0
    %v6078 = vadd.f32 %v6076, %v6077
    %v6079 = vsel %vm1868, %v5113, 0.0
    %v6080 = vadd.f32 %v6078, %v6079
    %v6081 = vsel %vm1868, %v5114, 0.0
    %v6082 = vadd.f32 %v6080, %v6081
    %v6083 = vsel %vm1868, %v5115, 0.0
    %v6084 = vadd.f32 %v6082, %v6083
    %v6085 = vsel %vm1868, %v5116, 0.0
    %v6086 = vadd.f32 %v6084, %v6085
    %v6087 = vsel %vm1868, %v5117, 0.0
    %v6088 = vadd.f32 %v6086, %v6087
    %v6089 = vsel %vm1868, %v5118, 0.0
    %v6090 = vadd.f32 %v6088, %v6089
    %v6091 = vsel %vm1868, %v5119, 0.0
    %v6092 = vadd.f32 %v6090, %v6091
    %v6093 = vsel %vm1868, %v5120, 0.0
    %v6094 = vadd.f32 %v6092, %v6093
    %v6095 = vsel %vm1868, %v5121, 0.0
    %v6096 = vadd.f32 %v6094, %v6095
    %v6097 = vsel %vm1868, %v5122, 0.0
    %v6098 = vadd.f32 %v6096, %v6097
    %v6099 = vsel %vm1868, %v5123, 0.0
    %v6100 = vadd.f32 %v6098, %v6099
    %v6101 = vsel %vm1868, %v5124, 0.0
    %v6102 = vadd.f32 %v6100, %v6101
    %v6103 = vsel %vm1868, %v5125, 0.0
    %v6104 = vadd.f32 %v6102, %v6103
    %v6105 = vsel %vm1868, %v5126, 0.0
    %v6106 = vadd.f32 %v6104, %v6105
    %v6107 = vsel %vm1868, %v5127, 0.0
    %v6108 = vadd.f32 %v6106, %v6107
    %v6109 = vsel %vm1868, %v5128, 0.0
    %v6110 = vadd.f32 %v6108, %v6109
    %v6111 = vsel %vm1868, %v5129, 0.0
    %v6112 = vadd.f32 %v6110, %v6111
    %v6113 = vsel %vm1868, %v5130, 0.0
    %v6114 = vadd.f32 %v6112, %v6113
    %v6115 = vsel %vm1868, %v5131, 0.0
    %v6116 = vadd.f32 %v6114, %v6115
    %v6117 = vsel %vm1868, %v5132, 0.0
    %v6118 = vadd.f32 %v6116, %v6117
    %v6119 = vsel %vm1868, %v5133, 0.0
    %v6120 = vadd.f32 %v6118, %v6119
    %v6121 = vrot.slane %v6120, 4
    %v6122 = vadd.f32 %v6120, %v6121
    %v6123 = vrot.slane %v6122, 2
    %v6124 = vadd.f32 %v6122, %v6123
    %v6125 = vrot.slane %v6124, 1
    %v6126 = vadd.f32 %v6124, %v6125
    %v6127 = vsel %vm1868, %v5134, 0.0
    %v6128 = vsel %vm1868, %v5135, 0.0
    %v6129 = vadd.f32 %v6127, %v6128
    %v6130 = vsel %vm1868, %v5136, 0.0
    %v6131 = vadd.f32 %v6129, %v6130
    %v6132 = vsel %vm1868, %v5137, 0.0
    %v6133 = vadd.f32 %v6131, %v6132
    %v6134 = vsel %vm1868, %v5138, 0.0
    %v6135 = vadd.f32 %v6133, %v6134
    %v6136 = vsel %vm1868, %v5139, 0.0
    %v6137 = vadd.f32 %v6135, %v6136
    %v6138 = vsel %vm1868, %v5140, 0.0
    %v6139 = vadd.f32 %v6137, %v6138
    %v6140 = vsel %vm1868, %v5141, 0.0
    %v6141 = vadd.f32 %v6139, %v6140
    %v6142 = vsel %vm1868, %v5142, 0.0
    %v6143 = vadd.f32 %v6141, %v6142
    %v6144 = vsel %vm1868, %v5143, 0.0
    %v6145 = vadd.f32 %v6143, %v6144
    %v6146 = vsel %vm1868, %v5144, 0.0
    %v6147 = vadd.f32 %v6145, %v6146
    %v6148 = vsel %vm1868, %v5145, 0.0
    %v6149 = vadd.f32 %v6147, %v6148
    %v6150 = vsel %vm1868, %v5146, 0.0
    %v6151 = vadd.f32 %v6149, %v6150
    %v6152 = vsel %vm1868, %v5147, 0.0
    %v6153 = vadd.f32 %v6151, %v6152
    %v6154 = vsel %vm1868, %v5148, 0.0
    %v6155 = vadd.f32 %v6153, %v6154
    %v6156 = vsel %vm1868, %v5149, 0.0
    %v6157 = vadd.f32 %v6155, %v6156
    %v6158 = vsel %vm1868, %v5150, 0.0
    %v6159 = vadd.f32 %v6157, %v6158
    %v6160 = vsel %vm1868, %v5151, 0.0
    %v6161 = vadd.f32 %v6159, %v6160
    %v6162 = vsel %vm1868, %v5152, 0.0
    %v6163 = vadd.f32 %v6161, %v6162
    %v6164 = vsel %vm1868, %v5153, 0.0
    %v6165 = vadd.f32 %v6163, %v6164
    %v6166 = vsel %vm1868, %v5154, 0.0
    %v6167 = vadd.f32 %v6165, %v6166
    %v6168 = vsel %vm1868, %v5155, 0.0
    %v6169 = vadd.f32 %v6167, %v6168
    %v6170 = vsel %vm1868, %v5156, 0.0
    %v6171 = vadd.f32 %v6169, %v6170
    %v6172 = vsel %vm1868, %v5157, 0.0
    %v6173 = vadd.f32 %v6171, %v6172
    %v6174 = vsel %vm1868, %v5158, 0.0
    %v6175 = vadd.f32 %v6173, %v6174
    %v6176 = vsel %vm1868, %v5159, 0.0
    %v6177 = vadd.f32 %v6175, %v6176
    %v6178 = vsel %vm1868, %v5160, 0.0
    %v6179 = vadd.f32 %v6177, %v6178
    %v6180 = vsel %vm1868, %v5161, 0.0
    %v6181 = vadd.f32 %v6179, %v6180
    %v6182 = vsel %vm1868, %v5162, 0.0
    %v6183 = vadd.f32 %v6181, %v6182
    %v6184 = vsel %vm1868, %v5163, 0.0
    %v6185 = vadd.f32 %v6183, %v6184
    %v6186 = vsel %vm1868, %v5164, 0.0
    %v6187 = vadd.f32 %v6185, %v6186
    %v6188 = vsel %vm1868, %v5165, 0.0
    %v6189 = vadd.f32 %v6187, %v6188
    %v6190 = vrot.slane %v6189, 4
    %v6191 = vadd.f32 %v6189, %v6190
    %v6192 = vrot.slane %v6191, 2
    %v6193 = vadd.f32 %v6191, %v6192
    %v6194 = vrot.slane %v6193, 1
    %v6195 = vadd.f32 %v6193, %v6194
    %v6196 = vsel %vm1868, %v5166, 0.0
    %v6197 = vsel %vm1868, %v5167, 0.0
    %v6198 = vadd.f32 %v6196, %v6197
    %v6199 = vsel %vm1868, %v5168, 0.0
    %v6200 = vadd.f32 %v6198, %v6199
    %v6201 = vsel %vm1868, %v5169, 0.0
    %v6202 = vadd.f32 %v6200, %v6201
    %v6203 = vsel %vm1868, %v5170, 0.0
    %v6204 = vadd.f32 %v6202, %v6203
    %v6205 = vsel %vm1868, %v5171, 0.0
    %v6206 = vadd.f32 %v6204, %v6205
    %v6207 = vsel %vm1868, %v5172, 0.0
    %v6208 = vadd.f32 %v6206, %v6207
    %v6209 = vsel %vm1868, %v5173, 0.0
    %v6210 = vadd.f32 %v6208, %v6209
    %v6211 = vsel %vm1868, %v5174, 0.0
    %v6212 = vadd.f32 %v6210, %v6211
    %v6213 = vsel %vm1868, %v5175, 0.0
    %v6214 = vadd.f32 %v6212, %v6213
    %v6215 = vsel %vm1868, %v5176, 0.0
    %v6216 = vadd.f32 %v6214, %v6215
    %v6217 = vsel %vm1868, %v5177, 0.0
    %v6218 = vadd.f32 %v6216, %v6217
    %v6219 = vsel %vm1868, %v5178, 0.0
    %v6220 = vadd.f32 %v6218, %v6219
    %v6221 = vsel %vm1868, %v5179, 0.0
    %v6222 = vadd.f32 %v6220, %v6221
    %v6223 = vsel %vm1868, %v5180, 0.0
    %v6224 = vadd.f32 %v6222, %v6223
    %v6225 = vsel %vm1868, %v5181, 0.0
    %v6226 = vadd.f32 %v6224, %v6225
    %v6227 = vsel %vm1868, %v5182, 0.0
    %v6228 = vadd.f32 %v6226, %v6227
    %v6229 = vsel %vm1868, %v5183, 0.0
    %v6230 = vadd.f32 %v6228, %v6229
    %v6231 = vsel %vm1868, %v5184, 0.0
    %v6232 = vadd.f32 %v6230, %v6231
    %v6233 = vsel %vm1868, %v5185, 0.0
    %v6234 = vadd.f32 %v6232, %v6233
    %v6235 = vsel %vm1868, %v5186, 0.0
    %v6236 = vadd.f32 %v6234, %v6235
    %v6237 = vsel %vm1868, %v5187, 0.0
    %v6238 = vadd.f32 %v6236, %v6237
    %v6239 = vsel %vm1868, %v5188, 0.0
    %v6240 = vadd.f32 %v6238, %v6239
    %v6241 = vsel %vm1868, %v5189, 0.0
    %v6242 = vadd.f32 %v6240, %v6241
    %v6243 = vsel %vm1868, %v5190, 0.0
    %v6244 = vadd.f32 %v6242, %v6243
    %v6245 = vsel %vm1868, %v5191, 0.0
    %v6246 = vadd.f32 %v6244, %v6245
    %v6247 = vsel %vm1868, %v5192, 0.0
    %v6248 = vadd.f32 %v6246, %v6247
    %v6249 = vsel %vm1868, %v5193, 0.0
    %v6250 = vadd.f32 %v6248, %v6249
    %v6251 = vsel %vm1868, %v5194, 0.0
    %v6252 = vadd.f32 %v6250, %v6251
    %v6253 = vsel %vm1868, %v5195, 0.0
    %v6254 = vadd.f32 %v6252, %v6253
    %v6255 = vsel %vm1868, %v5196, 0.0
    %v6256 = vadd.f32 %v6254, %v6255
    %v6257 = vsel %vm1868, %v5197, 0.0
    %v6258 = vadd.f32 %v6256, %v6257
    %v6259 = vrot.slane %v6258, 4
    %v6260 = vadd.f32 %v6258, %v6259
    %v6261 = vrot.slane %v6260, 2
    %v6262 = vadd.f32 %v6260, %v6261
    %v6263 = vrot.slane %v6262, 1
    %v6264 = vadd.f32 %v6262, %v6263
    %v6265 = vsel %vm1868, %v5198, 0.0
    %v6266 = vsel %vm1868, %v5199, 0.0
    %v6267 = vadd.f32 %v6265, %v6266
    %v6268 = vsel %vm1868, %v5200, 0.0
    %v6269 = vadd.f32 %v6267, %v6268
    %v6270 = vsel %vm1868, %v5201, 0.0
    %v6271 = vadd.f32 %v6269, %v6270
    %v6272 = vsel %vm1868, %v5202, 0.0
    %v6273 = vadd.f32 %v6271, %v6272
    %v6274 = vsel %vm1868, %v5203, 0.0
    %v6275 = vadd.f32 %v6273, %v6274
    %v6276 = vsel %vm1868, %v5204, 0.0
    %v6277 = vadd.f32 %v6275, %v6276
    %v6278 = vsel %vm1868, %v5205, 0.0
    %v6279 = vadd.f32 %v6277, %v6278
    %v6280 = vsel %vm1868, %v5206, 0.0
    %v6281 = vadd.f32 %v6279, %v6280
    %v6282 = vsel %vm1868, %v5207, 0.0
    %v6283 = vadd.f32 %v6281, %v6282
    %v6284 = vsel %vm1868, %v5208, 0.0
    %v6285 = vadd.f32 %v6283, %v6284
    %v6286 = vsel %vm1868, %v5209, 0.0
    %v6287 = vadd.f32 %v6285, %v6286
    %v6288 = vsel %vm1868, %v5210, 0.0
    %v6289 = vadd.f32 %v6287, %v6288
    %v6290 = vsel %vm1868, %v5211, 0.0
    %v6291 = vadd.f32 %v6289, %v6290
    %v6292 = vsel %vm1868, %v5212, 0.0
    %v6293 = vadd.f32 %v6291, %v6292
    %v6294 = vsel %vm1868, %v5213, 0.0
    %v6295 = vadd.f32 %v6293, %v6294
    %v6296 = vsel %vm1868, %v5214, 0.0
    %v6297 = vadd.f32 %v6295, %v6296
    %v6298 = vsel %vm1868, %v5215, 0.0
    %v6299 = vadd.f32 %v6297, %v6298
    %v6300 = vsel %vm1868, %v5216, 0.0
    %v6301 = vadd.f32 %v6299, %v6300
    %v6302 = vsel %vm1868, %v5217, 0.0
    %v6303 = vadd.f32 %v6301, %v6302
    %v6304 = vsel %vm1868, %v5218, 0.0
    %v6305 = vadd.f32 %v6303, %v6304
    %v6306 = vsel %vm1868, %v5219, 0.0
    %v6307 = vadd.f32 %v6305, %v6306
    %v6308 = vsel %vm1868, %v5220, 0.0
    %v6309 = vadd.f32 %v6307, %v6308
    %v6310 = vsel %vm1868, %v5221, 0.0
    %v6311 = vadd.f32 %v6309, %v6310
    %v6312 = vsel %vm1868, %v5222, 0.0
    %v6313 = vadd.f32 %v6311, %v6312
    %v6314 = vsel %vm1868, %v5223, 0.0
    %v6315 = vadd.f32 %v6313, %v6314
    %v6316 = vsel %vm1868, %v5224, 0.0
    %v6317 = vadd.f32 %v6315, %v6316
    %v6318 = vsel %vm1868, %v5225, 0.0
    %v6319 = vadd.f32 %v6317, %v6318
    %v6320 = vsel %vm1868, %v5226, 0.0
    %v6321 = vadd.f32 %v6319, %v6320
    %v6322 = vsel %vm1868, %v5227, 0.0
    %v6323 = vadd.f32 %v6321, %v6322
    %v6324 = vsel %vm1868, %v5228, 0.0
    %v6325 = vadd.f32 %v6323, %v6324
    %v6326 = vsel %vm1868, %v5229, 0.0
    %v6327 = vadd.f32 %v6325, %v6326
    %v6328 = vrot.slane %v6327, 4
    %v6329 = vadd.f32 %v6327, %v6328
    %v6330 = vrot.slane %v6329, 2
    %v6331 = vadd.f32 %v6329, %v6330
    %v6332 = vrot.slane %v6331, 1
    %v6333 = vadd.f32 %v6331, %v6332
    %v6334 = vrcp.pop 256.0
    %v6335 = vmul.f32 %v5298, %v6334
    %v6336 = vmul.f32 %v5367, %v6334
    %v6337 = vmul.f32 %v5436, %v6334
    %v6338 = vmul.f32 %v5505, %v6334
    %v6339 = vmul.f32 %v5574, %v6334
    %v6340 = vmul.f32 %v5643, %v6334
    %v6341 = vmul.f32 %v5712, %v6334
    %v6342 = vmul.f32 %v5781, %v6334
    %v6343 = vmul.f32 %v5850, %v6334
    %v6344 = vmul.f32 %v5919, %v6334
    %v6345 = vmul.f32 %v5988, %v6334
    %v6346 = vmul.f32 %v6057, %v6334
    %v6347 = vmul.f32 %v6126, %v6334
    %v6348 = vmul.f32 %v6195, %v6334
    %v6349 = vmul.f32 %v6264, %v6334
    %v6350 = vmul.f32 %v6333, %v6334
    %v6351 = vld [vmem:[%s3] sm:$0xff]
    %v6352 = vld [vmem:[%s3 + $0x8] sm:$0xff]
    %v6353 = vld [vmem:[%s3 + $0x10] sm:$0xff]
    %v6354 = vld [vmem:[%s3 + $0x18] sm:$0xff]
    %v6355 = vld [vmem:[%s3 + $0x20] sm:$0xff]
    %v6356 = vld [vmem:[%s3 + $0x28] sm:$0xff]
    %v6357 = vld [vmem:[%s3 + $0x30] sm:$0xff]
    %v6358 = vld [vmem:[%s3 + $0x38] sm:$0xff]
    %v6359 = vld [vmem:[%s4] sm:$0x1]
    %v6361 = vlaneseq
    %v6362 = vshrl.u32 %v6361, 7
    %v6363 = vsub.s32 0, %v6362
    %v6364 = vrot.slane %v6359, %v6363
    %vm6382 = vcmask 1041409
    %v6383 = vsel %vm6382, %v6336, %v6335
    %vm6384 = vcmask 1042434
    %v6385 = vsel %vm6384, %v6337, %v6383
    %vm6386 = vcmask 1043459
    %v6387 = vsel %vm6386, %v6338, %v6385
    %vm6388 = vcmask 1044484
    %v6389 = vsel %vm6388, %v6339, %v6387
    %vm6390 = vcmask 1045509
    %v6391 = vsel %vm6390, %v6340, %v6389
    %vm6392 = vcmask 1046534
    %v6393 = vsel %vm6392, %v6341, %v6391
    %vm6394 = vcmask 1047559
    %v6395 = vsel %vm6394, %v6342, %v6393
    %v6396 = vsel %vm6382, %v6344, %v6343
    %v6397 = vsel %vm6384, %v6345, %v6396
    %v6398 = vsel %vm6386, %v6346, %v6397
    %v6399 = vsel %vm6388, %v6347, %v6398
    %v6400 = vsel %vm6390, %v6348, %v6399
    %v6401 = vsel %vm6392, %v6349, %v6400
    %v6402 = vsel %vm6394, %v6350, %v6401
    %v6403 = vsel %vm1868, %v6395, 0
    %v6405 = vsel %vm1868, %v6402, 0
    %6407 = vmatprep.subr.mxu0 0.0
    %6408 = vmatpush1.msra.mxu0 0.0
    %6409 = vmatprep.subr.mxu0 0.0
    %6410 = vmatpush1.msra.mxu0 0.0
    %6411 = vmatprep.subr.mxu0 0.0
    %6412 = vmatpush1.msra.mxu0 0.0
    %6413 = vmatprep.subr.mxu0 0.0
    %6414 = vmatpush1.msra.mxu0 0.0
    %6415 = vmatprep.subr.mxu0 0.0
    %6416 = vmatpush1.msra.mxu0 0.0
    %6417 = vmatprep.subr.mxu0 0.0
    %6418 = vmatpush1.msra.mxu0 0.0
    %6419 = vmatprep.subr.mxu0 0.0
    %6420 = vmatpush1.msra.mxu0 0.0
    %6421 = vmatprep.subr.mxu0 0.0
    %6422 = vmatpush1.msra.mxu0 0.0
    %6423 = vmatprep.subr.mxu0 0.0
    %6424 = vmatpush1.msra.mxu0 %v6358
    %6425 = vmatprep.subr.mxu0 0.0
    %6426 = vmatpush1.msra.mxu0 %v6357
    %6427 = vmatprep.subr.mxu0 0.0
    %6428 = vmatpush1.msra.mxu0 %v6356
    %6429 = vmatprep.subr.mxu0 0.0
    %6430 = vmatpush1.msra.mxu0 %v6355
    %6431 = vmatprep.subr.mxu0 0.0
    %6432 = vmatpush1.msra.mxu0 %v6354
    %6433 = vmatprep.subr.mxu0 0.0
    %6434 = vmatpush1.msra.mxu0 %v6353
    %6435 = vmatprep.subr.mxu0 0.0
    %6436 = vmatpush1.msra.mxu0 %v6352
    %6437 = vmatprep.subr.mxu0 0.0
    %6438 = vmatpush1.msra.mxu0 %v6351
    %6439 = vmatprep.subr.mxu0 0.0
    %6440 = vmatpush2.msra.mxu0 0.0
    %6441 = vmatprep.subr.mxu0 0.0
    %6442 = vmatpush2.msra.mxu0 0.0
    %6443 = vmatprep.subr.mxu0 0.0
    %6444 = vmatpush2.msra.mxu0 0.0
    %6445 = vmatprep.subr.mxu0 0.0
    %6446 = vmatpush2.msra.mxu0 0.0
    %6447 = vmatprep.subr.mxu0 0.0
    %6448 = vmatpush2.msra.mxu0 0.0
    %6449 = vmatprep.subr.mxu0 0.0
    %6450 = vmatpush2.msra.mxu0 0.0
    %6451 = vmatprep.subr.mxu0 0.0
    %6452 = vmatpush2.msra.mxu0 0.0
    %6453 = vmatprep.subr.mxu0 0.0
    %6454 = vmatpush2.msra.mxu0 0.0
    %6455 = vmatprep.subr.mxu0 0.0
    %6456 = vmatpush2.msra.mxu0 0.0
    %6457 = vmatprep.subr.mxu0 0.0
    %6458 = vmatpush2.msra.mxu0 0.0
    %6459 = vmatprep.subr.mxu0 0.0
    %6460 = vmatpush2.msra.mxu0 0.0
    %6461 = vmatprep.subr.mxu0 0.0
    %6462 = vmatpush2.msra.mxu0 0.0
    %6463 = vmatprep.subr.mxu0 0.0
    %6464 = vmatpush2.msra.mxu0 0.0
    %6465 = vmatprep.subr.mxu0 0.0
    %6466 = vmatpush2.msra.mxu0 0.0
    %6467 = vmatprep.subr.mxu0 0.0
    %6468 = vmatpush2.msra.mxu0 0.0
    %6469 = vmatprep.subr.mxu0 0.0
    %6470 = vmatpush2.msra.mxu0 0.0
    %6471 = vmatprep.mubr.f32.mxu0 0.0
    %6472 = vmatmul.mubr.f32.gmra.mxu0 %v6403
    %v6473 = vpop.f32.mrf.mxu0
    %v6474 = vadd.f32 %v6364, %v6473
    %v6475 = vpop.f32.mrf.mxu0
    %6476 = vmatprep.mubr.f32.mxu0 0.0
    %6477 = vmatmul.mubr.f32.gmra.mxu0 %v6405
    %v6478 = vpop.f32.mrf.mxu0
    %v6479 = vadd.f32 %v6364, %v6478
    %v6480 = vpop.f32.mrf.mxu0
    %6481 = vdwg.mxu0
    %v6484 = vcombine.high %v6474, %v6474
    %v6486 = vunpack.c.l.s4 1983009808
    %v6487 = vunpack.c.0.s8 %v6486
    %v6488 = vlaneseq
    %v6489 = vshrl.u32 %v6488, 7
    %v6490 = vsub.s32 %v6487, %v6489
    %v6491 = vrot.slane %v6474, %v6490
    %v6493 = vunpack.c.l.s4 1983009808
    %v6494 = vunpack.c.0.s8 %v6493
    %v6495 = vlaneseq
    %v6496 = vshrl.u32 %v6495, 7
    %v6497 = vsub.s32 %v6494, %v6496
    %v6498 = vrot.slane %v6484, %v6497
    %v6499 = vcombine.high %v6491, %v6491
    %v6500 = vcombine.high %v6498, %v6498
    %v6501 = vcombine.high %v6479, %v6479
    %v6503 = vunpack.c.l.s4 1983009808
    %v6504 = vunpack.c.0.s8 %v6503
    %v6505 = vlaneseq
    %v6506 = vshrl.u32 %v6505, 7
    %v6507 = vsub.s32 %v6504, %v6506
    %v6508 = vrot.slane %v6479, %v6507
    %v6510 = vunpack.c.l.s4 1983009808
    %v6511 = vunpack.c.0.s8 %v6510
    %v6512 = vlaneseq
    %v6513 = vshrl.u32 %v6512, 7
    %v6514 = vsub.s32 %v6511, %v6513
    %v6515 = vrot.slane %v6501, %v6514
    %v6516 = vcombine.high %v6508, %v6508
    %v6517 = vcombine.high %v6515, %v6515
    %v6526 = vld [vmem:[%s5] sm:$0xff]
    %v6527 = vld [vmem:[%s5 + $0x8] sm:$0xff]
    %v6528 = vld [vmem:[%s5 + $0x10] sm:$0xff]
    %v6529 = vld [vmem:[%s5 + $0x18] sm:$0xff]
    %v6530 = vld [vmem:[%s5 + $0x20] sm:$0xff]
    %v6531 = vld [vmem:[%s5 + $0x28] sm:$0xff]
    %v6532 = vld [vmem:[%s5 + $0x30] sm:$0xff]
    %v6533 = vld [vmem:[%s5 + $0x38] sm:$0xff]
    %v6534 = vld [vmem:[%s5 + $0x40] sm:$0xff]
    %v6535 = vld [vmem:[%s5 + $0x48] sm:$0xff]
    %v6536 = vld [vmem:[%s5 + $0x50] sm:$0xff]
    %v6537 = vld [vmem:[%s5 + $0x58] sm:$0xff]
    %v6538 = vld [vmem:[%s5 + $0x60] sm:$0xff]
    %v6539 = vld [vmem:[%s5 + $0x68] sm:$0xff]
    %v6540 = vld [vmem:[%s5 + $0x70] sm:$0xff]
    %v6541 = vld [vmem:[%s5 + $0x78] sm:$0xff]
    %v6542 = vld [vmem:[%s6] sm:$0xff]
    %v6543 = vld [vmem:[%s6 + $0x8] sm:$0xff]
    %v6544 = vld [vmem:[%s6 + $0x10] sm:$0xff]
    %v6545 = vld [vmem:[%s6 + $0x18] sm:$0xff]
    %v6546 = vld [vmem:[%s7] sm:$0x1]
    %v6548 = vsel %vm1868, 0.0, 0
    %6550 = vmatprep.subr.mxu0 0.0
    %6551 = vmatpush1.msra.mxu0 0.0
    %6552 = vmatprep.subr.mxu0 0.0
    %6553 = vmatpush1.msra.mxu0 0.0
    %6554 = vmatprep.subr.mxu0 0.0
    %6555 = vmatpush1.msra.mxu0 0.0
    %6556 = vmatprep.subr.mxu0 0.0
    %6557 = vmatpush1.msra.mxu0 0.0
    %6558 = vmatprep.subr.mxu0 0.0
    %6559 = vmatpush1.msra.mxu0 0.0
    %6560 = vmatprep.subr.mxu0 0.0
    %6561 = vmatpush1.msra.mxu0 0.0
    %6562 = vmatprep.subr.mxu0 0.0
    %6563 = vmatpush1.msra.mxu0 0.0
    %6564 = vmatprep.subr.mxu0 0.0
    %6565 = vmatpush1.msra.mxu0 0.0
    %6566 = vmatprep.subr.mxu0 %v6541
    %6567 = vmatpush1.msra.mxu0 %v6540
    %6568 = vmatprep.subr.mxu0 %v6539
    %6569 = vmatpush1.msra.mxu0 %v6538
    %6570 = vmatprep.subr.mxu0 %v6537
    %6571 = vmatpush1.msra.mxu0 %v6536
    %6572 = vmatprep.subr.mxu0 %v6535
    %6573 = vmatpush1.msra.mxu0 %v6534
    %6574 = vmatprep.subr.mxu0 %v6533
    %6575 = vmatpush1.msra.mxu0 %v6532
    %6576 = vmatprep.subr.mxu0 %v6531
    %6577 = vmatpush1.msra.mxu0 %v6530
    %6578 = vmatprep.subr.mxu0 %v6529
    %6579 = vmatpush1.msra.mxu0 %v6528
    %6580 = vmatprep.subr.mxu0 %v6527
    %6581 = vmatpush1.msra.mxu0 %v6526
    %6582 = vmatprep.subr.mxu0 0.0
    %6583 = vmatpush2.msra.mxu0 0.0
    %6584 = vmatprep.subr.mxu0 0.0
    %6585 = vmatpush2.msra.mxu0 0.0
    %6586 = vmatprep.subr.mxu0 0.0
    %6587 = vmatpush2.msra.mxu0 0.0
    %6588 = vmatprep.subr.mxu0 0.0
    %6589 = vmatpush2.msra.mxu0 0.0
    %6590 = vmatprep.subr.mxu0 0.0
    %6591 = vmatpush2.msra.mxu0 0.0
    %6592 = vmatprep.subr.mxu0 0.0
    %6593 = vmatpush2.msra.mxu0 0.0
    %6594 = vmatprep.subr.mxu0 0.0
    %6595 = vmatpush2.msra.mxu0 0.0
    %6596 = vmatprep.subr.mxu0 0.0
    %6597 = vmatpush2.msra.mxu0 0.0
    %6598 = vmatprep.subr.mxu0 0.0
    %6599 = vmatpush2.msra.mxu0 0.0
    %6600 = vmatprep.subr.mxu0 0.0
    %6601 = vmatpush2.msra.mxu0 0.0
    %6602 = vmatprep.subr.mxu0 0.0
    %6603 = vmatpush2.msra.mxu0 0.0
    %6604 = vmatprep.subr.mxu0 0.0
    %6605 = vmatpush2.msra.mxu0 0.0
    %6606 = vmatprep.subr.mxu0 0.0
    %6607 = vmatpush2.msra.mxu0 0.0
    %6608 = vmatprep.subr.mxu0 0.0
    %6609 = vmatpush2.msra.mxu0 0.0
    %6610 = vmatprep.subr.mxu0 0.0
    %6611 = vmatpush2.msra.mxu0 0.0
    %6612 = vmatprep.subr.mxu0 0.0
    %6613 = vmatpush2.msra.mxu0 0.0
    %6614 = vmatprep.mubr.f32.mxu0 0.0
    %6615 = vmatmul.mubr.f32.gmra.mxu0 %v6548
    %v6616 = vpop.f32.mrf.mxu0
    %v6617 = vadd.f32 0.0, %v6616
    %v6618 = vpop.f32.mrf.mxu0
    %v6619 = vadd.f32 0.0, %v6618
    %6620 = vdwg.mxu0
    %v6621 = vadd.f32 %v6491, %v6617
    %v6622 = vxor.u32 %v6621, 2147483648
    %v6623 = vmul.f32 %v6622, 1.442695
    %v6624 = vpow.pop %v6623
    %v6625 = vadd.f32 %v6624, 1.0
    %v6626 = vrcp.pop %v6625
    %v6627 = vmul.f32 1.0, %v6626
    %v6628 = vtanh.pop %v6621
    %v6629 = vmul.f32 %v6627, 0.0
    %6631 = vrot.lane.b32.xlu0 %v6628, 64
    %v6632 = vpop.permute.xlu0 %6631
    %v6634 = vmul.f32 %v6627, %v6632
    %6636 = vrot.lane.b32.xlu0 %v6634, 32
    %v6637 = vpop.permute.xlu0 %6636
    %v6639 = vadd.f32 %v6629, %v6637
    %v6640 = vtanh.pop %v6639
    %6642 = vrot.lane.b32.xlu0 %v6640, 64
    %v6643 = vpop.permute.xlu0 %6642
    %v6645 = vmul.f32 %v6627, %v6643
    %v6648 = vunpack.c.l.s4 1983009808
    %v6649 = vunpack.c.0.s8 %v6648
    %v6650 = vlaneseq
    %v6651 = vshrl.u32 %v6650, 7
    %v6652 = vsub.s32 %v6649, %v6651
    %v6653 = vrot.slane %v6645, %v6652
    %6654 = vrot.lane.b32.xlu0 %v6653, 32
    %v6655 = vpop.permute.xlu0 %6654
    %vm6656 = vcmask 261120
    %v6657 = vsel %vm6656, %v6655, 0
    %6659 = vmatprep.subr.mxu0 0.0
    %6660 = vmatpush1.msra.mxu0 0.0
    %6661 = vmatprep.subr.mxu0 0.0
    %6662 = vmatpush1.msra.mxu0 0.0
    %6663 = vmatprep.subr.mxu0 0.0
    %6664 = vmatpush1.msra.mxu0 0.0
    %6665 = vmatprep.subr.mxu0 0.0
    %6666 = vmatpush1.msra.mxu0 0.0
    %6667 = vmatprep.subr.mxu0 0.0
    %6668 = vmatpush1.msra.mxu0 0.0
    %6669 = vmatprep.subr.mxu0 0.0
    %6670 = vmatpush1.msra.mxu0 0.0
    %6671 = vmatprep.subr.mxu0 0.0
    %6672 = vmatpush1.msra.mxu0 0.0
    %6673 = vmatprep.subr.mxu0 0.0
    %6674 = vmatpush1.msra.mxu0 0.0
    %6675 = vmatprep.subr.mxu0 0.0
    %6676 = vmatpush1.msra.mxu0 0.0
    %6677 = vmatprep.subr.mxu0 0.0
    %6678 = vmatpush1.msra.mxu0 0.0
    %6679 = vmatprep.subr.mxu0 0.0
    %6680 = vmatpush1.msra.mxu0 0.0
    %6681 = vmatprep.subr.mxu0 0.0
    %6682 = vmatpush1.msra.mxu0 0.0
    %6683 = vmatprep.subr.mxu0 0.0
    %6684 = vmatpush1.msra.mxu0 %v6545
    %6685 = vmatprep.subr.mxu0 0.0
    %6686 = vmatpush1.msra.mxu0 %v6544
    %6687 = vmatprep.subr.mxu0 0.0
    %6688 = vmatpush1.msra.mxu0 %v6543
    %6689 = vmatprep.subr.mxu0 0.0
    %6690 = vmatpush1.msra.mxu0 %v6542
    %6691 = vmatprep.subr.mxu0 0.0
    %6692 = vmatpush2.msra.mxu0 0.0
    %6693 = vmatprep.subr.mxu0 0.0
    %6694 = vmatpush2.msra.mxu0 0.0
    %6695 = vmatprep.subr.mxu0 0.0
    %6696 = vmatpush2.msra.mxu0 0.0
    %6697 = vmatprep.subr.mxu0 0.0
    %6698 = vmatpush2.msra.mxu0 0.0
    %6699 = vmatprep.subr.mxu0 0.0
    %6700 = vmatpush2.msra.mxu0 0.0
    %6701 = vmatprep.subr.mxu0 0.0
    %6702 = vmatpush2.msra.mxu0 0.0
    %6703 = vmatprep.subr.mxu0 0.0
    %6704 = vmatpush2.msra.mxu0 0.0
    %6705 = vmatprep.subr.mxu0 0.0
    %6706 = vmatpush2.msra.mxu0 0.0
    %6707 = vmatprep.subr.mxu0 0.0
    %6708 = vmatpush2.msra.mxu0 0.0
    %6709 = vmatprep.subr.mxu0 0.0
    %6710 = vmatpush2.msra.mxu0 0.0
    %6711 = vmatprep.subr.mxu0 0.0
    %6712 = vmatpush2.msra.mxu0 0.0
    %6713 = vmatprep.subr.mxu0 0.0
    %6714 = vmatpush2.msra.mxu0 0.0
    %6715 = vmatprep.subr.mxu0 0.0
    %6716 = vmatpush2.msra.mxu0 0.0
    %6717 = vmatprep.subr.mxu0 0.0
    %6718 = vmatpush2.msra.mxu0 0.0
    %6719 = vmatprep.subr.mxu0 0.0
    %6720 = vmatpush2.msra.mxu0 0.0
    %6721 = vmatprep.subr.mxu0 0.0
    %6722 = vmatpush2.msra.mxu0 0.0
    %6723 = vmatprep.mubr.f32.mxu0 0.0
    %6724 = vmatmul.mubr.f32.gmra.mxu0 %v6657
    %v6725 = vpop.f32.mrf.mxu0
    %v6726 = vadd.f32 %v6619, %v6725
    %v6727 = vpop.f32.mrf.mxu0
    %6728 = vdwg.mxu0
    %v6730 = vlaneseq
    %v6731 = vshrl.u32 %v6730, 7
    %v6732 = vsub.s32 0, %v6731
    %v6733 = vrot.slane %v6546, %v6732
    %v6735 = vadd.f32 %v6726, %v6733
    %v6736 = vxor.u32 %v6735, 2147483648
    %v6737 = vmul.f32 %v6736, 1.442695
    %v6738 = vpow.pop %v6737
    %v6739 = vadd.f32 %v6738, 1.0
    %v6740 = vrcp.pop %v6739
    %v6741 = vmul.f32 1.0, %v6740
    %v6742 = vtanh.pop %v6735
    %v6743 = vmul.f32 %v6741, 0.0
    %6745 = vrot.lane.b32.xlu0 %v6742, 64
    %v6746 = vpop.permute.xlu0 %6745
    %v6748 = vmul.f32 %v6741, %v6746
    %6750 = vrot.lane.b32.xlu0 %v6748, 32
    %v6751 = vpop.permute.xlu0 %6750
    %v6753 = vadd.f32 %v6743, %v6751
    %v6754 = vtanh.pop %v6753
    %6756 = vrot.lane.b32.xlu0 %v6754, 64
    %v6757 = vpop.permute.xlu0 %6756
    %v6759 = vmul.f32 %v6741, %v6757
    %6762 = vrot.lane.b32.xlu0 %v6759, 64
    %v6763 = vpop.permute.xlu0 %6762
    %v6765 = vsel %vm6656, %v6655, %v6763
    %v6767 = vsel %vm1868, %v6765, 0
    %6769 = vmatprep.subr.mxu0 0.0
    %6770 = vmatpush1.msra.mxu0 0.0
    %6771 = vmatprep.subr.mxu0 0.0
    %6772 = vmatpush1.msra.mxu0 0.0
    %6773 = vmatprep.subr.mxu0 0.0
    %6774 = vmatpush1.msra.mxu0 0.0
    %6775 = vmatprep.subr.mxu0 0.0
    %6776 = vmatpush1.msra.mxu0 0.0
    %6777 = vmatprep.subr.mxu0 0.0
    %6778 = vmatpush1.msra.mxu0 0.0
    %6779 = vmatprep.subr.mxu0 0.0
    %6780 = vmatpush1.msra.mxu0 0.0
    %6781 = vmatprep.subr.mxu0 0.0
    %6782 = vmatpush1.msra.mxu0 0.0
    %6783 = vmatprep.subr.mxu0 0.0
    %6784 = vmatpush1.msra.mxu0 0.0
    %6785 = vmatprep.subr.mxu0 %v6541
    %6786 = vmatpush1.msra.mxu0 %v6540
    %6787 = vmatprep.subr.mxu0 %v6539
    %6788 = vmatpush1.msra.mxu0 %v6538
    %6789 = vmatprep.subr.mxu0 %v6537
    %6790 = vmatpush1.msra.mxu0 %v6536
    %6791 = vmatprep.subr.mxu0 %v6535
    %6792 = vmatpush1.msra.mxu0 %v6534
    %6793 = vmatprep.subr.mxu0 %v6533
    %6794 = vmatpush1.msra.mxu0 %v6532
    %6795 = vmatprep.subr.mxu0 %v6531
    %6796 = vmatpush1.msra.mxu0 %v6530
    %6797 = vmatprep.subr.mxu0 %v6529
    %6798 = vmatpush1.msra.mxu0 %v6528
    %6799 = vmatprep.subr.mxu0 %v6527
    %6800 = vmatpush1.msra.mxu0 %v6526
    %6801 = vmatprep.subr.mxu0 0.0
    %6802 = vmatpush2.msra.mxu0 0.0
    %6803 = vmatprep.subr.mxu0 0.0
    %6804 = vmatpush2.msra.mxu0 0.0
    %6805 = vmatprep.subr.mxu0 0.0
    %6806 = vmatpush2.msra.mxu0 0.0
    %6807 = vmatprep.subr.mxu0 0.0
    %6808 = vmatpush2.msra.mxu0 0.0
    %6809 = vmatprep.subr.mxu0 0.0
    %6810 = vmatpush2.msra.mxu0 0.0
    %6811 = vmatprep.subr.mxu0 0.0
    %6812 = vmatpush2.msra.mxu0 0.0
    %6813 = vmatprep.subr.mxu0 0.0
    %6814 = vmatpush2.msra.mxu0 0.0
    %6815 = vmatprep.subr.mxu0 0.0
    %6816 = vmatpush2.msra.mxu0 0.0
    %6817 = vmatprep.subr.mxu0 0.0
    %6818 = vmatpush2.msra.mxu0 0.0
    %6819 = vmatprep.subr.mxu0 0.0
    %6820 = vmatpush2.msra.mxu0 0.0
    %6821 = vmatprep.subr.mxu0 0.0
    %6822 = vmatpush2.msra.mxu0 0.0
    %6823 = vmatprep.subr.mxu0 0.0
    %6824 = vmatpush2.msra.mxu0 0.0
    %6825 = vmatprep.subr.mxu0 0.0
    %6826 = vmatpush2.msra.mxu0 0.0
    %6827 = vmatprep.subr.mxu0 0.0
    %6828 = vmatpush2.msra.mxu0 0.0
    %6829 = vmatprep.subr.mxu0 0.0
    %6830 = vmatpush2.msra.mxu0 0.0
    %6831 = vmatprep.subr.mxu0 0.0
    %6832 = vmatpush2.msra.mxu0 0.0
    %6833 = vmatprep.mubr.f32.mxu0 0.0
    %6834 = vmatmul.mubr.f32.gmra.mxu0 %v6767
    %v6835 = vpop.f32.mrf.mxu0
    %v6836 = vadd.f32 0.0, %v6835
    %v6837 = vpop.f32.mrf.mxu0
    %v6838 = vadd.f32 0.0, %v6837
    %6839 = vdwg.mxu0
    %v6840 = vadd.f32 %v6499, %v6836
    %v6841 = vxor.u32 %v6840, 2147483648
    %v6842 = vmul.f32 %v6841, 1.442695
    %v6843 = vpow.pop %v6842
    %v6844 = vadd.f32 %v6843, 1.0
    %v6845 = vrcp.pop %v6844
    %v6846 = vmul.f32 1.0, %v6845
    %v6847 = vtanh.pop %v6840
    %v6848 = vmul.f32 %v6846, %v6639
    %6850 = vrot.lane.b32.xlu0 %v6847, 64
    %v6851 = vpop.permute.xlu0 %6850
    %v6853 = vmul.f32 %v6846, %v6851
    %6855 = vrot.lane.b32.xlu0 %v6853, 32
    %v6856 = vpop.permute.xlu0 %6855
    %v6858 = vadd.f32 %v6848, %v6856
    %v6859 = vtanh.pop %v6858
    %6861 = vrot.lane.b32.xlu0 %v6859, 64
    %v6862 = vpop.permute.xlu0 %6861
    %v6864 = vmul.f32 %v6846, %v6862
    %v6867 = vunpack.c.l.s4 1983009808
    %v6868 = vunpack.c.0.s8 %v6867
    %v6869 = vlaneseq
    %v6870 = vshrl.u32 %v6869, 7
    %v6871 = vsub.s32 %v6868, %v6870
    %v6872 = vrot.slane %v6864, %v6871
    %6873 = vrot.lane.b32.xlu0 %v6872, 32
    %v6874 = vpop.permute.xlu0 %6873
    %v6875 = vsel %vm6656, %v6874, 0
    %6877 = vmatprep.subr.mxu0 0.0
    %6878 = vmatpush1.msra.mxu0 0.0
    %6879 = vmatprep.subr.mxu0 0.0
    %6880 = vmatpush1.msra.mxu0 0.0
    %6881 = vmatprep.subr.mxu0 0.0
    %6882 = vmatpush1.msra.mxu0 0.0
    %6883 = vmatprep.subr.mxu0 0.0
    %6884 = vmatpush1.msra.mxu0 0.0
    %6885 = vmatprep.subr.mxu0 0.0
    %6886 = vmatpush1.msra.mxu0 0.0
    %6887 = vmatprep.subr.mxu0 0.0
    %6888 = vmatpush1.msra.mxu0 0.0
    %6889 = vmatprep.subr.mxu0 0.0
    %6890 = vmatpush1.msra.mxu0 0.0
    %6891 = vmatprep.subr.mxu0 0.0
    %6892 = vmatpush1.msra.mxu0 0.0
    %6893 = vmatprep.subr.mxu0 0.0
    %6894 = vmatpush1.msra.mxu0 0.0
    %6895 = vmatprep.subr.mxu0 0.0
    %6896 = vmatpush1.msra.mxu0 0.0
    %6897 = vmatprep.subr.mxu0 0.0
    %6898 = vmatpush1.msra.mxu0 0.0
    %6899 = vmatprep.subr.mxu0 0.0
    %6900 = vmatpush1.msra.mxu0 0.0
    %6901 = vmatprep.subr.mxu0 0.0
    %6902 = vmatpush1.msra.mxu0 %v6545
    %6903 = vmatprep.subr.mxu0 0.0
    %6904 = vmatpush1.msra.mxu0 %v6544
    %6905 = vmatprep.subr.mxu0 0.0
    %6906 = vmatpush1.msra.mxu0 %v6543
    %6907 = vmatprep.subr.mxu0 0.0
    %6908 = vmatpush1.msra.mxu0 %v6542
    %6909 = vmatprep.subr.mxu0 0.0
    %6910 = vmatpush2.msra.mxu0 0.0
    %6911 = vmatprep.subr.mxu0 0.0
    %6912 = vmatpush2.msra.mxu0 0.0
    %6913 = vmatprep.subr.mxu0 0.0
    %6914 = vmatpush2.msra.mxu0 0.0
    %6915 = vmatprep.subr.mxu0 0.0
    %6916 = vmatpush2.msra.mxu0 0.0
    %6917 = vmatprep.subr.mxu0 0.0
    %6918 = vmatpush2.msra.mxu0 0.0
    %6919 = vmatprep.subr.mxu0 0.0
    %6920 = vmatpush2.msra.mxu0 0.0
    %6921 = vmatprep.subr.mxu0 0.0
    %6922 = vmatpush2.msra.mxu0 0.0
    %6923 = vmatprep.subr.mxu0 0.0
    %6924 = vmatpush2.msra.mxu0 0.0
    %6925 = vmatprep.subr.mxu0 0.0
    %6926 = vmatpush2.msra.mxu0 0.0
    %6927 = vmatprep.subr.mxu0 0.0
    %6928 = vmatpush2.msra.mxu0 0.0
    %6929 = vmatprep.subr.mxu0 0.0
    %6930 = vmatpush2.msra.mxu0 0.0
    %6931 = vmatprep.subr.mxu0 0.0
    %6932 = vmatpush2.msra.mxu0 0.0
    %6933 = vmatprep.subr.mxu0 0.0
    %6934 = vmatpush2.msra.mxu0 0.0
    %6935 = vmatprep.subr.mxu0 0.0
    %6936 = vmatpush2.msra.mxu0 0.0
    %6937 = vmatprep.subr.mxu0 0.0
    %6938 = vmatpush2.msra.mxu0 0.0
    %6939 = vmatprep.subr.mxu0 0.0
    %6940 = vmatpush2.msra.mxu0 0.0
    %6941 = vmatprep.mubr.f32.mxu0 0.0
    %6942 = vmatmul.mubr.f32.gmra.mxu0 %v6875
    %v6943 = vpop.f32.mrf.mxu0
    %v6944 = vadd.f32 %v6838, %v6943
    %v6945 = vpop.f32.mrf.mxu0
    %6946 = vdwg.mxu0
    %v6947 = vadd.f32 %v6944, %v6733
    %v6948 = vxor.u32 %v6947, 2147483648
    %v6949 = vmul.f32 %v6948, 1.442695
    %v6950 = vpow.pop %v6949
    %v6951 = vadd.f32 %v6950, 1.0
    %v6952 = vrcp.pop %v6951
    %v6953 = vmul.f32 1.0, %v6952
    %v6954 = vtanh.pop %v6947
    %v6955 = vmul.f32 %v6953, %v6753
    %6957 = vrot.lane.b32.xlu0 %v6954, 64
    %v6958 = vpop.permute.xlu0 %6957
    %v6960 = vmul.f32 %v6953, %v6958
    %6962 = vrot.lane.b32.xlu0 %v6960, 32
    %v6963 = vpop.permute.xlu0 %6962
    %v6965 = vadd.f32 %v6955, %v6963
    %v6966 = vtanh.pop %v6965
    %6968 = vrot.lane.b32.xlu0 %v6966, 64
    %v6969 = vpop.permute.xlu0 %6968
    %v6971 = vmul.f32 %v6953, %v6969
    %6974 = vrot.lane.b32.xlu0 %v6971, 64
    %v6975 = vpop.permute.xlu0 %6974
    %v6977 = vsel %vm6656, %v6874, %v6975
    %v6979 = vsel %vm1868, %v6977, 0
    %6981 = vmatprep.subr.mxu0 0.0
    %6982 = vmatpush1.msra.mxu0 0.0
    %6983 = vmatprep.subr.mxu0 0.0
    %6984 = vmatpush1.msra.mxu0 0.0
    %6985 = vmatprep.subr.mxu0 0.0
    %6986 = vmatpush1.msra.mxu0 0.0
    %6987 = vmatprep.subr.mxu0 0.0
    %6988 = vmatpush1.msra.mxu0 0.0
    %6989 = vmatprep.subr.mxu0 0.0
    %6990 = vmatpush1.msra.mxu0 0.0
    %6991 = vmatprep.subr.mxu0 0.0
    %6992 = vmatpush1.msra.mxu0 0.0
    %6993 = vmatprep.subr.mxu0 0.0
    %6994 = vmatpush1.msra.mxu0 0.0
    %6995 = vmatprep.subr.mxu0 0.0
    %6996 = vmatpush1.msra.mxu0 0.0
    %6997 = vmatprep.subr.mxu0 %v6541
    %6998 = vmatpush1.msra.mxu0 %v6540
    %6999 = vmatprep.subr.mxu0 %v6539
    %7000 = vmatpush1.msra.mxu0 %v6538
    %7001 = vmatprep.subr.mxu0 %v6537
    %7002 = vmatpush1.msra.mxu0 %v6536
    %7003 = vmatprep.subr.mxu0 %v6535
    %7004 = vmatpush1.msra.mxu0 %v6534
    %7005 = vmatprep.subr.mxu0 %v6533
    %7006 = vmatpush1.msra.mxu0 %v6532
    %7007 = vmatprep.subr.mxu0 %v6531
    %7008 = vmatpush1.msra.mxu0 %v6530
    %7009 = vmatprep.subr.mxu0 %v6529
    %7010 = vmatpush1.msra.mxu0 %v6528
    %7011 = vmatprep.subr.mxu0 %v6527
    %7012 = vmatpush1.msra.mxu0 %v6526
    %7013 = vmatprep.subr.mxu0 0.0
    %7014 = vmatpush2.msra.mxu0 0.0
    %7015 = vmatprep.subr.mxu0 0.0
    %7016 = vmatpush2.msra.mxu0 0.0
    %7017 = vmatprep.subr.mxu0 0.0
    %7018 = vmatpush2.msra.mxu0 0.0
    %7019 = vmatprep.subr.mxu0 0.0
    %7020 = vmatpush2.msra.mxu0 0.0
    %7021 = vmatprep.subr.mxu0 0.0
    %7022 = vmatpush2.msra.mxu0 0.0
    %7023 = vmatprep.subr.mxu0 0.0
    %7024 = vmatpush2.msra.mxu0 0.0
    %7025 = vmatprep.subr.mxu0 0.0
    %7026 = vmatpush2.msra.mxu0 0.0
    %7027 = vmatprep.subr.mxu0 0.0
    %7028 = vmatpush2.msra.mxu0 0.0
    %7029 = vmatprep.subr.mxu0 0.0
    %7030 = vmatpush2.msra.mxu0 0.0
    %7031 = vmatprep.subr.mxu0 0.0
    %7032 = vmatpush2.msra.mxu0 0.0
    %7033 = vmatprep.subr.mxu0 0.0
    %7034 = vmatpush2.msra.mxu0 0.0
    %7035 = vmatprep.subr.mxu0 0.0
    %7036 = vmatpush2.msra.mxu0 0.0
    %7037 = vmatprep.subr.mxu0 0.0
    %7038 = vmatpush2.msra.mxu0 0.0
    %7039 = vmatprep.subr.mxu0 0.0
    %7040 = vmatpush2.msra.mxu0 0.0
    %7041 = vmatprep.subr.mxu0 0.0
    %7042 = vmatpush2.msra.mxu0 0.0
    %7043 = vmatprep.subr.mxu0 0.0
    %7044 = vmatpush2.msra.mxu0 0.0
    %7045 = vmatprep.mubr.f32.mxu0 0.0
    %7046 = vmatmul.mubr.f32.gmra.mxu0 %v6979
    %v7047 = vpop.f32.mrf.mxu0
    %v7048 = vadd.f32 0.0, %v7047
    %v7049 = vpop.f32.mrf.mxu0
    %v7050 = vadd.f32 0.0, %v7049
    %7051 = vdwg.mxu0
    %v7052 = vadd.f32 %v6498, %v7048
    %v7053 = vxor.u32 %v7052, 2147483648
    %v7054 = vmul.f32 %v7053, 1.442695
    %v7055 = vpow.pop %v7054
    %v7056 = vadd.f32 %v7055, 1.0
    %v7057 = vrcp.pop %v7056
    %v7058 = vmul.f32 1.0, %v7057
    %v7059 = vtanh.pop %v7052
    %v7060 = vmul.f32 %v7058, %v6858
    %7062 = vrot.lane.b32.xlu0 %v7059, 64
    %v7063 = vpop.permute.xlu0 %7062
    %v7065 = vmul.f32 %v7058, %v7063
    %7067 = vrot.lane.b32.xlu0 %v7065, 32
    %v7068 = vpop.permute.xlu0 %7067
    %v7070 = vadd.f32 %v7060, %v7068
    %v7071 = vtanh.pop %v7070
    %7073 = vrot.lane.b32.xlu0 %v7071, 64
    %v7074 = vpop.permute.xlu0 %7073
    %v7076 = vmul.f32 %v7058, %v7074
    %v7079 = vunpack.c.l.s4 1983009808
    %v7080 = vunpack.c.0.s8 %v7079
    %v7081 = vlaneseq
    %v7082 = vshrl.u32 %v7081, 7
    %v7083 = vsub.s32 %v7080, %v7082
    %v7084 = vrot.slane %v7076, %v7083
    %7085 = vrot.lane.b32.xlu0 %v7084, 32
    %v7086 = vpop.permute.xlu0 %7085
    %v7087 = vsel %vm6656, %v7086, 0
    %7089 = vmatprep.subr.mxu0 0.0
    %7090 = vmatpush1.msra.mxu0 0.0
    %7091 = vmatprep.subr.mxu0 0.0
    %7092 = vmatpush1.msra.mxu0 0.0
    %7093 = vmatprep.subr.mxu0 0.0
    %7094 = vmatpush1.msra.mxu0 0.0
    %7095 = vmatprep.subr.mxu0 0.0
    %7096 = vmatpush1.msra.mxu0 0.0
    %7097 = vmatprep.subr.mxu0 0.0
    %7098 = vmatpush1.msra.mxu0 0.0
    %7099 = vmatprep.subr.mxu0 0.0
    %7100 = vmatpush1.msra.mxu0 0.0
    %7101 = vmatprep.subr.mxu0 0.0
    %7102 = vmatpush1.msra.mxu0 0.0
    %7103 = vmatprep.subr.mxu0 0.0
    %7104 = vmatpush1.msra.mxu0 0.0
    %7105 = vmatprep.subr.mxu0 0.0
    %7106 = vmatpush1.msra.mxu0 0.0
    %7107 = vmatprep.subr.mxu0 0.0
    %7108 = vmatpush1.msra.mxu0 0.0
    %7109 = vmatprep.subr.mxu0 0.0
    %7110 = vmatpush1.msra.mxu0 0.0
    %7111 = vmatprep.subr.mxu0 0.0
    %7112 = vmatpush1.msra.mxu0 0.0
    %7113 = vmatprep.subr.mxu0 0.0
    %7114 = vmatpush1.msra.mxu0 %v6545
    %7115 = vmatprep.subr.mxu0 0.0
    %7116 = vmatpush1.msra.mxu0 %v6544
    %7117 = vmatprep.subr.mxu0 0.0
    %7118 = vmatpush1.msra.mxu0 %v6543
    %7119 = vmatprep.subr.mxu0 0.0
    %7120 = vmatpush1.msra.mxu0 %v6542
    %7121 = vmatprep.subr.mxu0 0.0
    %7122 = vmatpush2.msra.mxu0 0.0
    %7123 = vmatprep.subr.mxu0 0.0
    %7124 = vmatpush2.msra.mxu0 0.0
    %7125 = vmatprep.subr.mxu0 0.0
    %7126 = vmatpush2.msra.mxu0 0.0
    %7127 = vmatprep.subr.mxu0 0.0
    %7128 = vmatpush2.msra.mxu0 0.0
    %7129 = vmatprep.subr.mxu0 0.0
    %7130 = vmatpush2.msra.mxu0 0.0
    %7131 = vmatprep.subr.mxu0 0.0
    %7132 = vmatpush2.msra.mxu0 0.0
    %7133 = vmatprep.subr.mxu0 0.0
    %7134 = vmatpush2.msra.mxu0 0.0
    %7135 = vmatprep.subr.mxu0 0.0
    %7136 = vmatpush2.msra.mxu0 0.0
    %7137 = vmatprep.subr.mxu0 0.0
    %7138 = vmatpush2.msra.mxu0 0.0
    %7139 = vmatprep.subr.mxu0 0.0
    %7140 = vmatpush2.msra.mxu0 0.0
    %7141 = vmatprep.subr.mxu0 0.0
    %7142 = vmatpush2.msra.mxu0 0.0
    %7143 = vmatprep.subr.mxu0 0.0
    %7144 = vmatpush2.msra.mxu0 0.0
    %7145 = vmatprep.subr.mxu0 0.0
    %7146 = vmatpush2.msra.mxu0 0.0
    %7147 = vmatprep.subr.mxu0 0.0
    %7148 = vmatpush2.msra.mxu0 0.0
    %7149 = vmatprep.subr.mxu0 0.0
    %7150 = vmatpush2.msra.mxu0 0.0
    %7151 = vmatprep.subr.mxu0 0.0
    %7152 = vmatpush2.msra.mxu0 0.0
    %7153 = vmatprep.mubr.f32.mxu0 0.0
    %7154 = vmatmul.mubr.f32.gmra.mxu0 %v7087
    %v7155 = vpop.f32.mrf.mxu0
    %v7156 = vadd.f32 %v7050, %v7155
    %v7157 = vpop.f32.mrf.mxu0
    %7158 = vdwg.mxu0
    %v7159 = vadd.f32 %v7156, %v6733
    %v7160 = vxor.u32 %v7159, 2147483648
    %v7161 = vmul.f32 %v7160, 1.442695
    %v7162 = vpow.pop %v7161
    %v7163 = vadd.f32 %v7162, 1.0
    %v7164 = vrcp.pop %v7163
    %v7165 = vmul.f32 1.0, %v7164
    %v7166 = vtanh.pop %v7159
    %v7167 = vmul.f32 %v7165, %v6965
    %7169 = vrot.lane.b32.xlu0 %v7166, 64
    %v7170 = vpop.permute.xlu0 %7169
    %v7172 = vmul.f32 %v7165, %v7170
    %7174 = vrot.lane.b32.xlu0 %v7172, 32
    %v7175 = vpop.permute.xlu0 %7174
    %v7177 = vadd.f32 %v7167, %v7175
    %v7178 = vtanh.pop %v7177
    %7180 = vrot.lane.b32.xlu0 %v7178, 64
    %v7181 = vpop.permute.xlu0 %7180
    %v7183 = vmul.f32 %v7165, %v7181
    %7186 = vrot.lane.b32.xlu0 %v7183, 64
    %v7187 = vpop.permute.xlu0 %7186
    %v7189 = vsel %vm6656, %v7086, %v7187
    %v7191 = vsel %vm1868, %v7189, 0
    %7193 = vmatprep.subr.mxu0 0.0
    %7194 = vmatpush1.msra.mxu0 0.0
    %7195 = vmatprep.subr.mxu0 0.0
    %7196 = vmatpush1.msra.mxu0 0.0
    %7197 = vmatprep.subr.mxu0 0.0
    %7198 = vmatpush1.msra.mxu0 0.0
    %7199 = vmatprep.subr.mxu0 0.0
    %7200 = vmatpush1.msra.mxu0 0.0
    %7201 = vmatprep.subr.mxu0 0.0
    %7202 = vmatpush1.msra.mxu0 0.0
    %7203 = vmatprep.subr.mxu0 0.0
    %7204 = vmatpush1.msra.mxu0 0.0
    %7205 = vmatprep.subr.mxu0 0.0
    %7206 = vmatpush1.msra.mxu0 0.0
    %7207 = vmatprep.subr.mxu0 0.0
    %7208 = vmatpush1.msra.mxu0 0.0
    %7209 = vmatprep.subr.mxu0 %v6541
    %7210 = vmatpush1.msra.mxu0 %v6540
    %7211 = vmatprep.subr.mxu0 %v6539
    %7212 = vmatpush1.msra.mxu0 %v6538
    %7213 = vmatprep.subr.mxu0 %v6537
    %7214 = vmatpush1.msra.mxu0 %v6536
    %7215 = vmatprep.subr.mxu0 %v6535
    %7216 = vmatpush1.msra.mxu0 %v6534
    %7217 = vmatprep.subr.mxu0 %v6533
    %7218 = vmatpush1.msra.mxu0 %v6532
    %7219 = vmatprep.subr.mxu0 %v6531
    %7220 = vmatpush1.msra.mxu0 %v6530
    %7221 = vmatprep.subr.mxu0 %v6529
    %7222 = vmatpush1.msra.mxu0 %v6528
    %7223 = vmatprep.subr.mxu0 %v6527
    %7224 = vmatpush1.msra.mxu0 %v6526
    %7225 = vmatprep.subr.mxu0 0.0
    %7226 = vmatpush2.msra.mxu0 0.0
    %7227 = vmatprep.subr.mxu0 0.0
    %7228 = vmatpush2.msra.mxu0 0.0
    %7229 = vmatprep.subr.mxu0 0.0
    %7230 = vmatpush2.msra.mxu0 0.0
    %7231 = vmatprep.subr.mxu0 0.0
    %7232 = vmatpush2.msra.mxu0 0.0
    %7233 = vmatprep.subr.mxu0 0.0
    %7234 = vmatpush2.msra.mxu0 0.0
    %7235 = vmatprep.subr.mxu0 0.0
    %7236 = vmatpush2.msra.mxu0 0.0
    %7237 = vmatprep.subr.mxu0 0.0
    %7238 = vmatpush2.msra.mxu0 0.0
    %7239 = vmatprep.subr.mxu0 0.0
    %7240 = vmatpush2.msra.mxu0 0.0
    %7241 = vmatprep.subr.mxu0 0.0
    %7242 = vmatpush2.msra.mxu0 0.0
    %7243 = vmatprep.subr.mxu0 0.0
    %7244 = vmatpush2.msra.mxu0 0.0
    %7245 = vmatprep.subr.mxu0 0.0
    %7246 = vmatpush2.msra.mxu0 0.0
    %7247 = vmatprep.subr.mxu0 0.0
    %7248 = vmatpush2.msra.mxu0 0.0
    %7249 = vmatprep.subr.mxu0 0.0
    %7250 = vmatpush2.msra.mxu0 0.0
    %7251 = vmatprep.subr.mxu0 0.0
    %7252 = vmatpush2.msra.mxu0 0.0
    %7253 = vmatprep.subr.mxu0 0.0
    %7254 = vmatpush2.msra.mxu0 0.0
    %7255 = vmatprep.subr.mxu0 0.0
    %7256 = vmatpush2.msra.mxu0 0.0
    %7257 = vmatprep.mubr.f32.mxu0 0.0
    %7258 = vmatmul.mubr.f32.gmra.mxu0 %v7191
    %v7259 = vpop.f32.mrf.mxu0
    %v7260 = vadd.f32 0.0, %v7259
    %v7261 = vpop.f32.mrf.mxu0
    %v7262 = vadd.f32 0.0, %v7261
    %7263 = vdwg.mxu0
    %v7264 = vadd.f32 %v6500, %v7260
    %v7265 = vxor.u32 %v7264, 2147483648
    %v7266 = vmul.f32 %v7265, 1.442695
    %v7267 = vpow.pop %v7266
    %v7268 = vadd.f32 %v7267, 1.0
    %v7269 = vrcp.pop %v7268
    %v7270 = vmul.f32 1.0, %v7269
    %v7271 = vtanh.pop %v7264
    %v7272 = vmul.f32 %v7270, %v7070
    %7274 = vrot.lane.b32.xlu0 %v7271, 64
    %v7275 = vpop.permute.xlu0 %7274
    %v7277 = vmul.f32 %v7270, %v7275
    %7279 = vrot.lane.b32.xlu0 %v7277, 32
    %v7280 = vpop.permute.xlu0 %7279
    %v7282 = vadd.f32 %v7272, %v7280
    %v7283 = vtanh.pop %v7282
    %7285 = vrot.lane.b32.xlu0 %v7283, 64
    %v7286 = vpop.permute.xlu0 %7285
    %v7288 = vmul.f32 %v7270, %v7286
    %v7291 = vunpack.c.l.s4 1983009808
    %v7292 = vunpack.c.0.s8 %v7291
    %v7293 = vlaneseq
    %v7294 = vshrl.u32 %v7293, 7
    %v7295 = vsub.s32 %v7292, %v7294
    %v7296 = vrot.slane %v7288, %v7295
    %7297 = vrot.lane.b32.xlu0 %v7296, 32
    %v7298 = vpop.permute.xlu0 %7297
    %v7299 = vsel %vm6656, %v7298, 0
    %7301 = vmatprep.subr.mxu0 0.0
    %7302 = vmatpush1.msra.mxu0 0.0
    %7303 = vmatprep.subr.mxu0 0.0
    %7304 = vmatpush1.msra.mxu0 0.0
    %7305 = vmatprep.subr.mxu0 0.0
    %7306 = vmatpush1.msra.mxu0 0.0
    %7307 = vmatprep.subr.mxu0 0.0
    %7308 = vmatpush1.msra.mxu0 0.0
    %7309 = vmatprep.subr.mxu0 0.0
    %7310 = vmatpush1.msra.mxu0 0.0
    %7311 = vmatprep.subr.mxu0 0.0
    %7312 = vmatpush1.msra.mxu0 0.0
    %7313 = vmatprep.subr.mxu0 0.0
    %7314 = vmatpush1.msra.mxu0 0.0
    %7315 = vmatprep.subr.mxu0 0.0
    %7316 = vmatpush1.msra.mxu0 0.0
    %7317 = vmatprep.subr.mxu0 0.0
    %7318 = vmatpush1.msra.mxu0 0.0
    %7319 = vmatprep.subr.mxu0 0.0
    %7320 = vmatpush1.msra.mxu0 0.0
    %7321 = vmatprep.subr.mxu0 0.0
    %7322 = vmatpush1.msra.mxu0 0.0
    %7323 = vmatprep.subr.mxu0 0.0
    %7324 = vmatpush1.msra.mxu0 0.0
    %7325 = vmatprep.subr.mxu0 0.0
    %7326 = vmatpush1.msra.mxu0 %v6545
    %7327 = vmatprep.subr.mxu0 0.0
    %7328 = vmatpush1.msra.mxu0 %v6544
    %7329 = vmatprep.subr.mxu0 0.0
    %7330 = vmatpush1.msra.mxu0 %v6543
    %7331 = vmatprep.subr.mxu0 0.0
    %7332 = vmatpush1.msra.mxu0 %v6542
    %7333 = vmatprep.subr.mxu0 0.0
    %7334 = vmatpush2.msra.mxu0 0.0
    %7335 = vmatprep.subr.mxu0 0.0
    %7336 = vmatpush2.msra.mxu0 0.0
    %7337 = vmatprep.subr.mxu0 0.0
    %7338 = vmatpush2.msra.mxu0 0.0
    %7339 = vmatprep.subr.mxu0 0.0
    %7340 = vmatpush2.msra.mxu0 0.0
    %7341 = vmatprep.subr.mxu0 0.0
    %7342 = vmatpush2.msra.mxu0 0.0
    %7343 = vmatprep.subr.mxu0 0.0
    %7344 = vmatpush2.msra.mxu0 0.0
    %7345 = vmatprep.subr.mxu0 0.0
    %7346 = vmatpush2.msra.mxu0 0.0
    %7347 = vmatprep.subr.mxu0 0.0
    %7348 = vmatpush2.msra.mxu0 0.0
    %7349 = vmatprep.subr.mxu0 0.0
    %7350 = vmatpush2.msra.mxu0 0.0
    %7351 = vmatprep.subr.mxu0 0.0
    %7352 = vmatpush2.msra.mxu0 0.0
    %7353 = vmatprep.subr.mxu0 0.0
    %7354 = vmatpush2.msra.mxu0 0.0
    %7355 = vmatprep.subr.mxu0 0.0
    %7356 = vmatpush2.msra.mxu0 0.0
    %7357 = vmatprep.subr.mxu0 0.0
    %7358 = vmatpush2.msra.mxu0 0.0
    %7359 = vmatprep.subr.mxu0 0.0
    %7360 = vmatpush2.msra.mxu0 0.0
    %7361 = vmatprep.subr.mxu0 0.0
    %7362 = vmatpush2.msra.mxu0 0.0
    %7363 = vmatprep.subr.mxu0 0.0
    %7364 = vmatpush2.msra.mxu0 0.0
    %7365 = vmatprep.mubr.f32.mxu0 0.0
    %7366 = vmatmul.mubr.f32.gmra.mxu0 %v7299
    %v7367 = vpop.f32.mrf.mxu0
    %v7368 = vadd.f32 %v7262, %v7367
    %v7369 = vpop.f32.mrf.mxu0
    %7370 = vdwg.mxu0
    %v7371 = vadd.f32 %v7368, %v6733
    %v7372 = vxor.u32 %v7371, 2147483648
    %v7373 = vmul.f32 %v7372, 1.442695
    %v7374 = vpow.pop %v7373
    %v7375 = vadd.f32 %v7374, 1.0
    %v7376 = vrcp.pop %v7375
    %v7377 = vmul.f32 1.0, %v7376
    %v7378 = vtanh.pop %v7371
    %v7379 = vmul.f32 %v7377, %v7177
    %7381 = vrot.lane.b32.xlu0 %v7378, 64
    %v7382 = vpop.permute.xlu0 %7381
    %v7384 = vmul.f32 %v7377, %v7382
    %7386 = vrot.lane.b32.xlu0 %v7384, 32
    %v7387 = vpop.permute.xlu0 %7386
    %v7389 = vadd.f32 %v7379, %v7387
    %v7390 = vtanh.pop %v7389
    %7392 = vrot.lane.b32.xlu0 %v7390, 64
    %v7393 = vpop.permute.xlu0 %7392
    %v7395 = vmul.f32 %v7377, %v7393
    %7398 = vrot.lane.b32.xlu0 %v7395, 64
    %v7399 = vpop.permute.xlu0 %7398
    %v7401 = vsel %vm6656, %v7298, %v7399
    %v7403 = vsel %vm1868, %v7401, 0
    %7405 = vmatprep.subr.mxu0 0.0
    %7406 = vmatpush1.msra.mxu0 0.0
    %7407 = vmatprep.subr.mxu0 0.0
    %7408 = vmatpush1.msra.mxu0 0.0
    %7409 = vmatprep.subr.mxu0 0.0
    %7410 = vmatpush1.msra.mxu0 0.0
    %7411 = vmatprep.subr.mxu0 0.0
    %7412 = vmatpush1.msra.mxu0 0.0
    %7413 = vmatprep.subr.mxu0 0.0
    %7414 = vmatpush1.msra.mxu0 0.0
    %7415 = vmatprep.subr.mxu0 0.0
    %7416 = vmatpush1.msra.mxu0 0.0
    %7417 = vmatprep.subr.mxu0 0.0
    %7418 = vmatpush1.msra.mxu0 0.0
    %7419 = vmatprep.subr.mxu0 0.0
    %7420 = vmatpush1.msra.mxu0 0.0
    %7421 = vmatprep.subr.mxu0 %v6541
    %7422 = vmatpush1.msra.mxu0 %v6540
    %7423 = vmatprep.subr.mxu0 %v6539
    %7424 = vmatpush1.msra.mxu0 %v6538
    %7425 = vmatprep.subr.mxu0 %v6537
    %7426 = vmatpush1.msra.mxu0 %v6536
    %7427 = vmatprep.subr.mxu0 %v6535
    %7428 = vmatpush1.msra.mxu0 %v6534
    %7429 = vmatprep.subr.mxu0 %v6533
    %7430 = vmatpush1.msra.mxu0 %v6532
    %7431 = vmatprep.subr.mxu0 %v6531
    %7432 = vmatpush1.msra.mxu0 %v6530
    %7433 = vmatprep.subr.mxu0 %v6529
    %7434 = vmatpush1.msra.mxu0 %v6528
    %7435 = vmatprep.subr.mxu0 %v6527
    %7436 = vmatpush1.msra.mxu0 %v6526
    %7437 = vmatprep.subr.mxu0 0.0
    %7438 = vmatpush2.msra.mxu0 0.0
    %7439 = vmatprep.subr.mxu0 0.0
    %7440 = vmatpush2.msra.mxu0 0.0
    %7441 = vmatprep.subr.mxu0 0.0
    %7442 = vmatpush2.msra.mxu0 0.0
    %7443 = vmatprep.subr.mxu0 0.0
    %7444 = vmatpush2.msra.mxu0 0.0
    %7445 = vmatprep.subr.mxu0 0.0
    %7446 = vmatpush2.msra.mxu0 0.0
    %7447 = vmatprep.subr.mxu0 0.0
    %7448 = vmatpush2.msra.mxu0 0.0
    %7449 = vmatprep.subr.mxu0 0.0
    %7450 = vmatpush2.msra.mxu0 0.0
    %7451 = vmatprep.subr.mxu0 0.0
    %7452 = vmatpush2.msra.mxu0 0.0
    %7453 = vmatprep.subr.mxu0 0.0
    %7454 = vmatpush2.msra.mxu0 0.0
    %7455 = vmatprep.subr.mxu0 0.0
    %7456 = vmatpush2.msra.mxu0 0.0
    %7457 = vmatprep.subr.mxu0 0.0
    %7458 = vmatpush2.msra.mxu0 0.0
    %7459 = vmatprep.subr.mxu0 0.0
    %7460 = vmatpush2.msra.mxu0 0.0
    %7461 = vmatprep.subr.mxu0 0.0
    %7462 = vmatpush2.msra.mxu0 0.0
    %7463 = vmatprep.subr.mxu0 0.0
    %7464 = vmatpush2.msra.mxu0 0.0
    %7465 = vmatprep.subr.mxu0 0.0
    %7466 = vmatpush2.msra.mxu0 0.0
    %7467 = vmatprep.subr.mxu0 0.0
    %7468 = vmatpush2.msra.mxu0 0.0
    %7469 = vmatprep.mubr.f32.mxu0 0.0
    %7470 = vmatmul.mubr.f32.gmra.mxu0 %v7403
    %v7471 = vpop.f32.mrf.mxu0
    %v7472 = vadd.f32 0.0, %v7471
    %v7473 = vpop.f32.mrf.mxu0
    %v7474 = vadd.f32 0.0, %v7473
    %7475 = vdwg.mxu0
    %v7476 = vadd.f32 %v6508, %v7472
    %v7477 = vxor.u32 %v7476, 2147483648
    %v7478 = vmul.f32 %v7477, 1.442695
    %v7479 = vpow.pop %v7478
    %v7480 = vadd.f32 %v7479, 1.0
    %v7481 = vrcp.pop %v7480
    %v7482 = vmul.f32 1.0, %v7481
    %v7483 = vtanh.pop %v7476
    %v7484 = vmul.f32 %v7482, %v7282
    %7486 = vrot.lane.b32.xlu0 %v7483, 64
    %v7487 = vpop.permute.xlu0 %7486
    %v7489 = vmul.f32 %v7482, %v7487
    %7491 = vrot.lane.b32.xlu0 %v7489, 32
    %v7492 = vpop.permute.xlu0 %7491
    %v7494 = vadd.f32 %v7484, %v7492
    %v7495 = vtanh.pop %v7494
    %7497 = vrot.lane.b32.xlu0 %v7495, 64
    %v7498 = vpop.permute.xlu0 %7497
    %v7500 = vmul.f32 %v7482, %v7498
    %v7503 = vunpack.c.l.s4 1983009808
    %v7504 = vunpack.c.0.s8 %v7503
    %v7505 = vlaneseq
    %v7506 = vshrl.u32 %v7505, 7
    %v7507 = vsub.s32 %v7504, %v7506
    %v7508 = vrot.slane %v7500, %v7507
    %7509 = vrot.lane.b32.xlu0 %v7508, 32
    %v7510 = vpop.permute.xlu0 %7509
    %v7511 = vsel %vm6656, %v7510, 0
    %7513 = vmatprep.subr.mxu0 0.0
    %7514 = vmatpush1.msra.mxu0 0.0
    %7515 = vmatprep.subr.mxu0 0.0
    %7516 = vmatpush1.msra.mxu0 0.0
    %7517 = vmatprep.subr.mxu0 0.0
    %7518 = vmatpush1.msra.mxu0 0.0
    %7519 = vmatprep.subr.mxu0 0.0
    %7520 = vmatpush1.msra.mxu0 0.0
    %7521 = vmatprep.subr.mxu0 0.0
    %7522 = vmatpush1.msra.mxu0 0.0
    %7523 = vmatprep.subr.mxu0 0.0
    %7524 = vmatpush1.msra.mxu0 0.0
    %7525 = vmatprep.subr.mxu0 0.0
    %7526 = vmatpush1.msra.mxu0 0.0
    %7527 = vmatprep.subr.mxu0 0.0
    %7528 = vmatpush1.msra.mxu0 0.0
    %7529 = vmatprep.subr.mxu0 0.0
    %7530 = vmatpush1.msra.mxu0 0.0
    %7531 = vmatprep.subr.mxu0 0.0
    %7532 = vmatpush1.msra.mxu0 0.0
    %7533 = vmatprep.subr.mxu0 0.0
    %7534 = vmatpush1.msra.mxu0 0.0
    %7535 = vmatprep.subr.mxu0 0.0
    %7536 = vmatpush1.msra.mxu0 0.0
    %7537 = vmatprep.subr.mxu0 0.0
    %7538 = vmatpush1.msra.mxu0 %v6545
    %7539 = vmatprep.subr.mxu0 0.0
    %7540 = vmatpush1.msra.mxu0 %v6544
    %7541 = vmatprep.subr.mxu0 0.0
    %7542 = vmatpush1.msra.mxu0 %v6543
    %7543 = vmatprep.subr.mxu0 0.0
    %7544 = vmatpush1.msra.mxu0 %v6542
    %7545 = vmatprep.subr.mxu0 0.0
    %7546 = vmatpush2.msra.mxu0 0.0
    %7547 = vmatprep.subr.mxu0 0.0
    %7548 = vmatpush2.msra.mxu0 0.0
    %7549 = vmatprep.subr.mxu0 0.0
    %7550 = vmatpush2.msra.mxu0 0.0
    %7551 = vmatprep.subr.mxu0 0.0
    %7552 = vmatpush2.msra.mxu0 0.0
    %7553 = vmatprep.subr.mxu0 0.0
    %7554 = vmatpush2.msra.mxu0 0.0
    %7555 = vmatprep.subr.mxu0 0.0
    %7556 = vmatpush2.msra.mxu0 0.0
    %7557 = vmatprep.subr.mxu0 0.0
    %7558 = vmatpush2.msra.mxu0 0.0
    %7559 = vmatprep.subr.mxu0 0.0
    %7560 = vmatpush2.msra.mxu0 0.0
    %7561 = vmatprep.subr.mxu0 0.0
    %7562 = vmatpush2.msra.mxu0 0.0
    %7563 = vmatprep.subr.mxu0 0.0
    %7564 = vmatpush2.msra.mxu0 0.0
    %7565 = vmatprep.subr.mxu0 0.0
    %7566 = vmatpush2.msra.mxu0 0.0
    %7567 = vmatprep.subr.mxu0 0.0
    %7568 = vmatpush2.msra.mxu0 0.0
    %7569 = vmatprep.subr.mxu0 0.0
    %7570 = vmatpush2.msra.mxu0 0.0
    %7571 = vmatprep.subr.mxu0 0.0
    %7572 = vmatpush2.msra.mxu0 0.0
    %7573 = vmatprep.subr.mxu0 0.0
    %7574 = vmatpush2.msra.mxu0 0.0
    %7575 = vmatprep.subr.mxu0 0.0
    %7576 = vmatpush2.msra.mxu0 0.0
    %7577 = vmatprep.mubr.f32.mxu0 0.0
    %7578 = vmatmul.mubr.f32.gmra.mxu0 %v7511
    %v7579 = vpop.f32.mrf.mxu0
    %v7580 = vadd.f32 %v7474, %v7579
    %v7581 = vpop.f32.mrf.mxu0
    %7582 = vdwg.mxu0
    %v7583 = vadd.f32 %v7580, %v6733
    %v7584 = vxor.u32 %v7583, 2147483648
    %v7585 = vmul.f32 %v7584, 1.442695
    %v7586 = vpow.pop %v7585
    %v7587 = vadd.f32 %v7586, 1.0
    %v7588 = vrcp.pop %v7587
    %v7589 = vmul.f32 1.0, %v7588
    %v7590 = vtanh.pop %v7583
    %v7591 = vmul.f32 %v7589, %v7389
    %7593 = vrot.lane.b32.xlu0 %v7590, 64
    %v7594 = vpop.permute.xlu0 %7593
    %v7596 = vmul.f32 %v7589, %v7594
    %7598 = vrot.lane.b32.xlu0 %v7596, 32
    %v7599 = vpop.permute.xlu0 %7598
    %v7601 = vadd.f32 %v7591, %v7599
    %v7602 = vtanh.pop %v7601
    %7604 = vrot.lane.b32.xlu0 %v7602, 64
    %v7605 = vpop.permute.xlu0 %7604
    %v7607 = vmul.f32 %v7589, %v7605
    %7610 = vrot.lane.b32.xlu0 %v7607, 64
    %v7611 = vpop.permute.xlu0 %7610
    %v7613 = vsel %vm6656, %v7510, %v7611
    %v7615 = vsel %vm1868, %v7613, 0
    %7617 = vmatprep.subr.mxu0 0.0
    %7618 = vmatpush1.msra.mxu0 0.0
    %7619 = vmatprep.subr.mxu0 0.0
    %7620 = vmatpush1.msra.mxu0 0.0
    %7621 = vmatprep.subr.mxu0 0.0
    %7622 = vmatpush1.msra.mxu0 0.0
    %7623 = vmatprep.subr.mxu0 0.0
    %7624 = vmatpush1.msra.mxu0 0.0
    %7625 = vmatprep.subr.mxu0 0.0
    %7626 = vmatpush1.msra.mxu0 0.0
    %7627 = vmatprep.subr.mxu0 0.0
    %7628 = vmatpush1.msra.mxu0 0.0
    %7629 = vmatprep.subr.mxu0 0.0
    %7630 = vmatpush1.msra.mxu0 0.0
    %7631 = vmatprep.subr.mxu0 0.0
    %7632 = vmatpush1.msra.mxu0 0.0
    %7633 = vmatprep.subr.mxu0 %v6541
    %7634 = vmatpush1.msra.mxu0 %v6540
    %7635 = vmatprep.subr.mxu0 %v6539
    %7636 = vmatpush1.msra.mxu0 %v6538
    %7637 = vmatprep.subr.mxu0 %v6537
    %7638 = vmatpush1.msra.mxu0 %v6536
    %7639 = vmatprep.subr.mxu0 %v6535
    %7640 = vmatpush1.msra.mxu0 %v6534
    %7641 = vmatprep.subr.mxu0 %v6533
    %7642 = vmatpush1.msra.mxu0 %v6532
    %7643 = vmatprep.subr.mxu0 %v6531
    %7644 = vmatpush1.msra.mxu0 %v6530
    %7645 = vmatprep.subr.mxu0 %v6529
    %7646 = vmatpush1.msra.mxu0 %v6528
    %7647 = vmatprep.subr.mxu0 %v6527
    %7648 = vmatpush1.msra.mxu0 %v6526
    %7649 = vmatprep.subr.mxu0 0.0
    %7650 = vmatpush2.msra.mxu0 0.0
    %7651 = vmatprep.subr.mxu0 0.0
    %7652 = vmatpush2.msra.mxu0 0.0
    %7653 = vmatprep.subr.mxu0 0.0
    %7654 = vmatpush2.msra.mxu0 0.0
    %7655 = vmatprep.subr.mxu0 0.0
    %7656 = vmatpush2.msra.mxu0 0.0
    %7657 = vmatprep.subr.mxu0 0.0
    %7658 = vmatpush2.msra.mxu0 0.0
    %7659 = vmatprep.subr.mxu0 0.0
    %7660 = vmatpush2.msra.mxu0 0.0
    %7661 = vmatprep.subr.mxu0 0.0
    %7662 = vmatpush2.msra.mxu0 0.0
    %7663 = vmatprep.subr.mxu0 0.0
    %7664 = vmatpush2.msra.mxu0 0.0
    %7665 = vmatprep.subr.mxu0 0.0
    %7666 = vmatpush2.msra.mxu0 0.0
    %7667 = vmatprep.subr.mxu0 0.0
    %7668 = vmatpush2.msra.mxu0 0.0
    %7669 = vmatprep.subr.mxu0 0.0
    %7670 = vmatpush2.msra.mxu0 0.0
    %7671 = vmatprep.subr.mxu0 0.0
    %7672 = vmatpush2.msra.mxu0 0.0
    %7673 = vmatprep.subr.mxu0 0.0
    %7674 = vmatpush2.msra.mxu0 0.0
    %7675 = vmatprep.subr.mxu0 0.0
    %7676 = vmatpush2.msra.mxu0 0.0
    %7677 = vmatprep.subr.mxu0 0.0
    %7678 = vmatpush2.msra.mxu0 0.0
    %7679 = vmatprep.subr.mxu0 0.0
    %7680 = vmatpush2.msra.mxu0 0.0
    %7681 = vmatprep.mubr.f32.mxu0 0.0
    %7682 = vmatmul.mubr.f32.gmra.mxu0 %v7615
    %v7683 = vpop.f32.mrf.mxu0
    %v7684 = vadd.f32 0.0, %v7683
    %v7685 = vpop.f32.mrf.mxu0
    %v7686 = vadd.f32 0.0, %v7685
    %7687 = vdwg.mxu0
    %v7688 = vadd.f32 %v6516, %v7684
    %v7689 = vxor.u32 %v7688, 2147483648
    %v7690 = vmul.f32 %v7689, 1.442695
    %v7691 = vpow.pop %v7690
    %v7692 = vadd.f32 %v7691, 1.0
    %v7693 = vrcp.pop %v7692
    %v7694 = vmul.f32 1.0, %v7693
    %v7695 = vtanh.pop %v7688
    %v7696 = vmul.f32 %v7694, %v7494
    %7698 = vrot.lane.b32.xlu0 %v7695, 64
    %v7699 = vpop.permute.xlu0 %7698
    %v7701 = vmul.f32 %v7694, %v7699
    %7703 = vrot.lane.b32.xlu0 %v7701, 32
    %v7704 = vpop.permute.xlu0 %7703
    %v7706 = vadd.f32 %v7696, %v7704
    %v7707 = vtanh.pop %v7706
    %7709 = vrot.lane.b32.xlu0 %v7707, 64
    %v7710 = vpop.permute.xlu0 %7709
    %v7712 = vmul.f32 %v7694, %v7710
    %v7715 = vunpack.c.l.s4 1983009808
    %v7716 = vunpack.c.0.s8 %v7715
    %v7717 = vlaneseq
    %v7718 = vshrl.u32 %v7717, 7
    %v7719 = vsub.s32 %v7716, %v7718
    %v7720 = vrot.slane %v7712, %v7719
    %7721 = vrot.lane.b32.xlu0 %v7720, 32
    %v7722 = vpop.permute.xlu0 %7721
    %v7723 = vsel %vm6656, %v7722, 0
    %7725 = vmatprep.subr.mxu0 0.0
    %7726 = vmatpush1.msra.mxu0 0.0
    %7727 = vmatprep.subr.mxu0 0.0
    %7728 = vmatpush1.msra.mxu0 0.0
    %7729 = vmatprep.subr.mxu0 0.0
    %7730 = vmatpush1.msra.mxu0 0.0
    %7731 = vmatprep.subr.mxu0 0.0
    %7732 = vmatpush1.msra.mxu0 0.0
    %7733 = vmatprep.subr.mxu0 0.0
    %7734 = vmatpush1.msra.mxu0 0.0
    %7735 = vmatprep.subr.mxu0 0.0
    %7736 = vmatpush1.msra.mxu0 0.0
    %7737 = vmatprep.subr.mxu0 0.0
    %7738 = vmatpush1.msra.mxu0 0.0
    %7739 = vmatprep.subr.mxu0 0.0
    %7740 = vmatpush1.msra.mxu0 0.0
    %7741 = vmatprep.subr.mxu0 0.0
    %7742 = vmatpush1.msra.mxu0 0.0
    %7743 = vmatprep.subr.mxu0 0.0
    %7744 = vmatpush1.msra.mxu0 0.0
    %7745 = vmatprep.subr.mxu0 0.0
    %7746 = vmatpush1.msra.mxu0 0.0
    %7747 = vmatprep.subr.mxu0 0.0
    %7748 = vmatpush1.msra.mxu0 0.0
    %7749 = vmatprep.subr.mxu0 0.0
    %7750 = vmatpush1.msra.mxu0 %v6545
    %7751 = vmatprep.subr.mxu0 0.0
    %7752 = vmatpush1.msra.mxu0 %v6544
    %7753 = vmatprep.subr.mxu0 0.0
    %7754 = vmatpush1.msra.mxu0 %v6543
    %7755 = vmatprep.subr.mxu0 0.0
    %7756 = vmatpush1.msra.mxu0 %v6542
    %7757 = vmatprep.subr.mxu0 0.0
    %7758 = vmatpush2.msra.mxu0 0.0
    %7759 = vmatprep.subr.mxu0 0.0
    %7760 = vmatpush2.msra.mxu0 0.0
    %7761 = vmatprep.subr.mxu0 0.0
    %7762 = vmatpush2.msra.mxu0 0.0
    %7763 = vmatprep.subr.mxu0 0.0
    %7764 = vmatpush2.msra.mxu0 0.0
    %7765 = vmatprep.subr.mxu0 0.0
    %7766 = vmatpush2.msra.mxu0 0.0
    %7767 = vmatprep.subr.mxu0 0.0
    %7768 = vmatpush2.msra.mxu0 0.0
    %7769 = vmatprep.subr.mxu0 0.0
    %7770 = vmatpush2.msra.mxu0 0.0
    %7771 = vmatprep.subr.mxu0 0.0
    %7772 = vmatpush2.msra.mxu0 0.0
    %7773 = vmatprep.subr.mxu0 0.0
    %7774 = vmatpush2.msra.mxu0 0.0
    %7775 = vmatprep.subr.mxu0 0.0
    %7776 = vmatpush2.msra.mxu0 0.0
    %7777 = vmatprep.subr.mxu0 0.0
    %7778 = vmatpush2.msra.mxu0 0.0
    %7779 = vmatprep.subr.mxu0 0.0
    %7780 = vmatpush2.msra.mxu0 0.0
    %7781 = vmatprep.subr.mxu0 0.0
    %7782 = vmatpush2.msra.mxu0 0.0
    %7783 = vmatprep.subr.mxu0 0.0
    %7784 = vmatpush2.msra.mxu0 0.0
    %7785 = vmatprep.subr.mxu0 0.0
    %7786 = vmatpush2.msra.mxu0 0.0
    %7787 = vmatprep.subr.mxu0 0.0
    %7788 = vmatpush2.msra.mxu0 0.0
    %7789 = vmatprep.mubr.f32.mxu0 0.0
    %7790 = vmatmul.mubr.f32.gmra.mxu0 %v7723
    %v7791 = vpop.f32.mrf.mxu0
    %v7792 = vadd.f32 %v7686, %v7791
    %v7793 = vpop.f32.mrf.mxu0
    %7794 = vdwg.mxu0
    %v7795 = vadd.f32 %v7792, %v6733
    %v7796 = vxor.u32 %v7795, 2147483648
    %v7797 = vmul.f32 %v7796, 1.442695
    %v7798 = vpow.pop %v7797
    %v7799 = vadd.f32 %v7798, 1.0
    %v7800 = vrcp.pop %v7799
    %v7801 = vmul.f32 1.0, %v7800
    %v7802 = vtanh.pop %v7795
    %v7803 = vmul.f32 %v7801, %v7601
    %7805 = vrot.lane.b32.xlu0 %v7802, 64
    %v7806 = vpop.permute.xlu0 %7805
    %v7808 = vmul.f32 %v7801, %v7806
    %7810 = vrot.lane.b32.xlu0 %v7808, 32
    %v7811 = vpop.permute.xlu0 %7810
    %v7813 = vadd.f32 %v7803, %v7811
    %v7814 = vtanh.pop %v7813
    %7816 = vrot.lane.b32.xlu0 %v7814, 64
    %v7817 = vpop.permute.xlu0 %7816
    %v7819 = vmul.f32 %v7801, %v7817
    %7822 = vrot.lane.b32.xlu0 %v7819, 64
    %v7823 = vpop.permute.xlu0 %7822
    %v7825 = vsel %vm6656, %v7722, %v7823
    %v7827 = vsel %vm1868, %v7825, 0
    %7829 = vmatprep.subr.mxu0 0.0
    %7830 = vmatpush1.msra.mxu0 0.0
    %7831 = vmatprep.subr.mxu0 0.0
    %7832 = vmatpush1.msra.mxu0 0.0
    %7833 = vmatprep.subr.mxu0 0.0
    %7834 = vmatpush1.msra.mxu0 0.0
    %7835 = vmatprep.subr.mxu0 0.0
    %7836 = vmatpush1.msra.mxu0 0.0
    %7837 = vmatprep.subr.mxu0 0.0
    %7838 = vmatpush1.msra.mxu0 0.0
    %7839 = vmatprep.subr.mxu0 0.0
    %7840 = vmatpush1.msra.mxu0 0.0
    %7841 = vmatprep.subr.mxu0 0.0
    %7842 = vmatpush1.msra.mxu0 0.0
    %7843 = vmatprep.subr.mxu0 0.0
    %7844 = vmatpush1.msra.mxu0 0.0
    %7845 = vmatprep.subr.mxu0 %v6541
    %7846 = vmatpush1.msra.mxu0 %v6540
    %7847 = vmatprep.subr.mxu0 %v6539
    %7848 = vmatpush1.msra.mxu0 %v6538
    %7849 = vmatprep.subr.mxu0 %v6537
    %7850 = vmatpush1.msra.mxu0 %v6536
    %7851 = vmatprep.subr.mxu0 %v6535
    %7852 = vmatpush1.msra.mxu0 %v6534
    %7853 = vmatprep.subr.mxu0 %v6533
    %7854 = vmatpush1.msra.mxu0 %v6532
    %7855 = vmatprep.subr.mxu0 %v6531
    %7856 = vmatpush1.msra.mxu0 %v6530
    %7857 = vmatprep.subr.mxu0 %v6529
    %7858 = vmatpush1.msra.mxu0 %v6528
    %7859 = vmatprep.subr.mxu0 %v6527
    %7860 = vmatpush1.msra.mxu0 %v6526
    %7861 = vmatprep.subr.mxu0 0.0
    %7862 = vmatpush2.msra.mxu0 0.0
    %7863 = vmatprep.subr.mxu0 0.0
    %7864 = vmatpush2.msra.mxu0 0.0
    %7865 = vmatprep.subr.mxu0 0.0
    %7866 = vmatpush2.msra.mxu0 0.0
    %7867 = vmatprep.subr.mxu0 0.0
    %7868 = vmatpush2.msra.mxu0 0.0
    %7869 = vmatprep.subr.mxu0 0.0
    %7870 = vmatpush2.msra.mxu0 0.0
    %7871 = vmatprep.subr.mxu0 0.0
    %7872 = vmatpush2.msra.mxu0 0.0
    %7873 = vmatprep.subr.mxu0 0.0
    %7874 = vmatpush2.msra.mxu0 0.0
    %7875 = vmatprep.subr.mxu0 0.0
    %7876 = vmatpush2.msra.mxu0 0.0
    %7877 = vmatprep.subr.mxu0 0.0
    %7878 = vmatpush2.msra.mxu0 0.0
    %7879 = vmatprep.subr.mxu0 0.0
    %7880 = vmatpush2.msra.mxu0 0.0
    %7881 = vmatprep.subr.mxu0 0.0
    %7882 = vmatpush2.msra.mxu0 0.0
    %7883 = vmatprep.subr.mxu0 0.0
    %7884 = vmatpush2.msra.mxu0 0.0
    %7885 = vmatprep.subr.mxu0 0.0
    %7886 = vmatpush2.msra.mxu0 0.0
    %7887 = vmatprep.subr.mxu0 0.0
    %7888 = vmatpush2.msra.mxu0 0.0
    %7889 = vmatprep.subr.mxu0 0.0
    %7890 = vmatpush2.msra.mxu0 0.0
    %7891 = vmatprep.subr.mxu0 0.0
    %7892 = vmatpush2.msra.mxu0 0.0
    %7893 = vmatprep.mubr.f32.mxu0 0.0
    %7894 = vmatmul.mubr.f32.gmra.mxu0 %v7827
    %v7895 = vpop.f32.mrf.mxu0
    %v7896 = vadd.f32 0.0, %v7895
    %v7897 = vpop.f32.mrf.mxu0
    %v7898 = vadd.f32 0.0, %v7897
    %7899 = vdwg.mxu0
    %v7900 = vadd.f32 %v6515, %v7896
    %v7901 = vxor.u32 %v7900, 2147483648
    %v7902 = vmul.f32 %v7901, 1.442695
    %v7903 = vpow.pop %v7902
    %v7904 = vadd.f32 %v7903, 1.0
    %v7905 = vrcp.pop %v7904
    %v7906 = vmul.f32 1.0, %v7905
    %v7907 = vtanh.pop %v7900
    %v7908 = vmul.f32 %v7906, %v7706
    %7910 = vrot.lane.b32.xlu0 %v7907, 64
    %v7911 = vpop.permute.xlu0 %7910
    %v7913 = vmul.f32 %v7906, %v7911
    %7915 = vrot.lane.b32.xlu0 %v7913, 32
    %v7916 = vpop.permute.xlu0 %7915
    %v7918 = vadd.f32 %v7908, %v7916
    %v7919 = vtanh.pop %v7918
    %7921 = vrot.lane.b32.xlu0 %v7919, 64
    %v7922 = vpop.permute.xlu0 %7921
    %v7924 = vmul.f32 %v7906, %v7922
    %v7927 = vunpack.c.l.s4 1983009808
    %v7928 = vunpack.c.0.s8 %v7927
    %v7929 = vlaneseq
    %v7930 = vshrl.u32 %v7929, 7
    %v7931 = vsub.s32 %v7928, %v7930
    %v7932 = vrot.slane %v7924, %v7931
    %7933 = vrot.lane.b32.xlu0 %v7932, 32
    %v7934 = vpop.permute.xlu0 %7933
    %v7935 = vsel %vm6656, %v7934, 0
    %7937 = vmatprep.subr.mxu0 0.0
    %7938 = vmatpush1.msra.mxu0 0.0
    %7939 = vmatprep.subr.mxu0 0.0
    %7940 = vmatpush1.msra.mxu0 0.0
    %7941 = vmatprep.subr.mxu0 0.0
    %7942 = vmatpush1.msra.mxu0 0.0
    %7943 = vmatprep.subr.mxu0 0.0
    %7944 = vmatpush1.msra.mxu0 0.0
    %7945 = vmatprep.subr.mxu0 0.0
    %7946 = vmatpush1.msra.mxu0 0.0
    %7947 = vmatprep.subr.mxu0 0.0
    %7948 = vmatpush1.msra.mxu0 0.0
    %7949 = vmatprep.subr.mxu0 0.0
    %7950 = vmatpush1.msra.mxu0 0.0
    %7951 = vmatprep.subr.mxu0 0.0
    %7952 = vmatpush1.msra.mxu0 0.0
    %7953 = vmatprep.subr.mxu0 0.0
    %7954 = vmatpush1.msra.mxu0 0.0
    %7955 = vmatprep.subr.mxu0 0.0
    %7956 = vmatpush1.msra.mxu0 0.0
    %7957 = vmatprep.subr.mxu0 0.0
    %7958 = vmatpush1.msra.mxu0 0.0
    %7959 = vmatprep.subr.mxu0 0.0
    %7960 = vmatpush1.msra.mxu0 0.0
    %7961 = vmatprep.subr.mxu0 0.0
    %7962 = vmatpush1.msra.mxu0 %v6545
    %7963 = vmatprep.subr.mxu0 0.0
    %7964 = vmatpush1.msra.mxu0 %v6544
    %7965 = vmatprep.subr.mxu0 0.0
    %7966 = vmatpush1.msra.mxu0 %v6543
    %7967 = vmatprep.subr.mxu0 0.0
    %7968 = vmatpush1.msra.mxu0 %v6542
    %7969 = vmatprep.subr.mxu0 0.0
    %7970 = vmatpush2.msra.mxu0 0.0
    %7971 = vmatprep.subr.mxu0 0.0
    %7972 = vmatpush2.msra.mxu0 0.0
    %7973 = vmatprep.subr.mxu0 0.0
    %7974 = vmatpush2.msra.mxu0 0.0
    %7975 = vmatprep.subr.mxu0 0.0
    %7976 = vmatpush2.msra.mxu0 0.0
    %7977 = vmatprep.subr.mxu0 0.0
    %7978 = vmatpush2.msra.mxu0 0.0
    %7979 = vmatprep.subr.mxu0 0.0
    %7980 = vmatpush2.msra.mxu0 0.0
    %7981 = vmatprep.subr.mxu0 0.0
    %7982 = vmatpush2.msra.mxu0 0.0
    %7983 = vmatprep.subr.mxu0 0.0
    %7984 = vmatpush2.msra.mxu0 0.0
    %7985 = vmatprep.subr.mxu0 0.0
    %7986 = vmatpush2.msra.mxu0 0.0
    %7987 = vmatprep.subr.mxu0 0.0
    %7988 = vmatpush2.msra.mxu0 0.0
    %7989 = vmatprep.subr.mxu0 0.0
    %7990 = vmatpush2.msra.mxu0 0.0
    %7991 = vmatprep.subr.mxu0 0.0
    %7992 = vmatpush2.msra.mxu0 0.0
    %7993 = vmatprep.subr.mxu0 0.0
    %7994 = vmatpush2.msra.mxu0 0.0
    %7995 = vmatprep.subr.mxu0 0.0
    %7996 = vmatpush2.msra.mxu0 0.0
    %7997 = vmatprep.subr.mxu0 0.0
    %7998 = vmatpush2.msra.mxu0 0.0
    %7999 = vmatprep.subr.mxu0 0.0
    %8000 = vmatpush2.msra.mxu0 0.0
    %8001 = vmatprep.mubr.f32.mxu0 0.0
    %8002 = vmatmul.mubr.f32.gmra.mxu0 %v7935
    %v8003 = vpop.f32.mrf.mxu0
    %v8004 = vadd.f32 %v7898, %v8003
    %v8005 = vpop.f32.mrf.mxu0
    %8006 = vdwg.mxu0
    %v8007 = vadd.f32 %v8004, %v6733
    %v8008 = vxor.u32 %v8007, 2147483648
    %v8009 = vmul.f32 %v8008, 1.442695
    %v8010 = vpow.pop %v8009
    %v8011 = vadd.f32 %v8010, 1.0
    %v8012 = vrcp.pop %v8011
    %v8013 = vmul.f32 1.0, %v8012
    %v8014 = vtanh.pop %v8007
    %v8015 = vmul.f32 %v8013, %v7813
    %8017 = vrot.lane.b32.xlu0 %v8014, 64
    %v8018 = vpop.permute.xlu0 %8017
    %v8020 = vmul.f32 %v8013, %v8018
    %8022 = vrot.lane.b32.xlu0 %v8020, 32
    %v8023 = vpop.permute.xlu0 %8022
    %v8025 = vadd.f32 %v8015, %v8023
    %v8026 = vtanh.pop %v8025
    %8028 = vrot.lane.b32.xlu0 %v8026, 64
    %v8029 = vpop.permute.xlu0 %8028
    %v8031 = vmul.f32 %v8013, %v8029
    %8034 = vrot.lane.b32.xlu0 %v8031, 64
    %v8035 = vpop.permute.xlu0 %8034
    %v8037 = vsel %vm6656, %v7934, %v8035
    %v8039 = vsel %vm1868, %v8037, 0
    %8041 = vmatprep.subr.mxu0 0.0
    %8042 = vmatpush1.msra.mxu0 0.0
    %8043 = vmatprep.subr.mxu0 0.0
    %8044 = vmatpush1.msra.mxu0 0.0
    %8045 = vmatprep.subr.mxu0 0.0
    %8046 = vmatpush1.msra.mxu0 0.0
    %8047 = vmatprep.subr.mxu0 0.0
    %8048 = vmatpush1.msra.mxu0 0.0
    %8049 = vmatprep.subr.mxu0 0.0
    %8050 = vmatpush1.msra.mxu0 0.0
    %8051 = vmatprep.subr.mxu0 0.0
    %8052 = vmatpush1.msra.mxu0 0.0
    %8053 = vmatprep.subr.mxu0 0.0
    %8054 = vmatpush1.msra.mxu0 0.0
    %8055 = vmatprep.subr.mxu0 0.0
    %8056 = vmatpush1.msra.mxu0 0.0
    %8057 = vmatprep.subr.mxu0 %v6541
    %8058 = vmatpush1.msra.mxu0 %v6540
    %8059 = vmatprep.subr.mxu0 %v6539
    %8060 = vmatpush1.msra.mxu0 %v6538
    %8061 = vmatprep.subr.mxu0 %v6537
    %8062 = vmatpush1.msra.mxu0 %v6536
    %8063 = vmatprep.subr.mxu0 %v6535
    %8064 = vmatpush1.msra.mxu0 %v6534
    %8065 = vmatprep.subr.mxu0 %v6533
    %8066 = vmatpush1.msra.mxu0 %v6532
    %8067 = vmatprep.subr.mxu0 %v6531
    %8068 = vmatpush1.msra.mxu0 %v6530
    %8069 = vmatprep.subr.mxu0 %v6529
    %8070 = vmatpush1.msra.mxu0 %v6528
    %8071 = vmatprep.subr.mxu0 %v6527
    %8072 = vmatpush1.msra.mxu0 %v6526
    %8073 = vmatprep.subr.mxu0 0.0
    %8074 = vmatpush2.msra.mxu0 0.0
    %8075 = vmatprep.subr.mxu0 0.0
    %8076 = vmatpush2.msra.mxu0 0.0
    %8077 = vmatprep.subr.mxu0 0.0
    %8078 = vmatpush2.msra.mxu0 0.0
    %8079 = vmatprep.subr.mxu0 0.0
    %8080 = vmatpush2.msra.mxu0 0.0
    %8081 = vmatprep.subr.mxu0 0.0
    %8082 = vmatpush2.msra.mxu0 0.0
    %8083 = vmatprep.subr.mxu0 0.0
    %8084 = vmatpush2.msra.mxu0 0.0
    %8085 = vmatprep.subr.mxu0 0.0
    %8086 = vmatpush2.msra.mxu0 0.0
    %8087 = vmatprep.subr.mxu0 0.0
    %8088 = vmatpush2.msra.mxu0 0.0
    %8089 = vmatprep.subr.mxu0 0.0
    %8090 = vmatpush2.msra.mxu0 0.0
    %8091 = vmatprep.subr.mxu0 0.0
    %8092 = vmatpush2.msra.mxu0 0.0
    %8093 = vmatprep.subr.mxu0 0.0
    %8094 = vmatpush2.msra.mxu0 0.0
    %8095 = vmatprep.subr.mxu0 0.0
    %8096 = vmatpush2.msra.mxu0 0.0
    %8097 = vmatprep.subr.mxu0 0.0
    %8098 = vmatpush2.msra.mxu0 0.0
    %8099 = vmatprep.subr.mxu0 0.0
    %8100 = vmatpush2.msra.mxu0 0.0
    %8101 = vmatprep.subr.mxu0 0.0
    %8102 = vmatpush2.msra.mxu0 0.0
    %8103 = vmatprep.subr.mxu0 0.0
    %8104 = vmatpush2.msra.mxu0 0.0
    %8105 = vmatprep.mubr.f32.mxu0 0.0
    %8106 = vmatmul.mubr.f32.gmra.mxu0 %v8039
    %v8107 = vpop.f32.mrf.mxu0
    %v8108 = vadd.f32 0.0, %v8107
    %v8109 = vpop.f32.mrf.mxu0
    %v8110 = vadd.f32 0.0, %v8109
    %8111 = vdwg.mxu0
    %v8112 = vadd.f32 %v6517, %v8108
    %v8113 = vxor.u32 %v8112, 2147483648
    %v8114 = vmul.f32 %v8113, 1.442695
    %v8115 = vpow.pop %v8114
    %v8116 = vadd.f32 %v8115, 1.0
    %v8117 = vrcp.pop %v8116
    %v8118 = vmul.f32 1.0, %v8117
    %v8119 = vtanh.pop %v8112
    %v8120 = vmul.f32 %v8118, %v7918
    %8122 = vrot.lane.b32.xlu0 %v8119, 64
    %v8123 = vpop.permute.xlu0 %8122
    %v8125 = vmul.f32 %v8118, %v8123
    %8127 = vrot.lane.b32.xlu0 %v8125, 32
    %v8128 = vpop.permute.xlu0 %8127
    %v8130 = vadd.f32 %v8120, %v8128
    %v8131 = vtanh.pop %v8130
    %8133 = vrot.lane.b32.xlu0 %v8131, 64
    %v8134 = vpop.permute.xlu0 %8133
    %v8136 = vmul.f32 %v8118, %v8134
    %v8139 = vunpack.c.l.s4 1983009808
    %v8140 = vunpack.c.0.s8 %v8139
    %v8141 = vlaneseq
    %v8142 = vshrl.u32 %v8141, 7
    %v8143 = vsub.s32 %v8140, %v8142
    %v8144 = vrot.slane %v8136, %v8143
    %8145 = vrot.lane.b32.xlu0 %v8144, 32
    %v8146 = vpop.permute.xlu0 %8145
    %v8147 = vsel %vm6656, %v8146, 0
    %8149 = vmatprep.subr.mxu0 0.0
    %8150 = vmatpush1.msra.mxu0 0.0
    %8151 = vmatprep.subr.mxu0 0.0
    %8152 = vmatpush1.msra.mxu0 0.0
    %8153 = vmatprep.subr.mxu0 0.0
    %8154 = vmatpush1.msra.mxu0 0.0
    %8155 = vmatprep.subr.mxu0 0.0
    %8156 = vmatpush1.msra.mxu0 0.0
    %8157 = vmatprep.subr.mxu0 0.0
    %8158 = vmatpush1.msra.mxu0 0.0
    %8159 = vmatprep.subr.mxu0 0.0
    %8160 = vmatpush1.msra.mxu0 0.0
    %8161 = vmatprep.subr.mxu0 0.0
    %8162 = vmatpush1.msra.mxu0 0.0
    %8163 = vmatprep.subr.mxu0 0.0
    %8164 = vmatpush1.msra.mxu0 0.0
    %8165 = vmatprep.subr.mxu0 0.0
    %8166 = vmatpush1.msra.mxu0 0.0
    %8167 = vmatprep.subr.mxu0 0.0
    %8168 = vmatpush1.msra.mxu0 0.0
    %8169 = vmatprep.subr.mxu0 0.0
    %8170 = vmatpush1.msra.mxu0 0.0
    %8171 = vmatprep.subr.mxu0 0.0
    %8172 = vmatpush1.msra.mxu0 0.0
    %8173 = vmatprep.subr.mxu0 0.0
    %8174 = vmatpush1.msra.mxu0 %v6545
    %8175 = vmatprep.subr.mxu0 0.0
    %8176 = vmatpush1.msra.mxu0 %v6544
    %8177 = vmatprep.subr.mxu0 0.0
    %8178 = vmatpush1.msra.mxu0 %v6543
    %8179 = vmatprep.subr.mxu0 0.0
    %8180 = vmatpush1.msra.mxu0 %v6542
    %8181 = vmatprep.subr.mxu0 0.0
    %8182 = vmatpush2.msra.mxu0 0.0
    %8183 = vmatprep.subr.mxu0 0.0
    %8184 = vmatpush2.msra.mxu0 0.0
    %8185 = vmatprep.subr.mxu0 0.0
    %8186 = vmatpush2.msra.mxu0 0.0
    %8187 = vmatprep.subr.mxu0 0.0
    %8188 = vmatpush2.msra.mxu0 0.0
    %8189 = vmatprep.subr.mxu0 0.0
    %8190 = vmatpush2.msra.mxu0 0.0
    %8191 = vmatprep.subr.mxu0 0.0
    %8192 = vmatpush2.msra.mxu0 0.0
    %8193 = vmatprep.subr.mxu0 0.0
    %8194 = vmatpush2.msra.mxu0 0.0
    %8195 = vmatprep.subr.mxu0 0.0
    %8196 = vmatpush2.msra.mxu0 0.0
    %8197 = vmatprep.subr.mxu0 0.0
    %8198 = vmatpush2.msra.mxu0 0.0
    %8199 = vmatprep.subr.mxu0 0.0
    %8200 = vmatpush2.msra.mxu0 0.0
    %8201 = vmatprep.subr.mxu0 0.0
    %8202 = vmatpush2.msra.mxu0 0.0
    %8203 = vmatprep.subr.mxu0 0.0
    %8204 = vmatpush2.msra.mxu0 0.0
    %8205 = vmatprep.subr.mxu0 0.0
    %8206 = vmatpush2.msra.mxu0 0.0
    %8207 = vmatprep.subr.mxu0 0.0
    %8208 = vmatpush2.msra.mxu0 0.0
    %8209 = vmatprep.subr.mxu0 0.0
    %8210 = vmatpush2.msra.mxu0 0.0
    %8211 = vmatprep.subr.mxu0 0.0
    %8212 = vmatpush2.msra.mxu0 0.0
    %8213 = vmatprep.mubr.f32.mxu0 0.0
    %8214 = vmatmul.mubr.f32.gmra.mxu0 %v8147
    %v8215 = vpop.f32.mrf.mxu0
    %v8216 = vadd.f32 %v8110, %v8215
    %v8217 = vpop.f32.mrf.mxu0
    %8218 = vdwg.mxu0
    %v8219 = vadd.f32 %v8216, %v6733
    %v8220 = vxor.u32 %v8219, 2147483648
    %v8221 = vmul.f32 %v8220, 1.442695
    %v8222 = vpow.pop %v8221
    %v8223 = vadd.f32 %v8222, 1.0
    %v8224 = vrcp.pop %v8223
    %v8225 = vmul.f32 1.0, %v8224
    %v8226 = vtanh.pop %v8219
    %v8227 = vmul.f32 %v8225, %v8025
    %8229 = vrot.lane.b32.xlu0 %v8226, 64
    %v8230 = vpop.permute.xlu0 %8229
    %v8232 = vmul.f32 %v8225, %v8230
    %8234 = vrot.lane.b32.xlu0 %v8232, 32
    %v8235 = vpop.permute.xlu0 %8234
    %v8237 = vadd.f32 %v8227, %v8235
    %v8238 = vtanh.pop %v8237
    %8240 = vrot.lane.b32.xlu0 %v8238, 64
    %v8241 = vpop.permute.xlu0 %8240
    %v8243 = vmul.f32 %v8225, %v8241
    %v8244 = vld [vmem:[%s8] sm:$0xff]
    %v8245 = vld [vmem:[%s8 + $0x8] sm:$0xff]
    %v8246 = vld [vmem:[%s8 + $0x10] sm:$0xff]
    %v8247 = vld [vmem:[%s8 + $0x18] sm:$0xff]
    %v8248 = vld [vmem:[%s9] sm:$0x1]
    %v8250 = vlaneseq
    %v8251 = vshrl.u32 %v8250, 7
    %v8252 = vsub.s32 0, %v8251
    %v8253 = vrot.slane %v8248, %v8252
    %8256 = vrot.lane.b32.xlu0 %v8243, 32
    %v8257 = vpop.permute.xlu0 %8256
    %v8258 = vsel %vm6656, %v8257, 0
    %8260 = vmatprep.subr.mxu0 0.0
    %8261 = vmatpush1.msra.mxu0 0.0
    %8262 = vmatprep.subr.mxu0 0.0
    %8263 = vmatpush1.msra.mxu0 0.0
    %8264 = vmatprep.subr.mxu0 0.0
    %8265 = vmatpush1.msra.mxu0 0.0
    %8266 = vmatprep.subr.mxu0 0.0
    %8267 = vmatpush1.msra.mxu0 0.0
    %8268 = vmatprep.subr.mxu0 0.0
    %8269 = vmatpush1.msra.mxu0 0.0
    %8270 = vmatprep.subr.mxu0 0.0
    %8271 = vmatpush1.msra.mxu0 0.0
    %8272 = vmatprep.subr.mxu0 0.0
    %8273 = vmatpush1.msra.mxu0 0.0
    %8274 = vmatprep.subr.mxu0 0.0
    %8275 = vmatpush1.msra.mxu0 0.0
    %8276 = vmatprep.subr.mxu0 0.0
    %8277 = vmatpush1.msra.mxu0 0.0
    %8278 = vmatprep.subr.mxu0 0.0
    %8279 = vmatpush1.msra.mxu0 0.0
    %8280 = vmatprep.subr.mxu0 0.0
    %8281 = vmatpush1.msra.mxu0 0.0
    %8282 = vmatprep.subr.mxu0 0.0
    %8283 = vmatpush1.msra.mxu0 0.0
    %8284 = vmatprep.subr.mxu0 0.0
    %8285 = vmatpush1.msra.mxu0 %v8247
    %8286 = vmatprep.subr.mxu0 0.0
    %8287 = vmatpush1.msra.mxu0 %v8246
    %8288 = vmatprep.subr.mxu0 0.0
    %8289 = vmatpush1.msra.mxu0 %v8245
    %8290 = vmatprep.subr.mxu0 0.0
    %8291 = vmatpush1.msra.mxu0 %v8244
    %8292 = vmatprep.subr.mxu0 0.0
    %8293 = vmatpush2.msra.mxu0 0.0
    %8294 = vmatprep.subr.mxu0 0.0
    %8295 = vmatpush2.msra.mxu0 0.0
    %8296 = vmatprep.subr.mxu0 0.0
    %8297 = vmatpush2.msra.mxu0 0.0
    %8298 = vmatprep.subr.mxu0 0.0
    %8299 = vmatpush2.msra.mxu0 0.0
    %8300 = vmatprep.subr.mxu0 0.0
    %8301 = vmatpush2.msra.mxu0 0.0
    %8302 = vmatprep.subr.mxu0 0.0
    %8303 = vmatpush2.msra.mxu0 0.0
    %8304 = vmatprep.subr.mxu0 0.0
    %8305 = vmatpush2.msra.mxu0 0.0
    %8306 = vmatprep.subr.mxu0 0.0
    %8307 = vmatpush2.msra.mxu0 0.0
    %8308 = vmatprep.subr.mxu0 0.0
    %8309 = vmatpush2.msra.mxu0 0.0
    %8310 = vmatprep.subr.mxu0 0.0
    %8311 = vmatpush2.msra.mxu0 0.0
    %8312 = vmatprep.subr.mxu0 0.0
    %8313 = vmatpush2.msra.mxu0 0.0
    %8314 = vmatprep.subr.mxu0 0.0
    %8315 = vmatpush2.msra.mxu0 0.0
    %8316 = vmatprep.subr.mxu0 0.0
    %8317 = vmatpush2.msra.mxu0 0.0
    %8318 = vmatprep.subr.mxu0 0.0
    %8319 = vmatpush2.msra.mxu0 0.0
    %8320 = vmatprep.subr.mxu0 0.0
    %8321 = vmatpush2.msra.mxu0 0.0
    %8322 = vmatprep.subr.mxu0 0.0
    %8323 = vmatpush2.msra.mxu0 0.0
    %8324 = vmatprep.mubr.f32.mxu0 0.0
    %8325 = vmatmul.mubr.f32.gmra.mxu0 %v8258
    %v8326 = vpop.f32.mrf.mxu0
    %v8327 = vadd.f32 %v8253, %v8326
    %v8328 = vpop.f32.mrf.mxu0
    %8329 = vdwg.mxu0
    %vm8330 = vcmask 9216
    %8331 = vst.msk [vmem:[#allocation2] sm:$0x3] %vm8330, %v8327
    // Predicated region
    $region42: #{video_lstm_forward.1} parent=1 // pred_check
      _
    $region43: #{video_lstm_forward.1} parent=1 // pred_check_branch
      %8333 = sbr.rel (0) target = $region45
    $region44: #{video_lstm_forward.1} parent=1 // pred_region
      %s8335 = ssub.s32 32, 32
      %8336 = vsyncadd [#allocation3], %s8335
      %s8338 = sshll.u32 [#allocation2], 4
      %s8339 = int_to_ptr.vmem [resolvable:$true] %s8338
      %8341 = dma.vmem_to_hbm [thread:$0]  %s8339, 32, %s10, [#allocation3]
    $region45: #{video_lstm_forward.1} parent=1 // pred_fallthru
      _
    // Predicated region
    $region46: #{video_lstm_forward.1} parent=1 // pred_check
      _
    $region47: #{video_lstm_forward.1} parent=1 // pred_check_branch
      %8343 = sbr.rel (0) target = $region49
    $region48: #{video_lstm_forward.1} parent=1 // pred_region
      %8344 = dma.done [#allocation3], 32
    $region49: #{video_lstm_forward.1} parent=1 // pred_fallthru
      _
    %8345 = vsyncpa [#allocation3], 1

</llo_original>
